<compile_context>
chip_gen: v7x
topology: tpu7x:2x2x1
jax: 0.10.0
libtpu: 0.0.40
codegen_flags: <defaults>
</compile_context>

<pallas_src>
import functools

import jax
import jax.numpy as jnp
from jax.experimental import pallas as pl
from jax.experimental.pallas import tpu as pltpu

INPUT_DIM = 64
HIDDEN_DIMS = [512, 256, 128]
N_MODELS = 4
BN_EPS = 1e-5

TILE_GRAIN = 256      # batch-tile granularity (MXU/sublane friendly)
MAX_TILE_B = 1024     # ~1.6 GFLOP / step; ~16-18 MiB peak VMEM -> safe on every gen
VMEM_LIMIT_BYTES = 48 * 1024 * 1024   # explicit budget: ~3 MiB weights + activation
                                      # slabs at tile 1024; well under v7x's 64 MiB physical


# ---------------------------------------------------------------------------
# Kernel
# ---------------------------------------------------------------------------
def ensemble_kernel(x_ref,
                    w1_ref, b1_ref,
                    w2_ref, b2_ref,
                    w3_ref, b3_ref,
                    w4_ref, b4_ref,
                    o_ref,
                    *, ew_dtype):
    """One batch tile through all N_MODELS members; mean is pre-folded into w4/b4."""
    h1_dim = HIDDEN_DIMS[0]

    # x tile: (TILE_B, 64) f32 -> bf16 once for the MXU.
    x = x_ref[...].astype(jnp.bfloat16)

    # Layer 1 fused across all members: (TILE_B, 64) @ (64, N*512) -> one MXU pass,
    # one bias+ReLU pass (instead of four under-filled K=64 dots).
    h1 = jnp.dot(x, w1_ref[...], preferred_element_type=jnp.float32)
    h1 = jnp.maximum(h1.astype(ew_dtype) + b1_ref[...].astype(ew_dtype), 0.0)
    h1 = h1.astype(jnp.bfloat16)

    acc = jnp.zeros((x_ref.shape[0], 1), jnp.float32)

    # Static unroll over ensemble members (N_MODELS is a small compile-time const).
    for n in range(N_MODELS):
        # Free, 128-lane-aligned static column slice of the fused layer-1 output.
        h = h1[:, n * h1_dim:(n + 1) * h1_dim]
        # Layer 2: Linear (+ folded BN) -> ReLU. Dropout = identity at inference.
        h = jnp.dot(h, w2_ref[n], preferred_element_type=jnp.float32)
        h = jnp.maximum(h.astype(ew_dtype) + b2_ref[n].astype(ew_dtype), 0.0)
        # Layer 3.
        h = jnp.dot(h.astype(jnp.bfloat16), w3_ref[n],
                    preferred_element_type=jnp.float32)
        h = jnp.maximum(h.astype(ew_dtype) + b3_ref[n].astype(ew_dtype), 0.0)
        # Scalar head as a lane reduction (VPU/XLU) instead of a lane-sparse MXU matmul;
        # ensemble-mean factor 1/N is pre-folded into w4. Keep the reduction in f32.
        acc = acc + jnp.sum(h.astype(jnp.float32) * w4_ref[n], axis=-1, keepdims=True)

    o_ref[...] = acc + b4_ref[...]


# ---------------------------------------------------------------------------
# Parameters (PyTorch-equivalent init) + offline folding
# ---------------------------------------------------------------------------
def xavier_uniform(key, fan_in, fan_out):
    # torch.nn.init.xavier_uniform_ on a (out, in) weight, returned transposed (in, out).
    bound = (6.0 / (fan_in + fan_out)) ** 0.5
    return jax.random.uniform(key, (fan_in, fan_out), jnp.float32, -bound, bound)


def make_member_params(key):
    keys = jax.random.split(key, len(HIDDEN_DIMS) + 1)
    layers = []
    prev = INPUT_DIM
    for i, h in enumerate(HIDDEN_DIMS):
        w = xavier_uniform(keys[i], prev, h)          # (prev, h)
        b = jnp.zeros((h,), jnp.float32)
        layers.append((w, b))
        prev = h
    w_out = xavier_uniform(keys[-1], prev, 1)         # (prev, 1)
    b_out = jnp.zeros((1,), jnp.float32)
    return {"layers": layers, "head": (w_out, b_out)}


def make_raw_params(key, n_models=N_MODELS):
    return [make_member_params(k) for k in jax.random.split(key, n_models)]


def fold_params(raw):
    """Fold BN (eval, fresh stats), bias and the ensemble 1/N mean into packed weights.

    Layer 1 is concatenated across members along the output dim so the kernel can run
    it as a single (64, N*512) matmul; deeper layers are stacked per member.
    """
    n = len(raw)
    bn_scale = float(1.0 / (1.0 + BN_EPS) ** 0.5)     # gamma / sqrt(var + eps)
    bn_shift = 0.0                                    # beta - mean * scale

    # Layer 1: fused across members.
    w1 = jnp.concatenate([m["layers"][0][0] * bn_scale for m in raw],
                         axis=1).astype(jnp.bfloat16)                         # (64, N*512)
    b1 = jnp.concatenate([m["layers"][0][1] * bn_scale + bn_shift for m in raw],
                         axis=0)[None, :].astype(jnp.float32)                 # (1, N*512)

    def stack_layer(li):
        w = jnp.stack([(m["layers"][li][0] * bn_scale).astype(jnp.bfloat16)
                       for m in raw], axis=0)                                 # (N, in, out)
        b = jnp.stack([(m["layers"][li][1] * bn_scale + bn_shift)[None, :]
                       for m in raw], axis=0).astype(jnp.float32)             # (N, 1, out)
        return w, b

    w2, b2 = stack_layer(1)
    w3, b3 = stack_layer(2)

    w4 = jnp.stack([(m["head"][0][:, 0] / n)[None, :] for m in raw],
                   axis=0).astype(jnp.float32)                                # (N, 1, 128)
    b4 = jnp.mean(jnp.stack([m["head"][1] for m in raw]))[None, None].astype(jnp.float32)  # (1,1)

    return [w1, b1, w2, b2, w3, b3, w4, b4]


# ---------------------------------------------------------------------------
# pallas_call wrapper
# ---------------------------------------------------------------------------
def _full_spec(a):
    nd = a.ndim
    return pl.BlockSpec(a.shape, lambda i, _nd=nd: (0,) * _nd)  # VMEM-resident across grid


def _default_elementwise_dtype():
    """bf16 elementwise on v6e/v7x (native bf16 VPU); f32 on v5e and older gens."""
    try:
        kind = jax.devices()[0].device_kind.lower()
    except Exception:
        return jnp.float32
    for old in ("v2", "v3", "v4", "v5"):
        if old in kind:
            return jnp.float32
    return jnp.bfloat16


def _select_tile(batch, max_tile_b):
    # Big enough to amortize the ~0.35 us per-step pipeline overhead, but capped so the
    # 'parallel' batch axis has >= 2 grid steps whenever B > TILE_GRAIN (v7x: 2 TCs).
    half = pl.cdiv(batch, 2)
    return min(max_tile_b, pl.cdiv(half, TILE_GRAIN) * TILE_GRAIN)


def ensemble_forward(x, params, *, max_tile_b=MAX_TILE_B, ew_dtype=None):
    if ew_dtype is None:
        ew_dtype = _default_elementwise_dtype()

    B = x.shape[0]
    tile_b = _select_tile(B, max_tile_b)
    b_pad = pl.cdiv(B, tile_b) * tile_b
    if b_pad != B:
        x = jnp.pad(x, ((0, b_pad - B), (0, 0)))   # padded tail rows are discarded below
    grid = (b_pad // tile_b,)

    in_specs = [pl.BlockSpec((tile_b, INPUT_DIM), lambda i: (i, 0))]
    in_specs += [_full_spec(p) for p in params]

    out = pl.pallas_call(
        functools.partial(ensemble_kernel, ew_dtype=ew_dtype),
        grid=grid,
        in_specs=in_specs,
        out_specs=pl.BlockSpec((tile_b, 1), lambda i: (i, 0)),
        out_shape=jax.ShapeDtypeStruct((b_pad, 1), jnp.float32),
        compiler_params=pltpu.CompilerParams(
            dimension_semantics=("parallel",),      # independent batch tiles -> megacore
            vmem_limit_bytes=VMEM_LIMIT_BYTES),
    )(x, *params)
    return out[:B]


# ---------------------------------------------------------------------------
# Pure-JAX reference (unfolded, f32) of EnsembleRegressor.forward (eval mode)
# ---------------------------------------------------------------------------
def ensemble_reference(x, raw):
    bn_scale = 1.0 / jnp.sqrt(1.0 + BN_EPS)
    preds = []
    for m in raw:
        h = x
        for (w, b) in m["layers"]:
            h = jnp.dot(h, w, precision=jax.lax.Precision.HIGHEST) + b[None, :]
            h = h * bn_scale                    # BatchNorm1d eval: mean=0, var=1, gamma=1, beta=0
            h = jnp.maximum(h, 0.0)
        w4, b4 = m["head"]
        preds.append(jnp.dot(h, w4, precision=jax.lax.Precision.HIGHEST) + b4[None, :])
    return jnp.mean(jnp.stack(preds, axis=-1), axis=-1)   # (B, 1)


if __name__ == "__main__":
    key = jax.random.PRNGKey(0)
    k_param, k_x = jax.random.split(key)

    raw = make_raw_params(k_param)
    params = fold_params(raw)

    # Small check (batch=2, single grid step).
    batch = 2
    x = jax.random.normal(k_x, (batch, INPUT_DIM), jnp.float32)
    out = jax.block_until_ready(ensemble_forward(x, params))
    ref = ensemble_reference(x, raw)
    assert out.shape == (batch, 1)
    assert jnp.allclose(out, ref, atol=2e-2, rtol=2e-2), (out, ref)

    # Multi-tile check (grid > 1, batch not a multiple of the tile).
    batch2 = 387
    x2 = jax.random.normal(jax.random.PRNGKey(1), (batch2, INPUT_DIM), jnp.float32)
    out2 = jax.block_until_ready(ensemble_forward(x2, params))
    ref2 = ensemble_reference(x2, raw)
    assert out2.shape == (batch2, 1)
    assert jnp.allclose(out2, ref2, atol=2e-2, rtol=2e-2)

    # Large-batch check exercising the max tile size (tile_b = MAX_TILE_B, grid > 1).
    batch3 = 4096
    x3 = jax.random.normal(jax.random.PRNGKey(2), (batch3, INPUT_DIM), jnp.float32)
    out3 = jax.block_until_ready(ensemble_forward(x3, params))
    ref3 = ensemble_reference(x3, raw)
    assert out3.shape == (batch3, 1)
    assert jnp.allclose(out3, ref3, atol=2e-2, rtol=2e-2)

    print("KERNEL_OK")
</pallas_src>

<mosaic_0001>
module attributes {stable_mosaic.version = 11 : i64} {
  func.func @ensemble_kernel(%arg0: i32, %arg1: memref<256x64xf32, #tpu.memory_space<vmem>>, %arg2: memref<64x2048xbf16, #tpu.memory_space<vmem>>, %arg3: memref<1x2048xf32, #tpu.memory_space<vmem>>, %arg4: memref<4x512x256xbf16, #tpu.memory_space<vmem>>, %arg5: memref<4x1x256xf32, #tpu.memory_space<vmem>>, %arg6: memref<4x256x128xbf16, #tpu.memory_space<vmem>>, %arg7: memref<4x1x128xf32, #tpu.memory_space<vmem>>, %arg8: memref<4x1x128xf32, #tpu.memory_space<vmem>>, %arg9: memref<1x1xf32, #tpu.memory_space<vmem>>, %arg10: memref<256x1xf32, #tpu.memory_space<vmem>>) attributes {dimension_semantics = [#tpu.dimension_semantics<parallel>], iteration_bounds = array<i64: 1>, scalar_prefetch = 0 : i64, scratch_operands = 0 : i64, tpu.core_type = #tpu.core_type<tc>, window_params = [{transform_indices = @transform_0, window_bounds = array<i64: 256, 64>}, {pipeline_mode = #tpu.pipeline_mode<synchronous>, transform_indices = @transform_1, window_bounds = array<i64: 64, 2048>}, {pipeline_mode = #tpu.pipeline_mode<synchronous>, transform_indices = @transform_2, window_bounds = array<i64: 1, 2048>}, {pipeline_mode = #tpu.pipeline_mode<synchronous>, transform_indices = @transform_3, window_bounds = array<i64: 4, 512, 256>}, {pipeline_mode = #tpu.pipeline_mode<synchronous>, transform_indices = @transform_4, window_bounds = array<i64: 4, 1, 256>}, {pipeline_mode = #tpu.pipeline_mode<synchronous>, transform_indices = @transform_5, window_bounds = array<i64: 4, 256, 128>}, {pipeline_mode = #tpu.pipeline_mode<synchronous>, transform_indices = @transform_6, window_bounds = array<i64: 4, 1, 128>}, {pipeline_mode = #tpu.pipeline_mode<synchronous>, transform_indices = @transform_7, window_bounds = array<i64: 4, 1, 128>}, {pipeline_mode = #tpu.pipeline_mode<synchronous>, transform_indices = @transform_8, window_bounds = array<i64: 1, 1>}, {transform_indices = @transform_9, window_bounds = array<i64: 256, 1>}]} {
    %c0 = arith.constant 0 : index
    %c0_0 = arith.constant 0 : index
    %0 = vector.load %arg1[%c0, %c0_0] : memref<256x64xf32, #tpu.memory_space<vmem>>, vector<256x64xf32>
    %1 = arith.truncf %0 : vector<256x64xf32> to vector<256x64xbf16>
    %c0_1 = arith.constant 0 : index
    %c0_2 = arith.constant 0 : index
    %2 = vector.load %arg2[%c0_1, %c0_2] : memref<64x2048xbf16, #tpu.memory_space<vmem>>, vector<64x2048xbf16>
    %cst = arith.constant dense<0.000000e+00> : vector<256x2048xf32>
    %3 = tpu.matmul %1, %2, %cst {dimension_numbers = #tpu.dot_dimension_numbers<[1], [0], [0], [1], [0, 0, 1, 1], [], []>} : vector<256x64xbf16>, vector<64x2048xbf16>, vector<256x2048xf32> -> vector<256x2048xf32>
    %4 = arith.truncf %3 : vector<256x2048xf32> to vector<256x2048xbf16>
    %c0_3 = arith.constant 0 : index
    %c0_4 = arith.constant 0 : index
    %5 = vector.load %arg3[%c0_3, %c0_4] : memref<1x2048xf32, #tpu.memory_space<vmem>>, vector<1x2048xf32>
    %6 = arith.truncf %5 : vector<1x2048xf32> to vector<1x2048xbf16>
    %7 = vector.broadcast %6 : vector<1x2048xbf16> to vector<256x2048xbf16>
    %8 = arith.addf %4, %7 : vector<256x2048xbf16>
    %cst_5 = arith.constant 0.000000e+00 : bf16
    %9 = vector.broadcast %cst_5 : bf16 to vector<256x2048xbf16>
    %10 = arith.maximumf %8, %9 : vector<256x2048xbf16>
    %cst_6 = arith.constant 0.000000e+00 : f32
    %11 = vector.broadcast %cst_6 : f32 to vector<256x1xf32>
    %12 = vector.extract_strided_slice %10 {offsets = [0, 0], sizes = [256, 512], strides = [1, 1]} : vector<256x2048xbf16> to vector<256x512xbf16>
    %c0_7 = arith.constant 0 : index
    %c0_8 = arith.constant 0 : index
    %c0_9 = arith.constant 0 : index
    %13 = vector.load %arg4[%c0_7, %c0_8, %c0_9] : memref<4x512x256xbf16, #tpu.memory_space<vmem>>, vector<1x512x256xbf16>
    %14 = vector.shape_cast %13 : vector<1x512x256xbf16> to vector<512x256xbf16>
    %cst_10 = arith.constant dense<0.000000e+00> : vector<256x256xf32>
    %15 = tpu.matmul %12, %14, %cst_10 {dimension_numbers = #tpu.dot_dimension_numbers<[1], [0], [0], [1], [0, 0, 1, 1], [], []>} : vector<256x512xbf16>, vector<512x256xbf16>, vector<256x256xf32> -> vector<256x256xf32>
    %16 = arith.truncf %15 : vector<256x256xf32> to vector<256x256xbf16>
    %c0_11 = arith.constant 0 : index
    %c0_12 = arith.constant 0 : index
    %c0_13 = arith.constant 0 : index
    %17 = vector.load %arg5[%c0_11, %c0_12, %c0_13] : memref<4x1x256xf32, #tpu.memory_space<vmem>>, vector<1x1x256xf32>
    %18 = vector.shape_cast %17 : vector<1x1x256xf32> to vector<1x256xf32>
    %19 = arith.truncf %18 : vector<1x256xf32> to vector<1x256xbf16>
    %20 = vector.broadcast %19 : vector<1x256xbf16> to vector<256x256xbf16>
    %21 = arith.addf %16, %20 : vector<256x256xbf16>
    %cst_14 = arith.constant 0.000000e+00 : bf16
    %22 = vector.broadcast %cst_14 : bf16 to vector<256x256xbf16>
    %23 = arith.maximumf %21, %22 : vector<256x256xbf16>
    %c0_15 = arith.constant 0 : index
    %c0_16 = arith.constant 0 : index
    %c0_17 = arith.constant 0 : index
    %24 = vector.load %arg6[%c0_15, %c0_16, %c0_17] : memref<4x256x128xbf16, #tpu.memory_space<vmem>>, vector<1x256x128xbf16>
    %25 = vector.shape_cast %24 : vector<1x256x128xbf16> to vector<256x128xbf16>
    %cst_18 = arith.constant dense<0.000000e+00> : vector<256x128xf32>
    %26 = tpu.matmul %23, %25, %cst_18 {dimension_numbers = #tpu.dot_dimension_numbers<[1], [0], [0], [1], [0, 0, 1, 1], [], []>} : vector<256x256xbf16>, vector<256x128xbf16>, vector<256x128xf32> -> vector<256x128xf32>
    %27 = arith.truncf %26 : vector<256x128xf32> to vector<256x128xbf16>
    %c0_19 = arith.constant 0 : index
    %c0_20 = arith.constant 0 : index
    %c0_21 = arith.constant 0 : index
    %28 = vector.load %arg7[%c0_19, %c0_20, %c0_21] : memref<4x1x128xf32, #tpu.memory_space<vmem>>, vector<1x1x128xf32>
    %29 = vector.shape_cast %28 : vector<1x1x128xf32> to vector<1x128xf32>
    %30 = arith.truncf %29 : vector<1x128xf32> to vector<1x128xbf16>
    %31 = vector.broadcast %30 : vector<1x128xbf16> to vector<256x128xbf16>
    %32 = arith.addf %27, %31 : vector<256x128xbf16>
    %cst_22 = arith.constant 0.000000e+00 : bf16
    %33 = vector.broadcast %cst_22 : bf16 to vector<256x128xbf16>
    %34 = arith.maximumf %32, %33 : vector<256x128xbf16>
    %35 = arith.extf %34 : vector<256x128xbf16> to vector<256x128xf32>
    %c0_23 = arith.constant 0 : index
    %c0_24 = arith.constant 0 : index
    %c0_25 = arith.constant 0 : index
    %36 = vector.load %arg8[%c0_23, %c0_24, %c0_25] : memref<4x1x128xf32, #tpu.memory_space<vmem>>, vector<1x1x128xf32>
    %37 = vector.shape_cast %36 : vector<1x1x128xf32> to vector<1x128xf32>
    %38 = vector.broadcast %37 : vector<1x128xf32> to vector<256x128xf32>
    %39 = arith.mulf %35, %38 : vector<256x128xf32>
    %cst_26 = arith.constant dense<0.000000e+00> : vector<256xf32>
    %40 = vector.multi_reduction <add>, %39, %cst_26 [1] : vector<256x128xf32> to vector<256xf32>
    %41 = vector.shape_cast %40 : vector<256xf32> to vector<256x1xf32>
    %42 = arith.addf %11, %41 : vector<256x1xf32>
    %43 = vector.extract_strided_slice %10 {offsets = [0, 512], sizes = [256, 512], strides = [1, 1]} : vector<256x2048xbf16> to vector<256x512xbf16>
    %c1 = arith.constant 1 : index
    %c0_27 = arith.constant 0 : index
    %c0_28 = arith.constant 0 : index
    %44 = vector.load %arg4[%c1, %c0_27, %c0_28] : memref<4x512x256xbf16, #tpu.memory_space<vmem>>, vector<1x512x256xbf16>
    %45 = vector.shape_cast %44 : vector<1x512x256xbf16> to vector<512x256xbf16>
    %cst_29 = arith.constant dense<0.000000e+00> : vector<256x256xf32>
    %46 = tpu.matmul %43, %45, %cst_29 {dimension_numbers = #tpu.dot_dimension_numbers<[1], [0], [0], [1], [0, 0, 1, 1], [], []>} : vector<256x512xbf16>, vector<512x256xbf16>, vector<256x256xf32> -> vector<256x256xf32>
    %47 = arith.truncf %46 : vector<256x256xf32> to vector<256x256xbf16>
    %c1_30 = arith.constant 1 : index
    %c0_31 = arith.constant 0 : index
    %c0_32 = arith.constant 0 : index
    %48 = vector.load %arg5[%c1_30, %c0_31, %c0_32] : memref<4x1x256xf32, #tpu.memory_space<vmem>>, vector<1x1x256xf32>
    %49 = vector.shape_cast %48 : vector<1x1x256xf32> to vector<1x256xf32>
    %50 = arith.truncf %49 : vector<1x256xf32> to vector<1x256xbf16>
    %51 = vector.broadcast %50 : vector<1x256xbf16> to vector<256x256xbf16>
    %52 = arith.addf %47, %51 : vector<256x256xbf16>
    %cst_33 = arith.constant 0.000000e+00 : bf16
    %53 = vector.broadcast %cst_33 : bf16 to vector<256x256xbf16>
    %54 = arith.maximumf %52, %53 : vector<256x256xbf16>
    %c1_34 = arith.constant 1 : index
    %c0_35 = arith.constant 0 : index
    %c0_36 = arith.constant 0 : index
    %55 = vector.load %arg6[%c1_34, %c0_35, %c0_36] : memref<4x256x128xbf16, #tpu.memory_space<vmem>>, vector<1x256x128xbf16>
    %56 = vector.shape_cast %55 : vector<1x256x128xbf16> to vector<256x128xbf16>
    %cst_37 = arith.constant dense<0.000000e+00> : vector<256x128xf32>
    %57 = tpu.matmul %54, %56, %cst_37 {dimension_numbers = #tpu.dot_dimension_numbers<[1], [0], [0], [1], [0, 0, 1, 1], [], []>} : vector<256x256xbf16>, vector<256x128xbf16>, vector<256x128xf32> -> vector<256x128xf32>
    %58 = arith.truncf %57 : vector<256x128xf32> to vector<256x128xbf16>
    %c1_38 = arith.constant 1 : index
    %c0_39 = arith.constant 0 : index
    %c0_40 = arith.constant 0 : index
    %59 = vector.load %arg7[%c1_38, %c0_39, %c0_40] : memref<4x1x128xf32, #tpu.memory_space<vmem>>, vector<1x1x128xf32>
    %60 = vector.shape_cast %59 : vector<1x1x128xf32> to vector<1x128xf32>
    %61 = arith.truncf %60 : vector<1x128xf32> to vector<1x128xbf16>
    %62 = vector.broadcast %61 : vector<1x128xbf16> to vector<256x128xbf16>
    %63 = arith.addf %58, %62 : vector<256x128xbf16>
    %cst_41 = arith.constant 0.000000e+00 : bf16
    %64 = vector.broadcast %cst_41 : bf16 to vector<256x128xbf16>
    %65 = arith.maximumf %63, %64 : vector<256x128xbf16>
    %66 = arith.extf %65 : vector<256x128xbf16> to vector<256x128xf32>
    %c1_42 = arith.constant 1 : index
    %c0_43 = arith.constant 0 : index
    %c0_44 = arith.constant 0 : index
    %67 = vector.load %arg8[%c1_42, %c0_43, %c0_44] : memref<4x1x128xf32, #tpu.memory_space<vmem>>, vector<1x1x128xf32>
    %68 = vector.shape_cast %67 : vector<1x1x128xf32> to vector<1x128xf32>
    %69 = vector.broadcast %68 : vector<1x128xf32> to vector<256x128xf32>
    %70 = arith.mulf %66, %69 : vector<256x128xf32>
    %cst_45 = arith.constant dense<0.000000e+00> : vector<256xf32>
    %71 = vector.multi_reduction <add>, %70, %cst_45 [1] : vector<256x128xf32> to vector<256xf32>
    %72 = vector.shape_cast %71 : vector<256xf32> to vector<256x1xf32>
    %73 = arith.addf %42, %72 : vector<256x1xf32>
    %74 = vector.extract_strided_slice %10 {offsets = [0, 1024], sizes = [256, 512], strides = [1, 1]} : vector<256x2048xbf16> to vector<256x512xbf16>
    %c2 = arith.constant 2 : index
    %c0_46 = arith.constant 0 : index
    %c0_47 = arith.constant 0 : index
    %75 = vector.load %arg4[%c2, %c0_46, %c0_47] : memref<4x512x256xbf16, #tpu.memory_space<vmem>>, vector<1x512x256xbf16>
    %76 = vector.shape_cast %75 : vector<1x512x256xbf16> to vector<512x256xbf16>
    %cst_48 = arith.constant dense<0.000000e+00> : vector<256x256xf32>
    %77 = tpu.matmul %74, %76, %cst_48 {dimension_numbers = #tpu.dot_dimension_numbers<[1], [0], [0], [1], [0, 0, 1, 1], [], []>} : vector<256x512xbf16>, vector<512x256xbf16>, vector<256x256xf32> -> vector<256x256xf32>
    %78 = arith.truncf %77 : vector<256x256xf32> to vector<256x256xbf16>
    %c2_49 = arith.constant 2 : index
    %c0_50 = arith.constant 0 : index
    %c0_51 = arith.constant 0 : index
    %79 = vector.load %arg5[%c2_49, %c0_50, %c0_51] : memref<4x1x256xf32, #tpu.memory_space<vmem>>, vector<1x1x256xf32>
    %80 = vector.shape_cast %79 : vector<1x1x256xf32> to vector<1x256xf32>
    %81 = arith.truncf %80 : vector<1x256xf32> to vector<1x256xbf16>
    %82 = vector.broadcast %81 : vector<1x256xbf16> to vector<256x256xbf16>
    %83 = arith.addf %78, %82 : vector<256x256xbf16>
    %cst_52 = arith.constant 0.000000e+00 : bf16
    %84 = vector.broadcast %cst_52 : bf16 to vector<256x256xbf16>
    %85 = arith.maximumf %83, %84 : vector<256x256xbf16>
    %c2_53 = arith.constant 2 : index
    %c0_54 = arith.constant 0 : index
    %c0_55 = arith.constant 0 : index
    %86 = vector.load %arg6[%c2_53, %c0_54, %c0_55] : memref<4x256x128xbf16, #tpu.memory_space<vmem>>, vector<1x256x128xbf16>
    %87 = vector.shape_cast %86 : vector<1x256x128xbf16> to vector<256x128xbf16>
    %cst_56 = arith.constant dense<0.000000e+00> : vector<256x128xf32>
    %88 = tpu.matmul %85, %87, %cst_56 {dimension_numbers = #tpu.dot_dimension_numbers<[1], [0], [0], [1], [0, 0, 1, 1], [], []>} : vector<256x256xbf16>, vector<256x128xbf16>, vector<256x128xf32> -> vector<256x128xf32>
    %89 = arith.truncf %88 : vector<256x128xf32> to vector<256x128xbf16>
    %c2_57 = arith.constant 2 : index
    %c0_58 = arith.constant 0 : index
    %c0_59 = arith.constant 0 : index
    %90 = vector.load %arg7[%c2_57, %c0_58, %c0_59] : memref<4x1x128xf32, #tpu.memory_space<vmem>>, vector<1x1x128xf32>
    %91 = vector.shape_cast %90 : vector<1x1x128xf32> to vector<1x128xf32>
    %92 = arith.truncf %91 : vector<1x128xf32> to vector<1x128xbf16>
    %93 = vector.broadcast %92 : vector<1x128xbf16> to vector<256x128xbf16>
    %94 = arith.addf %89, %93 : vector<256x128xbf16>
    %cst_60 = arith.constant 0.000000e+00 : bf16
    %95 = vector.broadcast %cst_60 : bf16 to vector<256x128xbf16>
    %96 = arith.maximumf %94, %95 : vector<256x128xbf16>
    %97 = arith.extf %96 : vector<256x128xbf16> to vector<256x128xf32>
    %c2_61 = arith.constant 2 : index
    %c0_62 = arith.constant 0 : index
    %c0_63 = arith.constant 0 : index
    %98 = vector.load %arg8[%c2_61, %c0_62, %c0_63] : memref<4x1x128xf32, #tpu.memory_space<vmem>>, vector<1x1x128xf32>
    %99 = vector.shape_cast %98 : vector<1x1x128xf32> to vector<1x128xf32>
    %100 = vector.broadcast %99 : vector<1x128xf32> to vector<256x128xf32>
    %101 = arith.mulf %97, %100 : vector<256x128xf32>
    %cst_64 = arith.constant dense<0.000000e+00> : vector<256xf32>
    %102 = vector.multi_reduction <add>, %101, %cst_64 [1] : vector<256x128xf32> to vector<256xf32>
    %103 = vector.shape_cast %102 : vector<256xf32> to vector<256x1xf32>
    %104 = arith.addf %73, %103 : vector<256x1xf32>
    %105 = vector.extract_strided_slice %10 {offsets = [0, 1536], sizes = [256, 512], strides = [1, 1]} : vector<256x2048xbf16> to vector<256x512xbf16>
    %c3 = arith.constant 3 : index
    %c0_65 = arith.constant 0 : index
    %c0_66 = arith.constant 0 : index
    %106 = vector.load %arg4[%c3, %c0_65, %c0_66] : memref<4x512x256xbf16, #tpu.memory_space<vmem>>, vector<1x512x256xbf16>
    %107 = vector.shape_cast %106 : vector<1x512x256xbf16> to vector<512x256xbf16>
    %cst_67 = arith.constant dense<0.000000e+00> : vector<256x256xf32>
    %108 = tpu.matmul %105, %107, %cst_67 {dimension_numbers = #tpu.dot_dimension_numbers<[1], [0], [0], [1], [0, 0, 1, 1], [], []>} : vector<256x512xbf16>, vector<512x256xbf16>, vector<256x256xf32> -> vector<256x256xf32>
    %109 = arith.truncf %108 : vector<256x256xf32> to vector<256x256xbf16>
    %c3_68 = arith.constant 3 : index
    %c0_69 = arith.constant 0 : index
    %c0_70 = arith.constant 0 : index
    %110 = vector.load %arg5[%c3_68, %c0_69, %c0_70] : memref<4x1x256xf32, #tpu.memory_space<vmem>>, vector<1x1x256xf32>
    %111 = vector.shape_cast %110 : vector<1x1x256xf32> to vector<1x256xf32>
    %112 = arith.truncf %111 : vector<1x256xf32> to vector<1x256xbf16>
    %113 = vector.broadcast %112 : vector<1x256xbf16> to vector<256x256xbf16>
    %114 = arith.addf %109, %113 : vector<256x256xbf16>
    %cst_71 = arith.constant 0.000000e+00 : bf16
    %115 = vector.broadcast %cst_71 : bf16 to vector<256x256xbf16>
    %116 = arith.maximumf %114, %115 : vector<256x256xbf16>
    %c3_72 = arith.constant 3 : index
    %c0_73 = arith.constant 0 : index
    %c0_74 = arith.constant 0 : index
    %117 = vector.load %arg6[%c3_72, %c0_73, %c0_74] : memref<4x256x128xbf16, #tpu.memory_space<vmem>>, vector<1x256x128xbf16>
    %118 = vector.shape_cast %117 : vector<1x256x128xbf16> to vector<256x128xbf16>
    %cst_75 = arith.constant dense<0.000000e+00> : vector<256x128xf32>
    %119 = tpu.matmul %116, %118, %cst_75 {dimension_numbers = #tpu.dot_dimension_numbers<[1], [0], [0], [1], [0, 0, 1, 1], [], []>} : vector<256x256xbf16>, vector<256x128xbf16>, vector<256x128xf32> -> vector<256x128xf32>
    %120 = arith.truncf %119 : vector<256x128xf32> to vector<256x128xbf16>
    %c3_76 = arith.constant 3 : index
    %c0_77 = arith.constant 0 : index
    %c0_78 = arith.constant 0 : index
    %121 = vector.load %arg7[%c3_76, %c0_77, %c0_78] : memref<4x1x128xf32, #tpu.memory_space<vmem>>, vector<1x1x128xf32>
    %122 = vector.shape_cast %121 : vector<1x1x128xf32> to vector<1x128xf32>
    %123 = arith.truncf %122 : vector<1x128xf32> to vector<1x128xbf16>
    %124 = vector.broadcast %123 : vector<1x128xbf16> to vector<256x128xbf16>
    %125 = arith.addf %120, %124 : vector<256x128xbf16>
    %cst_79 = arith.constant 0.000000e+00 : bf16
    %126 = vector.broadcast %cst_79 : bf16 to vector<256x128xbf16>
    %127 = arith.maximumf %125, %126 : vector<256x128xbf16>
    %128 = arith.extf %127 : vector<256x128xbf16> to vector<256x128xf32>
    %c3_80 = arith.constant 3 : index
    %c0_81 = arith.constant 0 : index
    %c0_82 = arith.constant 0 : index
    %129 = vector.load %arg8[%c3_80, %c0_81, %c0_82] : memref<4x1x128xf32, #tpu.memory_space<vmem>>, vector<1x1x128xf32>
    %130 = vector.shape_cast %129 : vector<1x1x128xf32> to vector<1x128xf32>
    %131 = vector.broadcast %130 : vector<1x128xf32> to vector<256x128xf32>
    %132 = arith.mulf %128, %131 : vector<256x128xf32>
    %cst_83 = arith.constant dense<0.000000e+00> : vector<256xf32>
    %133 = vector.multi_reduction <add>, %132, %cst_83 [1] : vector<256x128xf32> to vector<256xf32>
    %134 = vector.shape_cast %133 : vector<256xf32> to vector<256x1xf32>
    %135 = arith.addf %104, %134 : vector<256x1xf32>
    %c0_84 = arith.constant 0 : index
    %c0_85 = arith.constant 0 : index
    %136 = vector.load %arg9[%c0_84, %c0_85] : memref<1x1xf32, #tpu.memory_space<vmem>>, vector<1x1xf32>
    %137 = vector.broadcast %136 : vector<1x1xf32> to vector<256x1xf32>
    %138 = arith.addf %135, %137 : vector<256x1xf32>
    %c0_86 = arith.constant 0 : index
    %c0_87 = arith.constant 0 : index
    %139 = vector.load %arg10[%c0_86, %c0_87] : memref<256x1xf32, #tpu.memory_space<vmem>>, vector<256x1xf32>
    tpu.vector_store %arg10[%c0_86, %c0_87], %138 {strides = array<i32>} : memref<256x1xf32, #tpu.memory_space<vmem>>, vector<256x1xf32>,
    return
  }
  func.func @transform_0(%arg0: i32) -> (i32, i32) {
    %c0_i32 = arith.constant 0 : i32
    %c0_i32_0 = arith.constant 0 : i32
    return %arg0, %c0_i32 : i32, i32
  }
  func.func @transform_1(%arg0: i32) -> (i32, i32) {
    %c0_i32 = arith.constant 0 : i32
    %c0_i32_0 = arith.constant 0 : i32
    %c0_i32_1 = arith.constant 0 : i32
    return %c0_i32, %c0_i32_0 : i32, i32
  }
  func.func @transform_2(%arg0: i32) -> (i32, i32) {
    %c0_i32 = arith.constant 0 : i32
    %c0_i32_0 = arith.constant 0 : i32
    %c0_i32_1 = arith.constant 0 : i32
    return %c0_i32, %c0_i32_0 : i32, i32
  }
  func.func @transform_3(%arg0: i32) -> (i32, i32, i32) {
    %c0_i32 = arith.constant 0 : i32
    %c0_i32_0 = arith.constant 0 : i32
    %c0_i32_1 = arith.constant 0 : i32
    %c0_i32_2 = arith.constant 0 : i32
    return %c0_i32, %c0_i32_0, %c0_i32_1 : i32, i32, i32
  }
  func.func @transform_4(%arg0: i32) -> (i32, i32, i32) {
    %c0_i32 = arith.constant 0 : i32
    %c0_i32_0 = arith.constant 0 : i32
    %c0_i32_1 = arith.constant 0 : i32
    %c0_i32_2 = arith.constant 0 : i32
    return %c0_i32, %c0_i32_0, %c0_i32_1 : i32, i32, i32
  }
  func.func @transform_5(%arg0: i32) -> (i32, i32, i32) {
    %c0_i32 = arith.constant 0 : i32
    %c0_i32_0 = arith.constant 0 : i32
    %c0_i32_1 = arith.constant 0 : i32
    %c0_i32_2 = arith.constant 0 : i32
    return %c0_i32, %c0_i32_0, %c0_i32_1 : i32, i32, i32
  }
  func.func @transform_6(%arg0: i32) -> (i32, i32, i32) {
    %c0_i32 = arith.constant 0 : i32
    %c0_i32_0 = arith.constant 0 : i32
    %c0_i32_1 = arith.constant 0 : i32
    %c0_i32_2 = arith.constant 0 : i32
    return %c0_i32, %c0_i32_0, %c0_i32_1 : i32, i32, i32
  }
  func.func @transform_7(%arg0: i32) -> (i32, i32, i32) {
    %c0_i32 = arith.constant 0 : i32
    %c0_i32_0 = arith.constant 0 : i32
    %c0_i32_1 = arith.constant 0 : i32
    %c0_i32_2 = arith.constant 0 : i32
    return %c0_i32, %c0_i32_0, %c0_i32_1 : i32, i32, i32
  }
  func.func @transform_8(%arg0: i32) -> (i32, i32) {
    %c0_i32 = arith.constant 0 : i32
    %c0_i32_0 = arith.constant 0 : i32
    %c0_i32_1 = arith.constant 0 : i32
    return %c0_i32, %c0_i32_0 : i32, i32
  }
  func.func @transform_9(%arg0: i32) -> (i32, i32) {
    %c0_i32 = arith.constant 0 : i32
    %c0_i32_0 = arith.constant 0 : i32
    return %arg0, %c0_i32 : i32, i32
  }
}

</mosaic_0001>

<llo_original>
// kernel: tpu_custom_call.1
$region0: #{tpu_custom_call.1}
  #allocation0 [shape = 'u32[]', space=smem, size = 0x4, offset = 0x4, fixed_abs, tag = 'smem constant byte address 0x4 - core index']
  #allocation1 [shape = 'u32[144,128]{1,0:T(1,128)}', space=vmem, size = 0x12000, scoped, tag = 'internal scratch']
  #allocation2 [shape = 'f32[1,1]{1,0:T(1,128)S(1)}', space=vmem, size = 0x200, scoped, tag = 'scoped memory for tpu_custom_call.1']
  %s0 = inlined_call_operand.vmem [shape: f32[256,64], index: 0, kind: input, shape index: {}]
  %s1 = inlined_call_operand.hbm [shape: bf16[64,2048], index: 1, kind: input, shape index: {}]
  %s2 = inlined_call_operand.vmem [shape: f32[1,2048], index: 2, kind: input, shape index: {}]
  %s3 = inlined_call_operand.hbm [shape: bf16[4,512,256], index: 3, kind: input, shape index: {}]
  %s4 = inlined_call_operand.vmem [shape: f32[4,1,256], index: 4, kind: input, shape index: {}]
  %s5 = inlined_call_operand.hbm [shape: bf16[4,256,128], index: 5, kind: input, shape index: {}]
  %s6 = inlined_call_operand.vmem [shape: f32[4,1,128], index: 6, kind: input, shape index: {}]
  %s7 = inlined_call_operand.vmem [shape: f32[4,1,128], index: 7, kind: input, shape index: {}]
  %s8 = inlined_call_operand.<no memory space> [shape: f32[1,1], index: 8, kind: input, shape index: {}]
  %s9 = inlined_call_operand.vmem [shape: f32[256,1], index: 9, kind: output, shape index: {}]
  %s10 = sld [smem:[#allocation0]]
  $region58: #{tpu_custom_call.1} parent=0
    _
  %s12 = ssub.s32 1, %s10
  %s13 = scalar_select 0, %s12, %s10
  %v14 = vstv %s8
  %15 = vst [vmem:[#allocation2] sm:$0x1] %v14
  $region1: #{tpu_custom_call.1} parent=0
    #allocation3 [shape = 'u8[262144]{0}', space=vmem, size = 0x40000, scoped, tag = 'input window, operand 1, single buffered']
    #allocation4 [shape = 's32[1]{0}', space=sflag, size = 0x4, scoped, tag = 'scoped memory for tpu_custom_call.1']
    #allocation5 [shape = 'u8[1048576]{0}', space=vmem, size = 0x100000, scoped, tag = 'input window, operand 3, single buffered']
    #allocation6 [shape = 's32[1]{0}', space=sflag, size = 0x4, scoped, tag = 'scoped memory for tpu_custom_call.1']
    #allocation7 [shape = 'u8[262144]{0}', space=vmem, size = 0x40000, scoped, tag = 'input window, operand 5, single buffered']
    %16 = vsyncpa [#allocation4], 0
    %17 = vsyncpa [#allocation6], 0
    // Predicated region
    $region2: #{tpu_custom_call.1} parent=1 // pred_check
      _
    $region3: #{tpu_custom_call.1} parent=1 // pred_check_branch
      %19 = sbr.rel (0) target = $region5
    $region4: #{tpu_custom_call.1} parent=1 // pred_region
      _
    $region5: #{tpu_custom_call.1} parent=1 // pred_fallthru
      _
    // Predicated region
    $region6: #{tpu_custom_call.1} parent=1 // pred_check
      _
    $region7: #{tpu_custom_call.1} parent=1 // pred_check_branch
      %21 = sbr.rel (0) target = $region9
    $region8: #{tpu_custom_call.1} parent=1 // pred_region
      %s23 = ssub.s32 8192, 8192
      %24 = vsyncadd [#allocation4], %s23
      %s25 = sshll.u32 [#allocation3], 4
      %s26 = int_to_ptr.vmem [resolvable:$true] %s25
      %31 = dma.hbm_to_vmem [thread:$0]  %s1, 8192, %s26, [#allocation4], 1024, 1024, 64
    $region9: #{tpu_custom_call.1} parent=1 // pred_fallthru
      _
    // Predicated region
    $region10: #{tpu_custom_call.1} parent=1 // pred_check
      _
    $region11: #{tpu_custom_call.1} parent=1 // pred_check_branch
      %33 = sbr.rel (0) target = $region13
    $region12: #{tpu_custom_call.1} parent=1 // pred_region
      _
    $region13: #{tpu_custom_call.1} parent=1 // pred_fallthru
      _
    // Predicated region
    $region14: #{tpu_custom_call.1} parent=1 // pred_check
      _
    $region15: #{tpu_custom_call.1} parent=1 // pred_check_branch
      %35 = sbr.rel (0) target = $region17
    $region16: #{tpu_custom_call.1} parent=1 // pred_region
      %s37 = ssub.s32 32768, 32768
      %38 = vsyncadd [#allocation6], %s37
      %s39 = sshll.u32 [#allocation5], 4
      %s40 = int_to_ptr.vmem [resolvable:$true] %s39
      %45 = dma.hbm_to_vmem [thread:$0]  %s3, 32768, %s40, [#allocation6], 128, 128, 8
    $region17: #{tpu_custom_call.1} parent=1 // pred_fallthru
      _
    // Predicated region
    $region18: #{tpu_custom_call.1} parent=1 // pred_check
      _
    $region19: #{tpu_custom_call.1} parent=1 // pred_check_branch
      %47 = sbr.rel (0) target = $region21
    $region20: #{tpu_custom_call.1} parent=1 // pred_region
      _
    $region21: #{tpu_custom_call.1} parent=1 // pred_fallthru
      _
    // Predicated region
    $region22: #{tpu_custom_call.1} parent=1 // pred_check
      _
    $region23: #{tpu_custom_call.1} parent=1 // pred_check_branch
      %49 = sbr.rel (0) target = $region25
    $region24: #{tpu_custom_call.1} parent=1 // pred_region
      %s51 = ssub.s32 8192, 8192
      %52 = vsyncadd [#allocation6], %s51
      %s53 = sshll.u32 [#allocation7], 4
      %s54 = int_to_ptr.vmem [resolvable:$true] %s53
      %59 = dma.hbm_to_vmem [thread:$0]  %s5, 8192, %s54, [#allocation6], 64, 64, 4
    $region25: #{tpu_custom_call.1} parent=1 // pred_fallthru
      _
    // Predicated region
    $region26: #{tpu_custom_call.1} parent=1 // pred_check
      _
    $region27: #{tpu_custom_call.1} parent=1 // pred_check_branch
      %61 = sbr.rel (0) target = $region29
    $region28: #{tpu_custom_call.1} parent=1 // pred_region
      _
    $region29: #{tpu_custom_call.1} parent=1 // pred_fallthru
      _
    // Predicated region
    $region30: #{tpu_custom_call.1} parent=1 // pred_check
      _
    $region31: #{tpu_custom_call.1} parent=1 // pred_check_branch
      %63 = sbr.rel (0) target = $region33
    $region32: #{tpu_custom_call.1} parent=1 // pred_region
      _
    $region33: #{tpu_custom_call.1} parent=1 // pred_fallthru
      _
    // Predicated region
    $region34: #{tpu_custom_call.1} parent=1 // pred_check
      _
    $region35: #{tpu_custom_call.1} parent=1 // pred_check_branch
      %65 = sbr.rel (0) target = $region37
    $region36: #{tpu_custom_call.1} parent=1 // pred_region
      _
    $region37: #{tpu_custom_call.1} parent=1 // pred_fallthru
      _
    // Predicated region
    $region38: #{tpu_custom_call.1} parent=1 // pred_check
      _
    $region39: #{tpu_custom_call.1} parent=1 // pred_check_branch
      %67 = sbr.rel (0) target = $region41
    $region40: #{tpu_custom_call.1} parent=1 // pred_region
      %68 = dma.done [#allocation4], 8192
    $region41: #{tpu_custom_call.1} parent=1 // pred_fallthru
      _
    // Predicated region
    $region42: #{tpu_custom_call.1} parent=1 // pred_check
      _
    $region43: #{tpu_custom_call.1} parent=1 // pred_check_branch
      %70 = sbr.rel (0) target = $region45
    $region44: #{tpu_custom_call.1} parent=1 // pred_region
      %71 = dma.done [#allocation6], 32768
    $region45: #{tpu_custom_call.1} parent=1 // pred_fallthru
      _
    // Predicated region
    $region46: #{tpu_custom_call.1} parent=1 // pred_check
      _
    $region47: #{tpu_custom_call.1} parent=1 // pred_check_branch
      %73 = sbr.rel (0) target = $region49
    $region48: #{tpu_custom_call.1} parent=1 // pred_region
      %74 = dma.done [#allocation6], 8192
    $region49: #{tpu_custom_call.1} parent=1 // pred_fallthru
      _
    %v76 = vld [vmem:[%s0] sm:$0xff]
    %v77 = vld [vmem:[%s0 + $0x8] sm:$0xff]
    %v78 = vld [vmem:[%s0 + $0x10] sm:$0xff]
    %v79 = vld [vmem:[%s0 + $0x18] sm:$0xff]
    %v80 = vld [vmem:[%s0 + $0x20] sm:$0xff]
    %v81 = vld [vmem:[%s0 + $0x28] sm:$0xff]
    %v82 = vld [vmem:[%s0 + $0x30] sm:$0xff]
    %v83 = vld [vmem:[%s0 + $0x38] sm:$0xff]
    %v84 = vld [vmem:[%s0 + $0x40] sm:$0xff]
    %v85 = vld [vmem:[%s0 + $0x48] sm:$0xff]
    %v86 = vld [vmem:[%s0 + $0x50] sm:$0xff]
    %v87 = vld [vmem:[%s0 + $0x58] sm:$0xff]
    %v88 = vld [vmem:[%s0 + $0x60] sm:$0xff]
    %v89 = vld [vmem:[%s0 + $0x68] sm:$0xff]
    %v90 = vld [vmem:[%s0 + $0x70] sm:$0xff]
    %v91 = vld [vmem:[%s0 + $0x78] sm:$0xff]
    %v92 = vld [vmem:[%s0 + $0x80] sm:$0xff]
    %v93 = vld [vmem:[%s0 + $0x88] sm:$0xff]
    %v94 = vld [vmem:[%s0 + $0x90] sm:$0xff]
    %v95 = vld [vmem:[%s0 + $0x98] sm:$0xff]
    %v96 = vld [vmem:[%s0 + $0xa0] sm:$0xff]
    %v97 = vld [vmem:[%s0 + $0xa8] sm:$0xff]
    %v98 = vld [vmem:[%s0 + $0xb0] sm:$0xff]
    %v99 = vld [vmem:[%s0 + $0xb8] sm:$0xff]
    %v100 = vld [vmem:[%s0 + $0xc0] sm:$0xff]
    %v101 = vld [vmem:[%s0 + $0xc8] sm:$0xff]
    %v102 = vld [vmem:[%s0 + $0xd0] sm:$0xff]
    %v103 = vld [vmem:[%s0 + $0xd8] sm:$0xff]
    %v104 = vld [vmem:[%s0 + $0xe0] sm:$0xff]
    %v105 = vld [vmem:[%s0 + $0xe8] sm:$0xff]
    %v106 = vld [vmem:[%s0 + $0xf0] sm:$0xff]
    %v107 = vld [vmem:[%s0 + $0xf8] sm:$0xff]
    %v108 = vpack.c.bf16 %v77, %v76
    %v109 = vpack.c.bf16 %v79, %v78
    %v110 = vpack.c.bf16 %v81, %v80
    %v111 = vpack.c.bf16 %v83, %v82
    %v112 = vpack.c.bf16 %v85, %v84
    %v113 = vpack.c.bf16 %v87, %v86
    %v114 = vpack.c.bf16 %v89, %v88
    %v115 = vpack.c.bf16 %v91, %v90
    %v116 = vpack.c.bf16 %v93, %v92
    %v117 = vpack.c.bf16 %v95, %v94
    %v118 = vpack.c.bf16 %v97, %v96
    %v119 = vpack.c.bf16 %v99, %v98
    %v120 = vpack.c.bf16 %v101, %v100
    %v121 = vpack.c.bf16 %v103, %v102
    %v122 = vpack.c.bf16 %v105, %v104
    %v123 = vpack.c.bf16 %v107, %v106
    %v124 = vld [vmem:[#allocation3] sm:$0xff]
    %v125 = vld [vmem:[#allocation3 + $0x8] sm:$0xff]
    %v126 = vld [vmem:[#allocation3 + $0x10] sm:$0xff]
    %v127 = vld [vmem:[#allocation3 + $0x18] sm:$0xff]
    %v128 = vld [vmem:[#allocation3 + $0x20] sm:$0xff]
    %v129 = vld [vmem:[#allocation3 + $0x28] sm:$0xff]
    %v130 = vld [vmem:[#allocation3 + $0x30] sm:$0xff]
    %v131 = vld [vmem:[#allocation3 + $0x38] sm:$0xff]
    %v132 = vld [vmem:[#allocation3 + $0x40] sm:$0xff]
    %v133 = vld [vmem:[#allocation3 + $0x48] sm:$0xff]
    %v134 = vld [vmem:[#allocation3 + $0x50] sm:$0xff]
    %v135 = vld [vmem:[#allocation3 + $0x58] sm:$0xff]
    %v136 = vld [vmem:[#allocation3 + $0x60] sm:$0xff]
    %v137 = vld [vmem:[#allocation3 + $0x68] sm:$0xff]
    %v138 = vld [vmem:[#allocation3 + $0x70] sm:$0xff]
    %v139 = vld [vmem:[#allocation3 + $0x78] sm:$0xff]
    %v140 = vld [vmem:[#allocation3 + $0x80] sm:$0xff]
    %v141 = vld [vmem:[#allocation3 + $0x88] sm:$0xff]
    %v142 = vld [vmem:[#allocation3 + $0x90] sm:$0xff]
    %v143 = vld [vmem:[#allocation3 + $0x98] sm:$0xff]
    %v144 = vld [vmem:[#allocation3 + $0xa0] sm:$0xff]
    %v145 = vld [vmem:[#allocation3 + $0xa8] sm:$0xff]
    %v146 = vld [vmem:[#allocation3 + $0xb0] sm:$0xff]
    %v147 = vld [vmem:[#allocation3 + $0xb8] sm:$0xff]
    %v148 = vld [vmem:[#allocation3 + $0xc0] sm:$0xff]
    %v149 = vld [vmem:[#allocation3 + $0xc8] sm:$0xff]
    %v150 = vld [vmem:[#allocation3 + $0xd0] sm:$0xff]
    %v151 = vld [vmem:[#allocation3 + $0xd8] sm:$0xff]
    %v152 = vld [vmem:[#allocation3 + $0xe0] sm:$0xff]
    %v153 = vld [vmem:[#allocation3 + $0xe8] sm:$0xff]
    %v154 = vld [vmem:[#allocation3 + $0xf0] sm:$0xff]
    %v155 = vld [vmem:[#allocation3 + $0xf8] sm:$0xff]
    %v156 = vld [vmem:[#allocation3 + $0x100] sm:$0xff]
    %v157 = vld [vmem:[#allocation3 + $0x108] sm:$0xff]
    %v158 = vld [vmem:[#allocation3 + $0x110] sm:$0xff]
    %v159 = vld [vmem:[#allocation3 + $0x118] sm:$0xff]
    %v160 = vld [vmem:[#allocation3 + $0x120] sm:$0xff]
    %v161 = vld [vmem:[#allocation3 + $0x128] sm:$0xff]
    %v162 = vld [vmem:[#allocation3 + $0x130] sm:$0xff]
    %v163 = vld [vmem:[#allocation3 + $0x138] sm:$0xff]
    %v164 = vld [vmem:[#allocation3 + $0x140] sm:$0xff]
    %v165 = vld [vmem:[#allocation3 + $0x148] sm:$0xff]
    %v166 = vld [vmem:[#allocation3 + $0x150] sm:$0xff]
    %v167 = vld [vmem:[#allocation3 + $0x158] sm:$0xff]
    %v168 = vld [vmem:[#allocation3 + $0x160] sm:$0xff]
    %v169 = vld [vmem:[#allocation3 + $0x168] sm:$0xff]
    %v170 = vld [vmem:[#allocation3 + $0x170] sm:$0xff]
    %v171 = vld [vmem:[#allocation3 + $0x178] sm:$0xff]
    %v172 = vld [vmem:[#allocation3 + $0x180] sm:$0xff]
    %v173 = vld [vmem:[#allocation3 + $0x188] sm:$0xff]
    %v174 = vld [vmem:[#allocation3 + $0x190] sm:$0xff]
    %v175 = vld [vmem:[#allocation3 + $0x198] sm:$0xff]
    %v176 = vld [vmem:[#allocation3 + $0x1a0] sm:$0xff]
    %v177 = vld [vmem:[#allocation3 + $0x1a8] sm:$0xff]
    %v178 = vld [vmem:[#allocation3 + $0x1b0] sm:$0xff]
    %v179 = vld [vmem:[#allocation3 + $0x1b8] sm:$0xff]
    %v180 = vld [vmem:[#allocation3 + $0x1c0] sm:$0xff]
    %v181 = vld [vmem:[#allocation3 + $0x1c8] sm:$0xff]
    %v182 = vld [vmem:[#allocation3 + $0x1d0] sm:$0xff]
    %v183 = vld [vmem:[#allocation3 + $0x1d8] sm:$0xff]
    %v184 = vld [vmem:[#allocation3 + $0x1e0] sm:$0xff]
    %v185 = vld [vmem:[#allocation3 + $0x1e8] sm:$0xff]
    %v186 = vld [vmem:[#allocation3 + $0x1f0] sm:$0xff]
    %v187 = vld [vmem:[#allocation3 + $0x1f8] sm:$0xff]
    %v252 = vunpack.c.l.b16 %v124
    %v253 = vunpack.c.h.b16 %v124
    %v254 = vunpack.c.l.b16 %v125
    %v255 = vunpack.c.h.b16 %v125
    %v256 = vunpack.c.l.b16 %v126
    %v257 = vunpack.c.h.b16 %v126
    %v258 = vunpack.c.l.b16 %v127
    %v259 = vunpack.c.h.b16 %v127
    %v260 = vunpack.c.l.b16 %v128
    %v261 = vunpack.c.h.b16 %v128
    %v262 = vunpack.c.l.b16 %v129
    %v263 = vunpack.c.h.b16 %v129
    %v264 = vunpack.c.l.b16 %v130
    %v265 = vunpack.c.h.b16 %v130
    %v266 = vunpack.c.l.b16 %v131
    %v267 = vunpack.c.h.b16 %v131
    %v268 = vunpack.c.l.b16 %v132
    %v269 = vunpack.c.h.b16 %v132
    %v270 = vunpack.c.l.b16 %v133
    %v271 = vunpack.c.h.b16 %v133
    %v272 = vunpack.c.l.b16 %v134
    %v273 = vunpack.c.h.b16 %v134
    %v274 = vunpack.c.l.b16 %v135
    %v275 = vunpack.c.h.b16 %v135
    %v276 = vunpack.c.l.b16 %v136
    %v277 = vunpack.c.h.b16 %v136
    %v278 = vunpack.c.l.b16 %v137
    %v279 = vunpack.c.h.b16 %v137
    %v280 = vunpack.c.l.b16 %v138
    %v281 = vunpack.c.h.b16 %v138
    %v282 = vunpack.c.l.b16 %v139
    %v283 = vunpack.c.h.b16 %v139
    %v284 = vunpack.c.l.b16 %v140
    %v285 = vunpack.c.h.b16 %v140
    %v286 = vunpack.c.l.b16 %v141
    %v287 = vunpack.c.h.b16 %v141
    %v288 = vunpack.c.l.b16 %v142
    %v289 = vunpack.c.h.b16 %v142
    %v290 = vunpack.c.l.b16 %v143
    %v291 = vunpack.c.h.b16 %v143
    %v292 = vunpack.c.l.b16 %v144
    %v293 = vunpack.c.h.b16 %v144
    %v294 = vunpack.c.l.b16 %v145
    %v295 = vunpack.c.h.b16 %v145
    %v296 = vunpack.c.l.b16 %v146
    %v297 = vunpack.c.h.b16 %v146
    %v298 = vunpack.c.l.b16 %v147
    %v299 = vunpack.c.h.b16 %v147
    %v300 = vunpack.c.l.b16 %v148
    %v301 = vunpack.c.h.b16 %v148
    %v302 = vunpack.c.l.b16 %v149
    %v303 = vunpack.c.h.b16 %v149
    %v304 = vunpack.c.l.b16 %v150
    %v305 = vunpack.c.h.b16 %v150
    %v306 = vunpack.c.l.b16 %v151
    %v307 = vunpack.c.h.b16 %v151
    %v308 = vunpack.c.l.b16 %v152
    %v309 = vunpack.c.h.b16 %v152
    %v310 = vunpack.c.l.b16 %v153
    %v311 = vunpack.c.h.b16 %v153
    %v312 = vunpack.c.l.b16 %v154
    %v313 = vunpack.c.h.b16 %v154
    %v314 = vunpack.c.l.b16 %v155
    %v315 = vunpack.c.h.b16 %v155
    %v316 = vunpack.c.l.b16 %v156
    %v317 = vunpack.c.h.b16 %v156
    %v318 = vunpack.c.l.b16 %v157
    %v319 = vunpack.c.h.b16 %v157
    %v320 = vunpack.c.l.b16 %v158
    %v321 = vunpack.c.h.b16 %v158
    %v322 = vunpack.c.l.b16 %v159
    %v323 = vunpack.c.h.b16 %v159
    %v324 = vunpack.c.l.b16 %v160
    %v325 = vunpack.c.h.b16 %v160
    %v326 = vunpack.c.l.b16 %v161
    %v327 = vunpack.c.h.b16 %v161
    %v328 = vunpack.c.l.b16 %v162
    %v329 = vunpack.c.h.b16 %v162
    %v330 = vunpack.c.l.b16 %v163
    %v331 = vunpack.c.h.b16 %v163
    %v332 = vunpack.c.l.b16 %v164
    %v333 = vunpack.c.h.b16 %v164
    %v334 = vunpack.c.l.b16 %v165
    %v335 = vunpack.c.h.b16 %v165
    %v336 = vunpack.c.l.b16 %v166
    %v337 = vunpack.c.h.b16 %v166
    %v338 = vunpack.c.l.b16 %v167
    %v339 = vunpack.c.h.b16 %v167
    %v340 = vunpack.c.l.b16 %v168
    %v341 = vunpack.c.h.b16 %v168
    %v342 = vunpack.c.l.b16 %v169
    %v343 = vunpack.c.h.b16 %v169
    %v344 = vunpack.c.l.b16 %v170
    %v345 = vunpack.c.h.b16 %v170
    %v346 = vunpack.c.l.b16 %v171
    %v347 = vunpack.c.h.b16 %v171
    %v348 = vunpack.c.l.b16 %v172
    %v349 = vunpack.c.h.b16 %v172
    %v350 = vunpack.c.l.b16 %v173
    %v351 = vunpack.c.h.b16 %v173
    %v352 = vunpack.c.l.b16 %v174
    %v353 = vunpack.c.h.b16 %v174
    %v354 = vunpack.c.l.b16 %v175
    %v355 = vunpack.c.h.b16 %v175
    %v356 = vunpack.c.l.b16 %v176
    %v357 = vunpack.c.h.b16 %v176
    %v358 = vunpack.c.l.b16 %v177
    %v359 = vunpack.c.h.b16 %v177
    %v360 = vunpack.c.l.b16 %v178
    %v361 = vunpack.c.h.b16 %v178
    %v362 = vunpack.c.l.b16 %v179
    %v363 = vunpack.c.h.b16 %v179
    %v364 = vunpack.c.l.b16 %v180
    %v365 = vunpack.c.h.b16 %v180
    %v366 = vunpack.c.l.b16 %v181
    %v367 = vunpack.c.h.b16 %v181
    %v368 = vunpack.c.l.b16 %v182
    %v369 = vunpack.c.h.b16 %v182
    %v370 = vunpack.c.l.b16 %v183
    %v371 = vunpack.c.h.b16 %v183
    %v372 = vunpack.c.l.b16 %v184
    %v373 = vunpack.c.h.b16 %v184
    %v374 = vunpack.c.l.b16 %v185
    %v375 = vunpack.c.h.b16 %v185
    %v376 = vunpack.c.l.b16 %v186
    %v377 = vunpack.c.h.b16 %v186
    %v378 = vunpack.c.l.b16 %v187
    %v379 = vunpack.c.h.b16 %v187
    %v380 = vpack.c.b16 %v268, %v252
    %v381 = vpack.c.b16 %v269, %v253
    %v382 = vpack.c.b16 %v270, %v254
    %v383 = vpack.c.b16 %v271, %v255
    %v384 = vpack.c.b16 %v272, %v256
    %v385 = vpack.c.b16 %v273, %v257
    %v386 = vpack.c.b16 %v274, %v258
    %v387 = vpack.c.b16 %v275, %v259
    %v388 = vpack.c.b16 %v276, %v260
    %v389 = vpack.c.b16 %v277, %v261
    %v390 = vpack.c.b16 %v278, %v262
    %v391 = vpack.c.b16 %v279, %v263
    %v392 = vpack.c.b16 %v280, %v264
    %v393 = vpack.c.b16 %v281, %v265
    %v394 = vpack.c.b16 %v282, %v266
    %v395 = vpack.c.b16 %v283, %v267
    %v396 = vpack.c.b16 %v300, %v284
    %v397 = vpack.c.b16 %v301, %v285
    %v398 = vpack.c.b16 %v302, %v286
    %v399 = vpack.c.b16 %v303, %v287
    %v400 = vpack.c.b16 %v304, %v288
    %v401 = vpack.c.b16 %v305, %v289
    %v402 = vpack.c.b16 %v306, %v290
    %v403 = vpack.c.b16 %v307, %v291
    %v404 = vpack.c.b16 %v308, %v292
    %v405 = vpack.c.b16 %v309, %v293
    %v406 = vpack.c.b16 %v310, %v294
    %v407 = vpack.c.b16 %v311, %v295
    %v408 = vpack.c.b16 %v312, %v296
    %v409 = vpack.c.b16 %v313, %v297
    %v410 = vpack.c.b16 %v314, %v298
    %v411 = vpack.c.b16 %v315, %v299
    %v412 = vpack.c.b16 %v332, %v316
    %v413 = vpack.c.b16 %v333, %v317
    %v414 = vpack.c.b16 %v334, %v318
    %v415 = vpack.c.b16 %v335, %v319
    %v416 = vpack.c.b16 %v336, %v320
    %v417 = vpack.c.b16 %v337, %v321
    %v418 = vpack.c.b16 %v338, %v322
    %v419 = vpack.c.b16 %v339, %v323
    %v420 = vpack.c.b16 %v340, %v324
    %v421 = vpack.c.b16 %v341, %v325
    %v422 = vpack.c.b16 %v342, %v326
    %v423 = vpack.c.b16 %v343, %v327
    %v424 = vpack.c.b16 %v344, %v328
    %v425 = vpack.c.b16 %v345, %v329
    %v426 = vpack.c.b16 %v346, %v330
    %v427 = vpack.c.b16 %v347, %v331
    %v428 = vpack.c.b16 %v364, %v348
    %v429 = vpack.c.b16 %v365, %v349
    %v430 = vpack.c.b16 %v366, %v350
    %v431 = vpack.c.b16 %v367, %v351
    %v432 = vpack.c.b16 %v368, %v352
    %v433 = vpack.c.b16 %v369, %v353
    %v434 = vpack.c.b16 %v370, %v354
    %v435 = vpack.c.b16 %v371, %v355
    %v436 = vpack.c.b16 %v372, %v356
    %v437 = vpack.c.b16 %v373, %v357
    %v438 = vpack.c.b16 %v374, %v358
    %v439 = vpack.c.b16 %v375, %v359
    %v440 = vpack.c.b16 %v376, %v360
    %v441 = vpack.c.b16 %v377, %v361
    %v442 = vpack.c.b16 %v378, %v362
    %v443 = vpack.c.b16 %v379, %v363
    %vm508 = vcmask 523264
    %v510 = vsel %vm508, %v108, 0
    %v513 = vsel %vm508, %v109, 0
    %v516 = vsel %vm508, %v110, 0
    %v519 = vsel %vm508, %v111, 0
    %v522 = vsel %vm508, %v112, 0
    %v525 = vsel %vm508, %v113, 0
    %v528 = vsel %vm508, %v114, 0
    %v531 = vsel %vm508, %v115, 0
    %v534 = vsel %vm508, %v116, 0
    %v537 = vsel %vm508, %v117, 0
    %v540 = vsel %vm508, %v118, 0
    %v543 = vsel %vm508, %v119, 0
    %v546 = vsel %vm508, %v120, 0
    %v549 = vsel %vm508, %v121, 0
    %v552 = vsel %vm508, %v122, 0
    %v555 = vsel %vm508, %v123, 0
    %557 = vmatprep.subr.bf16.mxu0 %v381
    %558 = vmatpush1.bf16.msra.mxu0 %v380
    %559 = vmatprep.subr.bf16.mxu0 %v397
    %560 = vmatpush1.bf16.msra.mxu0 %v396
    %561 = vmatprep.subr.bf16.mxu0 %v413
    %562 = vmatpush1.bf16.msra.mxu0 %v412
    %563 = vmatprep.subr.bf16.mxu0 %v429
    %564 = vmatpush1.bf16.msra.mxu0 %v428
    %565 = vmatprep.subr.bf16.mxu0 0
    %566 = vmatpush1.bf16.msra.mxu0 0
    %567 = vmatprep.subr.bf16.mxu0 0
    %568 = vmatpush1.bf16.msra.mxu0 0
    %569 = vmatprep.subr.bf16.mxu0 0
    %570 = vmatpush1.bf16.msra.mxu0 0
    %571 = vmatprep.subr.bf16.mxu0 0
    %572 = vmatpush1.bf16.msra.mxu0 0
    %573 = vmatprep.subr.bf16.mxu0 0
    %574 = vmatpush1.bf16.msra.mxu0 0
    %575 = vmatprep.subr.bf16.mxu0 0
    %576 = vmatpush1.bf16.msra.mxu0 0
    %577 = vmatprep.subr.bf16.mxu0 0
    %578 = vmatpush1.bf16.msra.mxu0 0
    %579 = vmatprep.subr.bf16.mxu0 0
    %580 = vmatpush1.bf16.msra.mxu0 0
    %581 = vmatprep.subr.bf16.mxu0 0
    %582 = vmatpush1.bf16.msra.mxu0 0
    %583 = vmatprep.subr.bf16.mxu0 0
    %584 = vmatpush1.bf16.msra.mxu0 0
    %585 = vmatprep.subr.bf16.mxu0 0
    %586 = vmatpush1.bf16.msra.mxu0 0
    %587 = vmatprep.subr.bf16.mxu0 0
    %588 = vmatpush1.bf16.msra.mxu0 0
    %589 = vmatprep.mubr.bf16.mxu0 0
    %590 = vmatmul.mubr.bf16.gmra.mrb[0].mxu0 %v510
    %v591 = vpop.f32.mrb[0].mxu0
    %v592 = vadd.f32 0.0, %v591
    %v593 = vpop.f32.mrb[0].mxu0
    %v594 = vadd.f32 0.0, %v593
    %v595 = vpop.f32.mrb[0].mxu0
    %v596 = vadd.f32 0.0, %v595
    %v597 = vpop.f32.mrb[0].mxu0
    %v598 = vadd.f32 0.0, %v597
    %599 = vmatprep.mubr.bf16.mxu0 0
    %600 = vmatmul.mubr.bf16.gmra.mrb[0].mxu0 %v513
    %v601 = vpop.f32.mrb[0].mxu0
    %v602 = vadd.f32 0.0, %v601
    %v603 = vpop.f32.mrb[0].mxu0
    %v604 = vadd.f32 0.0, %v603
    %v605 = vpop.f32.mrb[0].mxu0
    %v606 = vadd.f32 0.0, %v605
    %v607 = vpop.f32.mrb[0].mxu0
    %v608 = vadd.f32 0.0, %v607
    %609 = vmatprep.mubr.bf16.mxu0 0
    %610 = vmatmul.mubr.bf16.gmra.mrb[0].mxu0 %v516
    %v611 = vpop.f32.mrb[0].mxu0
    %v612 = vadd.f32 0.0, %v611
    %v613 = vpop.f32.mrb[0].mxu0
    %v614 = vadd.f32 0.0, %v613
    %v615 = vpop.f32.mrb[0].mxu0
    %v616 = vadd.f32 0.0, %v615
    %v617 = vpop.f32.mrb[0].mxu0
    %v618 = vadd.f32 0.0, %v617
    %619 = vmatprep.mubr.bf16.mxu0 0
    %620 = vmatmul.mubr.bf16.gmra.mrb[0].mxu0 %v519
    %v621 = vpop.f32.mrb[0].mxu0
    %v622 = vadd.f32 0.0, %v621
    %v623 = vpop.f32.mrb[0].mxu0
    %v624 = vadd.f32 0.0, %v623
    %v625 = vpop.f32.mrb[0].mxu0
    %v626 = vadd.f32 0.0, %v625
    %v627 = vpop.f32.mrb[0].mxu0
    %v628 = vadd.f32 0.0, %v627
    %629 = vmatprep.mubr.bf16.mxu0 0
    %630 = vmatmul.mubr.bf16.gmra.mrb[0].mxu0 %v522
    %v631 = vpop.f32.mrb[0].mxu0
    %v632 = vadd.f32 0.0, %v631
    %v633 = vpop.f32.mrb[0].mxu0
    %v634 = vadd.f32 0.0, %v633
    %v635 = vpop.f32.mrb[0].mxu0
    %v636 = vadd.f32 0.0, %v635
    %v637 = vpop.f32.mrb[0].mxu0
    %v638 = vadd.f32 0.0, %v637
    %639 = vmatprep.mubr.bf16.mxu0 0
    %640 = vmatmul.mubr.bf16.gmra.mrb[0].mxu0 %v525
    %v641 = vpop.f32.mrb[0].mxu0
    %v642 = vadd.f32 0.0, %v641
    %v643 = vpop.f32.mrb[0].mxu0
    %v644 = vadd.f32 0.0, %v643
    %v645 = vpop.f32.mrb[0].mxu0
    %v646 = vadd.f32 0.0, %v645
    %v647 = vpop.f32.mrb[0].mxu0
    %v648 = vadd.f32 0.0, %v647
    %649 = vmatprep.mubr.bf16.mxu0 0
    %650 = vmatmul.mubr.bf16.gmra.mrb[0].mxu0 %v528
    %v651 = vpop.f32.mrb[0].mxu0
    %v652 = vadd.f32 0.0, %v651
    %v653 = vpop.f32.mrb[0].mxu0
    %v654 = vadd.f32 0.0, %v653
    %v655 = vpop.f32.mrb[0].mxu0
    %v656 = vadd.f32 0.0, %v655
    %v657 = vpop.f32.mrb[0].mxu0
    %v658 = vadd.f32 0.0, %v657
    %659 = vmatprep.mubr.bf16.mxu0 0
    %660 = vmatmul.mubr.bf16.gmra.mrb[0].mxu0 %v531
    %v661 = vpop.f32.mrb[0].mxu0
    %v662 = vadd.f32 0.0, %v661
    %v663 = vpop.f32.mrb[0].mxu0
    %v664 = vadd.f32 0.0, %v663
    %v665 = vpop.f32.mrb[0].mxu0
    %v666 = vadd.f32 0.0, %v665
    %v667 = vpop.f32.mrb[0].mxu0
    %v668 = vadd.f32 0.0, %v667
    %669 = vmatprep.mubr.bf16.mxu0 0
    %670 = vmatmul.mubr.bf16.gmra.mrb[0].mxu0 %v534
    %v671 = vpop.f32.mrb[0].mxu0
    %v672 = vadd.f32 0.0, %v671
    %v673 = vpop.f32.mrb[0].mxu0
    %v674 = vadd.f32 0.0, %v673
    %v675 = vpop.f32.mrb[0].mxu0
    %v676 = vadd.f32 0.0, %v675
    %v677 = vpop.f32.mrb[0].mxu0
    %v678 = vadd.f32 0.0, %v677
    %679 = vmatprep.mubr.bf16.mxu0 0
    %680 = vmatmul.mubr.bf16.gmra.mrb[0].mxu0 %v537
    %v681 = vpop.f32.mrb[0].mxu0
    %v682 = vadd.f32 0.0, %v681
    %v683 = vpop.f32.mrb[0].mxu0
    %v684 = vadd.f32 0.0, %v683
    %v685 = vpop.f32.mrb[0].mxu0
    %v686 = vadd.f32 0.0, %v685
    %v687 = vpop.f32.mrb[0].mxu0
    %v688 = vadd.f32 0.0, %v687
    %689 = vmatprep.mubr.bf16.mxu0 0
    %690 = vmatmul.mubr.bf16.gmra.mrb[0].mxu0 %v540
    %v691 = vpop.f32.mrb[0].mxu0
    %v692 = vadd.f32 0.0, %v691
    %v693 = vpop.f32.mrb[0].mxu0
    %v694 = vadd.f32 0.0, %v693
    %v695 = vpop.f32.mrb[0].mxu0
    %v696 = vadd.f32 0.0, %v695
    %v697 = vpop.f32.mrb[0].mxu0
    %v698 = vadd.f32 0.0, %v697
    %699 = vmatprep.mubr.bf16.mxu0 0
    %700 = vmatmul.mubr.bf16.gmra.mrb[0].mxu0 %v543
    %v701 = vpop.f32.mrb[0].mxu0
    %v702 = vadd.f32 0.0, %v701
    %v703 = vpop.f32.mrb[0].mxu0
    %v704 = vadd.f32 0.0, %v703
    %v705 = vpop.f32.mrb[0].mxu0
    %v706 = vadd.f32 0.0, %v705
    %v707 = vpop.f32.mrb[0].mxu0
    %v708 = vadd.f32 0.0, %v707
    %709 = vmatprep.mubr.bf16.mxu0 0
    %710 = vmatmul.mubr.bf16.gmra.mrb[0].mxu0 %v546
    %v711 = vpop.f32.mrb[0].mxu0
    %v712 = vadd.f32 0.0, %v711
    %v713 = vpop.f32.mrb[0].mxu0
    %v714 = vadd.f32 0.0, %v713
    %v715 = vpop.f32.mrb[0].mxu0
    %v716 = vadd.f32 0.0, %v715
    %v717 = vpop.f32.mrb[0].mxu0
    %v718 = vadd.f32 0.0, %v717
    %719 = vmatprep.mubr.bf16.mxu0 0
    %720 = vmatmul.mubr.bf16.gmra.mrb[0].mxu0 %v549
    %v721 = vpop.f32.mrb[0].mxu0
    %v722 = vadd.f32 0.0, %v721
    %v723 = vpop.f32.mrb[0].mxu0
    %v724 = vadd.f32 0.0, %v723
    %v725 = vpop.f32.mrb[0].mxu0
    %v726 = vadd.f32 0.0, %v725
    %v727 = vpop.f32.mrb[0].mxu0
    %v728 = vadd.f32 0.0, %v727
    %729 = vmatprep.mubr.bf16.mxu0 0
    %730 = vmatmul.mubr.bf16.gmra.mrb[0].mxu0 %v552
    %v731 = vpop.f32.mrb[0].mxu0
    %v732 = vadd.f32 0.0, %v731
    %v733 = vpop.f32.mrb[0].mxu0
    %v734 = vadd.f32 0.0, %v733
    %v735 = vpop.f32.mrb[0].mxu0
    %v736 = vadd.f32 0.0, %v735
    %v737 = vpop.f32.mrb[0].mxu0
    %v738 = vadd.f32 0.0, %v737
    %739 = vmatprep.mubr.bf16.mxu0 0
    %740 = vmatmul.mubr.bf16.gmra.mrb[0].mxu0 %v555
    %v741 = vpop.f32.mrb[0].mxu0
    %v742 = vadd.f32 0.0, %v741
    %v743 = vpop.f32.mrb[0].mxu0
    %v744 = vadd.f32 0.0, %v743
    %v745 = vpop.f32.mrb[0].mxu0
    %v746 = vadd.f32 0.0, %v745
    %v747 = vpop.f32.mrb[0].mxu0
    %v748 = vadd.f32 0.0, %v747
    %749 = vdwg.mxu0
    %750 = vmatprep.subr.bf16.mxu0 %v383
    %751 = vmatpush1.bf16.msra.mxu0 %v382
    %752 = vmatprep.subr.bf16.mxu0 %v399
    %753 = vmatpush1.bf16.msra.mxu0 %v398
    %754 = vmatprep.subr.bf16.mxu0 %v415
    %755 = vmatpush1.bf16.msra.mxu0 %v414
    %756 = vmatprep.subr.bf16.mxu0 %v431
    %757 = vmatpush1.bf16.msra.mxu0 %v430
    %758 = vmatprep.subr.bf16.mxu0 0
    %759 = vmatpush1.bf16.msra.mxu0 0
    %760 = vmatprep.subr.bf16.mxu0 0
    %761 = vmatpush1.bf16.msra.mxu0 0
    %762 = vmatprep.subr.bf16.mxu0 0
    %763 = vmatpush1.bf16.msra.mxu0 0
    %764 = vmatprep.subr.bf16.mxu0 0
    %765 = vmatpush1.bf16.msra.mxu0 0
    %766 = vmatprep.subr.bf16.mxu0 0
    %767 = vmatpush1.bf16.msra.mxu0 0
    %768 = vmatprep.subr.bf16.mxu0 0
    %769 = vmatpush1.bf16.msra.mxu0 0
    %770 = vmatprep.subr.bf16.mxu0 0
    %771 = vmatpush1.bf16.msra.mxu0 0
    %772 = vmatprep.subr.bf16.mxu0 0
    %773 = vmatpush1.bf16.msra.mxu0 0
    %774 = vmatprep.subr.bf16.mxu0 0
    %775 = vmatpush1.bf16.msra.mxu0 0
    %776 = vmatprep.subr.bf16.mxu0 0
    %777 = vmatpush1.bf16.msra.mxu0 0
    %778 = vmatprep.subr.bf16.mxu0 0
    %779 = vmatpush1.bf16.msra.mxu0 0
    %780 = vmatprep.subr.bf16.mxu0 0
    %781 = vmatpush1.bf16.msra.mxu0 0
    %782 = vmatprep.mubr.bf16.mxu0 0
    %783 = vmatmul.mubr.bf16.gmra.mrb[0].mxu0 %v510
    %v784 = vpop.f32.mrb[0].mxu0
    %v785 = vadd.f32 0.0, %v784
    %v786 = vpop.f32.mrb[0].mxu0
    %v787 = vadd.f32 0.0, %v786
    %v788 = vpop.f32.mrb[0].mxu0
    %v789 = vadd.f32 0.0, %v788
    %v790 = vpop.f32.mrb[0].mxu0
    %v791 = vadd.f32 0.0, %v790
    %792 = vmatprep.mubr.bf16.mxu0 0
    %793 = vmatmul.mubr.bf16.gmra.mrb[0].mxu0 %v513
    %v794 = vpop.f32.mrb[0].mxu0
    %v795 = vadd.f32 0.0, %v794
    %v796 = vpop.f32.mrb[0].mxu0
    %v797 = vadd.f32 0.0, %v796
    %v798 = vpop.f32.mrb[0].mxu0
    %v799 = vadd.f32 0.0, %v798
    %v800 = vpop.f32.mrb[0].mxu0
    %v801 = vadd.f32 0.0, %v800
    %802 = vmatprep.mubr.bf16.mxu0 0
    %803 = vmatmul.mubr.bf16.gmra.mrb[0].mxu0 %v516
    %v804 = vpop.f32.mrb[0].mxu0
    %v805 = vadd.f32 0.0, %v804
    %v806 = vpop.f32.mrb[0].mxu0
    %v807 = vadd.f32 0.0, %v806
    %v808 = vpop.f32.mrb[0].mxu0
    %v809 = vadd.f32 0.0, %v808
    %v810 = vpop.f32.mrb[0].mxu0
    %v811 = vadd.f32 0.0, %v810
    %812 = vmatprep.mubr.bf16.mxu0 0
    %813 = vmatmul.mubr.bf16.gmra.mrb[0].mxu0 %v519
    %v814 = vpop.f32.mrb[0].mxu0
    %v815 = vadd.f32 0.0, %v814
    %v816 = vpop.f32.mrb[0].mxu0
    %v817 = vadd.f32 0.0, %v816
    %v818 = vpop.f32.mrb[0].mxu0
    %v819 = vadd.f32 0.0, %v818
    %v820 = vpop.f32.mrb[0].mxu0
    %v821 = vadd.f32 0.0, %v820
    %822 = vmatprep.mubr.bf16.mxu0 0
    %823 = vmatmul.mubr.bf16.gmra.mrb[0].mxu0 %v522
    %v824 = vpop.f32.mrb[0].mxu0
    %v825 = vadd.f32 0.0, %v824
    %v826 = vpop.f32.mrb[0].mxu0
    %v827 = vadd.f32 0.0, %v826
    %v828 = vpop.f32.mrb[0].mxu0
    %v829 = vadd.f32 0.0, %v828
    %v830 = vpop.f32.mrb[0].mxu0
    %v831 = vadd.f32 0.0, %v830
    %832 = vmatprep.mubr.bf16.mxu0 0
    %833 = vmatmul.mubr.bf16.gmra.mrb[0].mxu0 %v525
    %v834 = vpop.f32.mrb[0].mxu0
    %v835 = vadd.f32 0.0, %v834
    %v836 = vpop.f32.mrb[0].mxu0
    %v837 = vadd.f32 0.0, %v836
    %v838 = vpop.f32.mrb[0].mxu0
    %v839 = vadd.f32 0.0, %v838
    %v840 = vpop.f32.mrb[0].mxu0
    %v841 = vadd.f32 0.0, %v840
    %842 = vmatprep.mubr.bf16.mxu0 0
    %843 = vmatmul.mubr.bf16.gmra.mrb[0].mxu0 %v528
    %v844 = vpop.f32.mrb[0].mxu0
    %v845 = vadd.f32 0.0, %v844
    %v846 = vpop.f32.mrb[0].mxu0
    %v847 = vadd.f32 0.0, %v846
    %v848 = vpop.f32.mrb[0].mxu0
    %v849 = vadd.f32 0.0, %v848
    %v850 = vpop.f32.mrb[0].mxu0
    %v851 = vadd.f32 0.0, %v850
    %852 = vmatprep.mubr.bf16.mxu0 0
    %853 = vmatmul.mubr.bf16.gmra.mrb[0].mxu0 %v531
    %v854 = vpop.f32.mrb[0].mxu0
    %v855 = vadd.f32 0.0, %v854
    %v856 = vpop.f32.mrb[0].mxu0
    %v857 = vadd.f32 0.0, %v856
    %v858 = vpop.f32.mrb[0].mxu0
    %v859 = vadd.f32 0.0, %v858
    %v860 = vpop.f32.mrb[0].mxu0
    %v861 = vadd.f32 0.0, %v860
    %862 = vmatprep.mubr.bf16.mxu0 0
    %863 = vmatmul.mubr.bf16.gmra.mrb[0].mxu0 %v534
    %v864 = vpop.f32.mrb[0].mxu0
    %v865 = vadd.f32 0.0, %v864
    %v866 = vpop.f32.mrb[0].mxu0
    %v867 = vadd.f32 0.0, %v866
    %v868 = vpop.f32.mrb[0].mxu0
    %v869 = vadd.f32 0.0, %v868
    %v870 = vpop.f32.mrb[0].mxu0
    %v871 = vadd.f32 0.0, %v870
    %872 = vmatprep.mubr.bf16.mxu0 0
    %873 = vmatmul.mubr.bf16.gmra.mrb[0].mxu0 %v537
    %v874 = vpop.f32.mrb[0].mxu0
    %v875 = vadd.f32 0.0, %v874
    %v876 = vpop.f32.mrb[0].mxu0
    %v877 = vadd.f32 0.0, %v876
    %v878 = vpop.f32.mrb[0].mxu0
    %v879 = vadd.f32 0.0, %v878
    %v880 = vpop.f32.mrb[0].mxu0
    %v881 = vadd.f32 0.0, %v880
    %882 = vmatprep.mubr.bf16.mxu0 0
    %883 = vmatmul.mubr.bf16.gmra.mrb[0].mxu0 %v540
    %v884 = vpop.f32.mrb[0].mxu0
    %v885 = vadd.f32 0.0, %v884
    %v886 = vpop.f32.mrb[0].mxu0
    %v887 = vadd.f32 0.0, %v886
    %v888 = vpop.f32.mrb[0].mxu0
    %v889 = vadd.f32 0.0, %v888
    %v890 = vpop.f32.mrb[0].mxu0
    %v891 = vadd.f32 0.0, %v890
    %892 = vmatprep.mubr.bf16.mxu0 0
    %893 = vmatmul.mubr.bf16.gmra.mrb[0].mxu0 %v543
    %v894 = vpop.f32.mrb[0].mxu0
    %v895 = vadd.f32 0.0, %v894
    %v896 = vpop.f32.mrb[0].mxu0
    %v897 = vadd.f32 0.0, %v896
    %v898 = vpop.f32.mrb[0].mxu0
    %v899 = vadd.f32 0.0, %v898
    %v900 = vpop.f32.mrb[0].mxu0
    %v901 = vadd.f32 0.0, %v900
    %902 = vmatprep.mubr.bf16.mxu0 0
    %903 = vmatmul.mubr.bf16.gmra.mrb[0].mxu0 %v546
    %v904 = vpop.f32.mrb[0].mxu0
    %v905 = vadd.f32 0.0, %v904
    %v906 = vpop.f32.mrb[0].mxu0
    %v907 = vadd.f32 0.0, %v906
    %v908 = vpop.f32.mrb[0].mxu0
    %v909 = vadd.f32 0.0, %v908
    %v910 = vpop.f32.mrb[0].mxu0
    %v911 = vadd.f32 0.0, %v910
    %912 = vmatprep.mubr.bf16.mxu0 0
    %913 = vmatmul.mubr.bf16.gmra.mrb[0].mxu0 %v549
    %v914 = vpop.f32.mrb[0].mxu0
    %v915 = vadd.f32 0.0, %v914
    %v916 = vpop.f32.mrb[0].mxu0
    %v917 = vadd.f32 0.0, %v916
    %v918 = vpop.f32.mrb[0].mxu0
    %v919 = vadd.f32 0.0, %v918
    %v920 = vpop.f32.mrb[0].mxu0
    %v921 = vadd.f32 0.0, %v920
    %922 = vmatprep.mubr.bf16.mxu0 0
    %923 = vmatmul.mubr.bf16.gmra.mrb[0].mxu0 %v552
    %v924 = vpop.f32.mrb[0].mxu0
    %v925 = vadd.f32 0.0, %v924
    %v926 = vpop.f32.mrb[0].mxu0
    %v927 = vadd.f32 0.0, %v926
    %v928 = vpop.f32.mrb[0].mxu0
    %v929 = vadd.f32 0.0, %v928
    %v930 = vpop.f32.mrb[0].mxu0
    %v931 = vadd.f32 0.0, %v930
    %932 = vmatprep.mubr.bf16.mxu0 0
    %933 = vmatmul.mubr.bf16.gmra.mrb[0].mxu0 %v555
    %v934 = vpop.f32.mrb[0].mxu0
    %v935 = vadd.f32 0.0, %v934
    %v936 = vpop.f32.mrb[0].mxu0
    %v937 = vadd.f32 0.0, %v936
    %v938 = vpop.f32.mrb[0].mxu0
    %v939 = vadd.f32 0.0, %v938
    %v940 = vpop.f32.mrb[0].mxu0
    %v941 = vadd.f32 0.0, %v940
    %942 = vdwg.mxu0
    %943 = vmatprep.subr.bf16.mxu0 %v385
    %944 = vmatpush1.bf16.msra.mxu0 %v384
    %945 = vmatprep.subr.bf16.mxu0 %v401
    %946 = vmatpush1.bf16.msra.mxu0 %v400
    %947 = vmatprep.subr.bf16.mxu0 %v417
    %948 = vmatpush1.bf16.msra.mxu0 %v416
    %949 = vmatprep.subr.bf16.mxu0 %v433
    %950 = vmatpush1.bf16.msra.mxu0 %v432
    %951 = vmatprep.subr.bf16.mxu0 0
    %952 = vmatpush1.bf16.msra.mxu0 0
    %953 = vmatprep.subr.bf16.mxu0 0
    %954 = vmatpush1.bf16.msra.mxu0 0
    %955 = vmatprep.subr.bf16.mxu0 0
    %956 = vmatpush1.bf16.msra.mxu0 0
    %957 = vmatprep.subr.bf16.mxu0 0
    %958 = vmatpush1.bf16.msra.mxu0 0
    %959 = vmatprep.subr.bf16.mxu0 0
    %960 = vmatpush1.bf16.msra.mxu0 0
    %961 = vmatprep.subr.bf16.mxu0 0
    %962 = vmatpush1.bf16.msra.mxu0 0
    %963 = vmatprep.subr.bf16.mxu0 0
    %964 = vmatpush1.bf16.msra.mxu0 0
    %965 = vmatprep.subr.bf16.mxu0 0
    %966 = vmatpush1.bf16.msra.mxu0 0
    %967 = vmatprep.subr.bf16.mxu0 0
    %968 = vmatpush1.bf16.msra.mxu0 0
    %969 = vmatprep.subr.bf16.mxu0 0
    %970 = vmatpush1.bf16.msra.mxu0 0
    %971 = vmatprep.subr.bf16.mxu0 0
    %972 = vmatpush1.bf16.msra.mxu0 0
    %973 = vmatprep.subr.bf16.mxu0 0
    %974 = vmatpush1.bf16.msra.mxu0 0
    %975 = vmatprep.mubr.bf16.mxu0 0
    %976 = vmatmul.mubr.bf16.gmra.mrb[0].mxu0 %v510
    %v977 = vpop.f32.mrb[0].mxu0
    %v978 = vadd.f32 0.0, %v977
    %v979 = vpop.f32.mrb[0].mxu0
    %v980 = vadd.f32 0.0, %v979
    %v981 = vpop.f32.mrb[0].mxu0
    %v982 = vadd.f32 0.0, %v981
    %v983 = vpop.f32.mrb[0].mxu0
    %v984 = vadd.f32 0.0, %v983
    %985 = vmatprep.mubr.bf16.mxu0 0
    %986 = vmatmul.mubr.bf16.gmra.mrb[0].mxu0 %v513
    %v987 = vpop.f32.mrb[0].mxu0
    %v988 = vadd.f32 0.0, %v987
    %v989 = vpop.f32.mrb[0].mxu0
    %v990 = vadd.f32 0.0, %v989
    %v991 = vpop.f32.mrb[0].mxu0
    %v992 = vadd.f32 0.0, %v991
    %v993 = vpop.f32.mrb[0].mxu0
    %v994 = vadd.f32 0.0, %v993
    %995 = vmatprep.mubr.bf16.mxu0 0
    %996 = vmatmul.mubr.bf16.gmra.mrb[0].mxu0 %v516
    %v997 = vpop.f32.mrb[0].mxu0
    %v998 = vadd.f32 0.0, %v997
    %v999 = vpop.f32.mrb[0].mxu0
    %v1000 = vadd.f32 0.0, %v999
    %v1001 = vpop.f32.mrb[0].mxu0
    %v1002 = vadd.f32 0.0, %v1001
    %v1003 = vpop.f32.mrb[0].mxu0
    %v1004 = vadd.f32 0.0, %v1003
    %1005 = vmatprep.mubr.bf16.mxu0 0
    %1006 = vmatmul.mubr.bf16.gmra.mrb[0].mxu0 %v519
    %v1007 = vpop.f32.mrb[0].mxu0
    %v1008 = vadd.f32 0.0, %v1007
    %v1009 = vpop.f32.mrb[0].mxu0
    %v1010 = vadd.f32 0.0, %v1009
    %v1011 = vpop.f32.mrb[0].mxu0
    %v1012 = vadd.f32 0.0, %v1011
    %v1013 = vpop.f32.mrb[0].mxu0
    %v1014 = vadd.f32 0.0, %v1013
    %1015 = vmatprep.mubr.bf16.mxu0 0
    %1016 = vmatmul.mubr.bf16.gmra.mrb[0].mxu0 %v522
    %v1017 = vpop.f32.mrb[0].mxu0
    %v1018 = vadd.f32 0.0, %v1017
    %v1019 = vpop.f32.mrb[0].mxu0
    %v1020 = vadd.f32 0.0, %v1019
    %v1021 = vpop.f32.mrb[0].mxu0
    %v1022 = vadd.f32 0.0, %v1021
    %v1023 = vpop.f32.mrb[0].mxu0
    %v1024 = vadd.f32 0.0, %v1023
    %1025 = vmatprep.mubr.bf16.mxu0 0
    %1026 = vmatmul.mubr.bf16.gmra.mrb[0].mxu0 %v525
    %v1027 = vpop.f32.mrb[0].mxu0
    %v1028 = vadd.f32 0.0, %v1027
    %v1029 = vpop.f32.mrb[0].mxu0
    %v1030 = vadd.f32 0.0, %v1029
    %v1031 = vpop.f32.mrb[0].mxu0
    %v1032 = vadd.f32 0.0, %v1031
    %v1033 = vpop.f32.mrb[0].mxu0
    %v1034 = vadd.f32 0.0, %v1033
    %1035 = vmatprep.mubr.bf16.mxu0 0
    %1036 = vmatmul.mubr.bf16.gmra.mrb[0].mxu0 %v528
    %v1037 = vpop.f32.mrb[0].mxu0
    %v1038 = vadd.f32 0.0, %v1037
    %v1039 = vpop.f32.mrb[0].mxu0
    %v1040 = vadd.f32 0.0, %v1039
    %v1041 = vpop.f32.mrb[0].mxu0
    %v1042 = vadd.f32 0.0, %v1041
    %v1043 = vpop.f32.mrb[0].mxu0
    %v1044 = vadd.f32 0.0, %v1043
    %1045 = vmatprep.mubr.bf16.mxu0 0
    %1046 = vmatmul.mubr.bf16.gmra.mrb[0].mxu0 %v531
    %v1047 = vpop.f32.mrb[0].mxu0
    %v1048 = vadd.f32 0.0, %v1047
    %v1049 = vpop.f32.mrb[0].mxu0
    %v1050 = vadd.f32 0.0, %v1049
    %v1051 = vpop.f32.mrb[0].mxu0
    %v1052 = vadd.f32 0.0, %v1051
    %v1053 = vpop.f32.mrb[0].mxu0
    %v1054 = vadd.f32 0.0, %v1053
    %1055 = vmatprep.mubr.bf16.mxu0 0
    %1056 = vmatmul.mubr.bf16.gmra.mrb[0].mxu0 %v534
    %v1057 = vpop.f32.mrb[0].mxu0
    %v1058 = vadd.f32 0.0, %v1057
    %v1059 = vpop.f32.mrb[0].mxu0
    %v1060 = vadd.f32 0.0, %v1059
    %v1061 = vpop.f32.mrb[0].mxu0
    %v1062 = vadd.f32 0.0, %v1061
    %v1063 = vpop.f32.mrb[0].mxu0
    %v1064 = vadd.f32 0.0, %v1063
    %1065 = vmatprep.mubr.bf16.mxu0 0
    %1066 = vmatmul.mubr.bf16.gmra.mrb[0].mxu0 %v537
    %v1067 = vpop.f32.mrb[0].mxu0
    %v1068 = vadd.f32 0.0, %v1067
    %v1069 = vpop.f32.mrb[0].mxu0
    %v1070 = vadd.f32 0.0, %v1069
    %v1071 = vpop.f32.mrb[0].mxu0
    %v1072 = vadd.f32 0.0, %v1071
    %v1073 = vpop.f32.mrb[0].mxu0
    %v1074 = vadd.f32 0.0, %v1073
    %1075 = vmatprep.mubr.bf16.mxu0 0
    %1076 = vmatmul.mubr.bf16.gmra.mrb[0].mxu0 %v540
    %v1077 = vpop.f32.mrb[0].mxu0
    %v1078 = vadd.f32 0.0, %v1077
    %v1079 = vpop.f32.mrb[0].mxu0
    %v1080 = vadd.f32 0.0, %v1079
    %v1081 = vpop.f32.mrb[0].mxu0
    %v1082 = vadd.f32 0.0, %v1081
    %v1083 = vpop.f32.mrb[0].mxu0
    %v1084 = vadd.f32 0.0, %v1083
    %1085 = vmatprep.mubr.bf16.mxu0 0
    %1086 = vmatmul.mubr.bf16.gmra.mrb[0].mxu0 %v543
    %v1087 = vpop.f32.mrb[0].mxu0
    %v1088 = vadd.f32 0.0, %v1087
    %v1089 = vpop.f32.mrb[0].mxu0
    %v1090 = vadd.f32 0.0, %v1089
    %v1091 = vpop.f32.mrb[0].mxu0
    %v1092 = vadd.f32 0.0, %v1091
    %v1093 = vpop.f32.mrb[0].mxu0
    %v1094 = vadd.f32 0.0, %v1093
    %1095 = vmatprep.mubr.bf16.mxu0 0
    %1096 = vmatmul.mubr.bf16.gmra.mrb[0].mxu0 %v546
    %v1097 = vpop.f32.mrb[0].mxu0
    %v1098 = vadd.f32 0.0, %v1097
    %v1099 = vpop.f32.mrb[0].mxu0
    %v1100 = vadd.f32 0.0, %v1099
    %v1101 = vpop.f32.mrb[0].mxu0
    %v1102 = vadd.f32 0.0, %v1101
    %v1103 = vpop.f32.mrb[0].mxu0
    %v1104 = vadd.f32 0.0, %v1103
    %1105 = vmatprep.mubr.bf16.mxu0 0
    %1106 = vmatmul.mubr.bf16.gmra.mrb[0].mxu0 %v549
    %v1107 = vpop.f32.mrb[0].mxu0
    %v1108 = vadd.f32 0.0, %v1107
    %v1109 = vpop.f32.mrb[0].mxu0
    %v1110 = vadd.f32 0.0, %v1109
    %v1111 = vpop.f32.mrb[0].mxu0
    %v1112 = vadd.f32 0.0, %v1111
    %v1113 = vpop.f32.mrb[0].mxu0
    %v1114 = vadd.f32 0.0, %v1113
    %1115 = vmatprep.mubr.bf16.mxu0 0
    %1116 = vmatmul.mubr.bf16.gmra.mrb[0].mxu0 %v552
    %v1117 = vpop.f32.mrb[0].mxu0
    %v1118 = vadd.f32 0.0, %v1117
    %v1119 = vpop.f32.mrb[0].mxu0
    %v1120 = vadd.f32 0.0, %v1119
    %v1121 = vpop.f32.mrb[0].mxu0
    %v1122 = vadd.f32 0.0, %v1121
    %v1123 = vpop.f32.mrb[0].mxu0
    %v1124 = vadd.f32 0.0, %v1123
    %1125 = vmatprep.mubr.bf16.mxu0 0
    %1126 = vmatmul.mubr.bf16.gmra.mrb[0].mxu0 %v555
    %v1127 = vpop.f32.mrb[0].mxu0
    %v1128 = vadd.f32 0.0, %v1127
    %v1129 = vpop.f32.mrb[0].mxu0
    %v1130 = vadd.f32 0.0, %v1129
    %v1131 = vpop.f32.mrb[0].mxu0
    %v1132 = vadd.f32 0.0, %v1131
    %v1133 = vpop.f32.mrb[0].mxu0
    %v1134 = vadd.f32 0.0, %v1133
    %1135 = vdwg.mxu0
    %1136 = vmatprep.subr.bf16.mxu0 %v387
    %1137 = vmatpush1.bf16.msra.mxu0 %v386
    %1138 = vmatprep.subr.bf16.mxu0 %v403
    %1139 = vmatpush1.bf16.msra.mxu0 %v402
    %1140 = vmatprep.subr.bf16.mxu0 %v419
    %1141 = vmatpush1.bf16.msra.mxu0 %v418
    %1142 = vmatprep.subr.bf16.mxu0 %v435
    %1143 = vmatpush1.bf16.msra.mxu0 %v434
    %1144 = vmatprep.subr.bf16.mxu0 0
    %1145 = vmatpush1.bf16.msra.mxu0 0
    %1146 = vmatprep.subr.bf16.mxu0 0
    %1147 = vmatpush1.bf16.msra.mxu0 0
    %1148 = vmatprep.subr.bf16.mxu0 0
    %1149 = vmatpush1.bf16.msra.mxu0 0
    %1150 = vmatprep.subr.bf16.mxu0 0
    %1151 = vmatpush1.bf16.msra.mxu0 0
    %1152 = vmatprep.subr.bf16.mxu0 0
    %1153 = vmatpush1.bf16.msra.mxu0 0
    %1154 = vmatprep.subr.bf16.mxu0 0
    %1155 = vmatpush1.bf16.msra.mxu0 0
    %1156 = vmatprep.subr.bf16.mxu0 0
    %1157 = vmatpush1.bf16.msra.mxu0 0
    %1158 = vmatprep.subr.bf16.mxu0 0
    %1159 = vmatpush1.bf16.msra.mxu0 0
    %1160 = vmatprep.subr.bf16.mxu0 0
    %1161 = vmatpush1.bf16.msra.mxu0 0
    %1162 = vmatprep.subr.bf16.mxu0 0
    %1163 = vmatpush1.bf16.msra.mxu0 0
    %1164 = vmatprep.subr.bf16.mxu0 0
    %1165 = vmatpush1.bf16.msra.mxu0 0
    %1166 = vmatprep.subr.bf16.mxu0 0
    %1167 = vmatpush1.bf16.msra.mxu0 0
    %1168 = vmatprep.mubr.bf16.mxu0 0
    %1169 = vmatmul.mubr.bf16.gmra.mrb[0].mxu0 %v510
    %v1170 = vpop.f32.mrb[0].mxu0
    %v1171 = vadd.f32 0.0, %v1170
    %v1172 = vpop.f32.mrb[0].mxu0
    %v1173 = vadd.f32 0.0, %v1172
    %v1174 = vpop.f32.mrb[0].mxu0
    %v1175 = vadd.f32 0.0, %v1174
    %v1176 = vpop.f32.mrb[0].mxu0
    %v1177 = vadd.f32 0.0, %v1176
    %1178 = vmatprep.mubr.bf16.mxu0 0
    %1179 = vmatmul.mubr.bf16.gmra.mrb[0].mxu0 %v513
    %v1180 = vpop.f32.mrb[0].mxu0
    %v1181 = vadd.f32 0.0, %v1180
    %v1182 = vpop.f32.mrb[0].mxu0
    %v1183 = vadd.f32 0.0, %v1182
    %v1184 = vpop.f32.mrb[0].mxu0
    %v1185 = vadd.f32 0.0, %v1184
    %v1186 = vpop.f32.mrb[0].mxu0
    %v1187 = vadd.f32 0.0, %v1186
    %1188 = vmatprep.mubr.bf16.mxu0 0
    %1189 = vmatmul.mubr.bf16.gmra.mrb[0].mxu0 %v516
    %v1190 = vpop.f32.mrb[0].mxu0
    %v1191 = vadd.f32 0.0, %v1190
    %v1192 = vpop.f32.mrb[0].mxu0
    %v1193 = vadd.f32 0.0, %v1192
    %v1194 = vpop.f32.mrb[0].mxu0
    %v1195 = vadd.f32 0.0, %v1194
    %v1196 = vpop.f32.mrb[0].mxu0
    %v1197 = vadd.f32 0.0, %v1196
    %1198 = vmatprep.mubr.bf16.mxu0 0
    %1199 = vmatmul.mubr.bf16.gmra.mrb[0].mxu0 %v519
    %v1200 = vpop.f32.mrb[0].mxu0
    %v1201 = vadd.f32 0.0, %v1200
    %v1202 = vpop.f32.mrb[0].mxu0
    %v1203 = vadd.f32 0.0, %v1202
    %v1204 = vpop.f32.mrb[0].mxu0
    %v1205 = vadd.f32 0.0, %v1204
    %v1206 = vpop.f32.mrb[0].mxu0
    %v1207 = vadd.f32 0.0, %v1206
    %1208 = vmatprep.mubr.bf16.mxu0 0
    %1209 = vmatmul.mubr.bf16.gmra.mrb[0].mxu0 %v522
    %v1210 = vpop.f32.mrb[0].mxu0
    %v1211 = vadd.f32 0.0, %v1210
    %v1212 = vpop.f32.mrb[0].mxu0
    %v1213 = vadd.f32 0.0, %v1212
    %v1214 = vpop.f32.mrb[0].mxu0
    %v1215 = vadd.f32 0.0, %v1214
    %v1216 = vpop.f32.mrb[0].mxu0
    %v1217 = vadd.f32 0.0, %v1216
    %1218 = vmatprep.mubr.bf16.mxu0 0
    %1219 = vmatmul.mubr.bf16.gmra.mrb[0].mxu0 %v525
    %v1220 = vpop.f32.mrb[0].mxu0
    %v1221 = vadd.f32 0.0, %v1220
    %v1222 = vpop.f32.mrb[0].mxu0
    %v1223 = vadd.f32 0.0, %v1222
    %v1224 = vpop.f32.mrb[0].mxu0
    %v1225 = vadd.f32 0.0, %v1224
    %v1226 = vpop.f32.mrb[0].mxu0
    %v1227 = vadd.f32 0.0, %v1226
    %1228 = vmatprep.mubr.bf16.mxu0 0
    %1229 = vmatmul.mubr.bf16.gmra.mrb[0].mxu0 %v528
    %v1230 = vpop.f32.mrb[0].mxu0
    %v1231 = vadd.f32 0.0, %v1230
    %v1232 = vpop.f32.mrb[0].mxu0
    %v1233 = vadd.f32 0.0, %v1232
    %v1234 = vpop.f32.mrb[0].mxu0
    %v1235 = vadd.f32 0.0, %v1234
    %v1236 = vpop.f32.mrb[0].mxu0
    %v1237 = vadd.f32 0.0, %v1236
    %1238 = vmatprep.mubr.bf16.mxu0 0
    %1239 = vmatmul.mubr.bf16.gmra.mrb[0].mxu0 %v531
    %v1240 = vpop.f32.mrb[0].mxu0
    %v1241 = vadd.f32 0.0, %v1240
    %v1242 = vpop.f32.mrb[0].mxu0
    %v1243 = vadd.f32 0.0, %v1242
    %v1244 = vpop.f32.mrb[0].mxu0
    %v1245 = vadd.f32 0.0, %v1244
    %v1246 = vpop.f32.mrb[0].mxu0
    %v1247 = vadd.f32 0.0, %v1246
    %1248 = vmatprep.mubr.bf16.mxu0 0
    %1249 = vmatmul.mubr.bf16.gmra.mrb[0].mxu0 %v534
    %v1250 = vpop.f32.mrb[0].mxu0
    %v1251 = vadd.f32 0.0, %v1250
    %v1252 = vpop.f32.mrb[0].mxu0
    %v1253 = vadd.f32 0.0, %v1252
    %v1254 = vpop.f32.mrb[0].mxu0
    %v1255 = vadd.f32 0.0, %v1254
    %v1256 = vpop.f32.mrb[0].mxu0
    %v1257 = vadd.f32 0.0, %v1256
    %1258 = vmatprep.mubr.bf16.mxu0 0
    %1259 = vmatmul.mubr.bf16.gmra.mrb[0].mxu0 %v537
    %v1260 = vpop.f32.mrb[0].mxu0
    %v1261 = vadd.f32 0.0, %v1260
    %v1262 = vpop.f32.mrb[0].mxu0
    %v1263 = vadd.f32 0.0, %v1262
    %v1264 = vpop.f32.mrb[0].mxu0
    %v1265 = vadd.f32 0.0, %v1264
    %v1266 = vpop.f32.mrb[0].mxu0
    %v1267 = vadd.f32 0.0, %v1266
    %1268 = vmatprep.mubr.bf16.mxu0 0
    %1269 = vmatmul.mubr.bf16.gmra.mrb[0].mxu0 %v540
    %v1270 = vpop.f32.mrb[0].mxu0
    %v1271 = vadd.f32 0.0, %v1270
    %v1272 = vpop.f32.mrb[0].mxu0
    %v1273 = vadd.f32 0.0, %v1272
    %v1274 = vpop.f32.mrb[0].mxu0
    %v1275 = vadd.f32 0.0, %v1274
    %v1276 = vpop.f32.mrb[0].mxu0
    %v1277 = vadd.f32 0.0, %v1276
    %1278 = vmatprep.mubr.bf16.mxu0 0
    %1279 = vmatmul.mubr.bf16.gmra.mrb[0].mxu0 %v543
    %v1280 = vpop.f32.mrb[0].mxu0
    %v1281 = vadd.f32 0.0, %v1280
    %v1282 = vpop.f32.mrb[0].mxu0
    %v1283 = vadd.f32 0.0, %v1282
    %v1284 = vpop.f32.mrb[0].mxu0
    %v1285 = vadd.f32 0.0, %v1284
    %v1286 = vpop.f32.mrb[0].mxu0
    %v1287 = vadd.f32 0.0, %v1286
    %1288 = vmatprep.mubr.bf16.mxu0 0
    %1289 = vmatmul.mubr.bf16.gmra.mrb[0].mxu0 %v546
    %v1290 = vpop.f32.mrb[0].mxu0
    %v1291 = vadd.f32 0.0, %v1290
    %v1292 = vpop.f32.mrb[0].mxu0
    %v1293 = vadd.f32 0.0, %v1292
    %v1294 = vpop.f32.mrb[0].mxu0
    %v1295 = vadd.f32 0.0, %v1294
    %v1296 = vpop.f32.mrb[0].mxu0
    %v1297 = vadd.f32 0.0, %v1296
    %1298 = vmatprep.mubr.bf16.mxu0 0
    %1299 = vmatmul.mubr.bf16.gmra.mrb[0].mxu0 %v549
    %v1300 = vpop.f32.mrb[0].mxu0
    %v1301 = vadd.f32 0.0, %v1300
    %v1302 = vpop.f32.mrb[0].mxu0
    %v1303 = vadd.f32 0.0, %v1302
    %v1304 = vpop.f32.mrb[0].mxu0
    %v1305 = vadd.f32 0.0, %v1304
    %v1306 = vpop.f32.mrb[0].mxu0
    %v1307 = vadd.f32 0.0, %v1306
    %1308 = vmatprep.mubr.bf16.mxu0 0
    %1309 = vmatmul.mubr.bf16.gmra.mrb[0].mxu0 %v552
    %v1310 = vpop.f32.mrb[0].mxu0
    %v1311 = vadd.f32 0.0, %v1310
    %v1312 = vpop.f32.mrb[0].mxu0
    %v1313 = vadd.f32 0.0, %v1312
    %v1314 = vpop.f32.mrb[0].mxu0
    %v1315 = vadd.f32 0.0, %v1314
    %v1316 = vpop.f32.mrb[0].mxu0
    %v1317 = vadd.f32 0.0, %v1316
    %1318 = vmatprep.mubr.bf16.mxu0 0
    %1319 = vmatmul.mubr.bf16.gmra.mrb[0].mxu0 %v555
    %v1320 = vpop.f32.mrb[0].mxu0
    %v1321 = vadd.f32 0.0, %v1320
    %v1322 = vpop.f32.mrb[0].mxu0
    %v1323 = vadd.f32 0.0, %v1322
    %v1324 = vpop.f32.mrb[0].mxu0
    %v1325 = vadd.f32 0.0, %v1324
    %v1326 = vpop.f32.mrb[0].mxu0
    %v1327 = vadd.f32 0.0, %v1326
    %1328 = vdwg.mxu0
    %1329 = vmatprep.subr.bf16.mxu0 %v389
    %1330 = vmatpush1.bf16.msra.mxu0 %v388
    %1331 = vmatprep.subr.bf16.mxu0 %v405
    %1332 = vmatpush1.bf16.msra.mxu0 %v404
    %1333 = vmatprep.subr.bf16.mxu0 %v421
    %1334 = vmatpush1.bf16.msra.mxu0 %v420
    %1335 = vmatprep.subr.bf16.mxu0 %v437
    %1336 = vmatpush1.bf16.msra.mxu0 %v436
    %1337 = vmatprep.subr.bf16.mxu0 0
    %1338 = vmatpush1.bf16.msra.mxu0 0
    %1339 = vmatprep.subr.bf16.mxu0 0
    %1340 = vmatpush1.bf16.msra.mxu0 0
    %1341 = vmatprep.subr.bf16.mxu0 0
    %1342 = vmatpush1.bf16.msra.mxu0 0
    %1343 = vmatprep.subr.bf16.mxu0 0
    %1344 = vmatpush1.bf16.msra.mxu0 0
    %1345 = vmatprep.subr.bf16.mxu0 0
    %1346 = vmatpush1.bf16.msra.mxu0 0
    %1347 = vmatprep.subr.bf16.mxu0 0
    %1348 = vmatpush1.bf16.msra.mxu0 0
    %1349 = vmatprep.subr.bf16.mxu0 0
    %1350 = vmatpush1.bf16.msra.mxu0 0
    %1351 = vmatprep.subr.bf16.mxu0 0
    %1352 = vmatpush1.bf16.msra.mxu0 0
    %1353 = vmatprep.subr.bf16.mxu0 0
    %1354 = vmatpush1.bf16.msra.mxu0 0
    %1355 = vmatprep.subr.bf16.mxu0 0
    %1356 = vmatpush1.bf16.msra.mxu0 0
    %1357 = vmatprep.subr.bf16.mxu0 0
    %1358 = vmatpush1.bf16.msra.mxu0 0
    %1359 = vmatprep.subr.bf16.mxu0 0
    %1360 = vmatpush1.bf16.msra.mxu0 0
    %1361 = vmatprep.mubr.bf16.mxu0 0
    %1362 = vmatmul.mubr.bf16.gmra.mrb[0].mxu0 %v510
    %v1363 = vpop.f32.mrb[0].mxu0
    %v1364 = vadd.f32 0.0, %v1363
    %v1365 = vpop.f32.mrb[0].mxu0
    %v1366 = vadd.f32 0.0, %v1365
    %v1367 = vpop.f32.mrb[0].mxu0
    %v1368 = vadd.f32 0.0, %v1367
    %v1369 = vpop.f32.mrb[0].mxu0
    %v1370 = vadd.f32 0.0, %v1369
    %1371 = vmatprep.mubr.bf16.mxu0 0
    %1372 = vmatmul.mubr.bf16.gmra.mrb[0].mxu0 %v513
    %v1373 = vpop.f32.mrb[0].mxu0
    %v1374 = vadd.f32 0.0, %v1373
    %v1375 = vpop.f32.mrb[0].mxu0
    %v1376 = vadd.f32 0.0, %v1375
    %v1377 = vpop.f32.mrb[0].mxu0
    %v1378 = vadd.f32 0.0, %v1377
    %v1379 = vpop.f32.mrb[0].mxu0
    %v1380 = vadd.f32 0.0, %v1379
    %1381 = vmatprep.mubr.bf16.mxu0 0
    %1382 = vmatmul.mubr.bf16.gmra.mrb[0].mxu0 %v516
    %v1383 = vpop.f32.mrb[0].mxu0
    %v1384 = vadd.f32 0.0, %v1383
    %v1385 = vpop.f32.mrb[0].mxu0
    %v1386 = vadd.f32 0.0, %v1385
    %v1387 = vpop.f32.mrb[0].mxu0
    %v1388 = vadd.f32 0.0, %v1387
    %v1389 = vpop.f32.mrb[0].mxu0
    %v1390 = vadd.f32 0.0, %v1389
    %1391 = vmatprep.mubr.bf16.mxu0 0
    %1392 = vmatmul.mubr.bf16.gmra.mrb[0].mxu0 %v519
    %v1393 = vpop.f32.mrb[0].mxu0
    %v1394 = vadd.f32 0.0, %v1393
    %v1395 = vpop.f32.mrb[0].mxu0
    %v1396 = vadd.f32 0.0, %v1395
    %v1397 = vpop.f32.mrb[0].mxu0
    %v1398 = vadd.f32 0.0, %v1397
    %v1399 = vpop.f32.mrb[0].mxu0
    %v1400 = vadd.f32 0.0, %v1399
    %1401 = vmatprep.mubr.bf16.mxu0 0
    %1402 = vmatmul.mubr.bf16.gmra.mrb[0].mxu0 %v522
    %v1403 = vpop.f32.mrb[0].mxu0
    %v1404 = vadd.f32 0.0, %v1403
    %v1405 = vpop.f32.mrb[0].mxu0
    %v1406 = vadd.f32 0.0, %v1405
    %v1407 = vpop.f32.mrb[0].mxu0
    %v1408 = vadd.f32 0.0, %v1407
    %v1409 = vpop.f32.mrb[0].mxu0
    %v1410 = vadd.f32 0.0, %v1409
    %1411 = vmatprep.mubr.bf16.mxu0 0
    %1412 = vmatmul.mubr.bf16.gmra.mrb[0].mxu0 %v525
    %v1413 = vpop.f32.mrb[0].mxu0
    %v1414 = vadd.f32 0.0, %v1413
    %v1415 = vpop.f32.mrb[0].mxu0
    %v1416 = vadd.f32 0.0, %v1415
    %v1417 = vpop.f32.mrb[0].mxu0
    %v1418 = vadd.f32 0.0, %v1417
    %v1419 = vpop.f32.mrb[0].mxu0
    %v1420 = vadd.f32 0.0, %v1419
    %1421 = vmatprep.mubr.bf16.mxu0 0
    %1422 = vmatmul.mubr.bf16.gmra.mrb[0].mxu0 %v528
    %v1423 = vpop.f32.mrb[0].mxu0
    %v1424 = vadd.f32 0.0, %v1423
    %v1425 = vpop.f32.mrb[0].mxu0
    %v1426 = vadd.f32 0.0, %v1425
    %v1427 = vpop.f32.mrb[0].mxu0
    %v1428 = vadd.f32 0.0, %v1427
    %v1429 = vpop.f32.mrb[0].mxu0
    %v1430 = vadd.f32 0.0, %v1429
    %1431 = vmatprep.mubr.bf16.mxu0 0
    %1432 = vmatmul.mubr.bf16.gmra.mrb[0].mxu0 %v531
    %v1433 = vpop.f32.mrb[0].mxu0
    %v1434 = vadd.f32 0.0, %v1433
    %v1435 = vpop.f32.mrb[0].mxu0
    %v1436 = vadd.f32 0.0, %v1435
    %v1437 = vpop.f32.mrb[0].mxu0
    %v1438 = vadd.f32 0.0, %v1437
    %v1439 = vpop.f32.mrb[0].mxu0
    %v1440 = vadd.f32 0.0, %v1439
    %1441 = vmatprep.mubr.bf16.mxu0 0
    %1442 = vmatmul.mubr.bf16.gmra.mrb[0].mxu0 %v534
    %v1443 = vpop.f32.mrb[0].mxu0
    %v1444 = vadd.f32 0.0, %v1443
    %v1445 = vpop.f32.mrb[0].mxu0
    %v1446 = vadd.f32 0.0, %v1445
    %v1447 = vpop.f32.mrb[0].mxu0
    %v1448 = vadd.f32 0.0, %v1447
    %v1449 = vpop.f32.mrb[0].mxu0
    %v1450 = vadd.f32 0.0, %v1449
    %1451 = vmatprep.mubr.bf16.mxu0 0
    %1452 = vmatmul.mubr.bf16.gmra.mrb[0].mxu0 %v537
    %v1453 = vpop.f32.mrb[0].mxu0
    %v1454 = vadd.f32 0.0, %v1453
    %v1455 = vpop.f32.mrb[0].mxu0
    %v1456 = vadd.f32 0.0, %v1455
    %v1457 = vpop.f32.mrb[0].mxu0
    %v1458 = vadd.f32 0.0, %v1457
    %v1459 = vpop.f32.mrb[0].mxu0
    %v1460 = vadd.f32 0.0, %v1459
    %1461 = vmatprep.mubr.bf16.mxu0 0
    %1462 = vmatmul.mubr.bf16.gmra.mrb[0].mxu0 %v540
    %v1463 = vpop.f32.mrb[0].mxu0
    %v1464 = vadd.f32 0.0, %v1463
    %v1465 = vpop.f32.mrb[0].mxu0
    %v1466 = vadd.f32 0.0, %v1465
    %v1467 = vpop.f32.mrb[0].mxu0
    %v1468 = vadd.f32 0.0, %v1467
    %v1469 = vpop.f32.mrb[0].mxu0
    %v1470 = vadd.f32 0.0, %v1469
    %1471 = vmatprep.mubr.bf16.mxu0 0
    %1472 = vmatmul.mubr.bf16.gmra.mrb[0].mxu0 %v543
    %v1473 = vpop.f32.mrb[0].mxu0
    %v1474 = vadd.f32 0.0, %v1473
    %v1475 = vpop.f32.mrb[0].mxu0
    %v1476 = vadd.f32 0.0, %v1475
    %v1477 = vpop.f32.mrb[0].mxu0
    %v1478 = vadd.f32 0.0, %v1477
    %v1479 = vpop.f32.mrb[0].mxu0
    %v1480 = vadd.f32 0.0, %v1479
    %1481 = vmatprep.mubr.bf16.mxu0 0
    %1482 = vmatmul.mubr.bf16.gmra.mrb[0].mxu0 %v546
    %v1483 = vpop.f32.mrb[0].mxu0
    %v1484 = vadd.f32 0.0, %v1483
    %v1485 = vpop.f32.mrb[0].mxu0
    %v1486 = vadd.f32 0.0, %v1485
    %v1487 = vpop.f32.mrb[0].mxu0
    %v1488 = vadd.f32 0.0, %v1487
    %v1489 = vpop.f32.mrb[0].mxu0
    %v1490 = vadd.f32 0.0, %v1489
    %1491 = vmatprep.mubr.bf16.mxu0 0
    %1492 = vmatmul.mubr.bf16.gmra.mrb[0].mxu0 %v549
    %v1493 = vpop.f32.mrb[0].mxu0
    %v1494 = vadd.f32 0.0, %v1493
    %v1495 = vpop.f32.mrb[0].mxu0
    %v1496 = vadd.f32 0.0, %v1495
    %v1497 = vpop.f32.mrb[0].mxu0
    %v1498 = vadd.f32 0.0, %v1497
    %v1499 = vpop.f32.mrb[0].mxu0
    %v1500 = vadd.f32 0.0, %v1499
    %1501 = vmatprep.mubr.bf16.mxu0 0
    %1502 = vmatmul.mubr.bf16.gmra.mrb[0].mxu0 %v552
    %v1503 = vpop.f32.mrb[0].mxu0
    %v1504 = vadd.f32 0.0, %v1503
    %v1505 = vpop.f32.mrb[0].mxu0
    %v1506 = vadd.f32 0.0, %v1505
    %v1507 = vpop.f32.mrb[0].mxu0
    %v1508 = vadd.f32 0.0, %v1507
    %v1509 = vpop.f32.mrb[0].mxu0
    %v1510 = vadd.f32 0.0, %v1509
    %1511 = vmatprep.mubr.bf16.mxu0 0
    %1512 = vmatmul.mubr.bf16.gmra.mrb[0].mxu0 %v555
    %v1513 = vpop.f32.mrb[0].mxu0
    %v1514 = vadd.f32 0.0, %v1513
    %v1515 = vpop.f32.mrb[0].mxu0
    %v1516 = vadd.f32 0.0, %v1515
    %v1517 = vpop.f32.mrb[0].mxu0
    %v1518 = vadd.f32 0.0, %v1517
    %v1519 = vpop.f32.mrb[0].mxu0
    %v1520 = vadd.f32 0.0, %v1519
    %1521 = vdwg.mxu0
    %1522 = vmatprep.subr.bf16.mxu0 %v391
    %1523 = vmatpush1.bf16.msra.mxu0 %v390
    %1524 = vmatprep.subr.bf16.mxu0 %v407
    %1525 = vmatpush1.bf16.msra.mxu0 %v406
    %1526 = vmatprep.subr.bf16.mxu0 %v423
    %1527 = vmatpush1.bf16.msra.mxu0 %v422
    %1528 = vmatprep.subr.bf16.mxu0 %v439
    %1529 = vmatpush1.bf16.msra.mxu0 %v438
    %1530 = vmatprep.subr.bf16.mxu0 0
    %1531 = vmatpush1.bf16.msra.mxu0 0
    %1532 = vmatprep.subr.bf16.mxu0 0
    %1533 = vmatpush1.bf16.msra.mxu0 0
    %1534 = vmatprep.subr.bf16.mxu0 0
    %1535 = vmatpush1.bf16.msra.mxu0 0
    %1536 = vmatprep.subr.bf16.mxu0 0
    %1537 = vmatpush1.bf16.msra.mxu0 0
    %1538 = vmatprep.subr.bf16.mxu0 0
    %1539 = vmatpush1.bf16.msra.mxu0 0
    %1540 = vmatprep.subr.bf16.mxu0 0
    %1541 = vmatpush1.bf16.msra.mxu0 0
    %1542 = vmatprep.subr.bf16.mxu0 0
    %1543 = vmatpush1.bf16.msra.mxu0 0
    %1544 = vmatprep.subr.bf16.mxu0 0
    %1545 = vmatpush1.bf16.msra.mxu0 0
    %1546 = vmatprep.subr.bf16.mxu0 0
    %1547 = vmatpush1.bf16.msra.mxu0 0
    %1548 = vmatprep.subr.bf16.mxu0 0
    %1549 = vmatpush1.bf16.msra.mxu0 0
    %1550 = vmatprep.subr.bf16.mxu0 0
    %1551 = vmatpush1.bf16.msra.mxu0 0
    %1552 = vmatprep.subr.bf16.mxu0 0
    %1553 = vmatpush1.bf16.msra.mxu0 0
    %1554 = vmatprep.mubr.bf16.mxu0 0
    %1555 = vmatmul.mubr.bf16.gmra.mrb[0].mxu0 %v510
    %v1556 = vpop.f32.mrb[0].mxu0
    %v1557 = vadd.f32 0.0, %v1556
    %v1558 = vpop.f32.mrb[0].mxu0
    %v1559 = vadd.f32 0.0, %v1558
    %v1560 = vpop.f32.mrb[0].mxu0
    %v1561 = vadd.f32 0.0, %v1560
    %v1562 = vpop.f32.mrb[0].mxu0
    %v1563 = vadd.f32 0.0, %v1562
    %1564 = vmatprep.mubr.bf16.mxu0 0
    %1565 = vmatmul.mubr.bf16.gmra.mrb[0].mxu0 %v513
    %v1566 = vpop.f32.mrb[0].mxu0
    %v1567 = vadd.f32 0.0, %v1566
    %v1568 = vpop.f32.mrb[0].mxu0
    %v1569 = vadd.f32 0.0, %v1568
    %v1570 = vpop.f32.mrb[0].mxu0
    %v1571 = vadd.f32 0.0, %v1570
    %v1572 = vpop.f32.mrb[0].mxu0
    %v1573 = vadd.f32 0.0, %v1572
    %1574 = vmatprep.mubr.bf16.mxu0 0
    %1575 = vmatmul.mubr.bf16.gmra.mrb[0].mxu0 %v516
    %v1576 = vpop.f32.mrb[0].mxu0
    %v1577 = vadd.f32 0.0, %v1576
    %v1578 = vpop.f32.mrb[0].mxu0
    %v1579 = vadd.f32 0.0, %v1578
    %v1580 = vpop.f32.mrb[0].mxu0
    %v1581 = vadd.f32 0.0, %v1580
    %v1582 = vpop.f32.mrb[0].mxu0
    %v1583 = vadd.f32 0.0, %v1582
    %1584 = vmatprep.mubr.bf16.mxu0 0
    %1585 = vmatmul.mubr.bf16.gmra.mrb[0].mxu0 %v519
    %v1586 = vpop.f32.mrb[0].mxu0
    %v1587 = vadd.f32 0.0, %v1586
    %v1588 = vpop.f32.mrb[0].mxu0
    %v1589 = vadd.f32 0.0, %v1588
    %v1590 = vpop.f32.mrb[0].mxu0
    %v1591 = vadd.f32 0.0, %v1590
    %v1592 = vpop.f32.mrb[0].mxu0
    %v1593 = vadd.f32 0.0, %v1592
    %1594 = vmatprep.mubr.bf16.mxu0 0
    %1595 = vmatmul.mubr.bf16.gmra.mrb[0].mxu0 %v522
    %v1596 = vpop.f32.mrb[0].mxu0
    %v1597 = vadd.f32 0.0, %v1596
    %v1598 = vpop.f32.mrb[0].mxu0
    %v1599 = vadd.f32 0.0, %v1598
    %v1600 = vpop.f32.mrb[0].mxu0
    %v1601 = vadd.f32 0.0, %v1600
    %v1602 = vpop.f32.mrb[0].mxu0
    %v1603 = vadd.f32 0.0, %v1602
    %1604 = vmatprep.mubr.bf16.mxu0 0
    %1605 = vmatmul.mubr.bf16.gmra.mrb[0].mxu0 %v525
    %v1606 = vpop.f32.mrb[0].mxu0
    %v1607 = vadd.f32 0.0, %v1606
    %v1608 = vpop.f32.mrb[0].mxu0
    %v1609 = vadd.f32 0.0, %v1608
    %v1610 = vpop.f32.mrb[0].mxu0
    %v1611 = vadd.f32 0.0, %v1610
    %v1612 = vpop.f32.mrb[0].mxu0
    %v1613 = vadd.f32 0.0, %v1612
    %1614 = vmatprep.mubr.bf16.mxu0 0
    %1615 = vmatmul.mubr.bf16.gmra.mrb[0].mxu0 %v528
    %v1616 = vpop.f32.mrb[0].mxu0
    %v1617 = vadd.f32 0.0, %v1616
    %v1618 = vpop.f32.mrb[0].mxu0
    %v1619 = vadd.f32 0.0, %v1618
    %v1620 = vpop.f32.mrb[0].mxu0
    %v1621 = vadd.f32 0.0, %v1620
    %v1622 = vpop.f32.mrb[0].mxu0
    %v1623 = vadd.f32 0.0, %v1622
    %1624 = vmatprep.mubr.bf16.mxu0 0
    %1625 = vmatmul.mubr.bf16.gmra.mrb[0].mxu0 %v531
    %v1626 = vpop.f32.mrb[0].mxu0
    %v1627 = vadd.f32 0.0, %v1626
    %v1628 = vpop.f32.mrb[0].mxu0
    %v1629 = vadd.f32 0.0, %v1628
    %v1630 = vpop.f32.mrb[0].mxu0
    %v1631 = vadd.f32 0.0, %v1630
    %v1632 = vpop.f32.mrb[0].mxu0
    %v1633 = vadd.f32 0.0, %v1632
    %1634 = vmatprep.mubr.bf16.mxu0 0
    %1635 = vmatmul.mubr.bf16.gmra.mrb[0].mxu0 %v534
    %v1636 = vpop.f32.mrb[0].mxu0
    %v1637 = vadd.f32 0.0, %v1636
    %v1638 = vpop.f32.mrb[0].mxu0
    %v1639 = vadd.f32 0.0, %v1638
    %v1640 = vpop.f32.mrb[0].mxu0
    %v1641 = vadd.f32 0.0, %v1640
    %v1642 = vpop.f32.mrb[0].mxu0
    %v1643 = vadd.f32 0.0, %v1642
    %1644 = vmatprep.mubr.bf16.mxu0 0
    %1645 = vmatmul.mubr.bf16.gmra.mrb[0].mxu0 %v537
    %v1646 = vpop.f32.mrb[0].mxu0
    %v1647 = vadd.f32 0.0, %v1646
    %v1648 = vpop.f32.mrb[0].mxu0
    %v1649 = vadd.f32 0.0, %v1648
    %v1650 = vpop.f32.mrb[0].mxu0
    %v1651 = vadd.f32 0.0, %v1650
    %v1652 = vpop.f32.mrb[0].mxu0
    %v1653 = vadd.f32 0.0, %v1652
    %1654 = vmatprep.mubr.bf16.mxu0 0
    %1655 = vmatmul.mubr.bf16.gmra.mrb[0].mxu0 %v540
    %v1656 = vpop.f32.mrb[0].mxu0
    %v1657 = vadd.f32 0.0, %v1656
    %v1658 = vpop.f32.mrb[0].mxu0
    %v1659 = vadd.f32 0.0, %v1658
    %v1660 = vpop.f32.mrb[0].mxu0
    %v1661 = vadd.f32 0.0, %v1660
    %v1662 = vpop.f32.mrb[0].mxu0
    %v1663 = vadd.f32 0.0, %v1662
    %1664 = vmatprep.mubr.bf16.mxu0 0
    %1665 = vmatmul.mubr.bf16.gmra.mrb[0].mxu0 %v543
    %v1666 = vpop.f32.mrb[0].mxu0
    %v1667 = vadd.f32 0.0, %v1666
    %v1668 = vpop.f32.mrb[0].mxu0
    %v1669 = vadd.f32 0.0, %v1668
    %v1670 = vpop.f32.mrb[0].mxu0
    %v1671 = vadd.f32 0.0, %v1670
    %v1672 = vpop.f32.mrb[0].mxu0
    %v1673 = vadd.f32 0.0, %v1672
    %1674 = vmatprep.mubr.bf16.mxu0 0
    %1675 = vmatmul.mubr.bf16.gmra.mrb[0].mxu0 %v546
    %v1676 = vpop.f32.mrb[0].mxu0
    %v1677 = vadd.f32 0.0, %v1676
    %v1678 = vpop.f32.mrb[0].mxu0
    %v1679 = vadd.f32 0.0, %v1678
    %v1680 = vpop.f32.mrb[0].mxu0
    %v1681 = vadd.f32 0.0, %v1680
    %v1682 = vpop.f32.mrb[0].mxu0
    %v1683 = vadd.f32 0.0, %v1682
    %1684 = vmatprep.mubr.bf16.mxu0 0
    %1685 = vmatmul.mubr.bf16.gmra.mrb[0].mxu0 %v549
    %v1686 = vpop.f32.mrb[0].mxu0
    %v1687 = vadd.f32 0.0, %v1686
    %v1688 = vpop.f32.mrb[0].mxu0
    %v1689 = vadd.f32 0.0, %v1688
    %v1690 = vpop.f32.mrb[0].mxu0
    %v1691 = vadd.f32 0.0, %v1690
    %v1692 = vpop.f32.mrb[0].mxu0
    %v1693 = vadd.f32 0.0, %v1692
    %1694 = vmatprep.mubr.bf16.mxu0 0
    %1695 = vmatmul.mubr.bf16.gmra.mrb[0].mxu0 %v552
    %v1696 = vpop.f32.mrb[0].mxu0
    %v1697 = vadd.f32 0.0, %v1696
    %v1698 = vpop.f32.mrb[0].mxu0
    %v1699 = vadd.f32 0.0, %v1698
    %v1700 = vpop.f32.mrb[0].mxu0
    %v1701 = vadd.f32 0.0, %v1700
    %v1702 = vpop.f32.mrb[0].mxu0
    %v1703 = vadd.f32 0.0, %v1702
    %1704 = vmatprep.mubr.bf16.mxu0 0
    %1705 = vmatmul.mubr.bf16.gmra.mrb[0].mxu0 %v555
    %v1706 = vpop.f32.mrb[0].mxu0
    %v1707 = vadd.f32 0.0, %v1706
    %v1708 = vpop.f32.mrb[0].mxu0
    %v1709 = vadd.f32 0.0, %v1708
    %v1710 = vpop.f32.mrb[0].mxu0
    %v1711 = vadd.f32 0.0, %v1710
    %v1712 = vpop.f32.mrb[0].mxu0
    %v1713 = vadd.f32 0.0, %v1712
    %1714 = vdwg.mxu0
    %1715 = vmatprep.subr.bf16.mxu0 %v393
    %1716 = vmatpush1.bf16.msra.mxu0 %v392
    %1717 = vmatprep.subr.bf16.mxu0 %v409
    %1718 = vmatpush1.bf16.msra.mxu0 %v408
    %1719 = vmatprep.subr.bf16.mxu0 %v425
    %1720 = vmatpush1.bf16.msra.mxu0 %v424
    %1721 = vmatprep.subr.bf16.mxu0 %v441
    %1722 = vmatpush1.bf16.msra.mxu0 %v440
    %1723 = vmatprep.subr.bf16.mxu0 0
    %1724 = vmatpush1.bf16.msra.mxu0 0
    %1725 = vmatprep.subr.bf16.mxu0 0
    %1726 = vmatpush1.bf16.msra.mxu0 0
    %1727 = vmatprep.subr.bf16.mxu0 0
    %1728 = vmatpush1.bf16.msra.mxu0 0
    %1729 = vmatprep.subr.bf16.mxu0 0
    %1730 = vmatpush1.bf16.msra.mxu0 0
    %1731 = vmatprep.subr.bf16.mxu0 0
    %1732 = vmatpush1.bf16.msra.mxu0 0
    %1733 = vmatprep.subr.bf16.mxu0 0
    %1734 = vmatpush1.bf16.msra.mxu0 0
    %1735 = vmatprep.subr.bf16.mxu0 0
    %1736 = vmatpush1.bf16.msra.mxu0 0
    %1737 = vmatprep.subr.bf16.mxu0 0
    %1738 = vmatpush1.bf16.msra.mxu0 0
    %1739 = vmatprep.subr.bf16.mxu0 0
    %1740 = vmatpush1.bf16.msra.mxu0 0
    %1741 = vmatprep.subr.bf16.mxu0 0
    %1742 = vmatpush1.bf16.msra.mxu0 0
    %1743 = vmatprep.subr.bf16.mxu0 0
    %1744 = vmatpush1.bf16.msra.mxu0 0
    %1745 = vmatprep.subr.bf16.mxu0 0
    %1746 = vmatpush1.bf16.msra.mxu0 0
    %1747 = vmatprep.mubr.bf16.mxu0 0
    %1748 = vmatmul.mubr.bf16.gmra.mrb[0].mxu0 %v510
    %v1749 = vpop.f32.mrb[0].mxu0
    %v1750 = vadd.f32 0.0, %v1749
    %v1751 = vpop.f32.mrb[0].mxu0
    %v1752 = vadd.f32 0.0, %v1751
    %v1753 = vpop.f32.mrb[0].mxu0
    %v1754 = vadd.f32 0.0, %v1753
    %v1755 = vpop.f32.mrb[0].mxu0
    %v1756 = vadd.f32 0.0, %v1755
    %1757 = vmatprep.mubr.bf16.mxu0 0
    %1758 = vmatmul.mubr.bf16.gmra.mrb[0].mxu0 %v513
    %v1759 = vpop.f32.mrb[0].mxu0
    %v1760 = vadd.f32 0.0, %v1759
    %v1761 = vpop.f32.mrb[0].mxu0
    %v1762 = vadd.f32 0.0, %v1761
    %v1763 = vpop.f32.mrb[0].mxu0
    %v1764 = vadd.f32 0.0, %v1763
    %v1765 = vpop.f32.mrb[0].mxu0
    %v1766 = vadd.f32 0.0, %v1765
    %1767 = vmatprep.mubr.bf16.mxu0 0
    %1768 = vmatmul.mubr.bf16.gmra.mrb[0].mxu0 %v516
    %v1769 = vpop.f32.mrb[0].mxu0
    %v1770 = vadd.f32 0.0, %v1769
    %v1771 = vpop.f32.mrb[0].mxu0
    %v1772 = vadd.f32 0.0, %v1771
    %v1773 = vpop.f32.mrb[0].mxu0
    %v1774 = vadd.f32 0.0, %v1773
    %v1775 = vpop.f32.mrb[0].mxu0
    %v1776 = vadd.f32 0.0, %v1775
    %1777 = vmatprep.mubr.bf16.mxu0 0
    %1778 = vmatmul.mubr.bf16.gmra.mrb[0].mxu0 %v519
    %v1779 = vpop.f32.mrb[0].mxu0
    %v1780 = vadd.f32 0.0, %v1779
    %v1781 = vpop.f32.mrb[0].mxu0
    %v1782 = vadd.f32 0.0, %v1781
    %v1783 = vpop.f32.mrb[0].mxu0
    %v1784 = vadd.f32 0.0, %v1783
    %v1785 = vpop.f32.mrb[0].mxu0
    %v1786 = vadd.f32 0.0, %v1785
    %1787 = vmatprep.mubr.bf16.mxu0 0
    %1788 = vmatmul.mubr.bf16.gmra.mrb[0].mxu0 %v522
    %v1789 = vpop.f32.mrb[0].mxu0
    %v1790 = vadd.f32 0.0, %v1789
    %v1791 = vpop.f32.mrb[0].mxu0
    %v1792 = vadd.f32 0.0, %v1791
    %v1793 = vpop.f32.mrb[0].mxu0
    %v1794 = vadd.f32 0.0, %v1793
    %v1795 = vpop.f32.mrb[0].mxu0
    %v1796 = vadd.f32 0.0, %v1795
    %1797 = vmatprep.mubr.bf16.mxu0 0
    %1798 = vmatmul.mubr.bf16.gmra.mrb[0].mxu0 %v525
    %v1799 = vpop.f32.mrb[0].mxu0
    %v1800 = vadd.f32 0.0, %v1799
    %v1801 = vpop.f32.mrb[0].mxu0
    %v1802 = vadd.f32 0.0, %v1801
    %v1803 = vpop.f32.mrb[0].mxu0
    %v1804 = vadd.f32 0.0, %v1803
    %v1805 = vpop.f32.mrb[0].mxu0
    %v1806 = vadd.f32 0.0, %v1805
    %1807 = vmatprep.mubr.bf16.mxu0 0
    %1808 = vmatmul.mubr.bf16.gmra.mrb[0].mxu0 %v528
    %v1809 = vpop.f32.mrb[0].mxu0
    %v1810 = vadd.f32 0.0, %v1809
    %v1811 = vpop.f32.mrb[0].mxu0
    %v1812 = vadd.f32 0.0, %v1811
    %v1813 = vpop.f32.mrb[0].mxu0
    %v1814 = vadd.f32 0.0, %v1813
    %v1815 = vpop.f32.mrb[0].mxu0
    %v1816 = vadd.f32 0.0, %v1815
    %1817 = vmatprep.mubr.bf16.mxu0 0
    %1818 = vmatmul.mubr.bf16.gmra.mrb[0].mxu0 %v531
    %v1819 = vpop.f32.mrb[0].mxu0
    %v1820 = vadd.f32 0.0, %v1819
    %v1821 = vpop.f32.mrb[0].mxu0
    %v1822 = vadd.f32 0.0, %v1821
    %v1823 = vpop.f32.mrb[0].mxu0
    %v1824 = vadd.f32 0.0, %v1823
    %v1825 = vpop.f32.mrb[0].mxu0
    %v1826 = vadd.f32 0.0, %v1825
    %1827 = vmatprep.mubr.bf16.mxu0 0
    %1828 = vmatmul.mubr.bf16.gmra.mrb[0].mxu0 %v534
    %v1829 = vpop.f32.mrb[0].mxu0
    %v1830 = vadd.f32 0.0, %v1829
    %v1831 = vpop.f32.mrb[0].mxu0
    %v1832 = vadd.f32 0.0, %v1831
    %v1833 = vpop.f32.mrb[0].mxu0
    %v1834 = vadd.f32 0.0, %v1833
    %v1835 = vpop.f32.mrb[0].mxu0
    %v1836 = vadd.f32 0.0, %v1835
    %1837 = vmatprep.mubr.bf16.mxu0 0
    %1838 = vmatmul.mubr.bf16.gmra.mrb[0].mxu0 %v537
    %v1839 = vpop.f32.mrb[0].mxu0
    %v1840 = vadd.f32 0.0, %v1839
    %v1841 = vpop.f32.mrb[0].mxu0
    %v1842 = vadd.f32 0.0, %v1841
    %v1843 = vpop.f32.mrb[0].mxu0
    %v1844 = vadd.f32 0.0, %v1843
    %v1845 = vpop.f32.mrb[0].mxu0
    %v1846 = vadd.f32 0.0, %v1845
    %1847 = vmatprep.mubr.bf16.mxu0 0
    %1848 = vmatmul.mubr.bf16.gmra.mrb[0].mxu0 %v540
    %v1849 = vpop.f32.mrb[0].mxu0
    %v1850 = vadd.f32 0.0, %v1849
    %v1851 = vpop.f32.mrb[0].mxu0
    %v1852 = vadd.f32 0.0, %v1851
    %v1853 = vpop.f32.mrb[0].mxu0
    %v1854 = vadd.f32 0.0, %v1853
    %v1855 = vpop.f32.mrb[0].mxu0
    %v1856 = vadd.f32 0.0, %v1855
    %1857 = vmatprep.mubr.bf16.mxu0 0
    %1858 = vmatmul.mubr.bf16.gmra.mrb[0].mxu0 %v543
    %v1859 = vpop.f32.mrb[0].mxu0
    %v1860 = vadd.f32 0.0, %v1859
    %v1861 = vpop.f32.mrb[0].mxu0
    %v1862 = vadd.f32 0.0, %v1861
    %v1863 = vpop.f32.mrb[0].mxu0
    %v1864 = vadd.f32 0.0, %v1863
    %v1865 = vpop.f32.mrb[0].mxu0
    %v1866 = vadd.f32 0.0, %v1865
    %1867 = vmatprep.mubr.bf16.mxu0 0
    %1868 = vmatmul.mubr.bf16.gmra.mrb[0].mxu0 %v546
    %v1869 = vpop.f32.mrb[0].mxu0
    %v1870 = vadd.f32 0.0, %v1869
    %v1871 = vpop.f32.mrb[0].mxu0
    %v1872 = vadd.f32 0.0, %v1871
    %v1873 = vpop.f32.mrb[0].mxu0
    %v1874 = vadd.f32 0.0, %v1873
    %v1875 = vpop.f32.mrb[0].mxu0
    %v1876 = vadd.f32 0.0, %v1875
    %1877 = vmatprep.mubr.bf16.mxu0 0
    %1878 = vmatmul.mubr.bf16.gmra.mrb[0].mxu0 %v549
    %v1879 = vpop.f32.mrb[0].mxu0
    %v1880 = vadd.f32 0.0, %v1879
    %v1881 = vpop.f32.mrb[0].mxu0
    %v1882 = vadd.f32 0.0, %v1881
    %v1883 = vpop.f32.mrb[0].mxu0
    %v1884 = vadd.f32 0.0, %v1883
    %v1885 = vpop.f32.mrb[0].mxu0
    %v1886 = vadd.f32 0.0, %v1885
    %1887 = vmatprep.mubr.bf16.mxu0 0
    %1888 = vmatmul.mubr.bf16.gmra.mrb[0].mxu0 %v552
    %v1889 = vpop.f32.mrb[0].mxu0
    %v1890 = vadd.f32 0.0, %v1889
    %v1891 = vpop.f32.mrb[0].mxu0
    %v1892 = vadd.f32 0.0, %v1891
    %v1893 = vpop.f32.mrb[0].mxu0
    %v1894 = vadd.f32 0.0, %v1893
    %v1895 = vpop.f32.mrb[0].mxu0
    %v1896 = vadd.f32 0.0, %v1895
    %1897 = vmatprep.mubr.bf16.mxu0 0
    %1898 = vmatmul.mubr.bf16.gmra.mrb[0].mxu0 %v555
    %v1899 = vpop.f32.mrb[0].mxu0
    %v1900 = vadd.f32 0.0, %v1899
    %v1901 = vpop.f32.mrb[0].mxu0
    %v1902 = vadd.f32 0.0, %v1901
    %v1903 = vpop.f32.mrb[0].mxu0
    %v1904 = vadd.f32 0.0, %v1903
    %v1905 = vpop.f32.mrb[0].mxu0
    %v1906 = vadd.f32 0.0, %v1905
    %1907 = vdwg.mxu0
    %1908 = vmatprep.subr.bf16.mxu0 %v395
    %1909 = vmatpush1.bf16.msra.mxu0 %v394
    %1910 = vmatprep.subr.bf16.mxu0 %v411
    %1911 = vmatpush1.bf16.msra.mxu0 %v410
    %1912 = vmatprep.subr.bf16.mxu0 %v427
    %1913 = vmatpush1.bf16.msra.mxu0 %v426
    %1914 = vmatprep.subr.bf16.mxu0 %v443
    %1915 = vmatpush1.bf16.msra.mxu0 %v442
    %1916 = vmatprep.subr.bf16.mxu0 0
    %1917 = vmatpush1.bf16.msra.mxu0 0
    %1918 = vmatprep.subr.bf16.mxu0 0
    %1919 = vmatpush1.bf16.msra.mxu0 0
    %1920 = vmatprep.subr.bf16.mxu0 0
    %1921 = vmatpush1.bf16.msra.mxu0 0
    %1922 = vmatprep.subr.bf16.mxu0 0
    %1923 = vmatpush1.bf16.msra.mxu0 0
    %1924 = vmatprep.subr.bf16.mxu0 0
    %1925 = vmatpush1.bf16.msra.mxu0 0
    %1926 = vmatprep.subr.bf16.mxu0 0
    %1927 = vmatpush1.bf16.msra.mxu0 0
    %1928 = vmatprep.subr.bf16.mxu0 0
    %1929 = vmatpush1.bf16.msra.mxu0 0
    %1930 = vmatprep.subr.bf16.mxu0 0
    %1931 = vmatpush1.bf16.msra.mxu0 0
    %1932 = vmatprep.subr.bf16.mxu0 0
    %1933 = vmatpush1.bf16.msra.mxu0 0
    %1934 = vmatprep.subr.bf16.mxu0 0
    %1935 = vmatpush1.bf16.msra.mxu0 0
    %1936 = vmatprep.subr.bf16.mxu0 0
    %1937 = vmatpush1.bf16.msra.mxu0 0
    %1938 = vmatprep.subr.bf16.mxu0 0
    %1939 = vmatpush1.bf16.msra.mxu0 0
    %1940 = vmatprep.mubr.bf16.mxu0 0
    %1941 = vmatmul.mubr.bf16.gmra.mrb[0].mxu0 %v510
    %v1942 = vpop.f32.mrb[0].mxu0
    %v1943 = vadd.f32 0.0, %v1942
    %v1944 = vpop.f32.mrb[0].mxu0
    %v1945 = vadd.f32 0.0, %v1944
    %v1946 = vpop.f32.mrb[0].mxu0
    %v1947 = vadd.f32 0.0, %v1946
    %v1948 = vpop.f32.mrb[0].mxu0
    %v1949 = vadd.f32 0.0, %v1948
    %1950 = vmatprep.mubr.bf16.mxu0 0
    %1951 = vmatmul.mubr.bf16.gmra.mrb[0].mxu0 %v513
    %v1952 = vpop.f32.mrb[0].mxu0
    %v1953 = vadd.f32 0.0, %v1952
    %v1954 = vpop.f32.mrb[0].mxu0
    %v1955 = vadd.f32 0.0, %v1954
    %v1956 = vpop.f32.mrb[0].mxu0
    %v1957 = vadd.f32 0.0, %v1956
    %v1958 = vpop.f32.mrb[0].mxu0
    %v1959 = vadd.f32 0.0, %v1958
    %1960 = vmatprep.mubr.bf16.mxu0 0
    %1961 = vmatmul.mubr.bf16.gmra.mrb[0].mxu0 %v516
    %v1962 = vpop.f32.mrb[0].mxu0
    %v1963 = vadd.f32 0.0, %v1962
    %v1964 = vpop.f32.mrb[0].mxu0
    %v1965 = vadd.f32 0.0, %v1964
    %v1966 = vpop.f32.mrb[0].mxu0
    %v1967 = vadd.f32 0.0, %v1966
    %v1968 = vpop.f32.mrb[0].mxu0
    %v1969 = vadd.f32 0.0, %v1968
    %1970 = vmatprep.mubr.bf16.mxu0 0
    %1971 = vmatmul.mubr.bf16.gmra.mrb[0].mxu0 %v519
    %v1972 = vpop.f32.mrb[0].mxu0
    %v1973 = vadd.f32 0.0, %v1972
    %v1974 = vpop.f32.mrb[0].mxu0
    %v1975 = vadd.f32 0.0, %v1974
    %v1976 = vpop.f32.mrb[0].mxu0
    %v1977 = vadd.f32 0.0, %v1976
    %v1978 = vpop.f32.mrb[0].mxu0
    %v1979 = vadd.f32 0.0, %v1978
    %1980 = vmatprep.mubr.bf16.mxu0 0
    %1981 = vmatmul.mubr.bf16.gmra.mrb[0].mxu0 %v522
    %v1982 = vpop.f32.mrb[0].mxu0
    %v1983 = vadd.f32 0.0, %v1982
    %v1984 = vpop.f32.mrb[0].mxu0
    %v1985 = vadd.f32 0.0, %v1984
    %v1986 = vpop.f32.mrb[0].mxu0
    %v1987 = vadd.f32 0.0, %v1986
    %v1988 = vpop.f32.mrb[0].mxu0
    %v1989 = vadd.f32 0.0, %v1988
    %1990 = vmatprep.mubr.bf16.mxu0 0
    %1991 = vmatmul.mubr.bf16.gmra.mrb[0].mxu0 %v525
    %v1992 = vpop.f32.mrb[0].mxu0
    %v1993 = vadd.f32 0.0, %v1992
    %v1994 = vpop.f32.mrb[0].mxu0
    %v1995 = vadd.f32 0.0, %v1994
    %v1996 = vpop.f32.mrb[0].mxu0
    %v1997 = vadd.f32 0.0, %v1996
    %v1998 = vpop.f32.mrb[0].mxu0
    %v1999 = vadd.f32 0.0, %v1998
    %2000 = vmatprep.mubr.bf16.mxu0 0
    %2001 = vmatmul.mubr.bf16.gmra.mrb[0].mxu0 %v528
    %v2002 = vpop.f32.mrb[0].mxu0
    %v2003 = vadd.f32 0.0, %v2002
    %v2004 = vpop.f32.mrb[0].mxu0
    %v2005 = vadd.f32 0.0, %v2004
    %v2006 = vpop.f32.mrb[0].mxu0
    %v2007 = vadd.f32 0.0, %v2006
    %v2008 = vpop.f32.mrb[0].mxu0
    %v2009 = vadd.f32 0.0, %v2008
    %2010 = vmatprep.mubr.bf16.mxu0 0
    %2011 = vmatmul.mubr.bf16.gmra.mrb[0].mxu0 %v531
    %v2012 = vpop.f32.mrb[0].mxu0
    %v2013 = vadd.f32 0.0, %v2012
    %v2014 = vpop.f32.mrb[0].mxu0
    %v2015 = vadd.f32 0.0, %v2014
    %v2016 = vpop.f32.mrb[0].mxu0
    %v2017 = vadd.f32 0.0, %v2016
    %v2018 = vpop.f32.mrb[0].mxu0
    %v2019 = vadd.f32 0.0, %v2018
    %2020 = vmatprep.mubr.bf16.mxu0 0
    %2021 = vmatmul.mubr.bf16.gmra.mrb[0].mxu0 %v534
    %v2022 = vpop.f32.mrb[0].mxu0
    %v2023 = vadd.f32 0.0, %v2022
    %v2024 = vpop.f32.mrb[0].mxu0
    %v2025 = vadd.f32 0.0, %v2024
    %v2026 = vpop.f32.mrb[0].mxu0
    %v2027 = vadd.f32 0.0, %v2026
    %v2028 = vpop.f32.mrb[0].mxu0
    %v2029 = vadd.f32 0.0, %v2028
    %2030 = vmatprep.mubr.bf16.mxu0 0
    %2031 = vmatmul.mubr.bf16.gmra.mrb[0].mxu0 %v537
    %v2032 = vpop.f32.mrb[0].mxu0
    %v2033 = vadd.f32 0.0, %v2032
    %v2034 = vpop.f32.mrb[0].mxu0
    %v2035 = vadd.f32 0.0, %v2034
    %v2036 = vpop.f32.mrb[0].mxu0
    %v2037 = vadd.f32 0.0, %v2036
    %v2038 = vpop.f32.mrb[0].mxu0
    %v2039 = vadd.f32 0.0, %v2038
    %2040 = vmatprep.mubr.bf16.mxu0 0
    %2041 = vmatmul.mubr.bf16.gmra.mrb[0].mxu0 %v540
    %v2042 = vpop.f32.mrb[0].mxu0
    %v2043 = vadd.f32 0.0, %v2042
    %v2044 = vpop.f32.mrb[0].mxu0
    %v2045 = vadd.f32 0.0, %v2044
    %v2046 = vpop.f32.mrb[0].mxu0
    %v2047 = vadd.f32 0.0, %v2046
    %v2048 = vpop.f32.mrb[0].mxu0
    %v2049 = vadd.f32 0.0, %v2048
    %2050 = vmatprep.mubr.bf16.mxu0 0
    %2051 = vmatmul.mubr.bf16.gmra.mrb[0].mxu0 %v543
    %v2052 = vpop.f32.mrb[0].mxu0
    %v2053 = vadd.f32 0.0, %v2052
    %v2054 = vpop.f32.mrb[0].mxu0
    %v2055 = vadd.f32 0.0, %v2054
    %v2056 = vpop.f32.mrb[0].mxu0
    %v2057 = vadd.f32 0.0, %v2056
    %v2058 = vpop.f32.mrb[0].mxu0
    %v2059 = vadd.f32 0.0, %v2058
    %2060 = vmatprep.mubr.bf16.mxu0 0
    %2061 = vmatmul.mubr.bf16.gmra.mrb[0].mxu0 %v546
    %v2062 = vpop.f32.mrb[0].mxu0
    %v2063 = vadd.f32 0.0, %v2062
    %v2064 = vpop.f32.mrb[0].mxu0
    %v2065 = vadd.f32 0.0, %v2064
    %v2066 = vpop.f32.mrb[0].mxu0
    %v2067 = vadd.f32 0.0, %v2066
    %v2068 = vpop.f32.mrb[0].mxu0
    %v2069 = vadd.f32 0.0, %v2068
    %2070 = vmatprep.mubr.bf16.mxu0 0
    %2071 = vmatmul.mubr.bf16.gmra.mrb[0].mxu0 %v549
    %v2072 = vpop.f32.mrb[0].mxu0
    %v2073 = vadd.f32 0.0, %v2072
    %v2074 = vpop.f32.mrb[0].mxu0
    %v2075 = vadd.f32 0.0, %v2074
    %v2076 = vpop.f32.mrb[0].mxu0
    %v2077 = vadd.f32 0.0, %v2076
    %v2078 = vpop.f32.mrb[0].mxu0
    %v2079 = vadd.f32 0.0, %v2078
    %2080 = vmatprep.mubr.bf16.mxu0 0
    %2081 = vmatmul.mubr.bf16.gmra.mrb[0].mxu0 %v552
    %v2082 = vpop.f32.mrb[0].mxu0
    %v2083 = vadd.f32 0.0, %v2082
    %v2084 = vpop.f32.mrb[0].mxu0
    %v2085 = vadd.f32 0.0, %v2084
    %v2086 = vpop.f32.mrb[0].mxu0
    %v2087 = vadd.f32 0.0, %v2086
    %v2088 = vpop.f32.mrb[0].mxu0
    %v2089 = vadd.f32 0.0, %v2088
    %2090 = vmatprep.mubr.bf16.mxu0 0
    %2091 = vmatmul.mubr.bf16.gmra.mrb[0].mxu0 %v555
    %v2092 = vpop.f32.mrb[0].mxu0
    %v2093 = vadd.f32 0.0, %v2092
    %v2094 = vpop.f32.mrb[0].mxu0
    %v2095 = vadd.f32 0.0, %v2094
    %v2096 = vpop.f32.mrb[0].mxu0
    %v2097 = vadd.f32 0.0, %v2096
    %v2098 = vpop.f32.mrb[0].mxu0
    %v2099 = vadd.f32 0.0, %v2098
    %2100 = vdwg.mxu0
    %v2101 = vpack.c.bf16 %v596, %v592
    %v2102 = vpack.c.bf16 %v598, %v594
    %v2103 = vpack.c.bf16 %v789, %v785
    %v2104 = vpack.c.bf16 %v791, %v787
    %v2105 = vpack.c.bf16 %v982, %v978
    %v2106 = vpack.c.bf16 %v984, %v980
    %v2107 = vpack.c.bf16 %v1175, %v1171
    %v2108 = vpack.c.bf16 %v1177, %v1173
    %v2109 = vpack.c.bf16 %v1368, %v1364
    %v2110 = vpack.c.bf16 %v1370, %v1366
    %v2111 = vpack.c.bf16 %v1561, %v1557
    %v2112 = vpack.c.bf16 %v1563, %v1559
    %v2113 = vpack.c.bf16 %v1754, %v1750
    %v2114 = vpack.c.bf16 %v1756, %v1752
    %v2115 = vpack.c.bf16 %v1947, %v1943
    %v2116 = vpack.c.bf16 %v1949, %v1945
    %v2117 = vpack.c.bf16 %v606, %v602
    %v2118 = vpack.c.bf16 %v608, %v604
    %v2119 = vpack.c.bf16 %v799, %v795
    %v2120 = vpack.c.bf16 %v801, %v797
    %v2121 = vpack.c.bf16 %v992, %v988
    %v2122 = vpack.c.bf16 %v994, %v990
    %v2123 = vpack.c.bf16 %v1185, %v1181
    %v2124 = vpack.c.bf16 %v1187, %v1183
    %v2125 = vpack.c.bf16 %v1378, %v1374
    %v2126 = vpack.c.bf16 %v1380, %v1376
    %v2127 = vpack.c.bf16 %v1571, %v1567
    %v2128 = vpack.c.bf16 %v1573, %v1569
    %v2129 = vpack.c.bf16 %v1764, %v1760
    %v2130 = vpack.c.bf16 %v1766, %v1762
    %v2131 = vpack.c.bf16 %v1957, %v1953
    %v2132 = vpack.c.bf16 %v1959, %v1955
    %v2133 = vpack.c.bf16 %v616, %v612
    %v2134 = vpack.c.bf16 %v618, %v614
    %v2135 = vpack.c.bf16 %v809, %v805
    %v2136 = vpack.c.bf16 %v811, %v807
    %v2137 = vpack.c.bf16 %v1002, %v998
    %v2138 = vpack.c.bf16 %v1004, %v1000
    %v2139 = vpack.c.bf16 %v1195, %v1191
    %v2140 = vpack.c.bf16 %v1197, %v1193
    %v2141 = vpack.c.bf16 %v1388, %v1384
    %v2142 = vpack.c.bf16 %v1390, %v1386
    %v2143 = vpack.c.bf16 %v1581, %v1577
    %v2144 = vpack.c.bf16 %v1583, %v1579
    %v2145 = vpack.c.bf16 %v1774, %v1770
    %v2146 = vpack.c.bf16 %v1776, %v1772
    %v2147 = vpack.c.bf16 %v1967, %v1963
    %v2148 = vpack.c.bf16 %v1969, %v1965
    %v2149 = vpack.c.bf16 %v626, %v622
    %v2150 = vpack.c.bf16 %v628, %v624
    %v2151 = vpack.c.bf16 %v819, %v815
    %v2152 = vpack.c.bf16 %v821, %v817
    %v2153 = vpack.c.bf16 %v1012, %v1008
    %v2154 = vpack.c.bf16 %v1014, %v1010
    %v2155 = vpack.c.bf16 %v1205, %v1201
    %v2156 = vpack.c.bf16 %v1207, %v1203
    %v2157 = vpack.c.bf16 %v1398, %v1394
    %v2158 = vpack.c.bf16 %v1400, %v1396
    %v2159 = vpack.c.bf16 %v1591, %v1587
    %v2160 = vpack.c.bf16 %v1593, %v1589
    %v2161 = vpack.c.bf16 %v1784, %v1780
    %v2162 = vpack.c.bf16 %v1786, %v1782
    %v2163 = vpack.c.bf16 %v1977, %v1973
    %v2164 = vpack.c.bf16 %v1979, %v1975
    %v2165 = vpack.c.bf16 %v636, %v632
    %v2166 = vpack.c.bf16 %v638, %v634
    %v2167 = vpack.c.bf16 %v829, %v825
    %v2168 = vpack.c.bf16 %v831, %v827
    %v2169 = vpack.c.bf16 %v1022, %v1018
    %v2170 = vpack.c.bf16 %v1024, %v1020
    %v2171 = vpack.c.bf16 %v1215, %v1211
    %v2172 = vpack.c.bf16 %v1217, %v1213
    %v2173 = vpack.c.bf16 %v1408, %v1404
    %v2174 = vpack.c.bf16 %v1410, %v1406
    %v2175 = vpack.c.bf16 %v1601, %v1597
    %v2176 = vpack.c.bf16 %v1603, %v1599
    %v2177 = vpack.c.bf16 %v1794, %v1790
    %v2178 = vpack.c.bf16 %v1796, %v1792
    %v2179 = vpack.c.bf16 %v1987, %v1983
    %v2180 = vpack.c.bf16 %v1989, %v1985
    %v2181 = vpack.c.bf16 %v646, %v642
    %v2182 = vpack.c.bf16 %v648, %v644
    %v2183 = vpack.c.bf16 %v839, %v835
    %v2184 = vpack.c.bf16 %v841, %v837
    %v2185 = vpack.c.bf16 %v1032, %v1028
    %v2186 = vpack.c.bf16 %v1034, %v1030
    %v2187 = vpack.c.bf16 %v1225, %v1221
    %v2188 = vpack.c.bf16 %v1227, %v1223
    %v2189 = vpack.c.bf16 %v1418, %v1414
    %v2190 = vpack.c.bf16 %v1420, %v1416
    %v2191 = vpack.c.bf16 %v1611, %v1607
    %v2192 = vpack.c.bf16 %v1613, %v1609
    %v2193 = vpack.c.bf16 %v1804, %v1800
    %v2194 = vpack.c.bf16 %v1806, %v1802
    %v2195 = vpack.c.bf16 %v1997, %v1993
    %v2196 = vpack.c.bf16 %v1999, %v1995
    %v2197 = vpack.c.bf16 %v656, %v652
    %v2198 = vpack.c.bf16 %v658, %v654
    %v2199 = vpack.c.bf16 %v849, %v845
    %v2200 = vpack.c.bf16 %v851, %v847
    %v2201 = vpack.c.bf16 %v1042, %v1038
    %v2202 = vpack.c.bf16 %v1044, %v1040
    %v2203 = vpack.c.bf16 %v1235, %v1231
    %v2204 = vpack.c.bf16 %v1237, %v1233
    %v2205 = vpack.c.bf16 %v1428, %v1424
    %v2206 = vpack.c.bf16 %v1430, %v1426
    %v2207 = vpack.c.bf16 %v1621, %v1617
    %v2208 = vpack.c.bf16 %v1623, %v1619
    %v2209 = vpack.c.bf16 %v1814, %v1810
    %v2210 = vpack.c.bf16 %v1816, %v1812
    %v2211 = vpack.c.bf16 %v2007, %v2003
    %v2212 = vpack.c.bf16 %v2009, %v2005
    %v2213 = vpack.c.bf16 %v666, %v662
    %v2214 = vpack.c.bf16 %v668, %v664
    %v2215 = vpack.c.bf16 %v859, %v855
    %v2216 = vpack.c.bf16 %v861, %v857
    %v2217 = vpack.c.bf16 %v1052, %v1048
    %v2218 = vpack.c.bf16 %v1054, %v1050
    %v2219 = vpack.c.bf16 %v1245, %v1241
    %v2220 = vpack.c.bf16 %v1247, %v1243
    %v2221 = vpack.c.bf16 %v1438, %v1434
    %v2222 = vpack.c.bf16 %v1440, %v1436
    %v2223 = vpack.c.bf16 %v1631, %v1627
    %v2224 = vpack.c.bf16 %v1633, %v1629
    %v2225 = vpack.c.bf16 %v1824, %v1820
    %v2226 = vpack.c.bf16 %v1826, %v1822
    %v2227 = vpack.c.bf16 %v2017, %v2013
    %v2228 = vpack.c.bf16 %v2019, %v2015
    %v2229 = vpack.c.bf16 %v676, %v672
    %v2230 = vpack.c.bf16 %v678, %v674
    %v2231 = vpack.c.bf16 %v869, %v865
    %v2232 = vpack.c.bf16 %v871, %v867
    %v2233 = vpack.c.bf16 %v1062, %v1058
    %v2234 = vpack.c.bf16 %v1064, %v1060
    %v2235 = vpack.c.bf16 %v1255, %v1251
    %v2236 = vpack.c.bf16 %v1257, %v1253
    %v2237 = vpack.c.bf16 %v1448, %v1444
    %v2238 = vpack.c.bf16 %v1450, %v1446
    %v2239 = vpack.c.bf16 %v1641, %v1637
    %v2240 = vpack.c.bf16 %v1643, %v1639
    %v2241 = vpack.c.bf16 %v1834, %v1830
    %v2242 = vpack.c.bf16 %v1836, %v1832
    %v2243 = vpack.c.bf16 %v2027, %v2023
    %v2244 = vpack.c.bf16 %v2029, %v2025
    %v2245 = vpack.c.bf16 %v686, %v682
    %v2246 = vpack.c.bf16 %v688, %v684
    %v2247 = vpack.c.bf16 %v879, %v875
    %v2248 = vpack.c.bf16 %v881, %v877
    %v2249 = vpack.c.bf16 %v1072, %v1068
    %v2250 = vpack.c.bf16 %v1074, %v1070
    %v2251 = vpack.c.bf16 %v1265, %v1261
    %v2252 = vpack.c.bf16 %v1267, %v1263
    %v2253 = vpack.c.bf16 %v1458, %v1454
    %v2254 = vpack.c.bf16 %v1460, %v1456
    %v2255 = vpack.c.bf16 %v1651, %v1647
    %v2256 = vpack.c.bf16 %v1653, %v1649
    %v2257 = vpack.c.bf16 %v1844, %v1840
    %v2258 = vpack.c.bf16 %v1846, %v1842
    %v2259 = vpack.c.bf16 %v2037, %v2033
    %v2260 = vpack.c.bf16 %v2039, %v2035
    %v2261 = vpack.c.bf16 %v696, %v692
    %v2262 = vpack.c.bf16 %v698, %v694
    %v2263 = vpack.c.bf16 %v889, %v885
    %v2264 = vpack.c.bf16 %v891, %v887
    %v2265 = vpack.c.bf16 %v1082, %v1078
    %v2266 = vpack.c.bf16 %v1084, %v1080
    %v2267 = vpack.c.bf16 %v1275, %v1271
    %v2268 = vpack.c.bf16 %v1277, %v1273
    %v2269 = vpack.c.bf16 %v1468, %v1464
    %v2270 = vpack.c.bf16 %v1470, %v1466
    %v2271 = vpack.c.bf16 %v1661, %v1657
    %v2272 = vpack.c.bf16 %v1663, %v1659
    %v2273 = vpack.c.bf16 %v1854, %v1850
    %v2274 = vpack.c.bf16 %v1856, %v1852
    %v2275 = vpack.c.bf16 %v2047, %v2043
    %v2276 = vpack.c.bf16 %v2049, %v2045
    %v2277 = vpack.c.bf16 %v706, %v702
    %v2278 = vpack.c.bf16 %v708, %v704
    %v2279 = vpack.c.bf16 %v899, %v895
    %v2280 = vpack.c.bf16 %v901, %v897
    %v2281 = vpack.c.bf16 %v1092, %v1088
    %v2282 = vpack.c.bf16 %v1094, %v1090
    %v2283 = vpack.c.bf16 %v1285, %v1281
    %v2284 = vpack.c.bf16 %v1287, %v1283
    %v2285 = vpack.c.bf16 %v1478, %v1474
    %v2286 = vpack.c.bf16 %v1480, %v1476
    %v2287 = vpack.c.bf16 %v1671, %v1667
    %v2288 = vpack.c.bf16 %v1673, %v1669
    %v2289 = vpack.c.bf16 %v1864, %v1860
    %v2290 = vpack.c.bf16 %v1866, %v1862
    %v2291 = vpack.c.bf16 %v2057, %v2053
    %v2292 = vpack.c.bf16 %v2059, %v2055
    %v2293 = vpack.c.bf16 %v716, %v712
    %v2294 = vpack.c.bf16 %v718, %v714
    %v2295 = vpack.c.bf16 %v909, %v905
    %v2296 = vpack.c.bf16 %v911, %v907
    %v2297 = vpack.c.bf16 %v1102, %v1098
    %v2298 = vpack.c.bf16 %v1104, %v1100
    %v2299 = vpack.c.bf16 %v1295, %v1291
    %v2300 = vpack.c.bf16 %v1297, %v1293
    %v2301 = vpack.c.bf16 %v1488, %v1484
    %v2302 = vpack.c.bf16 %v1490, %v1486
    %v2303 = vpack.c.bf16 %v1681, %v1677
    %v2304 = vpack.c.bf16 %v1683, %v1679
    %v2305 = vpack.c.bf16 %v1874, %v1870
    %v2306 = vpack.c.bf16 %v1876, %v1872
    %v2307 = vpack.c.bf16 %v2067, %v2063
    %v2308 = vpack.c.bf16 %v2069, %v2065
    %v2309 = vpack.c.bf16 %v726, %v722
    %v2310 = vpack.c.bf16 %v728, %v724
    %v2311 = vpack.c.bf16 %v919, %v915
    %v2312 = vpack.c.bf16 %v921, %v917
    %v2313 = vpack.c.bf16 %v1112, %v1108
    %v2314 = vpack.c.bf16 %v1114, %v1110
    %v2315 = vpack.c.bf16 %v1305, %v1301
    %v2316 = vpack.c.bf16 %v1307, %v1303
    %v2317 = vpack.c.bf16 %v1498, %v1494
    %v2318 = vpack.c.bf16 %v1500, %v1496
    %v2319 = vpack.c.bf16 %v1691, %v1687
    %v2320 = vpack.c.bf16 %v1693, %v1689
    %v2321 = vpack.c.bf16 %v1884, %v1880
    %v2322 = vpack.c.bf16 %v1886, %v1882
    %v2323 = vpack.c.bf16 %v2077, %v2073
    %v2324 = vpack.c.bf16 %v2079, %v2075
    %v2325 = vpack.c.bf16 %v736, %v732
    %v2326 = vpack.c.bf16 %v738, %v734
    %v2327 = vpack.c.bf16 %v929, %v925
    %v2328 = vpack.c.bf16 %v931, %v927
    %v2329 = vpack.c.bf16 %v1122, %v1118
    %v2330 = vpack.c.bf16 %v1124, %v1120
    %v2331 = vpack.c.bf16 %v1315, %v1311
    %v2332 = vpack.c.bf16 %v1317, %v1313
    %v2333 = vpack.c.bf16 %v1508, %v1504
    %v2334 = vpack.c.bf16 %v1510, %v1506
    %v2335 = vpack.c.bf16 %v1701, %v1697
    %v2336 = vpack.c.bf16 %v1703, %v1699
    %v2337 = vpack.c.bf16 %v1894, %v1890
    %v2338 = vpack.c.bf16 %v1896, %v1892
    %v2339 = vpack.c.bf16 %v2087, %v2083
    %v2340 = vpack.c.bf16 %v2089, %v2085
    %v2341 = vpack.c.bf16 %v746, %v742
    %v2342 = vpack.c.bf16 %v748, %v744
    %v2343 = vpack.c.bf16 %v939, %v935
    %v2344 = vpack.c.bf16 %v941, %v937
    %v2345 = vpack.c.bf16 %v1132, %v1128
    %v2346 = vpack.c.bf16 %v1134, %v1130
    %v2347 = vpack.c.bf16 %v1325, %v1321
    %v2348 = vpack.c.bf16 %v1327, %v1323
    %v2349 = vpack.c.bf16 %v1518, %v1514
    %v2350 = vpack.c.bf16 %v1520, %v1516
    %v2351 = vpack.c.bf16 %v1711, %v1707
    %v2352 = vpack.c.bf16 %v1713, %v1709
    %v2353 = vpack.c.bf16 %v1904, %v1900
    %v2354 = vpack.c.bf16 %v1906, %v1902
    %v2355 = vpack.c.bf16 %v2097, %v2093
    %v2356 = vpack.c.bf16 %v2099, %v2095
    %v2357 = vld [vmem:[%s2] sm:$0xff]
    %v2358 = vld [vmem:[%s2 + $0x8] sm:$0xff]
    %v2361 = vlaneseq
    %v2362 = vshrl.u32 %v2361, 7
    %v2363 = vsub.s32 0, %v2362
    %v2364 = vrot.slane %v2357, %v2363
    %v2365 = vlaneseq
    %v2366 = vshrl.u32 %v2365, 7
    %v2367 = vsub.s32 1, %v2366
    %v2368 = vrot.slane %v2357, %v2367
    %v2369 = vlaneseq
    %v2370 = vshrl.u32 %v2369, 7
    %v2371 = vsub.s32 2, %v2370
    %v2372 = vrot.slane %v2357, %v2371
    %v2373 = vlaneseq
    %v2374 = vshrl.u32 %v2373, 7
    %v2375 = vsub.s32 3, %v2374
    %v2376 = vrot.slane %v2357, %v2375
    %v2377 = vlaneseq
    %v2378 = vshrl.u32 %v2377, 7
    %v2379 = vsub.s32 4, %v2378
    %v2380 = vrot.slane %v2357, %v2379
    %v2381 = vlaneseq
    %v2382 = vshrl.u32 %v2381, 7
    %v2383 = vsub.s32 5, %v2382
    %v2384 = vrot.slane %v2357, %v2383
    %v2385 = vlaneseq
    %v2386 = vshrl.u32 %v2385, 7
    %v2387 = vsub.s32 6, %v2386
    %v2388 = vrot.slane %v2357, %v2387
    %v2389 = vlaneseq
    %v2390 = vshrl.u32 %v2389, 7
    %v2391 = vsub.s32 7, %v2390
    %v2392 = vrot.slane %v2357, %v2391
    %v2393 = vlaneseq
    %v2394 = vshrl.u32 %v2393, 7
    %v2395 = vsub.s32 0, %v2394
    %v2396 = vrot.slane %v2358, %v2395
    %v2397 = vlaneseq
    %v2398 = vshrl.u32 %v2397, 7
    %v2399 = vsub.s32 1, %v2398
    %v2400 = vrot.slane %v2358, %v2399
    %v2401 = vlaneseq
    %v2402 = vshrl.u32 %v2401, 7
    %v2403 = vsub.s32 2, %v2402
    %v2404 = vrot.slane %v2358, %v2403
    %v2405 = vlaneseq
    %v2406 = vshrl.u32 %v2405, 7
    %v2407 = vsub.s32 3, %v2406
    %v2408 = vrot.slane %v2358, %v2407
    %v2409 = vlaneseq
    %v2410 = vshrl.u32 %v2409, 7
    %v2411 = vsub.s32 4, %v2410
    %v2412 = vrot.slane %v2358, %v2411
    %v2413 = vlaneseq
    %v2414 = vshrl.u32 %v2413, 7
    %v2415 = vsub.s32 5, %v2414
    %v2416 = vrot.slane %v2358, %v2415
    %v2417 = vlaneseq
    %v2418 = vshrl.u32 %v2417, 7
    %v2419 = vsub.s32 6, %v2418
    %v2420 = vrot.slane %v2358, %v2419
    %v2421 = vlaneseq
    %v2422 = vshrl.u32 %v2421, 7
    %v2423 = vsub.s32 7, %v2422
    %v2424 = vrot.slane %v2358, %v2423
    %v2441 = vpack.c.bf16 %v2364, %v2364
    %v2442 = vpack.c.bf16 %v2368, %v2368
    %v2443 = vpack.c.bf16 %v2372, %v2372
    %v2444 = vpack.c.bf16 %v2376, %v2376
    %v2445 = vpack.c.bf16 %v2380, %v2380
    %v2446 = vpack.c.bf16 %v2384, %v2384
    %v2447 = vpack.c.bf16 %v2388, %v2388
    %v2448 = vpack.c.bf16 %v2392, %v2392
    %v2449 = vpack.c.bf16 %v2396, %v2396
    %v2450 = vpack.c.bf16 %v2400, %v2400
    %v2451 = vpack.c.bf16 %v2404, %v2404
    %v2452 = vpack.c.bf16 %v2408, %v2408
    %v2453 = vpack.c.bf16 %v2412, %v2412
    %v2454 = vpack.c.bf16 %v2416, %v2416
    %v2455 = vpack.c.bf16 %v2420, %v2420
    %v2456 = vpack.c.bf16 %v2424, %v2424
    %v2458 = vpack.i.b16 %v2441, %v2441
    %v2460 = vlaneseq
    %v2461 = vshrl.u32 %v2460, 7
    %v2462 = vsub.s32 0, %v2461
    %v2463 = vrot.slane %v2458, %v2462
    %v2465 = vpack.i.b16 %v2442, %v2442
    %v2467 = vlaneseq
    %v2468 = vshrl.u32 %v2467, 7
    %v2469 = vsub.s32 0, %v2468
    %v2470 = vrot.slane %v2465, %v2469
    %v2472 = vpack.i.b16 %v2443, %v2443
    %v2474 = vlaneseq
    %v2475 = vshrl.u32 %v2474, 7
    %v2476 = vsub.s32 0, %v2475
    %v2477 = vrot.slane %v2472, %v2476
    %v2479 = vpack.i.b16 %v2444, %v2444
    %v2481 = vlaneseq
    %v2482 = vshrl.u32 %v2481, 7
    %v2483 = vsub.s32 0, %v2482
    %v2484 = vrot.slane %v2479, %v2483
    %v2486 = vpack.i.b16 %v2445, %v2445
    %v2488 = vlaneseq
    %v2489 = vshrl.u32 %v2488, 7
    %v2490 = vsub.s32 0, %v2489
    %v2491 = vrot.slane %v2486, %v2490
    %v2493 = vpack.i.b16 %v2446, %v2446
    %v2495 = vlaneseq
    %v2496 = vshrl.u32 %v2495, 7
    %v2497 = vsub.s32 0, %v2496
    %v2498 = vrot.slane %v2493, %v2497
    %v2500 = vpack.i.b16 %v2447, %v2447
    %v2502 = vlaneseq
    %v2503 = vshrl.u32 %v2502, 7
    %v2504 = vsub.s32 0, %v2503
    %v2505 = vrot.slane %v2500, %v2504
    %v2507 = vpack.i.b16 %v2448, %v2448
    %v2509 = vlaneseq
    %v2510 = vshrl.u32 %v2509, 7
    %v2511 = vsub.s32 0, %v2510
    %v2512 = vrot.slane %v2507, %v2511
    %v2514 = vpack.i.b16 %v2449, %v2449
    %v2516 = vlaneseq
    %v2517 = vshrl.u32 %v2516, 7
    %v2518 = vsub.s32 0, %v2517
    %v2519 = vrot.slane %v2514, %v2518
    %v2521 = vpack.i.b16 %v2450, %v2450
    %v2523 = vlaneseq
    %v2524 = vshrl.u32 %v2523, 7
    %v2525 = vsub.s32 0, %v2524
    %v2526 = vrot.slane %v2521, %v2525
    %v2528 = vpack.i.b16 %v2451, %v2451
    %v2530 = vlaneseq
    %v2531 = vshrl.u32 %v2530, 7
    %v2532 = vsub.s32 0, %v2531
    %v2533 = vrot.slane %v2528, %v2532
    %v2535 = vpack.i.b16 %v2452, %v2452
    %v2537 = vlaneseq
    %v2538 = vshrl.u32 %v2537, 7
    %v2539 = vsub.s32 0, %v2538
    %v2540 = vrot.slane %v2535, %v2539
    %v2542 = vpack.i.b16 %v2453, %v2453
    %v2544 = vlaneseq
    %v2545 = vshrl.u32 %v2544, 7
    %v2546 = vsub.s32 0, %v2545
    %v2547 = vrot.slane %v2542, %v2546
    %v2549 = vpack.i.b16 %v2454, %v2454
    %v2551 = vlaneseq
    %v2552 = vshrl.u32 %v2551, 7
    %v2553 = vsub.s32 0, %v2552
    %v2554 = vrot.slane %v2549, %v2553
    %v2556 = vpack.i.b16 %v2455, %v2455
    %v2558 = vlaneseq
    %v2559 = vshrl.u32 %v2558, 7
    %v2560 = vsub.s32 0, %v2559
    %v2561 = vrot.slane %v2556, %v2560
    %v2563 = vpack.i.b16 %v2456, %v2456
    %v2565 = vlaneseq
    %v2566 = vshrl.u32 %v2565, 7
    %v2567 = vsub.s32 0, %v2566
    %v2568 = vrot.slane %v2563, %v2567
    %v2569 = vadd.bf16 %v2101, %v2463
    %v2570 = vadd.bf16 %v2102, %v2470
    %v2571 = vadd.bf16 %v2103, %v2477
    %v2572 = vadd.bf16 %v2104, %v2484
    %v2573 = vadd.bf16 %v2105, %v2491
    %v2574 = vadd.bf16 %v2106, %v2498
    %v2575 = vadd.bf16 %v2107, %v2505
    %v2576 = vadd.bf16 %v2108, %v2512
    %v2577 = vadd.bf16 %v2109, %v2519
    %v2578 = vadd.bf16 %v2110, %v2526
    %v2579 = vadd.bf16 %v2111, %v2533
    %v2580 = vadd.bf16 %v2112, %v2540
    %v2581 = vadd.bf16 %v2113, %v2547
    %v2582 = vadd.bf16 %v2114, %v2554
    %v2583 = vadd.bf16 %v2115, %v2561
    %v2584 = vadd.bf16 %v2116, %v2568
    %v2585 = vadd.bf16 %v2117, %v2463
    %v2586 = vadd.bf16 %v2118, %v2470
    %v2587 = vadd.bf16 %v2119, %v2477
    %v2588 = vadd.bf16 %v2120, %v2484
    %v2589 = vadd.bf16 %v2121, %v2491
    %v2590 = vadd.bf16 %v2122, %v2498
    %v2591 = vadd.bf16 %v2123, %v2505
    %v2592 = vadd.bf16 %v2124, %v2512
    %v2593 = vadd.bf16 %v2125, %v2519
    %v2594 = vadd.bf16 %v2126, %v2526
    %v2595 = vadd.bf16 %v2127, %v2533
    %v2596 = vadd.bf16 %v2128, %v2540
    %v2597 = vadd.bf16 %v2129, %v2547
    %v2598 = vadd.bf16 %v2130, %v2554
    %v2599 = vadd.bf16 %v2131, %v2561
    %v2600 = vadd.bf16 %v2132, %v2568
    %v2601 = vadd.bf16 %v2133, %v2463
    %v2602 = vadd.bf16 %v2134, %v2470
    %v2603 = vadd.bf16 %v2135, %v2477
    %v2604 = vadd.bf16 %v2136, %v2484
    %v2605 = vadd.bf16 %v2137, %v2491
    %v2606 = vadd.bf16 %v2138, %v2498
    %v2607 = vadd.bf16 %v2139, %v2505
    %v2608 = vadd.bf16 %v2140, %v2512
    %v2609 = vadd.bf16 %v2141, %v2519
    %v2610 = vadd.bf16 %v2142, %v2526
    %v2611 = vadd.bf16 %v2143, %v2533
    %v2612 = vadd.bf16 %v2144, %v2540
    %v2613 = vadd.bf16 %v2145, %v2547
    %v2614 = vadd.bf16 %v2146, %v2554
    %v2615 = vadd.bf16 %v2147, %v2561
    %v2616 = vadd.bf16 %v2148, %v2568
    %v2617 = vadd.bf16 %v2149, %v2463
    %v2618 = vadd.bf16 %v2150, %v2470
    %v2619 = vadd.bf16 %v2151, %v2477
    %v2620 = vadd.bf16 %v2152, %v2484
    %v2621 = vadd.bf16 %v2153, %v2491
    %v2622 = vadd.bf16 %v2154, %v2498
    %v2623 = vadd.bf16 %v2155, %v2505
    %v2624 = vadd.bf16 %v2156, %v2512
    %v2625 = vadd.bf16 %v2157, %v2519
    %v2626 = vadd.bf16 %v2158, %v2526
    %v2627 = vadd.bf16 %v2159, %v2533
    %v2628 = vadd.bf16 %v2160, %v2540
    %v2629 = vadd.bf16 %v2161, %v2547
    %v2630 = vadd.bf16 %v2162, %v2554
    %v2631 = vadd.bf16 %v2163, %v2561
    %v2632 = vadd.bf16 %v2164, %v2568
    %v2633 = vadd.bf16 %v2165, %v2463
    %v2634 = vadd.bf16 %v2166, %v2470
    %v2635 = vadd.bf16 %v2167, %v2477
    %v2636 = vadd.bf16 %v2168, %v2484
    %v2637 = vadd.bf16 %v2169, %v2491
    %v2638 = vadd.bf16 %v2170, %v2498
    %v2639 = vadd.bf16 %v2171, %v2505
    %v2640 = vadd.bf16 %v2172, %v2512
    %v2641 = vadd.bf16 %v2173, %v2519
    %v2642 = vadd.bf16 %v2174, %v2526
    %v2643 = vadd.bf16 %v2175, %v2533
    %v2644 = vadd.bf16 %v2176, %v2540
    %v2645 = vadd.bf16 %v2177, %v2547
    %v2646 = vadd.bf16 %v2178, %v2554
    %v2647 = vadd.bf16 %v2179, %v2561
    %v2648 = vadd.bf16 %v2180, %v2568
    %v2649 = vadd.bf16 %v2181, %v2463
    %v2650 = vadd.bf16 %v2182, %v2470
    %v2651 = vadd.bf16 %v2183, %v2477
    %v2652 = vadd.bf16 %v2184, %v2484
    %v2653 = vadd.bf16 %v2185, %v2491
    %v2654 = vadd.bf16 %v2186, %v2498
    %v2655 = vadd.bf16 %v2187, %v2505
    %v2656 = vadd.bf16 %v2188, %v2512
    %v2657 = vadd.bf16 %v2189, %v2519
    %v2658 = vadd.bf16 %v2190, %v2526
    %v2659 = vadd.bf16 %v2191, %v2533
    %v2660 = vadd.bf16 %v2192, %v2540
    %v2661 = vadd.bf16 %v2193, %v2547
    %v2662 = vadd.bf16 %v2194, %v2554
    %v2663 = vadd.bf16 %v2195, %v2561
    %v2664 = vadd.bf16 %v2196, %v2568
    %v2665 = vadd.bf16 %v2197, %v2463
    %v2666 = vadd.bf16 %v2198, %v2470
    %v2667 = vadd.bf16 %v2199, %v2477
    %v2668 = vadd.bf16 %v2200, %v2484
    %v2669 = vadd.bf16 %v2201, %v2491
    %v2670 = vadd.bf16 %v2202, %v2498
    %v2671 = vadd.bf16 %v2203, %v2505
    %v2672 = vadd.bf16 %v2204, %v2512
    %v2673 = vadd.bf16 %v2205, %v2519
    %v2674 = vadd.bf16 %v2206, %v2526
    %v2675 = vadd.bf16 %v2207, %v2533
    %v2676 = vadd.bf16 %v2208, %v2540
    %v2677 = vadd.bf16 %v2209, %v2547
    %v2678 = vadd.bf16 %v2210, %v2554
    %v2679 = vadd.bf16 %v2211, %v2561
    %v2680 = vadd.bf16 %v2212, %v2568
    %v2681 = vadd.bf16 %v2213, %v2463
    %v2682 = vadd.bf16 %v2214, %v2470
    %v2683 = vadd.bf16 %v2215, %v2477
    %v2684 = vadd.bf16 %v2216, %v2484
    %v2685 = vadd.bf16 %v2217, %v2491
    %v2686 = vadd.bf16 %v2218, %v2498
    %v2687 = vadd.bf16 %v2219, %v2505
    %v2688 = vadd.bf16 %v2220, %v2512
    %v2689 = vadd.bf16 %v2221, %v2519
    %v2690 = vadd.bf16 %v2222, %v2526
    %v2691 = vadd.bf16 %v2223, %v2533
    %v2692 = vadd.bf16 %v2224, %v2540
    %v2693 = vadd.bf16 %v2225, %v2547
    %v2694 = vadd.bf16 %v2226, %v2554
    %v2695 = vadd.bf16 %v2227, %v2561
    %v2696 = vadd.bf16 %v2228, %v2568
    %v2697 = vadd.bf16 %v2229, %v2463
    %v2698 = vadd.bf16 %v2230, %v2470
    %v2699 = vadd.bf16 %v2231, %v2477
    %v2700 = vadd.bf16 %v2232, %v2484
    %v2701 = vadd.bf16 %v2233, %v2491
    %v2702 = vadd.bf16 %v2234, %v2498
    %v2703 = vadd.bf16 %v2235, %v2505
    %v2704 = vadd.bf16 %v2236, %v2512
    %v2705 = vadd.bf16 %v2237, %v2519
    %v2706 = vadd.bf16 %v2238, %v2526
    %v2707 = vadd.bf16 %v2239, %v2533
    %v2708 = vadd.bf16 %v2240, %v2540
    %v2709 = vadd.bf16 %v2241, %v2547
    %v2710 = vadd.bf16 %v2242, %v2554
    %v2711 = vadd.bf16 %v2243, %v2561
    %v2712 = vadd.bf16 %v2244, %v2568
    %v2713 = vadd.bf16 %v2245, %v2463
    %v2714 = vadd.bf16 %v2246, %v2470
    %v2715 = vadd.bf16 %v2247, %v2477
    %v2716 = vadd.bf16 %v2248, %v2484
    %v2717 = vadd.bf16 %v2249, %v2491
    %v2718 = vadd.bf16 %v2250, %v2498
    %v2719 = vadd.bf16 %v2251, %v2505
    %v2720 = vadd.bf16 %v2252, %v2512
    %v2721 = vadd.bf16 %v2253, %v2519
    %v2722 = vadd.bf16 %v2254, %v2526
    %v2723 = vadd.bf16 %v2255, %v2533
    %v2724 = vadd.bf16 %v2256, %v2540
    %v2725 = vadd.bf16 %v2257, %v2547
    %v2726 = vadd.bf16 %v2258, %v2554
    %v2727 = vadd.bf16 %v2259, %v2561
    %v2728 = vadd.bf16 %v2260, %v2568
    %v2729 = vadd.bf16 %v2261, %v2463
    %v2730 = vadd.bf16 %v2262, %v2470
    %v2731 = vadd.bf16 %v2263, %v2477
    %v2732 = vadd.bf16 %v2264, %v2484
    %v2733 = vadd.bf16 %v2265, %v2491
    %v2734 = vadd.bf16 %v2266, %v2498
    %v2735 = vadd.bf16 %v2267, %v2505
    %v2736 = vadd.bf16 %v2268, %v2512
    %v2737 = vadd.bf16 %v2269, %v2519
    %v2738 = vadd.bf16 %v2270, %v2526
    %v2739 = vadd.bf16 %v2271, %v2533
    %v2740 = vadd.bf16 %v2272, %v2540
    %v2741 = vadd.bf16 %v2273, %v2547
    %v2742 = vadd.bf16 %v2274, %v2554
    %v2743 = vadd.bf16 %v2275, %v2561
    %v2744 = vadd.bf16 %v2276, %v2568
    %v2745 = vadd.bf16 %v2277, %v2463
    %v2746 = vadd.bf16 %v2278, %v2470
    %v2747 = vadd.bf16 %v2279, %v2477
    %v2748 = vadd.bf16 %v2280, %v2484
    %v2749 = vadd.bf16 %v2281, %v2491
    %v2750 = vadd.bf16 %v2282, %v2498
    %v2751 = vadd.bf16 %v2283, %v2505
    %v2752 = vadd.bf16 %v2284, %v2512
    %v2753 = vadd.bf16 %v2285, %v2519
    %v2754 = vadd.bf16 %v2286, %v2526
    %v2755 = vadd.bf16 %v2287, %v2533
    %v2756 = vadd.bf16 %v2288, %v2540
    %v2757 = vadd.bf16 %v2289, %v2547
    %v2758 = vadd.bf16 %v2290, %v2554
    %v2759 = vadd.bf16 %v2291, %v2561
    %v2760 = vadd.bf16 %v2292, %v2568
    %v2761 = vadd.bf16 %v2293, %v2463
    %v2762 = vadd.bf16 %v2294, %v2470
    %v2763 = vadd.bf16 %v2295, %v2477
    %v2764 = vadd.bf16 %v2296, %v2484
    %v2765 = vadd.bf16 %v2297, %v2491
    %v2766 = vadd.bf16 %v2298, %v2498
    %v2767 = vadd.bf16 %v2299, %v2505
    %v2768 = vadd.bf16 %v2300, %v2512
    %v2769 = vadd.bf16 %v2301, %v2519
    %v2770 = vadd.bf16 %v2302, %v2526
    %v2771 = vadd.bf16 %v2303, %v2533
    %v2772 = vadd.bf16 %v2304, %v2540
    %v2773 = vadd.bf16 %v2305, %v2547
    %v2774 = vadd.bf16 %v2306, %v2554
    %v2775 = vadd.bf16 %v2307, %v2561
    %v2776 = vadd.bf16 %v2308, %v2568
    %v2777 = vadd.bf16 %v2309, %v2463
    %v2778 = vadd.bf16 %v2310, %v2470
    %v2779 = vadd.bf16 %v2311, %v2477
    %v2780 = vadd.bf16 %v2312, %v2484
    %v2781 = vadd.bf16 %v2313, %v2491
    %v2782 = vadd.bf16 %v2314, %v2498
    %v2783 = vadd.bf16 %v2315, %v2505
    %v2784 = vadd.bf16 %v2316, %v2512
    %v2785 = vadd.bf16 %v2317, %v2519
    %v2786 = vadd.bf16 %v2318, %v2526
    %v2787 = vadd.bf16 %v2319, %v2533
    %v2788 = vadd.bf16 %v2320, %v2540
    %v2789 = vadd.bf16 %v2321, %v2547
    %v2790 = vadd.bf16 %v2322, %v2554
    %v2791 = vadd.bf16 %v2323, %v2561
    %v2792 = vadd.bf16 %v2324, %v2568
    %v2793 = vadd.bf16 %v2325, %v2463
    %v2794 = vadd.bf16 %v2326, %v2470
    %v2795 = vadd.bf16 %v2327, %v2477
    %v2796 = vadd.bf16 %v2328, %v2484
    %v2797 = vadd.bf16 %v2329, %v2491
    %v2798 = vadd.bf16 %v2330, %v2498
    %v2799 = vadd.bf16 %v2331, %v2505
    %v2800 = vadd.bf16 %v2332, %v2512
    %v2801 = vadd.bf16 %v2333, %v2519
    %v2802 = vadd.bf16 %v2334, %v2526
    %v2803 = vadd.bf16 %v2335, %v2533
    %v2804 = vadd.bf16 %v2336, %v2540
    %v2805 = vadd.bf16 %v2337, %v2547
    %v2806 = vadd.bf16 %v2338, %v2554
    %v2807 = vadd.bf16 %v2339, %v2561
    %v2808 = vadd.bf16 %v2340, %v2568
    %v2809 = vadd.bf16 %v2341, %v2463
    %v2810 = vadd.bf16 %v2342, %v2470
    %v2811 = vadd.bf16 %v2343, %v2477
    %v2812 = vadd.bf16 %v2344, %v2484
    %v2813 = vadd.bf16 %v2345, %v2491
    %v2814 = vadd.bf16 %v2346, %v2498
    %v2815 = vadd.bf16 %v2347, %v2505
    %v2816 = vadd.bf16 %v2348, %v2512
    %v2817 = vadd.bf16 %v2349, %v2519
    %v2818 = vadd.bf16 %v2350, %v2526
    %v2819 = vadd.bf16 %v2351, %v2533
    %v2820 = vadd.bf16 %v2352, %v2540
    %v2821 = vadd.bf16 %v2353, %v2547
    %v2822 = vadd.bf16 %v2354, %v2554
    %v2823 = vadd.bf16 %v2355, %v2561
    %v2824 = vadd.bf16 %v2356, %v2568
    %v2825 = vmax.bf16 %v2569, 0
    %v2826 = vmax.bf16 %v2570, 0
    %v2827 = vmax.bf16 %v2571, 0
    %v2828 = vmax.bf16 %v2572, 0
    %v2829 = vmax.bf16 %v2573, 0
    %v2830 = vmax.bf16 %v2574, 0
    %v2831 = vmax.bf16 %v2575, 0
    %v2832 = vmax.bf16 %v2576, 0
    %v2833 = vmax.bf16 %v2577, 0
    %v2834 = vmax.bf16 %v2578, 0
    %v2835 = vmax.bf16 %v2579, 0
    %v2836 = vmax.bf16 %v2580, 0
    %v2837 = vmax.bf16 %v2581, 0
    %v2838 = vmax.bf16 %v2582, 0
    %v2839 = vmax.bf16 %v2583, 0
    %v2840 = vmax.bf16 %v2584, 0
    %v2841 = vmax.bf16 %v2585, 0
    %v2842 = vmax.bf16 %v2586, 0
    %v2843 = vmax.bf16 %v2587, 0
    %v2844 = vmax.bf16 %v2588, 0
    %v2845 = vmax.bf16 %v2589, 0
    %v2846 = vmax.bf16 %v2590, 0
    %v2847 = vmax.bf16 %v2591, 0
    %v2848 = vmax.bf16 %v2592, 0
    %v2849 = vmax.bf16 %v2593, 0
    %v2850 = vmax.bf16 %v2594, 0
    %v2851 = vmax.bf16 %v2595, 0
    %v2852 = vmax.bf16 %v2596, 0
    %v2853 = vmax.bf16 %v2597, 0
    %v2854 = vmax.bf16 %v2598, 0
    %v2855 = vmax.bf16 %v2599, 0
    %v2856 = vmax.bf16 %v2600, 0
    %v2857 = vmax.bf16 %v2601, 0
    %v2858 = vmax.bf16 %v2602, 0
    %v2859 = vmax.bf16 %v2603, 0
    %v2860 = vmax.bf16 %v2604, 0
    %v2861 = vmax.bf16 %v2605, 0
    %v2862 = vmax.bf16 %v2606, 0
    %v2863 = vmax.bf16 %v2607, 0
    %v2864 = vmax.bf16 %v2608, 0
    %v2865 = vmax.bf16 %v2609, 0
    %v2866 = vmax.bf16 %v2610, 0
    %v2867 = vmax.bf16 %v2611, 0
    %v2868 = vmax.bf16 %v2612, 0
    %v2869 = vmax.bf16 %v2613, 0
    %v2870 = vmax.bf16 %v2614, 0
    %v2871 = vmax.bf16 %v2615, 0
    %v2872 = vmax.bf16 %v2616, 0
    %v2873 = vmax.bf16 %v2617, 0
    %v2874 = vmax.bf16 %v2618, 0
    %v2875 = vmax.bf16 %v2619, 0
    %v2876 = vmax.bf16 %v2620, 0
    %v2877 = vmax.bf16 %v2621, 0
    %v2878 = vmax.bf16 %v2622, 0
    %v2879 = vmax.bf16 %v2623, 0
    %v2880 = vmax.bf16 %v2624, 0
    %v2881 = vmax.bf16 %v2625, 0
    %v2882 = vmax.bf16 %v2626, 0
    %v2883 = vmax.bf16 %v2627, 0
    %v2884 = vmax.bf16 %v2628, 0
    %v2885 = vmax.bf16 %v2629, 0
    %v2886 = vmax.bf16 %v2630, 0
    %v2887 = vmax.bf16 %v2631, 0
    %v2888 = vmax.bf16 %v2632, 0
    %v2889 = vmax.bf16 %v2633, 0
    %v2890 = vmax.bf16 %v2634, 0
    %v2891 = vmax.bf16 %v2635, 0
    %v2892 = vmax.bf16 %v2636, 0
    %v2893 = vmax.bf16 %v2637, 0
    %v2894 = vmax.bf16 %v2638, 0
    %v2895 = vmax.bf16 %v2639, 0
    %v2896 = vmax.bf16 %v2640, 0
    %v2897 = vmax.bf16 %v2641, 0
    %v2898 = vmax.bf16 %v2642, 0
    %v2899 = vmax.bf16 %v2643, 0
    %v2900 = vmax.bf16 %v2644, 0
    %v2901 = vmax.bf16 %v2645, 0
    %v2902 = vmax.bf16 %v2646, 0
    %v2903 = vmax.bf16 %v2647, 0
    %v2904 = vmax.bf16 %v2648, 0
    %v2905 = vmax.bf16 %v2649, 0
    %v2906 = vmax.bf16 %v2650, 0
    %v2907 = vmax.bf16 %v2651, 0
    %v2908 = vmax.bf16 %v2652, 0
    %v2909 = vmax.bf16 %v2653, 0
    %v2910 = vmax.bf16 %v2654, 0
    %v2911 = vmax.bf16 %v2655, 0
    %v2912 = vmax.bf16 %v2656, 0
    %v2913 = vmax.bf16 %v2657, 0
    %v2914 = vmax.bf16 %v2658, 0
    %v2915 = vmax.bf16 %v2659, 0
    %v2916 = vmax.bf16 %v2660, 0
    %v2917 = vmax.bf16 %v2661, 0
    %v2918 = vmax.bf16 %v2662, 0
    %v2919 = vmax.bf16 %v2663, 0
    %v2920 = vmax.bf16 %v2664, 0
    %v2921 = vmax.bf16 %v2665, 0
    %v2922 = vmax.bf16 %v2666, 0
    %v2923 = vmax.bf16 %v2667, 0
    %v2924 = vmax.bf16 %v2668, 0
    %v2925 = vmax.bf16 %v2669, 0
    %v2926 = vmax.bf16 %v2670, 0
    %v2927 = vmax.bf16 %v2671, 0
    %v2928 = vmax.bf16 %v2672, 0
    %v2929 = vmax.bf16 %v2673, 0
    %v2930 = vmax.bf16 %v2674, 0
    %v2931 = vmax.bf16 %v2675, 0
    %v2932 = vmax.bf16 %v2676, 0
    %v2933 = vmax.bf16 %v2677, 0
    %v2934 = vmax.bf16 %v2678, 0
    %v2935 = vmax.bf16 %v2679, 0
    %v2936 = vmax.bf16 %v2680, 0
    %v2937 = vmax.bf16 %v2681, 0
    %v2938 = vmax.bf16 %v2682, 0
    %v2939 = vmax.bf16 %v2683, 0
    %v2940 = vmax.bf16 %v2684, 0
    %v2941 = vmax.bf16 %v2685, 0
    %v2942 = vmax.bf16 %v2686, 0
    %v2943 = vmax.bf16 %v2687, 0
    %v2944 = vmax.bf16 %v2688, 0
    %v2945 = vmax.bf16 %v2689, 0
    %v2946 = vmax.bf16 %v2690, 0
    %v2947 = vmax.bf16 %v2691, 0
    %v2948 = vmax.bf16 %v2692, 0
    %v2949 = vmax.bf16 %v2693, 0
    %v2950 = vmax.bf16 %v2694, 0
    %v2951 = vmax.bf16 %v2695, 0
    %v2952 = vmax.bf16 %v2696, 0
    %v2953 = vmax.bf16 %v2697, 0
    %v2954 = vmax.bf16 %v2698, 0
    %v2955 = vmax.bf16 %v2699, 0
    %v2956 = vmax.bf16 %v2700, 0
    %v2957 = vmax.bf16 %v2701, 0
    %v2958 = vmax.bf16 %v2702, 0
    %v2959 = vmax.bf16 %v2703, 0
    %v2960 = vmax.bf16 %v2704, 0
    %v2961 = vmax.bf16 %v2705, 0
    %v2962 = vmax.bf16 %v2706, 0
    %v2963 = vmax.bf16 %v2707, 0
    %v2964 = vmax.bf16 %v2708, 0
    %v2965 = vmax.bf16 %v2709, 0
    %v2966 = vmax.bf16 %v2710, 0
    %v2967 = vmax.bf16 %v2711, 0
    %v2968 = vmax.bf16 %v2712, 0
    %v2969 = vmax.bf16 %v2713, 0
    %v2970 = vmax.bf16 %v2714, 0
    %v2971 = vmax.bf16 %v2715, 0
    %v2972 = vmax.bf16 %v2716, 0
    %v2973 = vmax.bf16 %v2717, 0
    %v2974 = vmax.bf16 %v2718, 0
    %v2975 = vmax.bf16 %v2719, 0
    %v2976 = vmax.bf16 %v2720, 0
    %v2977 = vmax.bf16 %v2721, 0
    %v2978 = vmax.bf16 %v2722, 0
    %v2979 = vmax.bf16 %v2723, 0
    %v2980 = vmax.bf16 %v2724, 0
    %v2981 = vmax.bf16 %v2725, 0
    %v2982 = vmax.bf16 %v2726, 0
    %v2983 = vmax.bf16 %v2727, 0
    %v2984 = vmax.bf16 %v2728, 0
    %v2985 = vmax.bf16 %v2729, 0
    %v2986 = vmax.bf16 %v2730, 0
    %v2987 = vmax.bf16 %v2731, 0
    %v2988 = vmax.bf16 %v2732, 0
    %v2989 = vmax.bf16 %v2733, 0
    %v2990 = vmax.bf16 %v2734, 0
    %v2991 = vmax.bf16 %v2735, 0
    %v2992 = vmax.bf16 %v2736, 0
    %v2993 = vmax.bf16 %v2737, 0
    %v2994 = vmax.bf16 %v2738, 0
    %v2995 = vmax.bf16 %v2739, 0
    %v2996 = vmax.bf16 %v2740, 0
    %v2997 = vmax.bf16 %v2741, 0
    %v2998 = vmax.bf16 %v2742, 0
    %v2999 = vmax.bf16 %v2743, 0
    %v3000 = vmax.bf16 %v2744, 0
    %v3001 = vmax.bf16 %v2745, 0
    %v3002 = vmax.bf16 %v2746, 0
    %v3003 = vmax.bf16 %v2747, 0
    %v3004 = vmax.bf16 %v2748, 0
    %v3005 = vmax.bf16 %v2749, 0
    %v3006 = vmax.bf16 %v2750, 0
    %v3007 = vmax.bf16 %v2751, 0
    %v3008 = vmax.bf16 %v2752, 0
    %v3009 = vmax.bf16 %v2753, 0
    %v3010 = vmax.bf16 %v2754, 0
    %v3011 = vmax.bf16 %v2755, 0
    %v3012 = vmax.bf16 %v2756, 0
    %v3013 = vmax.bf16 %v2757, 0
    %v3014 = vmax.bf16 %v2758, 0
    %v3015 = vmax.bf16 %v2759, 0
    %v3016 = vmax.bf16 %v2760, 0
    %v3017 = vmax.bf16 %v2761, 0
    %v3018 = vmax.bf16 %v2762, 0
    %v3019 = vmax.bf16 %v2763, 0
    %v3020 = vmax.bf16 %v2764, 0
    %v3021 = vmax.bf16 %v2765, 0
    %v3022 = vmax.bf16 %v2766, 0
    %v3023 = vmax.bf16 %v2767, 0
    %v3024 = vmax.bf16 %v2768, 0
    %v3025 = vmax.bf16 %v2769, 0
    %v3026 = vmax.bf16 %v2770, 0
    %v3027 = vmax.bf16 %v2771, 0
    %v3028 = vmax.bf16 %v2772, 0
    %v3029 = vmax.bf16 %v2773, 0
    %v3030 = vmax.bf16 %v2774, 0
    %v3031 = vmax.bf16 %v2775, 0
    %v3032 = vmax.bf16 %v2776, 0
    %v3033 = vmax.bf16 %v2777, 0
    %v3034 = vmax.bf16 %v2778, 0
    %v3035 = vmax.bf16 %v2779, 0
    %v3036 = vmax.bf16 %v2780, 0
    %v3037 = vmax.bf16 %v2781, 0
    %v3038 = vmax.bf16 %v2782, 0
    %v3039 = vmax.bf16 %v2783, 0
    %v3040 = vmax.bf16 %v2784, 0
    %v3041 = vmax.bf16 %v2785, 0
    %v3042 = vmax.bf16 %v2786, 0
    %v3043 = vmax.bf16 %v2787, 0
    %v3044 = vmax.bf16 %v2788, 0
    %v3045 = vmax.bf16 %v2789, 0
    %v3046 = vmax.bf16 %v2790, 0
    %v3047 = vmax.bf16 %v2791, 0
    %v3048 = vmax.bf16 %v2792, 0
    %v3049 = vmax.bf16 %v2793, 0
    %v3050 = vmax.bf16 %v2794, 0
    %v3051 = vmax.bf16 %v2795, 0
    %v3052 = vmax.bf16 %v2796, 0
    %v3053 = vmax.bf16 %v2797, 0
    %v3054 = vmax.bf16 %v2798, 0
    %v3055 = vmax.bf16 %v2799, 0
    %v3056 = vmax.bf16 %v2800, 0
    %v3057 = vmax.bf16 %v2801, 0
    %v3058 = vmax.bf16 %v2802, 0
    %v3059 = vmax.bf16 %v2803, 0
    %v3060 = vmax.bf16 %v2804, 0
    %v3061 = vmax.bf16 %v2805, 0
    %v3062 = vmax.bf16 %v2806, 0
    %v3063 = vmax.bf16 %v2807, 0
    %v3064 = vmax.bf16 %v2808, 0
    %v3065 = vmax.bf16 %v2809, 0
    %v3066 = vmax.bf16 %v2810, 0
    %v3067 = vmax.bf16 %v2811, 0
    %v3068 = vmax.bf16 %v2812, 0
    %v3069 = vmax.bf16 %v2813, 0
    %v3070 = vmax.bf16 %v2814, 0
    %v3071 = vmax.bf16 %v2815, 0
    %v3072 = vmax.bf16 %v2816, 0
    %v3073 = vmax.bf16 %v2817, 0
    %v3074 = vmax.bf16 %v2818, 0
    %v3075 = vmax.bf16 %v2819, 0
    %v3076 = vmax.bf16 %v2820, 0
    %v3077 = vmax.bf16 %v2821, 0
    %v3078 = vmax.bf16 %v2822, 0
    %v3079 = vmax.bf16 %v2823, 0
    %v3080 = vmax.bf16 %v2824, 0
    %v3081 = vld [vmem:[#allocation5] sm:$0xff]
    %v3082 = vld [vmem:[#allocation5 + $0x8] sm:$0xff]
    %v3083 = vld [vmem:[#allocation5 + $0x10] sm:$0xff]
    %v3084 = vld [vmem:[#allocation5 + $0x18] sm:$0xff]
    %v3085 = vld [vmem:[#allocation5 + $0x20] sm:$0xff]
    %v3086 = vld [vmem:[#allocation5 + $0x28] sm:$0xff]
    %v3087 = vld [vmem:[#allocation5 + $0x30] sm:$0xff]
    %v3088 = vld [vmem:[#allocation5 + $0x38] sm:$0xff]
    %v3089 = vld [vmem:[#allocation5 + $0x40] sm:$0xff]
    %v3090 = vld [vmem:[#allocation5 + $0x48] sm:$0xff]
    %v3091 = vld [vmem:[#allocation5 + $0x50] sm:$0xff]
    %v3092 = vld [vmem:[#allocation5 + $0x58] sm:$0xff]
    %v3093 = vld [vmem:[#allocation5 + $0x60] sm:$0xff]
    %v3094 = vld [vmem:[#allocation5 + $0x68] sm:$0xff]
    %v3095 = vld [vmem:[#allocation5 + $0x70] sm:$0xff]
    %v3096 = vld [vmem:[#allocation5 + $0x78] sm:$0xff]
    %v3097 = vld [vmem:[#allocation5 + $0x80] sm:$0xff]
    %v3098 = vld [vmem:[#allocation5 + $0x88] sm:$0xff]
    %v3099 = vld [vmem:[#allocation5 + $0x90] sm:$0xff]
    %v3100 = vld [vmem:[#allocation5 + $0x98] sm:$0xff]
    %v3101 = vld [vmem:[#allocation5 + $0xa0] sm:$0xff]
    %v3102 = vld [vmem:[#allocation5 + $0xa8] sm:$0xff]
    %v3103 = vld [vmem:[#allocation5 + $0xb0] sm:$0xff]
    %v3104 = vld [vmem:[#allocation5 + $0xb8] sm:$0xff]
    %v3105 = vld [vmem:[#allocation5 + $0xc0] sm:$0xff]
    %v3106 = vld [vmem:[#allocation5 + $0xc8] sm:$0xff]
    %v3107 = vld [vmem:[#allocation5 + $0xd0] sm:$0xff]
    %v3108 = vld [vmem:[#allocation5 + $0xd8] sm:$0xff]
    %v3109 = vld [vmem:[#allocation5 + $0xe0] sm:$0xff]
    %v3110 = vld [vmem:[#allocation5 + $0xe8] sm:$0xff]
    %v3111 = vld [vmem:[#allocation5 + $0xf0] sm:$0xff]
    %v3112 = vld [vmem:[#allocation5 + $0xf8] sm:$0xff]
    %v3113 = vld [vmem:[#allocation5 + $0x100] sm:$0xff]
    %v3114 = vld [vmem:[#allocation5 + $0x108] sm:$0xff]
    %v3115 = vld [vmem:[#allocation5 + $0x110] sm:$0xff]
    %v3116 = vld [vmem:[#allocation5 + $0x118] sm:$0xff]
    %v3117 = vld [vmem:[#allocation5 + $0x120] sm:$0xff]
    %v3118 = vld [vmem:[#allocation5 + $0x128] sm:$0xff]
    %v3119 = vld [vmem:[#allocation5 + $0x130] sm:$0xff]
    %v3120 = vld [vmem:[#allocation5 + $0x138] sm:$0xff]
    %v3121 = vld [vmem:[#allocation5 + $0x140] sm:$0xff]
    %v3122 = vld [vmem:[#allocation5 + $0x148] sm:$0xff]
    %v3123 = vld [vmem:[#allocation5 + $0x150] sm:$0xff]
    %v3124 = vld [vmem:[#allocation5 + $0x158] sm:$0xff]
    %v3125 = vld [vmem:[#allocation5 + $0x160] sm:$0xff]
    %v3126 = vld [vmem:[#allocation5 + $0x168] sm:$0xff]
    %v3127 = vld [vmem:[#allocation5 + $0x170] sm:$0xff]
    %v3128 = vld [vmem:[#allocation5 + $0x178] sm:$0xff]
    %v3129 = vld [vmem:[#allocation5 + $0x180] sm:$0xff]
    %v3130 = vld [vmem:[#allocation5 + $0x188] sm:$0xff]
    %v3131 = vld [vmem:[#allocation5 + $0x190] sm:$0xff]
    %v3132 = vld [vmem:[#allocation5 + $0x198] sm:$0xff]
    %v3133 = vld [vmem:[#allocation5 + $0x1a0] sm:$0xff]
    %v3134 = vld [vmem:[#allocation5 + $0x1a8] sm:$0xff]
    %v3135 = vld [vmem:[#allocation5 + $0x1b0] sm:$0xff]
    %v3136 = vld [vmem:[#allocation5 + $0x1b8] sm:$0xff]
    %v3137 = vld [vmem:[#allocation5 + $0x1c0] sm:$0xff]
    %v3138 = vld [vmem:[#allocation5 + $0x1c8] sm:$0xff]
    %v3139 = vld [vmem:[#allocation5 + $0x1d0] sm:$0xff]
    %v3140 = vld [vmem:[#allocation5 + $0x1d8] sm:$0xff]
    %v3141 = vld [vmem:[#allocation5 + $0x1e0] sm:$0xff]
    %v3142 = vld [vmem:[#allocation5 + $0x1e8] sm:$0xff]
    %v3143 = vld [vmem:[#allocation5 + $0x1f0] sm:$0xff]
    %v3144 = vld [vmem:[#allocation5 + $0x1f8] sm:$0xff]
    %v3209 = vunpack.c.l.b16 %v3081
    %v3210 = vunpack.c.h.b16 %v3081
    %v3211 = vunpack.c.l.b16 %v3082
    %v3212 = vunpack.c.h.b16 %v3082
    %v3213 = vunpack.c.l.b16 %v3083
    %v3214 = vunpack.c.h.b16 %v3083
    %v3215 = vunpack.c.l.b16 %v3084
    %v3216 = vunpack.c.h.b16 %v3084
    %v3217 = vunpack.c.l.b16 %v3085
    %v3218 = vunpack.c.h.b16 %v3085
    %v3219 = vunpack.c.l.b16 %v3086
    %v3220 = vunpack.c.h.b16 %v3086
    %v3221 = vunpack.c.l.b16 %v3087
    %v3222 = vunpack.c.h.b16 %v3087
    %v3223 = vunpack.c.l.b16 %v3088
    %v3224 = vunpack.c.h.b16 %v3088
    %v3225 = vunpack.c.l.b16 %v3089
    %v3226 = vunpack.c.h.b16 %v3089
    %v3227 = vunpack.c.l.b16 %v3090
    %v3228 = vunpack.c.h.b16 %v3090
    %v3229 = vunpack.c.l.b16 %v3091
    %v3230 = vunpack.c.h.b16 %v3091
    %v3231 = vunpack.c.l.b16 %v3092
    %v3232 = vunpack.c.h.b16 %v3092
    %v3233 = vunpack.c.l.b16 %v3093
    %v3234 = vunpack.c.h.b16 %v3093
    %v3235 = vunpack.c.l.b16 %v3094
    %v3236 = vunpack.c.h.b16 %v3094
    %v3237 = vunpack.c.l.b16 %v3095
    %v3238 = vunpack.c.h.b16 %v3095
    %v3239 = vunpack.c.l.b16 %v3096
    %v3240 = vunpack.c.h.b16 %v3096
    %v3241 = vunpack.c.l.b16 %v3097
    %v3242 = vunpack.c.h.b16 %v3097
    %v3243 = vunpack.c.l.b16 %v3098
    %v3244 = vunpack.c.h.b16 %v3098
    %v3245 = vunpack.c.l.b16 %v3099
    %v3246 = vunpack.c.h.b16 %v3099
    %v3247 = vunpack.c.l.b16 %v3100
    %v3248 = vunpack.c.h.b16 %v3100
    %v3249 = vunpack.c.l.b16 %v3101
    %v3250 = vunpack.c.h.b16 %v3101
    %v3251 = vunpack.c.l.b16 %v3102
    %v3252 = vunpack.c.h.b16 %v3102
    %v3253 = vunpack.c.l.b16 %v3103
    %v3254 = vunpack.c.h.b16 %v3103
    %v3255 = vunpack.c.l.b16 %v3104
    %v3256 = vunpack.c.h.b16 %v3104
    %v3257 = vunpack.c.l.b16 %v3105
    %v3258 = vunpack.c.h.b16 %v3105
    %v3259 = vunpack.c.l.b16 %v3106
    %v3260 = vunpack.c.h.b16 %v3106
    %v3261 = vunpack.c.l.b16 %v3107
    %v3262 = vunpack.c.h.b16 %v3107
    %v3263 = vunpack.c.l.b16 %v3108
    %v3264 = vunpack.c.h.b16 %v3108
    %v3265 = vunpack.c.l.b16 %v3109
    %v3266 = vunpack.c.h.b16 %v3109
    %v3267 = vunpack.c.l.b16 %v3110
    %v3268 = vunpack.c.h.b16 %v3110
    %v3269 = vunpack.c.l.b16 %v3111
    %v3270 = vunpack.c.h.b16 %v3111
    %v3271 = vunpack.c.l.b16 %v3112
    %v3272 = vunpack.c.h.b16 %v3112
    %v3273 = vunpack.c.l.b16 %v3113
    %v3274 = vunpack.c.h.b16 %v3113
    %v3275 = vunpack.c.l.b16 %v3114
    %v3276 = vunpack.c.h.b16 %v3114
    %v3277 = vunpack.c.l.b16 %v3115
    %v3278 = vunpack.c.h.b16 %v3115
    %v3279 = vunpack.c.l.b16 %v3116
    %v3280 = vunpack.c.h.b16 %v3116
    %v3281 = vunpack.c.l.b16 %v3117
    %v3282 = vunpack.c.h.b16 %v3117
    %v3283 = vunpack.c.l.b16 %v3118
    %v3284 = vunpack.c.h.b16 %v3118
    %v3285 = vunpack.c.l.b16 %v3119
    %v3286 = vunpack.c.h.b16 %v3119
    %v3287 = vunpack.c.l.b16 %v3120
    %v3288 = vunpack.c.h.b16 %v3120
    %v3289 = vunpack.c.l.b16 %v3121
    %v3290 = vunpack.c.h.b16 %v3121
    %v3291 = vunpack.c.l.b16 %v3122
    %v3292 = vunpack.c.h.b16 %v3122
    %v3293 = vunpack.c.l.b16 %v3123
    %v3294 = vunpack.c.h.b16 %v3123
    %v3295 = vunpack.c.l.b16 %v3124
    %v3296 = vunpack.c.h.b16 %v3124
    %v3297 = vunpack.c.l.b16 %v3125
    %v3298 = vunpack.c.h.b16 %v3125
    %v3299 = vunpack.c.l.b16 %v3126
    %v3300 = vunpack.c.h.b16 %v3126
    %v3301 = vunpack.c.l.b16 %v3127
    %v3302 = vunpack.c.h.b16 %v3127
    %v3303 = vunpack.c.l.b16 %v3128
    %v3304 = vunpack.c.h.b16 %v3128
    %v3305 = vunpack.c.l.b16 %v3129
    %v3306 = vunpack.c.h.b16 %v3129
    %v3307 = vunpack.c.l.b16 %v3130
    %v3308 = vunpack.c.h.b16 %v3130
    %v3309 = vunpack.c.l.b16 %v3131
    %v3310 = vunpack.c.h.b16 %v3131
    %v3311 = vunpack.c.l.b16 %v3132
    %v3312 = vunpack.c.h.b16 %v3132
    %v3313 = vunpack.c.l.b16 %v3133
    %v3314 = vunpack.c.h.b16 %v3133
    %v3315 = vunpack.c.l.b16 %v3134
    %v3316 = vunpack.c.h.b16 %v3134
    %v3317 = vunpack.c.l.b16 %v3135
    %v3318 = vunpack.c.h.b16 %v3135
    %v3319 = vunpack.c.l.b16 %v3136
    %v3320 = vunpack.c.h.b16 %v3136
    %v3321 = vunpack.c.l.b16 %v3137
    %v3322 = vunpack.c.h.b16 %v3137
    %v3323 = vunpack.c.l.b16 %v3138
    %v3324 = vunpack.c.h.b16 %v3138
    %v3325 = vunpack.c.l.b16 %v3139
    %v3326 = vunpack.c.h.b16 %v3139
    %v3327 = vunpack.c.l.b16 %v3140
    %v3328 = vunpack.c.h.b16 %v3140
    %v3329 = vunpack.c.l.b16 %v3141
    %v3330 = vunpack.c.h.b16 %v3141
    %v3331 = vunpack.c.l.b16 %v3142
    %v3332 = vunpack.c.h.b16 %v3142
    %v3333 = vunpack.c.l.b16 %v3143
    %v3334 = vunpack.c.h.b16 %v3143
    %v3335 = vunpack.c.l.b16 %v3144
    %v3336 = vunpack.c.h.b16 %v3144
    %v3337 = vpack.c.b16 %v3211, %v3209
    %v3338 = vpack.c.b16 %v3212, %v3210
    %v3339 = vpack.c.b16 %v3215, %v3213
    %v3340 = vpack.c.b16 %v3216, %v3214
    %v3341 = vpack.c.b16 %v3219, %v3217
    %v3342 = vpack.c.b16 %v3220, %v3218
    %v3343 = vpack.c.b16 %v3223, %v3221
    %v3344 = vpack.c.b16 %v3224, %v3222
    %v3345 = vpack.c.b16 %v3227, %v3225
    %v3346 = vpack.c.b16 %v3228, %v3226
    %v3347 = vpack.c.b16 %v3231, %v3229
    %v3348 = vpack.c.b16 %v3232, %v3230
    %v3349 = vpack.c.b16 %v3235, %v3233
    %v3350 = vpack.c.b16 %v3236, %v3234
    %v3351 = vpack.c.b16 %v3239, %v3237
    %v3352 = vpack.c.b16 %v3240, %v3238
    %v3353 = vpack.c.b16 %v3243, %v3241
    %v3354 = vpack.c.b16 %v3244, %v3242
    %v3355 = vpack.c.b16 %v3247, %v3245
    %v3356 = vpack.c.b16 %v3248, %v3246
    %v3357 = vpack.c.b16 %v3251, %v3249
    %v3358 = vpack.c.b16 %v3252, %v3250
    %v3359 = vpack.c.b16 %v3255, %v3253
    %v3360 = vpack.c.b16 %v3256, %v3254
    %v3361 = vpack.c.b16 %v3259, %v3257
    %v3362 = vpack.c.b16 %v3260, %v3258
    %v3363 = vpack.c.b16 %v3263, %v3261
    %v3364 = vpack.c.b16 %v3264, %v3262
    %v3365 = vpack.c.b16 %v3267, %v3265
    %v3366 = vpack.c.b16 %v3268, %v3266
    %v3367 = vpack.c.b16 %v3271, %v3269
    %v3368 = vpack.c.b16 %v3272, %v3270
    %v3369 = vpack.c.b16 %v3275, %v3273
    %v3370 = vpack.c.b16 %v3276, %v3274
    %v3371 = vpack.c.b16 %v3279, %v3277
    %v3372 = vpack.c.b16 %v3280, %v3278
    %v3373 = vpack.c.b16 %v3283, %v3281
    %v3374 = vpack.c.b16 %v3284, %v3282
    %v3375 = vpack.c.b16 %v3287, %v3285
    %v3376 = vpack.c.b16 %v3288, %v3286
    %v3377 = vpack.c.b16 %v3291, %v3289
    %v3378 = vpack.c.b16 %v3292, %v3290
    %v3379 = vpack.c.b16 %v3295, %v3293
    %v3380 = vpack.c.b16 %v3296, %v3294
    %v3381 = vpack.c.b16 %v3299, %v3297
    %v3382 = vpack.c.b16 %v3300, %v3298
    %v3383 = vpack.c.b16 %v3303, %v3301
    %v3384 = vpack.c.b16 %v3304, %v3302
    %v3385 = vpack.c.b16 %v3307, %v3305
    %v3386 = vpack.c.b16 %v3308, %v3306
    %v3387 = vpack.c.b16 %v3311, %v3309
    %v3388 = vpack.c.b16 %v3312, %v3310
    %v3389 = vpack.c.b16 %v3315, %v3313
    %v3390 = vpack.c.b16 %v3316, %v3314
    %v3391 = vpack.c.b16 %v3319, %v3317
    %v3392 = vpack.c.b16 %v3320, %v3318
    %v3393 = vpack.c.b16 %v3323, %v3321
    %v3394 = vpack.c.b16 %v3324, %v3322
    %v3395 = vpack.c.b16 %v3327, %v3325
    %v3396 = vpack.c.b16 %v3328, %v3326
    %v3397 = vpack.c.b16 %v3331, %v3329
    %v3398 = vpack.c.b16 %v3332, %v3330
    %v3399 = vpack.c.b16 %v3335, %v3333
    %v3400 = vpack.c.b16 %v3336, %v3334
    %3465 = vmatprep.subr.bf16.mxu0 %v3338
    %3466 = vmatpush1.bf16.msra.mxu0 %v3337
    %3467 = vmatprep.subr.bf16.mxu0 %v3340
    %3468 = vmatpush1.bf16.msra.mxu0 %v3339
    %3469 = vmatprep.subr.bf16.mxu0 %v3342
    %3470 = vmatpush1.bf16.msra.mxu0 %v3341
    %3471 = vmatprep.subr.bf16.mxu0 %v3344
    %3472 = vmatpush1.bf16.msra.mxu0 %v3343
    %3473 = vmatprep.subr.bf16.mxu0 %v3346
    %3474 = vmatpush1.bf16.msra.mxu0 %v3345
    %3475 = vmatprep.subr.bf16.mxu0 %v3348
    %3476 = vmatpush1.bf16.msra.mxu0 %v3347
    %3477 = vmatprep.subr.bf16.mxu0 %v3350
    %3478 = vmatpush1.bf16.msra.mxu0 %v3349
    %3479 = vmatprep.subr.bf16.mxu0 %v3352
    %3480 = vmatpush1.bf16.msra.mxu0 %v3351
    %3481 = vmatprep.subr.bf16.mxu0 %v3354
    %3482 = vmatpush1.bf16.msra.mxu0 %v3353
    %3483 = vmatprep.subr.bf16.mxu0 %v3356
    %3484 = vmatpush1.bf16.msra.mxu0 %v3355
    %3485 = vmatprep.subr.bf16.mxu0 %v3358
    %3486 = vmatpush1.bf16.msra.mxu0 %v3357
    %3487 = vmatprep.subr.bf16.mxu0 %v3360
    %3488 = vmatpush1.bf16.msra.mxu0 %v3359
    %3489 = vmatprep.subr.bf16.mxu0 %v3362
    %3490 = vmatpush1.bf16.msra.mxu0 %v3361
    %3491 = vmatprep.subr.bf16.mxu0 %v3364
    %3492 = vmatpush1.bf16.msra.mxu0 %v3363
    %3493 = vmatprep.subr.bf16.mxu0 %v3366
    %3494 = vmatpush1.bf16.msra.mxu0 %v3365
    %3495 = vmatprep.subr.bf16.mxu0 %v3368
    %3496 = vmatpush1.bf16.msra.mxu0 %v3367
    %3497 = vmatprep.mubr.bf16.mxu0 %v2826
    %3498 = vmatmul.mubr.bf16.gmra.mrb[0].mxu0 %v2825
    %v3499 = vpop.f32.mrb[0].mxu0
    %v3500 = vadd.f32 0.0, %v3499
    %v3501 = vpop.f32.mrb[0].mxu0
    %v3502 = vadd.f32 0.0, %v3501
    %v3503 = vpop.f32.mrb[0].mxu0
    %v3504 = vadd.f32 0.0, %v3503
    %v3505 = vpop.f32.mrb[0].mxu0
    %v3506 = vadd.f32 0.0, %v3505
    %3507 = vmatprep.mubr.bf16.mxu0 %v2842
    %3508 = vmatmul.mubr.bf16.gmra.mrb[0].mxu0 %v2841
    %v3509 = vpop.f32.mrb[0].mxu0
    %v3510 = vadd.f32 0.0, %v3509
    %v3511 = vpop.f32.mrb[0].mxu0
    %v3512 = vadd.f32 0.0, %v3511
    %v3513 = vpop.f32.mrb[0].mxu0
    %v3514 = vadd.f32 0.0, %v3513
    %v3515 = vpop.f32.mrb[0].mxu0
    %v3516 = vadd.f32 0.0, %v3515
    %3517 = vmatprep.mubr.bf16.mxu0 %v2858
    %3518 = vmatmul.mubr.bf16.gmra.mrb[0].mxu0 %v2857
    %v3519 = vpop.f32.mrb[0].mxu0
    %v3520 = vadd.f32 0.0, %v3519
    %v3521 = vpop.f32.mrb[0].mxu0
    %v3522 = vadd.f32 0.0, %v3521
    %v3523 = vpop.f32.mrb[0].mxu0
    %v3524 = vadd.f32 0.0, %v3523
    %v3525 = vpop.f32.mrb[0].mxu0
    %v3526 = vadd.f32 0.0, %v3525
    %3527 = vmatprep.mubr.bf16.mxu0 %v2874
    %3528 = vmatmul.mubr.bf16.gmra.mrb[0].mxu0 %v2873
    %v3529 = vpop.f32.mrb[0].mxu0
    %v3530 = vadd.f32 0.0, %v3529
    %v3531 = vpop.f32.mrb[0].mxu0
    %v3532 = vadd.f32 0.0, %v3531
    %v3533 = vpop.f32.mrb[0].mxu0
    %v3534 = vadd.f32 0.0, %v3533
    %v3535 = vpop.f32.mrb[0].mxu0
    %v3536 = vadd.f32 0.0, %v3535
    %3537 = vmatprep.mubr.bf16.mxu0 %v2890
    %3538 = vmatmul.mubr.bf16.gmra.mrb[0].mxu0 %v2889
    %v3539 = vpop.f32.mrb[0].mxu0
    %v3540 = vadd.f32 0.0, %v3539
    %v3541 = vpop.f32.mrb[0].mxu0
    %v3542 = vadd.f32 0.0, %v3541
    %v3543 = vpop.f32.mrb[0].mxu0
    %v3544 = vadd.f32 0.0, %v3543
    %v3545 = vpop.f32.mrb[0].mxu0
    %v3546 = vadd.f32 0.0, %v3545
    %3547 = vmatprep.mubr.bf16.mxu0 %v2906
    %3548 = vmatmul.mubr.bf16.gmra.mrb[0].mxu0 %v2905
    %v3549 = vpop.f32.mrb[0].mxu0
    %v3550 = vadd.f32 0.0, %v3549
    %v3551 = vpop.f32.mrb[0].mxu0
    %v3552 = vadd.f32 0.0, %v3551
    %v3553 = vpop.f32.mrb[0].mxu0
    %v3554 = vadd.f32 0.0, %v3553
    %v3555 = vpop.f32.mrb[0].mxu0
    %v3556 = vadd.f32 0.0, %v3555
    %3557 = vmatprep.mubr.bf16.mxu0 %v2922
    %3558 = vmatmul.mubr.bf16.gmra.mrb[0].mxu0 %v2921
    %v3559 = vpop.f32.mrb[0].mxu0
    %v3560 = vadd.f32 0.0, %v3559
    %v3561 = vpop.f32.mrb[0].mxu0
    %v3562 = vadd.f32 0.0, %v3561
    %v3563 = vpop.f32.mrb[0].mxu0
    %v3564 = vadd.f32 0.0, %v3563
    %v3565 = vpop.f32.mrb[0].mxu0
    %v3566 = vadd.f32 0.0, %v3565
    %3567 = vmatprep.mubr.bf16.mxu0 %v2938
    %3568 = vmatmul.mubr.bf16.gmra.mrb[0].mxu0 %v2937
    %v3569 = vpop.f32.mrb[0].mxu0
    %v3570 = vadd.f32 0.0, %v3569
    %v3571 = vpop.f32.mrb[0].mxu0
    %v3572 = vadd.f32 0.0, %v3571
    %v3573 = vpop.f32.mrb[0].mxu0
    %v3574 = vadd.f32 0.0, %v3573
    %v3575 = vpop.f32.mrb[0].mxu0
    %v3576 = vadd.f32 0.0, %v3575
    %3577 = vmatprep.mubr.bf16.mxu0 %v2954
    %3578 = vmatmul.mubr.bf16.gmra.mrb[0].mxu0 %v2953
    %v3579 = vpop.f32.mrb[0].mxu0
    %v3580 = vadd.f32 0.0, %v3579
    %v3581 = vpop.f32.mrb[0].mxu0
    %v3582 = vadd.f32 0.0, %v3581
    %v3583 = vpop.f32.mrb[0].mxu0
    %v3584 = vadd.f32 0.0, %v3583
    %v3585 = vpop.f32.mrb[0].mxu0
    %v3586 = vadd.f32 0.0, %v3585
    %3587 = vmatprep.mubr.bf16.mxu0 %v2970
    %3588 = vmatmul.mubr.bf16.gmra.mrb[0].mxu0 %v2969
    %v3589 = vpop.f32.mrb[0].mxu0
    %v3590 = vadd.f32 0.0, %v3589
    %v3591 = vpop.f32.mrb[0].mxu0
    %v3592 = vadd.f32 0.0, %v3591
    %v3593 = vpop.f32.mrb[0].mxu0
    %v3594 = vadd.f32 0.0, %v3593
    %v3595 = vpop.f32.mrb[0].mxu0
    %v3596 = vadd.f32 0.0, %v3595
    %3597 = vmatprep.mubr.bf16.mxu0 %v2986
    %3598 = vmatmul.mubr.bf16.gmra.mrb[0].mxu0 %v2985
    %v3599 = vpop.f32.mrb[0].mxu0
    %v3600 = vadd.f32 0.0, %v3599
    %v3601 = vpop.f32.mrb[0].mxu0
    %v3602 = vadd.f32 0.0, %v3601
    %v3603 = vpop.f32.mrb[0].mxu0
    %v3604 = vadd.f32 0.0, %v3603
    %v3605 = vpop.f32.mrb[0].mxu0
    %v3606 = vadd.f32 0.0, %v3605
    %3607 = vmatprep.mubr.bf16.mxu0 %v3002
    %3608 = vmatmul.mubr.bf16.gmra.mrb[0].mxu0 %v3001
    %v3609 = vpop.f32.mrb[0].mxu0
    %v3610 = vadd.f32 0.0, %v3609
    %v3611 = vpop.f32.mrb[0].mxu0
    %v3612 = vadd.f32 0.0, %v3611
    %v3613 = vpop.f32.mrb[0].mxu0
    %v3614 = vadd.f32 0.0, %v3613
    %v3615 = vpop.f32.mrb[0].mxu0
    %v3616 = vadd.f32 0.0, %v3615
    %3617 = vmatprep.mubr.bf16.mxu0 %v3018
    %3618 = vmatmul.mubr.bf16.gmra.mrb[0].mxu0 %v3017
    %v3619 = vpop.f32.mrb[0].mxu0
    %v3620 = vadd.f32 0.0, %v3619
    %v3621 = vpop.f32.mrb[0].mxu0
    %v3622 = vadd.f32 0.0, %v3621
    %v3623 = vpop.f32.mrb[0].mxu0
    %v3624 = vadd.f32 0.0, %v3623
    %v3625 = vpop.f32.mrb[0].mxu0
    %v3626 = vadd.f32 0.0, %v3625
    %3627 = vmatprep.mubr.bf16.mxu0 %v3034
    %3628 = vmatmul.mubr.bf16.gmra.mrb[0].mxu0 %v3033
    %v3629 = vpop.f32.mrb[0].mxu0
    %v3630 = vadd.f32 0.0, %v3629
    %v3631 = vpop.f32.mrb[0].mxu0
    %v3632 = vadd.f32 0.0, %v3631
    %v3633 = vpop.f32.mrb[0].mxu0
    %v3634 = vadd.f32 0.0, %v3633
    %v3635 = vpop.f32.mrb[0].mxu0
    %v3636 = vadd.f32 0.0, %v3635
    %3637 = vmatprep.mubr.bf16.mxu0 %v3050
    %3638 = vmatmul.mubr.bf16.gmra.mrb[0].mxu0 %v3049
    %v3639 = vpop.f32.mrb[0].mxu0
    %v3640 = vadd.f32 0.0, %v3639
    %v3641 = vpop.f32.mrb[0].mxu0
    %v3642 = vadd.f32 0.0, %v3641
    %v3643 = vpop.f32.mrb[0].mxu0
    %v3644 = vadd.f32 0.0, %v3643
    %v3645 = vpop.f32.mrb[0].mxu0
    %v3646 = vadd.f32 0.0, %v3645
    %3647 = vmatprep.mubr.bf16.mxu0 %v3066
    %3648 = vmatmul.mubr.bf16.gmra.mrb[0].mxu0 %v3065
    %v3649 = vpop.f32.mrb[0].mxu0
    %v3650 = vadd.f32 0.0, %v3649
    %v3651 = vpop.f32.mrb[0].mxu0
    %v3652 = vadd.f32 0.0, %v3651
    %v3653 = vpop.f32.mrb[0].mxu0
    %v3654 = vadd.f32 0.0, %v3653
    %v3655 = vpop.f32.mrb[0].mxu0
    %v3656 = vadd.f32 0.0, %v3655
    %3657 = vdwg.mxu0
    %3658 = vmatprep.subr.bf16.mxu0 %v3370
    %3659 = vmatpush1.bf16.msra.mxu0 %v3369
    %3660 = vmatprep.subr.bf16.mxu0 %v3372
    %3661 = vmatpush1.bf16.msra.mxu0 %v3371
    %3662 = vmatprep.subr.bf16.mxu0 %v3374
    %3663 = vmatpush1.bf16.msra.mxu0 %v3373
    %3664 = vmatprep.subr.bf16.mxu0 %v3376
    %3665 = vmatpush1.bf16.msra.mxu0 %v3375
    %3666 = vmatprep.subr.bf16.mxu0 %v3378
    %3667 = vmatpush1.bf16.msra.mxu0 %v3377
    %3668 = vmatprep.subr.bf16.mxu0 %v3380
    %3669 = vmatpush1.bf16.msra.mxu0 %v3379
    %3670 = vmatprep.subr.bf16.mxu0 %v3382
    %3671 = vmatpush1.bf16.msra.mxu0 %v3381
    %3672 = vmatprep.subr.bf16.mxu0 %v3384
    %3673 = vmatpush1.bf16.msra.mxu0 %v3383
    %3674 = vmatprep.subr.bf16.mxu0 %v3386
    %3675 = vmatpush1.bf16.msra.mxu0 %v3385
    %3676 = vmatprep.subr.bf16.mxu0 %v3388
    %3677 = vmatpush1.bf16.msra.mxu0 %v3387
    %3678 = vmatprep.subr.bf16.mxu0 %v3390
    %3679 = vmatpush1.bf16.msra.mxu0 %v3389
    %3680 = vmatprep.subr.bf16.mxu0 %v3392
    %3681 = vmatpush1.bf16.msra.mxu0 %v3391
    %3682 = vmatprep.subr.bf16.mxu0 %v3394
    %3683 = vmatpush1.bf16.msra.mxu0 %v3393
    %3684 = vmatprep.subr.bf16.mxu0 %v3396
    %3685 = vmatpush1.bf16.msra.mxu0 %v3395
    %3686 = vmatprep.subr.bf16.mxu0 %v3398
    %3687 = vmatpush1.bf16.msra.mxu0 %v3397
    %3688 = vmatprep.subr.bf16.mxu0 %v3400
    %3689 = vmatpush1.bf16.msra.mxu0 %v3399
    %3690 = vmatprep.mubr.bf16.mxu0 %v2828
    %3691 = vmatmul.mubr.bf16.gmra.mrb[0].mxu0 %v2827
    %v3692 = vpop.f32.mrb[0].mxu0
    %v3693 = vadd.f32 %v3500, %v3692
    %v3694 = vpop.f32.mrb[0].mxu0
    %v3695 = vadd.f32 %v3502, %v3694
    %v3696 = vpop.f32.mrb[0].mxu0
    %v3697 = vadd.f32 %v3504, %v3696
    %v3698 = vpop.f32.mrb[0].mxu0
    %v3699 = vadd.f32 %v3506, %v3698
    %3700 = vmatprep.mubr.bf16.mxu0 %v2844
    %3701 = vmatmul.mubr.bf16.gmra.mrb[0].mxu0 %v2843
    %v3702 = vpop.f32.mrb[0].mxu0
    %v3703 = vadd.f32 %v3510, %v3702
    %v3704 = vpop.f32.mrb[0].mxu0
    %v3705 = vadd.f32 %v3512, %v3704
    %v3706 = vpop.f32.mrb[0].mxu0
    %v3707 = vadd.f32 %v3514, %v3706
    %v3708 = vpop.f32.mrb[0].mxu0
    %v3709 = vadd.f32 %v3516, %v3708
    %3710 = vmatprep.mubr.bf16.mxu0 %v2860
    %3711 = vmatmul.mubr.bf16.gmra.mrb[0].mxu0 %v2859
    %v3712 = vpop.f32.mrb[0].mxu0
    %v3713 = vadd.f32 %v3520, %v3712
    %v3714 = vpop.f32.mrb[0].mxu0
    %v3715 = vadd.f32 %v3522, %v3714
    %v3716 = vpop.f32.mrb[0].mxu0
    %v3717 = vadd.f32 %v3524, %v3716
    %v3718 = vpop.f32.mrb[0].mxu0
    %v3719 = vadd.f32 %v3526, %v3718
    %3720 = vmatprep.mubr.bf16.mxu0 %v2876
    %3721 = vmatmul.mubr.bf16.gmra.mrb[0].mxu0 %v2875
    %v3722 = vpop.f32.mrb[0].mxu0
    %v3723 = vadd.f32 %v3530, %v3722
    %v3724 = vpop.f32.mrb[0].mxu0
    %v3725 = vadd.f32 %v3532, %v3724
    %v3726 = vpop.f32.mrb[0].mxu0
    %v3727 = vadd.f32 %v3534, %v3726
    %v3728 = vpop.f32.mrb[0].mxu0
    %v3729 = vadd.f32 %v3536, %v3728
    %3730 = vmatprep.mubr.bf16.mxu0 %v2892
    %3731 = vmatmul.mubr.bf16.gmra.mrb[0].mxu0 %v2891
    %v3732 = vpop.f32.mrb[0].mxu0
    %v3733 = vadd.f32 %v3540, %v3732
    %v3734 = vpop.f32.mrb[0].mxu0
    %v3735 = vadd.f32 %v3542, %v3734
    %v3736 = vpop.f32.mrb[0].mxu0
    %v3737 = vadd.f32 %v3544, %v3736
    %v3738 = vpop.f32.mrb[0].mxu0
    %v3739 = vadd.f32 %v3546, %v3738
    %3740 = vmatprep.mubr.bf16.mxu0 %v2908
    %3741 = vmatmul.mubr.bf16.gmra.mrb[0].mxu0 %v2907
    %v3742 = vpop.f32.mrb[0].mxu0
    %v3743 = vadd.f32 %v3550, %v3742
    %v3744 = vpop.f32.mrb[0].mxu0
    %v3745 = vadd.f32 %v3552, %v3744
    %v3746 = vpop.f32.mrb[0].mxu0
    %v3747 = vadd.f32 %v3554, %v3746
    %v3748 = vpop.f32.mrb[0].mxu0
    %v3749 = vadd.f32 %v3556, %v3748
    %3750 = vmatprep.mubr.bf16.mxu0 %v2924
    %3751 = vmatmul.mubr.bf16.gmra.mrb[0].mxu0 %v2923
    %v3752 = vpop.f32.mrb[0].mxu0
    %v3753 = vadd.f32 %v3560, %v3752
    %v3754 = vpop.f32.mrb[0].mxu0
    %v3755 = vadd.f32 %v3562, %v3754
    %v3756 = vpop.f32.mrb[0].mxu0
    %v3757 = vadd.f32 %v3564, %v3756
    %v3758 = vpop.f32.mrb[0].mxu0
    %v3759 = vadd.f32 %v3566, %v3758
    %3760 = vmatprep.mubr.bf16.mxu0 %v2940
    %3761 = vmatmul.mubr.bf16.gmra.mrb[0].mxu0 %v2939
    %v3762 = vpop.f32.mrb[0].mxu0
    %v3763 = vadd.f32 %v3570, %v3762
    %v3764 = vpop.f32.mrb[0].mxu0
    %v3765 = vadd.f32 %v3572, %v3764
    %v3766 = vpop.f32.mrb[0].mxu0
    %v3767 = vadd.f32 %v3574, %v3766
    %v3768 = vpop.f32.mrb[0].mxu0
    %v3769 = vadd.f32 %v3576, %v3768
    %3770 = vmatprep.mubr.bf16.mxu0 %v2956
    %3771 = vmatmul.mubr.bf16.gmra.mrb[0].mxu0 %v2955
    %v3772 = vpop.f32.mrb[0].mxu0
    %v3773 = vadd.f32 %v3580, %v3772
    %v3774 = vpop.f32.mrb[0].mxu0
    %v3775 = vadd.f32 %v3582, %v3774
    %v3776 = vpop.f32.mrb[0].mxu0
    %v3777 = vadd.f32 %v3584, %v3776
    %v3778 = vpop.f32.mrb[0].mxu0
    %v3779 = vadd.f32 %v3586, %v3778
    %3780 = vmatprep.mubr.bf16.mxu0 %v2972
    %3781 = vmatmul.mubr.bf16.gmra.mrb[0].mxu0 %v2971
    %v3782 = vpop.f32.mrb[0].mxu0
    %v3783 = vadd.f32 %v3590, %v3782
    %v3784 = vpop.f32.mrb[0].mxu0
    %v3785 = vadd.f32 %v3592, %v3784
    %v3786 = vpop.f32.mrb[0].mxu0
    %v3787 = vadd.f32 %v3594, %v3786
    %v3788 = vpop.f32.mrb[0].mxu0
    %v3789 = vadd.f32 %v3596, %v3788
    %3790 = vmatprep.mubr.bf16.mxu0 %v2988
    %3791 = vmatmul.mubr.bf16.gmra.mrb[0].mxu0 %v2987
    %v3792 = vpop.f32.mrb[0].mxu0
    %v3793 = vadd.f32 %v3600, %v3792
    %v3794 = vpop.f32.mrb[0].mxu0
    %v3795 = vadd.f32 %v3602, %v3794
    %v3796 = vpop.f32.mrb[0].mxu0
    %v3797 = vadd.f32 %v3604, %v3796
    %v3798 = vpop.f32.mrb[0].mxu0
    %v3799 = vadd.f32 %v3606, %v3798
    %3800 = vmatprep.mubr.bf16.mxu0 %v3004
    %3801 = vmatmul.mubr.bf16.gmra.mrb[0].mxu0 %v3003
    %v3802 = vpop.f32.mrb[0].mxu0
    %v3803 = vadd.f32 %v3610, %v3802
    %v3804 = vpop.f32.mrb[0].mxu0
    %v3805 = vadd.f32 %v3612, %v3804
    %v3806 = vpop.f32.mrb[0].mxu0
    %v3807 = vadd.f32 %v3614, %v3806
    %v3808 = vpop.f32.mrb[0].mxu0
    %v3809 = vadd.f32 %v3616, %v3808
    %3810 = vmatprep.mubr.bf16.mxu0 %v3020
    %3811 = vmatmul.mubr.bf16.gmra.mrb[0].mxu0 %v3019
    %v3812 = vpop.f32.mrb[0].mxu0
    %v3813 = vadd.f32 %v3620, %v3812
    %v3814 = vpop.f32.mrb[0].mxu0
    %v3815 = vadd.f32 %v3622, %v3814
    %v3816 = vpop.f32.mrb[0].mxu0
    %v3817 = vadd.f32 %v3624, %v3816
    %v3818 = vpop.f32.mrb[0].mxu0
    %v3819 = vadd.f32 %v3626, %v3818
    %3820 = vmatprep.mubr.bf16.mxu0 %v3036
    %3821 = vmatmul.mubr.bf16.gmra.mrb[0].mxu0 %v3035
    %v3822 = vpop.f32.mrb[0].mxu0
    %v3823 = vadd.f32 %v3630, %v3822
    %v3824 = vpop.f32.mrb[0].mxu0
    %v3825 = vadd.f32 %v3632, %v3824
    %v3826 = vpop.f32.mrb[0].mxu0
    %v3827 = vadd.f32 %v3634, %v3826
    %v3828 = vpop.f32.mrb[0].mxu0
    %v3829 = vadd.f32 %v3636, %v3828
    %3830 = vmatprep.mubr.bf16.mxu0 %v3052
    %3831 = vmatmul.mubr.bf16.gmra.mrb[0].mxu0 %v3051
    %v3832 = vpop.f32.mrb[0].mxu0
    %v3833 = vadd.f32 %v3640, %v3832
    %v3834 = vpop.f32.mrb[0].mxu0
    %v3835 = vadd.f32 %v3642, %v3834
    %v3836 = vpop.f32.mrb[0].mxu0
    %v3837 = vadd.f32 %v3644, %v3836
    %v3838 = vpop.f32.mrb[0].mxu0
    %v3839 = vadd.f32 %v3646, %v3838
    %3840 = vmatprep.mubr.bf16.mxu0 %v3068
    %3841 = vmatmul.mubr.bf16.gmra.mrb[0].mxu0 %v3067
    %v3842 = vpop.f32.mrb[0].mxu0
    %v3843 = vadd.f32 %v3650, %v3842
    %v3844 = vpop.f32.mrb[0].mxu0
    %v3845 = vadd.f32 %v3652, %v3844
    %v3846 = vpop.f32.mrb[0].mxu0
    %v3847 = vadd.f32 %v3654, %v3846
    %v3848 = vpop.f32.mrb[0].mxu0
    %v3849 = vadd.f32 %v3656, %v3848
    %3850 = vdwg.mxu0
    %v3851 = vpack.c.bf16 %v3697, %v3693
    %v3852 = vpack.c.bf16 %v3699, %v3695
    %v3853 = vpack.c.bf16 %v3707, %v3703
    %v3854 = vpack.c.bf16 %v3709, %v3705
    %v3855 = vpack.c.bf16 %v3717, %v3713
    %v3856 = vpack.c.bf16 %v3719, %v3715
    %v3857 = vpack.c.bf16 %v3727, %v3723
    %v3858 = vpack.c.bf16 %v3729, %v3725
    %v3859 = vpack.c.bf16 %v3737, %v3733
    %v3860 = vpack.c.bf16 %v3739, %v3735
    %v3861 = vpack.c.bf16 %v3747, %v3743
    %v3862 = vpack.c.bf16 %v3749, %v3745
    %v3863 = vpack.c.bf16 %v3757, %v3753
    %v3864 = vpack.c.bf16 %v3759, %v3755
    %v3865 = vpack.c.bf16 %v3767, %v3763
    %v3866 = vpack.c.bf16 %v3769, %v3765
    %v3867 = vpack.c.bf16 %v3777, %v3773
    %v3868 = vpack.c.bf16 %v3779, %v3775
    %v3869 = vpack.c.bf16 %v3787, %v3783
    %v3870 = vpack.c.bf16 %v3789, %v3785
    %v3871 = vpack.c.bf16 %v3797, %v3793
    %v3872 = vpack.c.bf16 %v3799, %v3795
    %v3873 = vpack.c.bf16 %v3807, %v3803
    %v3874 = vpack.c.bf16 %v3809, %v3805
    %v3875 = vpack.c.bf16 %v3817, %v3813
    %v3876 = vpack.c.bf16 %v3819, %v3815
    %v3877 = vpack.c.bf16 %v3827, %v3823
    %v3878 = vpack.c.bf16 %v3829, %v3825
    %v3879 = vpack.c.bf16 %v3837, %v3833
    %v3880 = vpack.c.bf16 %v3839, %v3835
    %v3881 = vpack.c.bf16 %v3847, %v3843
    %v3882 = vpack.c.bf16 %v3849, %v3845
    %v3883 = vld [vmem:[%s4] sm:$0x3]
    %v3885 = vlaneseq
    %v3886 = vshrl.u32 %v3885, 7
    %v3887 = vsub.s32 0, %v3886
    %v3888 = vrot.slane %v3883, %v3887
    %v3889 = vlaneseq
    %v3890 = vshrl.u32 %v3889, 7
    %v3891 = vsub.s32 1, %v3890
    %v3892 = vrot.slane %v3883, %v3891
    %v3895 = vpack.c.bf16 %v3888, %v3888
    %v3896 = vpack.c.bf16 %v3892, %v3892
    %v3898 = vpack.i.b16 %v3895, %v3895
    %v3900 = vlaneseq
    %v3901 = vshrl.u32 %v3900, 7
    %v3902 = vsub.s32 0, %v3901
    %v3903 = vrot.slane %v3898, %v3902
    %v3905 = vpack.i.b16 %v3896, %v3896
    %v3907 = vlaneseq
    %v3908 = vshrl.u32 %v3907, 7
    %v3909 = vsub.s32 0, %v3908
    %v3910 = vrot.slane %v3905, %v3909
    %v3911 = vadd.bf16 %v3851, %v3903
    %v3912 = vadd.bf16 %v3852, %v3910
    %v3913 = vadd.bf16 %v3853, %v3903
    %v3914 = vadd.bf16 %v3854, %v3910
    %v3915 = vadd.bf16 %v3855, %v3903
    %v3916 = vadd.bf16 %v3856, %v3910
    %v3917 = vadd.bf16 %v3857, %v3903
    %v3918 = vadd.bf16 %v3858, %v3910
    %v3919 = vadd.bf16 %v3859, %v3903
    %v3920 = vadd.bf16 %v3860, %v3910
    %v3921 = vadd.bf16 %v3861, %v3903
    %v3922 = vadd.bf16 %v3862, %v3910
    %v3923 = vadd.bf16 %v3863, %v3903
    %v3924 = vadd.bf16 %v3864, %v3910
    %v3925 = vadd.bf16 %v3865, %v3903
    %v3926 = vadd.bf16 %v3866, %v3910
    %v3927 = vadd.bf16 %v3867, %v3903
    %v3928 = vadd.bf16 %v3868, %v3910
    %v3929 = vadd.bf16 %v3869, %v3903
    %v3930 = vadd.bf16 %v3870, %v3910
    %v3931 = vadd.bf16 %v3871, %v3903
    %v3932 = vadd.bf16 %v3872, %v3910
    %v3933 = vadd.bf16 %v3873, %v3903
    %v3934 = vadd.bf16 %v3874, %v3910
    %v3935 = vadd.bf16 %v3875, %v3903
    %v3936 = vadd.bf16 %v3876, %v3910
    %v3937 = vadd.bf16 %v3877, %v3903
    %v3938 = vadd.bf16 %v3878, %v3910
    %v3939 = vadd.bf16 %v3879, %v3903
    %v3940 = vadd.bf16 %v3880, %v3910
    %v3941 = vadd.bf16 %v3881, %v3903
    %v3942 = vadd.bf16 %v3882, %v3910
    %v3943 = vmax.bf16 %v3911, 0
    %v3944 = vmax.bf16 %v3912, 0
    %v3945 = vmax.bf16 %v3913, 0
    %v3946 = vmax.bf16 %v3914, 0
    %v3947 = vmax.bf16 %v3915, 0
    %v3948 = vmax.bf16 %v3916, 0
    %v3949 = vmax.bf16 %v3917, 0
    %v3950 = vmax.bf16 %v3918, 0
    %v3951 = vmax.bf16 %v3919, 0
    %v3952 = vmax.bf16 %v3920, 0
    %v3953 = vmax.bf16 %v3921, 0
    %v3954 = vmax.bf16 %v3922, 0
    %v3955 = vmax.bf16 %v3923, 0
    %v3956 = vmax.bf16 %v3924, 0
    %v3957 = vmax.bf16 %v3925, 0
    %v3958 = vmax.bf16 %v3926, 0
    %v3959 = vmax.bf16 %v3927, 0
    %v3960 = vmax.bf16 %v3928, 0
    %v3961 = vmax.bf16 %v3929, 0
    %v3962 = vmax.bf16 %v3930, 0
    %v3963 = vmax.bf16 %v3931, 0
    %v3964 = vmax.bf16 %v3932, 0
    %v3965 = vmax.bf16 %v3933, 0
    %v3966 = vmax.bf16 %v3934, 0
    %v3967 = vmax.bf16 %v3935, 0
    %v3968 = vmax.bf16 %v3936, 0
    %v3969 = vmax.bf16 %v3937, 0
    %v3970 = vmax.bf16 %v3938, 0
    %v3971 = vmax.bf16 %v3939, 0
    %v3972 = vmax.bf16 %v3940, 0
    %v3973 = vmax.bf16 %v3941, 0
    %v3974 = vmax.bf16 %v3942, 0
    %v3975 = vld [vmem:[#allocation7] sm:$0xf]
    %v3976 = vld [vmem:[#allocation7 + $0x4] sm:$0xf]
    %v3977 = vld [vmem:[#allocation7 + $0x8] sm:$0xf]
    %v3978 = vld [vmem:[#allocation7 + $0xc] sm:$0xf]
    %v3979 = vld [vmem:[#allocation7 + $0x10] sm:$0xf]
    %v3980 = vld [vmem:[#allocation7 + $0x14] sm:$0xf]
    %v3981 = vld [vmem:[#allocation7 + $0x18] sm:$0xf]
    %v3982 = vld [vmem:[#allocation7 + $0x1c] sm:$0xf]
    %v3983 = vld [vmem:[#allocation7 + $0x20] sm:$0xf]
    %v3984 = vld [vmem:[#allocation7 + $0x24] sm:$0xf]
    %v3985 = vld [vmem:[#allocation7 + $0x28] sm:$0xf]
    %v3986 = vld [vmem:[#allocation7 + $0x2c] sm:$0xf]
    %v3987 = vld [vmem:[#allocation7 + $0x30] sm:$0xf]
    %v3988 = vld [vmem:[#allocation7 + $0x34] sm:$0xf]
    %v3989 = vld [vmem:[#allocation7 + $0x38] sm:$0xf]
    %v3990 = vld [vmem:[#allocation7 + $0x3c] sm:$0xf]
    %v3991 = vld [vmem:[#allocation7 + $0x40] sm:$0xf]
    %v3992 = vld [vmem:[#allocation7 + $0x44] sm:$0xf]
    %v3993 = vld [vmem:[#allocation7 + $0x48] sm:$0xf]
    %v3994 = vld [vmem:[#allocation7 + $0x4c] sm:$0xf]
    %v3995 = vld [vmem:[#allocation7 + $0x50] sm:$0xf]
    %v3996 = vld [vmem:[#allocation7 + $0x54] sm:$0xf]
    %v3997 = vld [vmem:[#allocation7 + $0x58] sm:$0xf]
    %v3998 = vld [vmem:[#allocation7 + $0x5c] sm:$0xf]
    %v3999 = vld [vmem:[#allocation7 + $0x60] sm:$0xf]
    %v4000 = vld [vmem:[#allocation7 + $0x64] sm:$0xf]
    %v4001 = vld [vmem:[#allocation7 + $0x68] sm:$0xf]
    %v4002 = vld [vmem:[#allocation7 + $0x6c] sm:$0xf]
    %v4003 = vld [vmem:[#allocation7 + $0x70] sm:$0xf]
    %v4004 = vld [vmem:[#allocation7 + $0x74] sm:$0xf]
    %v4005 = vld [vmem:[#allocation7 + $0x78] sm:$0xf]
    %v4006 = vld [vmem:[#allocation7 + $0x7c] sm:$0xf]
    %v4039 = vunpack.c.l.b16 %v3975
    %v4040 = vunpack.c.l.b16 %v3976
    %v4041 = vunpack.c.l.b16 %v3977
    %v4042 = vunpack.c.l.b16 %v3978
    %v4043 = vunpack.c.l.b16 %v3979
    %v4044 = vunpack.c.l.b16 %v3980
    %v4045 = vunpack.c.l.b16 %v3981
    %v4046 = vunpack.c.l.b16 %v3982
    %v4047 = vunpack.c.l.b16 %v3983
    %v4048 = vunpack.c.l.b16 %v3984
    %v4049 = vunpack.c.l.b16 %v3985
    %v4050 = vunpack.c.l.b16 %v3986
    %v4051 = vunpack.c.l.b16 %v3987
    %v4052 = vunpack.c.l.b16 %v3988
    %v4053 = vunpack.c.l.b16 %v3989
    %v4054 = vunpack.c.l.b16 %v3990
    %v4055 = vunpack.c.l.b16 %v3991
    %v4056 = vunpack.c.l.b16 %v3992
    %v4057 = vunpack.c.l.b16 %v3993
    %v4058 = vunpack.c.l.b16 %v3994
    %v4059 = vunpack.c.l.b16 %v3995
    %v4060 = vunpack.c.l.b16 %v3996
    %v4061 = vunpack.c.l.b16 %v3997
    %v4062 = vunpack.c.l.b16 %v3998
    %v4063 = vunpack.c.l.b16 %v3999
    %v4064 = vunpack.c.l.b16 %v4000
    %v4065 = vunpack.c.l.b16 %v4001
    %v4066 = vunpack.c.l.b16 %v4002
    %v4067 = vunpack.c.l.b16 %v4003
    %v4068 = vunpack.c.l.b16 %v4004
    %v4069 = vunpack.c.l.b16 %v4005
    %v4070 = vunpack.c.l.b16 %v4006
    %v4071 = vpack.c.b16 %v4040, %v4039
    %v4072 = vpack.c.b16 %v4042, %v4041
    %v4073 = vpack.c.b16 %v4044, %v4043
    %v4074 = vpack.c.b16 %v4046, %v4045
    %v4075 = vpack.c.b16 %v4048, %v4047
    %v4076 = vpack.c.b16 %v4050, %v4049
    %v4077 = vpack.c.b16 %v4052, %v4051
    %v4078 = vpack.c.b16 %v4054, %v4053
    %v4079 = vpack.c.b16 %v4056, %v4055
    %v4080 = vpack.c.b16 %v4058, %v4057
    %v4081 = vpack.c.b16 %v4060, %v4059
    %v4082 = vpack.c.b16 %v4062, %v4061
    %v4083 = vpack.c.b16 %v4064, %v4063
    %v4084 = vpack.c.b16 %v4066, %v4065
    %v4085 = vpack.c.b16 %v4068, %v4067
    %v4086 = vpack.c.b16 %v4070, %v4069
    %4103 = vmatprep.subr.bf16.mxu0 0
    %4104 = vmatpush1.bf16.msra.mxu0 %v4071
    %4105 = vmatprep.subr.bf16.mxu0 0
    %4106 = vmatpush1.bf16.msra.mxu0 %v4072
    %4107 = vmatprep.subr.bf16.mxu0 0
    %4108 = vmatpush1.bf16.msra.mxu0 %v4073
    %4109 = vmatprep.subr.bf16.mxu0 0
    %4110 = vmatpush1.bf16.msra.mxu0 %v4074
    %4111 = vmatprep.subr.bf16.mxu0 0
    %4112 = vmatpush1.bf16.msra.mxu0 %v4075
    %4113 = vmatprep.subr.bf16.mxu0 0
    %4114 = vmatpush1.bf16.msra.mxu0 %v4076
    %4115 = vmatprep.subr.bf16.mxu0 0
    %4116 = vmatpush1.bf16.msra.mxu0 %v4077
    %4117 = vmatprep.subr.bf16.mxu0 0
    %4118 = vmatpush1.bf16.msra.mxu0 %v4078
    %4119 = vmatprep.subr.bf16.mxu0 0
    %4120 = vmatpush1.bf16.msra.mxu0 %v4079
    %4121 = vmatprep.subr.bf16.mxu0 0
    %4122 = vmatpush1.bf16.msra.mxu0 %v4080
    %4123 = vmatprep.subr.bf16.mxu0 0
    %4124 = vmatpush1.bf16.msra.mxu0 %v4081
    %4125 = vmatprep.subr.bf16.mxu0 0
    %4126 = vmatpush1.bf16.msra.mxu0 %v4082
    %4127 = vmatprep.subr.bf16.mxu0 0
    %4128 = vmatpush1.bf16.msra.mxu0 %v4083
    %4129 = vmatprep.subr.bf16.mxu0 0
    %4130 = vmatpush1.bf16.msra.mxu0 %v4084
    %4131 = vmatprep.subr.bf16.mxu0 0
    %4132 = vmatpush1.bf16.msra.mxu0 %v4085
    %4133 = vmatprep.subr.bf16.mxu0 0
    %4134 = vmatpush1.bf16.msra.mxu0 %v4086
    %4135 = vmatprep.mubr.bf16.mxu0 %v3944
    %4136 = vmatmul.mubr.bf16.gmra.mrb[0].mxu0 %v3943
    %v4137 = vpop.f32.mrb[0].mxu0
    %v4138 = vadd.f32 0.0, %v4137
    %v4139 = vpop.f32.mrb[0].mxu0
    %v4140 = vpop.f32.mrb[0].mxu0
    %v4141 = vadd.f32 0.0, %v4140
    %v4142 = vpop.f32.mrb[0].mxu0
    %4143 = vmatprep.mubr.bf16.mxu0 %v3946
    %4144 = vmatmul.mubr.bf16.gmra.mrb[0].mxu0 %v3945
    %v4145 = vpop.f32.mrb[0].mxu0
    %v4146 = vadd.f32 0.0, %v4145
    %v4147 = vpop.f32.mrb[0].mxu0
    %v4148 = vpop.f32.mrb[0].mxu0
    %v4149 = vadd.f32 0.0, %v4148
    %v4150 = vpop.f32.mrb[0].mxu0
    %4151 = vmatprep.mubr.bf16.mxu0 %v3948
    %4152 = vmatmul.mubr.bf16.gmra.mrb[0].mxu0 %v3947
    %v4153 = vpop.f32.mrb[0].mxu0
    %v4154 = vadd.f32 0.0, %v4153
    %v4155 = vpop.f32.mrb[0].mxu0
    %v4156 = vpop.f32.mrb[0].mxu0
    %v4157 = vadd.f32 0.0, %v4156
    %v4158 = vpop.f32.mrb[0].mxu0
    %4159 = vmatprep.mubr.bf16.mxu0 %v3950
    %4160 = vmatmul.mubr.bf16.gmra.mrb[0].mxu0 %v3949
    %v4161 = vpop.f32.mrb[0].mxu0
    %v4162 = vadd.f32 0.0, %v4161
    %v4163 = vpop.f32.mrb[0].mxu0
    %v4164 = vpop.f32.mrb[0].mxu0
    %v4165 = vadd.f32 0.0, %v4164
    %v4166 = vpop.f32.mrb[0].mxu0
    %4167 = vmatprep.mubr.bf16.mxu0 %v3952
    %4168 = vmatmul.mubr.bf16.gmra.mrb[0].mxu0 %v3951
    %v4169 = vpop.f32.mrb[0].mxu0
    %v4170 = vadd.f32 0.0, %v4169
    %v4171 = vpop.f32.mrb[0].mxu0
    %v4172 = vpop.f32.mrb[0].mxu0
    %v4173 = vadd.f32 0.0, %v4172
    %v4174 = vpop.f32.mrb[0].mxu0
    %4175 = vmatprep.mubr.bf16.mxu0 %v3954
    %4176 = vmatmul.mubr.bf16.gmra.mrb[0].mxu0 %v3953
    %v4177 = vpop.f32.mrb[0].mxu0
    %v4178 = vadd.f32 0.0, %v4177
    %v4179 = vpop.f32.mrb[0].mxu0
    %v4180 = vpop.f32.mrb[0].mxu0
    %v4181 = vadd.f32 0.0, %v4180
    %v4182 = vpop.f32.mrb[0].mxu0
    %4183 = vmatprep.mubr.bf16.mxu0 %v3956
    %4184 = vmatmul.mubr.bf16.gmra.mrb[0].mxu0 %v3955
    %v4185 = vpop.f32.mrb[0].mxu0
    %v4186 = vadd.f32 0.0, %v4185
    %v4187 = vpop.f32.mrb[0].mxu0
    %v4188 = vpop.f32.mrb[0].mxu0
    %v4189 = vadd.f32 0.0, %v4188
    %v4190 = vpop.f32.mrb[0].mxu0
    %4191 = vmatprep.mubr.bf16.mxu0 %v3958
    %4192 = vmatmul.mubr.bf16.gmra.mrb[0].mxu0 %v3957
    %v4193 = vpop.f32.mrb[0].mxu0
    %v4194 = vadd.f32 0.0, %v4193
    %v4195 = vpop.f32.mrb[0].mxu0
    %v4196 = vpop.f32.mrb[0].mxu0
    %v4197 = vadd.f32 0.0, %v4196
    %v4198 = vpop.f32.mrb[0].mxu0
    %4199 = vmatprep.mubr.bf16.mxu0 %v3960
    %4200 = vmatmul.mubr.bf16.gmra.mrb[0].mxu0 %v3959
    %v4201 = vpop.f32.mrb[0].mxu0
    %v4202 = vadd.f32 0.0, %v4201
    %v4203 = vpop.f32.mrb[0].mxu0
    %v4204 = vpop.f32.mrb[0].mxu0
    %v4205 = vadd.f32 0.0, %v4204
    %v4206 = vpop.f32.mrb[0].mxu0
    %4207 = vmatprep.mubr.bf16.mxu0 %v3962
    %4208 = vmatmul.mubr.bf16.gmra.mrb[0].mxu0 %v3961
    %v4209 = vpop.f32.mrb[0].mxu0
    %v4210 = vadd.f32 0.0, %v4209
    %v4211 = vpop.f32.mrb[0].mxu0
    %v4212 = vpop.f32.mrb[0].mxu0
    %v4213 = vadd.f32 0.0, %v4212
    %v4214 = vpop.f32.mrb[0].mxu0
    %4215 = vmatprep.mubr.bf16.mxu0 %v3964
    %4216 = vmatmul.mubr.bf16.gmra.mrb[0].mxu0 %v3963
    %v4217 = vpop.f32.mrb[0].mxu0
    %v4218 = vadd.f32 0.0, %v4217
    %v4219 = vpop.f32.mrb[0].mxu0
    %v4220 = vpop.f32.mrb[0].mxu0
    %v4221 = vadd.f32 0.0, %v4220
    %v4222 = vpop.f32.mrb[0].mxu0
    %4223 = vmatprep.mubr.bf16.mxu0 %v3966
    %4224 = vmatmul.mubr.bf16.gmra.mrb[0].mxu0 %v3965
    %v4225 = vpop.f32.mrb[0].mxu0
    %v4226 = vadd.f32 0.0, %v4225
    %v4227 = vpop.f32.mrb[0].mxu0
    %v4228 = vpop.f32.mrb[0].mxu0
    %v4229 = vadd.f32 0.0, %v4228
    %v4230 = vpop.f32.mrb[0].mxu0
    %4231 = vmatprep.mubr.bf16.mxu0 %v3968
    %4232 = vmatmul.mubr.bf16.gmra.mrb[0].mxu0 %v3967
    %v4233 = vpop.f32.mrb[0].mxu0
    %v4234 = vadd.f32 0.0, %v4233
    %v4235 = vpop.f32.mrb[0].mxu0
    %v4236 = vpop.f32.mrb[0].mxu0
    %v4237 = vadd.f32 0.0, %v4236
    %v4238 = vpop.f32.mrb[0].mxu0
    %4239 = vmatprep.mubr.bf16.mxu0 %v3970
    %4240 = vmatmul.mubr.bf16.gmra.mrb[0].mxu0 %v3969
    %v4241 = vpop.f32.mrb[0].mxu0
    %v4242 = vadd.f32 0.0, %v4241
    %v4243 = vpop.f32.mrb[0].mxu0
    %v4244 = vpop.f32.mrb[0].mxu0
    %v4245 = vadd.f32 0.0, %v4244
    %v4246 = vpop.f32.mrb[0].mxu0
    %4247 = vmatprep.mubr.bf16.mxu0 %v3972
    %4248 = vmatmul.mubr.bf16.gmra.mrb[0].mxu0 %v3971
    %v4249 = vpop.f32.mrb[0].mxu0
    %v4250 = vadd.f32 0.0, %v4249
    %v4251 = vpop.f32.mrb[0].mxu0
    %v4252 = vpop.f32.mrb[0].mxu0
    %v4253 = vadd.f32 0.0, %v4252
    %v4254 = vpop.f32.mrb[0].mxu0
    %4255 = vmatprep.mubr.bf16.mxu0 %v3974
    %4256 = vmatmul.mubr.bf16.gmra.mrb[0].mxu0 %v3973
    %v4257 = vpop.f32.mrb[0].mxu0
    %v4258 = vadd.f32 0.0, %v4257
    %v4259 = vpop.f32.mrb[0].mxu0
    %v4260 = vpop.f32.mrb[0].mxu0
    %v4261 = vadd.f32 0.0, %v4260
    %v4262 = vpop.f32.mrb[0].mxu0
    %4263 = vdwg.mxu0
    %v4264 = vpack.c.bf16 %v4141, %v4138
    %v4265 = vpack.c.bf16 %v4149, %v4146
    %v4266 = vpack.c.bf16 %v4157, %v4154
    %v4267 = vpack.c.bf16 %v4165, %v4162
    %v4268 = vpack.c.bf16 %v4173, %v4170
    %v4269 = vpack.c.bf16 %v4181, %v4178
    %v4270 = vpack.c.bf16 %v4189, %v4186
    %v4271 = vpack.c.bf16 %v4197, %v4194
    %v4272 = vpack.c.bf16 %v4205, %v4202
    %v4273 = vpack.c.bf16 %v4213, %v4210
    %v4274 = vpack.c.bf16 %v4221, %v4218
    %v4275 = vpack.c.bf16 %v4229, %v4226
    %v4276 = vpack.c.bf16 %v4237, %v4234
    %v4277 = vpack.c.bf16 %v4245, %v4242
    %v4278 = vpack.c.bf16 %v4253, %v4250
    %v4279 = vpack.c.bf16 %v4261, %v4258
    %v4280 = vld [vmem:[%s6] sm:$0x1]
    %v4281 = vpack.c.bf16 %v4280, %v4280
    %v4283 = vpack.i.b16 %v4281, %v4281
    %v4285 = vlaneseq
    %v4286 = vshrl.u32 %v4285, 7
    %v4287 = vsub.s32 0, %v4286
    %v4288 = vrot.slane %v4283, %v4287
    %v4289 = vadd.bf16 %v4264, %v4288
    %v4290 = vadd.bf16 %v4265, %v4288
    %v4291 = vadd.bf16 %v4266, %v4288
    %v4292 = vadd.bf16 %v4267, %v4288
    %v4293 = vadd.bf16 %v4268, %v4288
    %v4294 = vadd.bf16 %v4269, %v4288
    %v4295 = vadd.bf16 %v4270, %v4288
    %v4296 = vadd.bf16 %v4271, %v4288
    %v4297 = vadd.bf16 %v4272, %v4288
    %v4298 = vadd.bf16 %v4273, %v4288
    %v4299 = vadd.bf16 %v4274, %v4288
    %v4300 = vadd.bf16 %v4275, %v4288
    %v4301 = vadd.bf16 %v4276, %v4288
    %v4302 = vadd.bf16 %v4277, %v4288
    %v4303 = vadd.bf16 %v4278, %v4288
    %v4304 = vadd.bf16 %v4279, %v4288
    %v4305 = vmax.bf16 %v4289, 0
    %v4306 = vmax.bf16 %v4290, 0
    %v4307 = vmax.bf16 %v4291, 0
    %v4308 = vmax.bf16 %v4292, 0
    %v4309 = vmax.bf16 %v4293, 0
    %v4310 = vmax.bf16 %v4294, 0
    %v4311 = vmax.bf16 %v4295, 0
    %v4312 = vmax.bf16 %v4296, 0
    %v4313 = vmax.bf16 %v4297, 0
    %v4314 = vmax.bf16 %v4298, 0
    %v4315 = vmax.bf16 %v4299, 0
    %v4316 = vmax.bf16 %v4300, 0
    %v4317 = vmax.bf16 %v4301, 0
    %v4318 = vmax.bf16 %v4302, 0
    %v4319 = vmax.bf16 %v4303, 0
    %v4320 = vmax.bf16 %v4304, 0
    %v4321 = vunpack.c.l.bf16 %v4305
    %v4322 = vunpack.c.h.bf16 %v4305
    %v4323 = vunpack.c.l.bf16 %v4306
    %v4324 = vunpack.c.h.bf16 %v4306
    %v4325 = vunpack.c.l.bf16 %v4307
    %v4326 = vunpack.c.h.bf16 %v4307
    %v4327 = vunpack.c.l.bf16 %v4308
    %v4328 = vunpack.c.h.bf16 %v4308
    %v4329 = vunpack.c.l.bf16 %v4309
    %v4330 = vunpack.c.h.bf16 %v4309
    %v4331 = vunpack.c.l.bf16 %v4310
    %v4332 = vunpack.c.h.bf16 %v4310
    %v4333 = vunpack.c.l.bf16 %v4311
    %v4334 = vunpack.c.h.bf16 %v4311
    %v4335 = vunpack.c.l.bf16 %v4312
    %v4336 = vunpack.c.h.bf16 %v4312
    %v4337 = vunpack.c.l.bf16 %v4313
    %v4338 = vunpack.c.h.bf16 %v4313
    %v4339 = vunpack.c.l.bf16 %v4314
    %v4340 = vunpack.c.h.bf16 %v4314
    %v4341 = vunpack.c.l.bf16 %v4315
    %v4342 = vunpack.c.h.bf16 %v4315
    %v4343 = vunpack.c.l.bf16 %v4316
    %v4344 = vunpack.c.h.bf16 %v4316
    %v4345 = vunpack.c.l.bf16 %v4317
    %v4346 = vunpack.c.h.bf16 %v4317
    %v4347 = vunpack.c.l.bf16 %v4318
    %v4348 = vunpack.c.h.bf16 %v4318
    %v4349 = vunpack.c.l.bf16 %v4319
    %v4350 = vunpack.c.h.bf16 %v4319
    %v4351 = vunpack.c.l.bf16 %v4320
    %v4352 = vunpack.c.h.bf16 %v4320
    %v4353 = vld [vmem:[%s7] sm:$0x1]
    %v4355 = vlaneseq
    %v4356 = vshrl.u32 %v4355, 7
    %v4357 = vsub.s32 0, %v4356
    %v4358 = vrot.slane %v4353, %v4357
    %v4360 = vmul.f32 %v4321, %v4358
    %v4361 = vmul.f32 %v4322, %v4358
    %v4362 = vmul.f32 %v4323, %v4358
    %v4363 = vmul.f32 %v4324, %v4358
    %v4364 = vmul.f32 %v4325, %v4358
    %v4365 = vmul.f32 %v4326, %v4358
    %v4366 = vmul.f32 %v4327, %v4358
    %v4367 = vmul.f32 %v4328, %v4358
    %v4368 = vmul.f32 %v4329, %v4358
    %v4369 = vmul.f32 %v4330, %v4358
    %v4370 = vmul.f32 %v4331, %v4358
    %v4371 = vmul.f32 %v4332, %v4358
    %v4372 = vmul.f32 %v4333, %v4358
    %v4373 = vmul.f32 %v4334, %v4358
    %v4374 = vmul.f32 %v4335, %v4358
    %v4375 = vmul.f32 %v4336, %v4358
    %v4376 = vmul.f32 %v4337, %v4358
    %v4377 = vmul.f32 %v4338, %v4358
    %v4378 = vmul.f32 %v4339, %v4358
    %v4379 = vmul.f32 %v4340, %v4358
    %v4380 = vmul.f32 %v4341, %v4358
    %v4381 = vmul.f32 %v4342, %v4358
    %v4382 = vmul.f32 %v4343, %v4358
    %v4383 = vmul.f32 %v4344, %v4358
    %v4384 = vmul.f32 %v4345, %v4358
    %v4385 = vmul.f32 %v4346, %v4358
    %v4386 = vmul.f32 %v4347, %v4358
    %v4387 = vmul.f32 %v4348, %v4358
    %v4388 = vmul.f32 %v4349, %v4358
    %v4389 = vmul.f32 %v4350, %v4358
    %v4390 = vmul.f32 %v4351, %v4358
    %v4391 = vmul.f32 %v4352, %v4358
    %4392 = vadd.xlane.f32.xlu0 %v4360
    %v4393 = vpop.xlane.xlu0 %4392
    %4394 = vadd.xlane.f32.xlu0 %v4361
    %v4395 = vpop.xlane.xlu0 %4394
    %4396 = vadd.xlane.f32.xlu0 %v4362
    %v4397 = vpop.xlane.xlu0 %4396
    %4398 = vadd.xlane.f32.xlu0 %v4363
    %v4399 = vpop.xlane.xlu0 %4398
    %4400 = vadd.xlane.f32.xlu0 %v4364
    %v4401 = vpop.xlane.xlu0 %4400
    %4402 = vadd.xlane.f32.xlu0 %v4365
    %v4403 = vpop.xlane.xlu0 %4402
    %4404 = vadd.xlane.f32.xlu0 %v4366
    %v4405 = vpop.xlane.xlu0 %4404
    %4406 = vadd.xlane.f32.xlu0 %v4367
    %v4407 = vpop.xlane.xlu0 %4406
    %4408 = vadd.xlane.f32.xlu0 %v4368
    %v4409 = vpop.xlane.xlu0 %4408
    %4410 = vadd.xlane.f32.xlu0 %v4369
    %v4411 = vpop.xlane.xlu0 %4410
    %4412 = vadd.xlane.f32.xlu0 %v4370
    %v4413 = vpop.xlane.xlu0 %4412
    %4414 = vadd.xlane.f32.xlu0 %v4371
    %v4415 = vpop.xlane.xlu0 %4414
    %4416 = vadd.xlane.f32.xlu0 %v4372
    %v4417 = vpop.xlane.xlu0 %4416
    %4418 = vadd.xlane.f32.xlu0 %v4373
    %v4419 = vpop.xlane.xlu0 %4418
    %4420 = vadd.xlane.f32.xlu0 %v4374
    %v4421 = vpop.xlane.xlu0 %4420
    %4422 = vadd.xlane.f32.xlu0 %v4375
    %v4423 = vpop.xlane.xlu0 %4422
    %4424 = vadd.xlane.f32.xlu0 %v4376
    %v4425 = vpop.xlane.xlu0 %4424
    %4426 = vadd.xlane.f32.xlu0 %v4377
    %v4427 = vpop.xlane.xlu0 %4426
    %4428 = vadd.xlane.f32.xlu0 %v4378
    %v4429 = vpop.xlane.xlu0 %4428
    %4430 = vadd.xlane.f32.xlu0 %v4379
    %v4431 = vpop.xlane.xlu0 %4430
    %4432 = vadd.xlane.f32.xlu0 %v4380
    %v4433 = vpop.xlane.xlu0 %4432
    %4434 = vadd.xlane.f32.xlu0 %v4381
    %v4435 = vpop.xlane.xlu0 %4434
    %4436 = vadd.xlane.f32.xlu0 %v4382
    %v4437 = vpop.xlane.xlu0 %4436
    %4438 = vadd.xlane.f32.xlu0 %v4383
    %v4439 = vpop.xlane.xlu0 %4438
    %4440 = vadd.xlane.f32.xlu0 %v4384
    %v4441 = vpop.xlane.xlu0 %4440
    %4442 = vadd.xlane.f32.xlu0 %v4385
    %v4443 = vpop.xlane.xlu0 %4442
    %4444 = vadd.xlane.f32.xlu0 %v4386
    %v4445 = vpop.xlane.xlu0 %4444
    %4446 = vadd.xlane.f32.xlu0 %v4387
    %v4447 = vpop.xlane.xlu0 %4446
    %4448 = vadd.xlane.f32.xlu0 %v4388
    %v4449 = vpop.xlane.xlu0 %4448
    %4450 = vadd.xlane.f32.xlu0 %v4389
    %v4451 = vpop.xlane.xlu0 %4450
    %4452 = vadd.xlane.f32.xlu0 %v4390
    %v4453 = vpop.xlane.xlu0 %4452
    %4454 = vadd.xlane.f32.xlu0 %v4391
    %v4455 = vpop.xlane.xlu0 %4454
    %v4456 = vadd.f32 %v4393, 0.0
    %v4457 = vadd.f32 %v4395, 0.0
    %v4458 = vadd.f32 %v4397, 0.0
    %v4459 = vadd.f32 %v4399, 0.0
    %v4460 = vadd.f32 %v4401, 0.0
    %v4461 = vadd.f32 %v4403, 0.0
    %v4462 = vadd.f32 %v4405, 0.0
    %v4463 = vadd.f32 %v4407, 0.0
    %v4464 = vadd.f32 %v4409, 0.0
    %v4465 = vadd.f32 %v4411, 0.0
    %v4466 = vadd.f32 %v4413, 0.0
    %v4467 = vadd.f32 %v4415, 0.0
    %v4468 = vadd.f32 %v4417, 0.0
    %v4469 = vadd.f32 %v4419, 0.0
    %v4470 = vadd.f32 %v4421, 0.0
    %v4471 = vadd.f32 %v4423, 0.0
    %v4472 = vadd.f32 %v4425, 0.0
    %v4473 = vadd.f32 %v4427, 0.0
    %v4474 = vadd.f32 %v4429, 0.0
    %v4475 = vadd.f32 %v4431, 0.0
    %v4476 = vadd.f32 %v4433, 0.0
    %v4477 = vadd.f32 %v4435, 0.0
    %v4478 = vadd.f32 %v4437, 0.0
    %v4479 = vadd.f32 %v4439, 0.0
    %v4480 = vadd.f32 %v4441, 0.0
    %v4481 = vadd.f32 %v4443, 0.0
    %v4482 = vadd.f32 %v4445, 0.0
    %v4483 = vadd.f32 %v4447, 0.0
    %v4484 = vadd.f32 %v4449, 0.0
    %v4485 = vadd.f32 %v4451, 0.0
    %v4486 = vadd.f32 %v4453, 0.0
    %v4487 = vadd.f32 %v4455, 0.0
    %s4488 = scalar_lea.vmem [#allocation5], 512
    %v4489 = vld [vmem:[%s4488] sm:$0xff]
    %v4490 = vld [vmem:[%s4488 + $0x8] sm:$0xff]
    %v4491 = vld [vmem:[%s4488 + $0x10] sm:$0xff]
    %v4492 = vld [vmem:[%s4488 + $0x18] sm:$0xff]
    %v4493 = vld [vmem:[%s4488 + $0x20] sm:$0xff]
    %v4494 = vld [vmem:[%s4488 + $0x28] sm:$0xff]
    %v4495 = vld [vmem:[%s4488 + $0x30] sm:$0xff]
    %v4496 = vld [vmem:[%s4488 + $0x38] sm:$0xff]
    %v4497 = vld [vmem:[%s4488 + $0x40] sm:$0xff]
    %v4498 = vld [vmem:[%s4488 + $0x48] sm:$0xff]
    %v4499 = vld [vmem:[%s4488 + $0x50] sm:$0xff]
    %v4500 = vld [vmem:[%s4488 + $0x58] sm:$0xff]
    %v4501 = vld [vmem:[%s4488 + $0x60] sm:$0xff]
    %v4502 = vld [vmem:[%s4488 + $0x68] sm:$0xff]
    %v4503 = vld [vmem:[%s4488 + $0x70] sm:$0xff]
    %v4504 = vld [vmem:[%s4488 + $0x78] sm:$0xff]
    %v4505 = vld [vmem:[%s4488 + $0x80] sm:$0xff]
    %v4506 = vld [vmem:[%s4488 + $0x88] sm:$0xff]
    %v4507 = vld [vmem:[%s4488 + $0x90] sm:$0xff]
    %v4508 = vld [vmem:[%s4488 + $0x98] sm:$0xff]
    %v4509 = vld [vmem:[%s4488 + $0xa0] sm:$0xff]
    %v4510 = vld [vmem:[%s4488 + $0xa8] sm:$0xff]
    %v4511 = vld [vmem:[%s4488 + $0xb0] sm:$0xff]
    %v4512 = vld [vmem:[%s4488 + $0xb8] sm:$0xff]
    %v4513 = vld [vmem:[%s4488 + $0xc0] sm:$0xff]
    %v4514 = vld [vmem:[%s4488 + $0xc8] sm:$0xff]
    %v4515 = vld [vmem:[%s4488 + $0xd0] sm:$0xff]
    %v4516 = vld [vmem:[%s4488 + $0xd8] sm:$0xff]
    %v4517 = vld [vmem:[%s4488 + $0xe0] sm:$0xff]
    %v4518 = vld [vmem:[%s4488 + $0xe8] sm:$0xff]
    %v4519 = vld [vmem:[%s4488 + $0xf0] sm:$0xff]
    %v4520 = vld [vmem:[%s4488 + $0xf8] sm:$0xff]
    %v4521 = vld [vmem:[%s4488 + $0x100] sm:$0xff]
    %v4522 = vld [vmem:[%s4488 + $0x108] sm:$0xff]
    %v4523 = vld [vmem:[%s4488 + $0x110] sm:$0xff]
    %v4524 = vld [vmem:[%s4488 + $0x118] sm:$0xff]
    %v4525 = vld [vmem:[%s4488 + $0x120] sm:$0xff]
    %v4526 = vld [vmem:[%s4488 + $0x128] sm:$0xff]
    %v4527 = vld [vmem:[%s4488 + $0x130] sm:$0xff]
    %v4528 = vld [vmem:[%s4488 + $0x138] sm:$0xff]
    %v4529 = vld [vmem:[%s4488 + $0x140] sm:$0xff]
    %v4530 = vld [vmem:[%s4488 + $0x148] sm:$0xff]
    %v4531 = vld [vmem:[%s4488 + $0x150] sm:$0xff]
    %v4532 = vld [vmem:[%s4488 + $0x158] sm:$0xff]
    %v4533 = vld [vmem:[%s4488 + $0x160] sm:$0xff]
    %v4534 = vld [vmem:[%s4488 + $0x168] sm:$0xff]
    %v4535 = vld [vmem:[%s4488 + $0x170] sm:$0xff]
    %v4536 = vld [vmem:[%s4488 + $0x178] sm:$0xff]
    %v4537 = vld [vmem:[%s4488 + $0x180] sm:$0xff]
    %v4538 = vld [vmem:[%s4488 + $0x188] sm:$0xff]
    %v4539 = vld [vmem:[%s4488 + $0x190] sm:$0xff]
    %v4540 = vld [vmem:[%s4488 + $0x198] sm:$0xff]
    %v4541 = vld [vmem:[%s4488 + $0x1a0] sm:$0xff]
    %v4542 = vld [vmem:[%s4488 + $0x1a8] sm:$0xff]
    %v4543 = vld [vmem:[%s4488 + $0x1b0] sm:$0xff]
    %v4544 = vld [vmem:[%s4488 + $0x1b8] sm:$0xff]
    %v4545 = vld [vmem:[%s4488 + $0x1c0] sm:$0xff]
    %v4546 = vld [vmem:[%s4488 + $0x1c8] sm:$0xff]
    %v4547 = vld [vmem:[%s4488 + $0x1d0] sm:$0xff]
    %v4548 = vld [vmem:[%s4488 + $0x1d8] sm:$0xff]
    %v4549 = vld [vmem:[%s4488 + $0x1e0] sm:$0xff]
    %v4550 = vld [vmem:[%s4488 + $0x1e8] sm:$0xff]
    %v4551 = vld [vmem:[%s4488 + $0x1f0] sm:$0xff]
    %v4552 = vld [vmem:[%s4488 + $0x1f8] sm:$0xff]
    %v4617 = vunpack.c.l.b16 %v4489
    %v4618 = vunpack.c.h.b16 %v4489
    %v4619 = vunpack.c.l.b16 %v4490
    %v4620 = vunpack.c.h.b16 %v4490
    %v4621 = vunpack.c.l.b16 %v4491
    %v4622 = vunpack.c.h.b16 %v4491
    %v4623 = vunpack.c.l.b16 %v4492
    %v4624 = vunpack.c.h.b16 %v4492
    %v4625 = vunpack.c.l.b16 %v4493
    %v4626 = vunpack.c.h.b16 %v4493
    %v4627 = vunpack.c.l.b16 %v4494
    %v4628 = vunpack.c.h.b16 %v4494
    %v4629 = vunpack.c.l.b16 %v4495
    %v4630 = vunpack.c.h.b16 %v4495
    %v4631 = vunpack.c.l.b16 %v4496
    %v4632 = vunpack.c.h.b16 %v4496
    %v4633 = vunpack.c.l.b16 %v4497
    %v4634 = vunpack.c.h.b16 %v4497
    %v4635 = vunpack.c.l.b16 %v4498
    %v4636 = vunpack.c.h.b16 %v4498
    %v4637 = vunpack.c.l.b16 %v4499
    %v4638 = vunpack.c.h.b16 %v4499
    %v4639 = vunpack.c.l.b16 %v4500
    %v4640 = vunpack.c.h.b16 %v4500
    %v4641 = vunpack.c.l.b16 %v4501
    %v4642 = vunpack.c.h.b16 %v4501
    %v4643 = vunpack.c.l.b16 %v4502
    %v4644 = vunpack.c.h.b16 %v4502
    %v4645 = vunpack.c.l.b16 %v4503
    %v4646 = vunpack.c.h.b16 %v4503
    %v4647 = vunpack.c.l.b16 %v4504
    %v4648 = vunpack.c.h.b16 %v4504
    %v4649 = vunpack.c.l.b16 %v4505
    %v4650 = vunpack.c.h.b16 %v4505
    %v4651 = vunpack.c.l.b16 %v4506
    %v4652 = vunpack.c.h.b16 %v4506
    %v4653 = vunpack.c.l.b16 %v4507
    %v4654 = vunpack.c.h.b16 %v4507
    %v4655 = vunpack.c.l.b16 %v4508
    %v4656 = vunpack.c.h.b16 %v4508
    %v4657 = vunpack.c.l.b16 %v4509
    %v4658 = vunpack.c.h.b16 %v4509
    %v4659 = vunpack.c.l.b16 %v4510
    %v4660 = vunpack.c.h.b16 %v4510
    %v4661 = vunpack.c.l.b16 %v4511
    %v4662 = vunpack.c.h.b16 %v4511
    %v4663 = vunpack.c.l.b16 %v4512
    %v4664 = vunpack.c.h.b16 %v4512
    %v4665 = vunpack.c.l.b16 %v4513
    %v4666 = vunpack.c.h.b16 %v4513
    %v4667 = vunpack.c.l.b16 %v4514
    %v4668 = vunpack.c.h.b16 %v4514
    %v4669 = vunpack.c.l.b16 %v4515
    %v4670 = vunpack.c.h.b16 %v4515
    %v4671 = vunpack.c.l.b16 %v4516
    %v4672 = vunpack.c.h.b16 %v4516
    %v4673 = vunpack.c.l.b16 %v4517
    %v4674 = vunpack.c.h.b16 %v4517
    %v4675 = vunpack.c.l.b16 %v4518
    %v4676 = vunpack.c.h.b16 %v4518
    %v4677 = vunpack.c.l.b16 %v4519
    %v4678 = vunpack.c.h.b16 %v4519
    %v4679 = vunpack.c.l.b16 %v4520
    %v4680 = vunpack.c.h.b16 %v4520
    %v4681 = vunpack.c.l.b16 %v4521
    %v4682 = vunpack.c.h.b16 %v4521
    %v4683 = vunpack.c.l.b16 %v4522
    %v4684 = vunpack.c.h.b16 %v4522
    %v4685 = vunpack.c.l.b16 %v4523
    %v4686 = vunpack.c.h.b16 %v4523
    %v4687 = vunpack.c.l.b16 %v4524
    %v4688 = vunpack.c.h.b16 %v4524
    %v4689 = vunpack.c.l.b16 %v4525
    %v4690 = vunpack.c.h.b16 %v4525
    %v4691 = vunpack.c.l.b16 %v4526
    %v4692 = vunpack.c.h.b16 %v4526
    %v4693 = vunpack.c.l.b16 %v4527
    %v4694 = vunpack.c.h.b16 %v4527
    %v4695 = vunpack.c.l.b16 %v4528
    %v4696 = vunpack.c.h.b16 %v4528
    %v4697 = vunpack.c.l.b16 %v4529
    %v4698 = vunpack.c.h.b16 %v4529
    %v4699 = vunpack.c.l.b16 %v4530
    %v4700 = vunpack.c.h.b16 %v4530
    %v4701 = vunpack.c.l.b16 %v4531
    %v4702 = vunpack.c.h.b16 %v4531
    %v4703 = vunpack.c.l.b16 %v4532
    %v4704 = vunpack.c.h.b16 %v4532
    %v4705 = vunpack.c.l.b16 %v4533
    %v4706 = vunpack.c.h.b16 %v4533
    %v4707 = vunpack.c.l.b16 %v4534
    %v4708 = vunpack.c.h.b16 %v4534
    %v4709 = vunpack.c.l.b16 %v4535
    %v4710 = vunpack.c.h.b16 %v4535
    %v4711 = vunpack.c.l.b16 %v4536
    %v4712 = vunpack.c.h.b16 %v4536
    %v4713 = vunpack.c.l.b16 %v4537
    %v4714 = vunpack.c.h.b16 %v4537
    %v4715 = vunpack.c.l.b16 %v4538
    %v4716 = vunpack.c.h.b16 %v4538
    %v4717 = vunpack.c.l.b16 %v4539
    %v4718 = vunpack.c.h.b16 %v4539
    %v4719 = vunpack.c.l.b16 %v4540
    %v4720 = vunpack.c.h.b16 %v4540
    %v4721 = vunpack.c.l.b16 %v4541
    %v4722 = vunpack.c.h.b16 %v4541
    %v4723 = vunpack.c.l.b16 %v4542
    %v4724 = vunpack.c.h.b16 %v4542
    %v4725 = vunpack.c.l.b16 %v4543
    %v4726 = vunpack.c.h.b16 %v4543
    %v4727 = vunpack.c.l.b16 %v4544
    %v4728 = vunpack.c.h.b16 %v4544
    %v4729 = vunpack.c.l.b16 %v4545
    %v4730 = vunpack.c.h.b16 %v4545
    %v4731 = vunpack.c.l.b16 %v4546
    %v4732 = vunpack.c.h.b16 %v4546
    %v4733 = vunpack.c.l.b16 %v4547
    %v4734 = vunpack.c.h.b16 %v4547
    %v4735 = vunpack.c.l.b16 %v4548
    %v4736 = vunpack.c.h.b16 %v4548
    %v4737 = vunpack.c.l.b16 %v4549
    %v4738 = vunpack.c.h.b16 %v4549
    %v4739 = vunpack.c.l.b16 %v4550
    %v4740 = vunpack.c.h.b16 %v4550
    %v4741 = vunpack.c.l.b16 %v4551
    %v4742 = vunpack.c.h.b16 %v4551
    %v4743 = vunpack.c.l.b16 %v4552
    %v4744 = vunpack.c.h.b16 %v4552
    %v4745 = vpack.c.b16 %v4619, %v4617
    %v4746 = vpack.c.b16 %v4620, %v4618
    %v4747 = vpack.c.b16 %v4623, %v4621
    %v4748 = vpack.c.b16 %v4624, %v4622
    %v4749 = vpack.c.b16 %v4627, %v4625
    %v4750 = vpack.c.b16 %v4628, %v4626
    %v4751 = vpack.c.b16 %v4631, %v4629
    %v4752 = vpack.c.b16 %v4632, %v4630
    %v4753 = vpack.c.b16 %v4635, %v4633
    %v4754 = vpack.c.b16 %v4636, %v4634
    %v4755 = vpack.c.b16 %v4639, %v4637
    %v4756 = vpack.c.b16 %v4640, %v4638
    %v4757 = vpack.c.b16 %v4643, %v4641
    %v4758 = vpack.c.b16 %v4644, %v4642
    %v4759 = vpack.c.b16 %v4647, %v4645
    %v4760 = vpack.c.b16 %v4648, %v4646
    %v4761 = vpack.c.b16 %v4651, %v4649
    %v4762 = vpack.c.b16 %v4652, %v4650
    %v4763 = vpack.c.b16 %v4655, %v4653
    %v4764 = vpack.c.b16 %v4656, %v4654
    %v4765 = vpack.c.b16 %v4659, %v4657
    %v4766 = vpack.c.b16 %v4660, %v4658
    %v4767 = vpack.c.b16 %v4663, %v4661
    %v4768 = vpack.c.b16 %v4664, %v4662
    %v4769 = vpack.c.b16 %v4667, %v4665
    %v4770 = vpack.c.b16 %v4668, %v4666
    %v4771 = vpack.c.b16 %v4671, %v4669
    %v4772 = vpack.c.b16 %v4672, %v4670
    %v4773 = vpack.c.b16 %v4675, %v4673
    %v4774 = vpack.c.b16 %v4676, %v4674
    %v4775 = vpack.c.b16 %v4679, %v4677
    %v4776 = vpack.c.b16 %v4680, %v4678
    %v4777 = vpack.c.b16 %v4683, %v4681
    %v4778 = vpack.c.b16 %v4684, %v4682
    %v4779 = vpack.c.b16 %v4687, %v4685
    %v4780 = vpack.c.b16 %v4688, %v4686
    %v4781 = vpack.c.b16 %v4691, %v4689
    %v4782 = vpack.c.b16 %v4692, %v4690
    %v4783 = vpack.c.b16 %v4695, %v4693
    %v4784 = vpack.c.b16 %v4696, %v4694
    %v4785 = vpack.c.b16 %v4699, %v4697
    %v4786 = vpack.c.b16 %v4700, %v4698
    %v4787 = vpack.c.b16 %v4703, %v4701
    %v4788 = vpack.c.b16 %v4704, %v4702
    %v4789 = vpack.c.b16 %v4707, %v4705
    %v4790 = vpack.c.b16 %v4708, %v4706
    %v4791 = vpack.c.b16 %v4711, %v4709
    %v4792 = vpack.c.b16 %v4712, %v4710
    %v4793 = vpack.c.b16 %v4715, %v4713
    %v4794 = vpack.c.b16 %v4716, %v4714
    %v4795 = vpack.c.b16 %v4719, %v4717
    %v4796 = vpack.c.b16 %v4720, %v4718
    %v4797 = vpack.c.b16 %v4723, %v4721
    %v4798 = vpack.c.b16 %v4724, %v4722
    %v4799 = vpack.c.b16 %v4727, %v4725
    %v4800 = vpack.c.b16 %v4728, %v4726
    %v4801 = vpack.c.b16 %v4731, %v4729
    %v4802 = vpack.c.b16 %v4732, %v4730
    %v4803 = vpack.c.b16 %v4735, %v4733
    %v4804 = vpack.c.b16 %v4736, %v4734
    %v4805 = vpack.c.b16 %v4739, %v4737
    %v4806 = vpack.c.b16 %v4740, %v4738
    %v4807 = vpack.c.b16 %v4743, %v4741
    %v4808 = vpack.c.b16 %v4744, %v4742
    %4873 = vmatprep.subr.bf16.mxu0 %v4746
    %4874 = vmatpush1.bf16.msra.mxu0 %v4745
    %4875 = vmatprep.subr.bf16.mxu0 %v4748
    %4876 = vmatpush1.bf16.msra.mxu0 %v4747
    %4877 = vmatprep.subr.bf16.mxu0 %v4750
    %4878 = vmatpush1.bf16.msra.mxu0 %v4749
    %4879 = vmatprep.subr.bf16.mxu0 %v4752
    %4880 = vmatpush1.bf16.msra.mxu0 %v4751
    %4881 = vmatprep.subr.bf16.mxu0 %v4754
    %4882 = vmatpush1.bf16.msra.mxu0 %v4753
    %4883 = vmatprep.subr.bf16.mxu0 %v4756
    %4884 = vmatpush1.bf16.msra.mxu0 %v4755
    %4885 = vmatprep.subr.bf16.mxu0 %v4758
    %4886 = vmatpush1.bf16.msra.mxu0 %v4757
    %4887 = vmatprep.subr.bf16.mxu0 %v4760
    %4888 = vmatpush1.bf16.msra.mxu0 %v4759
    %4889 = vmatprep.subr.bf16.mxu0 %v4762
    %4890 = vmatpush1.bf16.msra.mxu0 %v4761
    %4891 = vmatprep.subr.bf16.mxu0 %v4764
    %4892 = vmatpush1.bf16.msra.mxu0 %v4763
    %4893 = vmatprep.subr.bf16.mxu0 %v4766
    %4894 = vmatpush1.bf16.msra.mxu0 %v4765
    %4895 = vmatprep.subr.bf16.mxu0 %v4768
    %4896 = vmatpush1.bf16.msra.mxu0 %v4767
    %4897 = vmatprep.subr.bf16.mxu0 %v4770
    %4898 = vmatpush1.bf16.msra.mxu0 %v4769
    %4899 = vmatprep.subr.bf16.mxu0 %v4772
    %4900 = vmatpush1.bf16.msra.mxu0 %v4771
    %4901 = vmatprep.subr.bf16.mxu0 %v4774
    %4902 = vmatpush1.bf16.msra.mxu0 %v4773
    %4903 = vmatprep.subr.bf16.mxu0 %v4776
    %4904 = vmatpush1.bf16.msra.mxu0 %v4775
    %4905 = vmatprep.mubr.bf16.mxu0 %v2830
    %4906 = vmatmul.mubr.bf16.gmra.mrb[0].mxu0 %v2829
    %v4907 = vpop.f32.mrb[0].mxu0
    %v4908 = vadd.f32 0.0, %v4907
    %v4909 = vpop.f32.mrb[0].mxu0
    %v4910 = vadd.f32 0.0, %v4909
    %v4911 = vpop.f32.mrb[0].mxu0
    %v4912 = vadd.f32 0.0, %v4911
    %v4913 = vpop.f32.mrb[0].mxu0
    %v4914 = vadd.f32 0.0, %v4913
    %4915 = vmatprep.mubr.bf16.mxu0 %v2846
    %4916 = vmatmul.mubr.bf16.gmra.mrb[0].mxu0 %v2845
    %v4917 = vpop.f32.mrb[0].mxu0
    %v4918 = vadd.f32 0.0, %v4917
    %v4919 = vpop.f32.mrb[0].mxu0
    %v4920 = vadd.f32 0.0, %v4919
    %v4921 = vpop.f32.mrb[0].mxu0
    %v4922 = vadd.f32 0.0, %v4921
    %v4923 = vpop.f32.mrb[0].mxu0
    %v4924 = vadd.f32 0.0, %v4923
    %4925 = vmatprep.mubr.bf16.mxu0 %v2862
    %4926 = vmatmul.mubr.bf16.gmra.mrb[0].mxu0 %v2861
    %v4927 = vpop.f32.mrb[0].mxu0
    %v4928 = vadd.f32 0.0, %v4927
    %v4929 = vpop.f32.mrb[0].mxu0
    %v4930 = vadd.f32 0.0, %v4929
    %v4931 = vpop.f32.mrb[0].mxu0
    %v4932 = vadd.f32 0.0, %v4931
    %v4933 = vpop.f32.mrb[0].mxu0
    %v4934 = vadd.f32 0.0, %v4933
    %4935 = vmatprep.mubr.bf16.mxu0 %v2878
    %4936 = vmatmul.mubr.bf16.gmra.mrb[0].mxu0 %v2877
    %v4937 = vpop.f32.mrb[0].mxu0
    %v4938 = vadd.f32 0.0, %v4937
    %v4939 = vpop.f32.mrb[0].mxu0
    %v4940 = vadd.f32 0.0, %v4939
    %v4941 = vpop.f32.mrb[0].mxu0
    %v4942 = vadd.f32 0.0, %v4941
    %v4943 = vpop.f32.mrb[0].mxu0
    %v4944 = vadd.f32 0.0, %v4943
    %4945 = vmatprep.mubr.bf16.mxu0 %v2894
    %4946 = vmatmul.mubr.bf16.gmra.mrb[0].mxu0 %v2893
    %v4947 = vpop.f32.mrb[0].mxu0
    %v4948 = vadd.f32 0.0, %v4947
    %v4949 = vpop.f32.mrb[0].mxu0
    %v4950 = vadd.f32 0.0, %v4949
    %v4951 = vpop.f32.mrb[0].mxu0
    %v4952 = vadd.f32 0.0, %v4951
    %v4953 = vpop.f32.mrb[0].mxu0
    %v4954 = vadd.f32 0.0, %v4953
    %4955 = vmatprep.mubr.bf16.mxu0 %v2910
    %4956 = vmatmul.mubr.bf16.gmra.mrb[0].mxu0 %v2909
    %v4957 = vpop.f32.mrb[0].mxu0
    %v4958 = vadd.f32 0.0, %v4957
    %v4959 = vpop.f32.mrb[0].mxu0
    %v4960 = vadd.f32 0.0, %v4959
    %v4961 = vpop.f32.mrb[0].mxu0
    %v4962 = vadd.f32 0.0, %v4961
    %v4963 = vpop.f32.mrb[0].mxu0
    %v4964 = vadd.f32 0.0, %v4963
    %4965 = vmatprep.mubr.bf16.mxu0 %v2926
    %4966 = vmatmul.mubr.bf16.gmra.mrb[0].mxu0 %v2925
    %v4967 = vpop.f32.mrb[0].mxu0
    %v4968 = vadd.f32 0.0, %v4967
    %v4969 = vpop.f32.mrb[0].mxu0
    %v4970 = vadd.f32 0.0, %v4969
    %v4971 = vpop.f32.mrb[0].mxu0
    %v4972 = vadd.f32 0.0, %v4971
    %v4973 = vpop.f32.mrb[0].mxu0
    %v4974 = vadd.f32 0.0, %v4973
    %4975 = vmatprep.mubr.bf16.mxu0 %v2942
    %4976 = vmatmul.mubr.bf16.gmra.mrb[0].mxu0 %v2941
    %v4977 = vpop.f32.mrb[0].mxu0
    %v4978 = vadd.f32 0.0, %v4977
    %v4979 = vpop.f32.mrb[0].mxu0
    %v4980 = vadd.f32 0.0, %v4979
    %v4981 = vpop.f32.mrb[0].mxu0
    %v4982 = vadd.f32 0.0, %v4981
    %v4983 = vpop.f32.mrb[0].mxu0
    %v4984 = vadd.f32 0.0, %v4983
    %4985 = vmatprep.mubr.bf16.mxu0 %v2958
    %4986 = vmatmul.mubr.bf16.gmra.mrb[0].mxu0 %v2957
    %v4987 = vpop.f32.mrb[0].mxu0
    %v4988 = vadd.f32 0.0, %v4987
    %v4989 = vpop.f32.mrb[0].mxu0
    %v4990 = vadd.f32 0.0, %v4989
    %v4991 = vpop.f32.mrb[0].mxu0
    %v4992 = vadd.f32 0.0, %v4991
    %v4993 = vpop.f32.mrb[0].mxu0
    %v4994 = vadd.f32 0.0, %v4993
    %4995 = vmatprep.mubr.bf16.mxu0 %v2974
    %4996 = vmatmul.mubr.bf16.gmra.mrb[0].mxu0 %v2973
    %v4997 = vpop.f32.mrb[0].mxu0
    %v4998 = vadd.f32 0.0, %v4997
    %v4999 = vpop.f32.mrb[0].mxu0
    %v5000 = vadd.f32 0.0, %v4999
    %v5001 = vpop.f32.mrb[0].mxu0
    %v5002 = vadd.f32 0.0, %v5001
    %v5003 = vpop.f32.mrb[0].mxu0
    %v5004 = vadd.f32 0.0, %v5003
    %5005 = vmatprep.mubr.bf16.mxu0 %v2990
    %5006 = vmatmul.mubr.bf16.gmra.mrb[0].mxu0 %v2989
    %v5007 = vpop.f32.mrb[0].mxu0
    %v5008 = vadd.f32 0.0, %v5007
    %v5009 = vpop.f32.mrb[0].mxu0
    %v5010 = vadd.f32 0.0, %v5009
    %v5011 = vpop.f32.mrb[0].mxu0
    %v5012 = vadd.f32 0.0, %v5011
    %v5013 = vpop.f32.mrb[0].mxu0
    %v5014 = vadd.f32 0.0, %v5013
    %5015 = vmatprep.mubr.bf16.mxu0 %v3006
    %5016 = vmatmul.mubr.bf16.gmra.mrb[0].mxu0 %v3005
    %v5017 = vpop.f32.mrb[0].mxu0
    %v5018 = vadd.f32 0.0, %v5017
    %v5019 = vpop.f32.mrb[0].mxu0
    %v5020 = vadd.f32 0.0, %v5019
    %v5021 = vpop.f32.mrb[0].mxu0
    %v5022 = vadd.f32 0.0, %v5021
    %v5023 = vpop.f32.mrb[0].mxu0
    %v5024 = vadd.f32 0.0, %v5023
    %5025 = vmatprep.mubr.bf16.mxu0 %v3022
    %5026 = vmatmul.mubr.bf16.gmra.mrb[0].mxu0 %v3021
    %v5027 = vpop.f32.mrb[0].mxu0
    %v5028 = vadd.f32 0.0, %v5027
    %v5029 = vpop.f32.mrb[0].mxu0
    %v5030 = vadd.f32 0.0, %v5029
    %v5031 = vpop.f32.mrb[0].mxu0
    %v5032 = vadd.f32 0.0, %v5031
    %v5033 = vpop.f32.mrb[0].mxu0
    %v5034 = vadd.f32 0.0, %v5033
    %5035 = vmatprep.mubr.bf16.mxu0 %v3038
    %5036 = vmatmul.mubr.bf16.gmra.mrb[0].mxu0 %v3037
    %v5037 = vpop.f32.mrb[0].mxu0
    %v5038 = vadd.f32 0.0, %v5037
    %v5039 = vpop.f32.mrb[0].mxu0
    %v5040 = vadd.f32 0.0, %v5039
    %v5041 = vpop.f32.mrb[0].mxu0
    %v5042 = vadd.f32 0.0, %v5041
    %v5043 = vpop.f32.mrb[0].mxu0
    %v5044 = vadd.f32 0.0, %v5043
    %5045 = vmatprep.mubr.bf16.mxu0 %v3054
    %5046 = vmatmul.mubr.bf16.gmra.mrb[0].mxu0 %v3053
    %v5047 = vpop.f32.mrb[0].mxu0
    %v5048 = vadd.f32 0.0, %v5047
    %v5049 = vpop.f32.mrb[0].mxu0
    %v5050 = vadd.f32 0.0, %v5049
    %v5051 = vpop.f32.mrb[0].mxu0
    %v5052 = vadd.f32 0.0, %v5051
    %v5053 = vpop.f32.mrb[0].mxu0
    %v5054 = vadd.f32 0.0, %v5053
    %5055 = vmatprep.mubr.bf16.mxu0 %v3070
    %5056 = vmatmul.mubr.bf16.gmra.mrb[0].mxu0 %v3069
    %v5057 = vpop.f32.mrb[0].mxu0
    %v5058 = vadd.f32 0.0, %v5057
    %v5059 = vpop.f32.mrb[0].mxu0
    %v5060 = vadd.f32 0.0, %v5059
    %v5061 = vpop.f32.mrb[0].mxu0
    %v5062 = vadd.f32 0.0, %v5061
    %v5063 = vpop.f32.mrb[0].mxu0
    %v5064 = vadd.f32 0.0, %v5063
    %5065 = vdwg.mxu0
    %5066 = vmatprep.subr.bf16.mxu0 %v4778
    %5067 = vmatpush1.bf16.msra.mxu0 %v4777
    %5068 = vmatprep.subr.bf16.mxu0 %v4780
    %5069 = vmatpush1.bf16.msra.mxu0 %v4779
    %5070 = vmatprep.subr.bf16.mxu0 %v4782
    %5071 = vmatpush1.bf16.msra.mxu0 %v4781
    %5072 = vmatprep.subr.bf16.mxu0 %v4784
    %5073 = vmatpush1.bf16.msra.mxu0 %v4783
    %5074 = vmatprep.subr.bf16.mxu0 %v4786
    %5075 = vmatpush1.bf16.msra.mxu0 %v4785
    %5076 = vmatprep.subr.bf16.mxu0 %v4788
    %5077 = vmatpush1.bf16.msra.mxu0 %v4787
    %5078 = vmatprep.subr.bf16.mxu0 %v4790
    %5079 = vmatpush1.bf16.msra.mxu0 %v4789
    %5080 = vmatprep.subr.bf16.mxu0 %v4792
    %5081 = vmatpush1.bf16.msra.mxu0 %v4791
    %5082 = vmatprep.subr.bf16.mxu0 %v4794
    %5083 = vmatpush1.bf16.msra.mxu0 %v4793
    %5084 = vmatprep.subr.bf16.mxu0 %v4796
    %5085 = vmatpush1.bf16.msra.mxu0 %v4795
    %5086 = vmatprep.subr.bf16.mxu0 %v4798
    %5087 = vmatpush1.bf16.msra.mxu0 %v4797
    %5088 = vmatprep.subr.bf16.mxu0 %v4800
    %5089 = vmatpush1.bf16.msra.mxu0 %v4799
    %5090 = vmatprep.subr.bf16.mxu0 %v4802
    %5091 = vmatpush1.bf16.msra.mxu0 %v4801
    %5092 = vmatprep.subr.bf16.mxu0 %v4804
    %5093 = vmatpush1.bf16.msra.mxu0 %v4803
    %5094 = vmatprep.subr.bf16.mxu0 %v4806
    %5095 = vmatpush1.bf16.msra.mxu0 %v4805
    %5096 = vmatprep.subr.bf16.mxu0 %v4808
    %5097 = vmatpush1.bf16.msra.mxu0 %v4807
    %5098 = vmatprep.mubr.bf16.mxu0 %v2832
    %5099 = vmatmul.mubr.bf16.gmra.mrb[0].mxu0 %v2831
    %v5100 = vpop.f32.mrb[0].mxu0
    %v5101 = vadd.f32 %v4908, %v5100
    %v5102 = vpop.f32.mrb[0].mxu0
    %v5103 = vadd.f32 %v4910, %v5102
    %v5104 = vpop.f32.mrb[0].mxu0
    %v5105 = vadd.f32 %v4912, %v5104
    %v5106 = vpop.f32.mrb[0].mxu0
    %v5107 = vadd.f32 %v4914, %v5106
    %5108 = vmatprep.mubr.bf16.mxu0 %v2848
    %5109 = vmatmul.mubr.bf16.gmra.mrb[0].mxu0 %v2847
    %v5110 = vpop.f32.mrb[0].mxu0
    %v5111 = vadd.f32 %v4918, %v5110
    %v5112 = vpop.f32.mrb[0].mxu0
    %v5113 = vadd.f32 %v4920, %v5112
    %v5114 = vpop.f32.mrb[0].mxu0
    %v5115 = vadd.f32 %v4922, %v5114
    %v5116 = vpop.f32.mrb[0].mxu0
    %v5117 = vadd.f32 %v4924, %v5116
    %5118 = vmatprep.mubr.bf16.mxu0 %v2864
    %5119 = vmatmul.mubr.bf16.gmra.mrb[0].mxu0 %v2863
    %v5120 = vpop.f32.mrb[0].mxu0
    %v5121 = vadd.f32 %v4928, %v5120
    %v5122 = vpop.f32.mrb[0].mxu0
    %v5123 = vadd.f32 %v4930, %v5122
    %v5124 = vpop.f32.mrb[0].mxu0
    %v5125 = vadd.f32 %v4932, %v5124
    %v5126 = vpop.f32.mrb[0].mxu0
    %v5127 = vadd.f32 %v4934, %v5126
    %5128 = vmatprep.mubr.bf16.mxu0 %v2880
    %5129 = vmatmul.mubr.bf16.gmra.mrb[0].mxu0 %v2879
    %v5130 = vpop.f32.mrb[0].mxu0
    %v5131 = vadd.f32 %v4938, %v5130
    %v5132 = vpop.f32.mrb[0].mxu0
    %v5133 = vadd.f32 %v4940, %v5132
    %v5134 = vpop.f32.mrb[0].mxu0
    %v5135 = vadd.f32 %v4942, %v5134
    %v5136 = vpop.f32.mrb[0].mxu0
    %v5137 = vadd.f32 %v4944, %v5136
    %5138 = vmatprep.mubr.bf16.mxu0 %v2896
    %5139 = vmatmul.mubr.bf16.gmra.mrb[0].mxu0 %v2895
    %v5140 = vpop.f32.mrb[0].mxu0
    %v5141 = vadd.f32 %v4948, %v5140
    %v5142 = vpop.f32.mrb[0].mxu0
    %v5143 = vadd.f32 %v4950, %v5142
    %v5144 = vpop.f32.mrb[0].mxu0
    %v5145 = vadd.f32 %v4952, %v5144
    %v5146 = vpop.f32.mrb[0].mxu0
    %v5147 = vadd.f32 %v4954, %v5146
    %5148 = vmatprep.mubr.bf16.mxu0 %v2912
    %5149 = vmatmul.mubr.bf16.gmra.mrb[0].mxu0 %v2911
    %v5150 = vpop.f32.mrb[0].mxu0
    %v5151 = vadd.f32 %v4958, %v5150
    %v5152 = vpop.f32.mrb[0].mxu0
    %v5153 = vadd.f32 %v4960, %v5152
    %v5154 = vpop.f32.mrb[0].mxu0
    %v5155 = vadd.f32 %v4962, %v5154
    %v5156 = vpop.f32.mrb[0].mxu0
    %v5157 = vadd.f32 %v4964, %v5156
    %5158 = vmatprep.mubr.bf16.mxu0 %v2928
    %5159 = vmatmul.mubr.bf16.gmra.mrb[0].mxu0 %v2927
    %v5160 = vpop.f32.mrb[0].mxu0
    %v5161 = vadd.f32 %v4968, %v5160
    %v5162 = vpop.f32.mrb[0].mxu0
    %v5163 = vadd.f32 %v4970, %v5162
    %v5164 = vpop.f32.mrb[0].mxu0
    %v5165 = vadd.f32 %v4972, %v5164
    %v5166 = vpop.f32.mrb[0].mxu0
    %v5167 = vadd.f32 %v4974, %v5166
    %5168 = vmatprep.mubr.bf16.mxu0 %v2944
    %5169 = vmatmul.mubr.bf16.gmra.mrb[0].mxu0 %v2943
    %v5170 = vpop.f32.mrb[0].mxu0
    %v5171 = vadd.f32 %v4978, %v5170
    %v5172 = vpop.f32.mrb[0].mxu0
    %v5173 = vadd.f32 %v4980, %v5172
    %v5174 = vpop.f32.mrb[0].mxu0
    %v5175 = vadd.f32 %v4982, %v5174
    %v5176 = vpop.f32.mrb[0].mxu0
    %v5177 = vadd.f32 %v4984, %v5176
    %5178 = vmatprep.mubr.bf16.mxu0 %v2960
    %5179 = vmatmul.mubr.bf16.gmra.mrb[0].mxu0 %v2959
    %v5180 = vpop.f32.mrb[0].mxu0
    %v5181 = vadd.f32 %v4988, %v5180
    %v5182 = vpop.f32.mrb[0].mxu0
    %v5183 = vadd.f32 %v4990, %v5182
    %v5184 = vpop.f32.mrb[0].mxu0
    %v5185 = vadd.f32 %v4992, %v5184
    %v5186 = vpop.f32.mrb[0].mxu0
    %v5187 = vadd.f32 %v4994, %v5186
    %5188 = vmatprep.mubr.bf16.mxu0 %v2976
    %5189 = vmatmul.mubr.bf16.gmra.mrb[0].mxu0 %v2975
    %v5190 = vpop.f32.mrb[0].mxu0
    %v5191 = vadd.f32 %v4998, %v5190
    %v5192 = vpop.f32.mrb[0].mxu0
    %v5193 = vadd.f32 %v5000, %v5192
    %v5194 = vpop.f32.mrb[0].mxu0
    %v5195 = vadd.f32 %v5002, %v5194
    %v5196 = vpop.f32.mrb[0].mxu0
    %v5197 = vadd.f32 %v5004, %v5196
    %5198 = vmatprep.mubr.bf16.mxu0 %v2992
    %5199 = vmatmul.mubr.bf16.gmra.mrb[0].mxu0 %v2991
    %v5200 = vpop.f32.mrb[0].mxu0
    %v5201 = vadd.f32 %v5008, %v5200
    %v5202 = vpop.f32.mrb[0].mxu0
    %v5203 = vadd.f32 %v5010, %v5202
    %v5204 = vpop.f32.mrb[0].mxu0
    %v5205 = vadd.f32 %v5012, %v5204
    %v5206 = vpop.f32.mrb[0].mxu0
    %v5207 = vadd.f32 %v5014, %v5206
    %5208 = vmatprep.mubr.bf16.mxu0 %v3008
    %5209 = vmatmul.mubr.bf16.gmra.mrb[0].mxu0 %v3007
    %v5210 = vpop.f32.mrb[0].mxu0
    %v5211 = vadd.f32 %v5018, %v5210
    %v5212 = vpop.f32.mrb[0].mxu0
    %v5213 = vadd.f32 %v5020, %v5212
    %v5214 = vpop.f32.mrb[0].mxu0
    %v5215 = vadd.f32 %v5022, %v5214
    %v5216 = vpop.f32.mrb[0].mxu0
    %v5217 = vadd.f32 %v5024, %v5216
    %5218 = vmatprep.mubr.bf16.mxu0 %v3024
    %5219 = vmatmul.mubr.bf16.gmra.mrb[0].mxu0 %v3023
    %v5220 = vpop.f32.mrb[0].mxu0
    %v5221 = vadd.f32 %v5028, %v5220
    %v5222 = vpop.f32.mrb[0].mxu0
    %v5223 = vadd.f32 %v5030, %v5222
    %v5224 = vpop.f32.mrb[0].mxu0
    %v5225 = vadd.f32 %v5032, %v5224
    %v5226 = vpop.f32.mrb[0].mxu0
    %v5227 = vadd.f32 %v5034, %v5226
    %5228 = vmatprep.mubr.bf16.mxu0 %v3040
    %5229 = vmatmul.mubr.bf16.gmra.mrb[0].mxu0 %v3039
    %v5230 = vpop.f32.mrb[0].mxu0
    %v5231 = vadd.f32 %v5038, %v5230
    %v5232 = vpop.f32.mrb[0].mxu0
    %v5233 = vadd.f32 %v5040, %v5232
    %v5234 = vpop.f32.mrb[0].mxu0
    %v5235 = vadd.f32 %v5042, %v5234
    %v5236 = vpop.f32.mrb[0].mxu0
    %v5237 = vadd.f32 %v5044, %v5236
    %5238 = vmatprep.mubr.bf16.mxu0 %v3056
    %5239 = vmatmul.mubr.bf16.gmra.mrb[0].mxu0 %v3055
    %v5240 = vpop.f32.mrb[0].mxu0
    %v5241 = vadd.f32 %v5048, %v5240
    %v5242 = vpop.f32.mrb[0].mxu0
    %v5243 = vadd.f32 %v5050, %v5242
    %v5244 = vpop.f32.mrb[0].mxu0
    %v5245 = vadd.f32 %v5052, %v5244
    %v5246 = vpop.f32.mrb[0].mxu0
    %v5247 = vadd.f32 %v5054, %v5246
    %5248 = vmatprep.mubr.bf16.mxu0 %v3072
    %5249 = vmatmul.mubr.bf16.gmra.mrb[0].mxu0 %v3071
    %v5250 = vpop.f32.mrb[0].mxu0
    %v5251 = vadd.f32 %v5058, %v5250
    %v5252 = vpop.f32.mrb[0].mxu0
    %v5253 = vadd.f32 %v5060, %v5252
    %v5254 = vpop.f32.mrb[0].mxu0
    %v5255 = vadd.f32 %v5062, %v5254
    %v5256 = vpop.f32.mrb[0].mxu0
    %v5257 = vadd.f32 %v5064, %v5256
    %5258 = vdwg.mxu0
    %v5259 = vpack.c.bf16 %v5105, %v5101
    %v5260 = vpack.c.bf16 %v5107, %v5103
    %v5261 = vpack.c.bf16 %v5115, %v5111
    %v5262 = vpack.c.bf16 %v5117, %v5113
    %v5263 = vpack.c.bf16 %v5125, %v5121
    %v5264 = vpack.c.bf16 %v5127, %v5123
    %v5265 = vpack.c.bf16 %v5135, %v5131
    %v5266 = vpack.c.bf16 %v5137, %v5133
    %v5267 = vpack.c.bf16 %v5145, %v5141
    %v5268 = vpack.c.bf16 %v5147, %v5143
    %v5269 = vpack.c.bf16 %v5155, %v5151
    %v5270 = vpack.c.bf16 %v5157, %v5153
    %v5271 = vpack.c.bf16 %v5165, %v5161
    %v5272 = vpack.c.bf16 %v5167, %v5163
    %v5273 = vpack.c.bf16 %v5175, %v5171
    %v5274 = vpack.c.bf16 %v5177, %v5173
    %v5275 = vpack.c.bf16 %v5185, %v5181
    %v5276 = vpack.c.bf16 %v5187, %v5183
    %v5277 = vpack.c.bf16 %v5195, %v5191
    %v5278 = vpack.c.bf16 %v5197, %v5193
    %v5279 = vpack.c.bf16 %v5205, %v5201
    %v5280 = vpack.c.bf16 %v5207, %v5203
    %v5281 = vpack.c.bf16 %v5215, %v5211
    %v5282 = vpack.c.bf16 %v5217, %v5213
    %v5283 = vpack.c.bf16 %v5225, %v5221
    %v5284 = vpack.c.bf16 %v5227, %v5223
    %v5285 = vpack.c.bf16 %v5235, %v5231
    %v5286 = vpack.c.bf16 %v5237, %v5233
    %v5287 = vpack.c.bf16 %v5245, %v5241
    %v5288 = vpack.c.bf16 %v5247, %v5243
    %v5289 = vpack.c.bf16 %v5255, %v5251
    %v5290 = vpack.c.bf16 %v5257, %v5253
    %s5291 = scalar_lea.vmem %s4, 2
    %v5292 = vld [vmem:[%s5291] sm:$0x3]
    %v5294 = vlaneseq
    %v5295 = vshrl.u32 %v5294, 7
    %v5296 = vsub.s32 0, %v5295
    %v5297 = vrot.slane %v5292, %v5296
    %v5298 = vlaneseq
    %v5299 = vshrl.u32 %v5298, 7
    %v5300 = vsub.s32 1, %v5299
    %v5301 = vrot.slane %v5292, %v5300
    %v5304 = vpack.c.bf16 %v5297, %v5297
    %v5305 = vpack.c.bf16 %v5301, %v5301
    %v5307 = vpack.i.b16 %v5304, %v5304
    %v5309 = vlaneseq
    %v5310 = vshrl.u32 %v5309, 7
    %v5311 = vsub.s32 0, %v5310
    %v5312 = vrot.slane %v5307, %v5311
    %v5314 = vpack.i.b16 %v5305, %v5305
    %v5316 = vlaneseq
    %v5317 = vshrl.u32 %v5316, 7
    %v5318 = vsub.s32 0, %v5317
    %v5319 = vrot.slane %v5314, %v5318
    %v5320 = vadd.bf16 %v5259, %v5312
    %v5321 = vadd.bf16 %v5260, %v5319
    %v5322 = vadd.bf16 %v5261, %v5312
    %v5323 = vadd.bf16 %v5262, %v5319
    %v5324 = vadd.bf16 %v5263, %v5312
    %v5325 = vadd.bf16 %v5264, %v5319
    %v5326 = vadd.bf16 %v5265, %v5312
    %v5327 = vadd.bf16 %v5266, %v5319
    %v5328 = vadd.bf16 %v5267, %v5312
    %v5329 = vadd.bf16 %v5268, %v5319
    %v5330 = vadd.bf16 %v5269, %v5312
    %v5331 = vadd.bf16 %v5270, %v5319
    %v5332 = vadd.bf16 %v5271, %v5312
    %v5333 = vadd.bf16 %v5272, %v5319
    %v5334 = vadd.bf16 %v5273, %v5312
    %v5335 = vadd.bf16 %v5274, %v5319
    %v5336 = vadd.bf16 %v5275, %v5312
    %v5337 = vadd.bf16 %v5276, %v5319
    %v5338 = vadd.bf16 %v5277, %v5312
    %v5339 = vadd.bf16 %v5278, %v5319
    %v5340 = vadd.bf16 %v5279, %v5312
    %v5341 = vadd.bf16 %v5280, %v5319
    %v5342 = vadd.bf16 %v5281, %v5312
    %v5343 = vadd.bf16 %v5282, %v5319
    %v5344 = vadd.bf16 %v5283, %v5312
    %v5345 = vadd.bf16 %v5284, %v5319
    %v5346 = vadd.bf16 %v5285, %v5312
    %v5347 = vadd.bf16 %v5286, %v5319
    %v5348 = vadd.bf16 %v5287, %v5312
    %v5349 = vadd.bf16 %v5288, %v5319
    %v5350 = vadd.bf16 %v5289, %v5312
    %v5351 = vadd.bf16 %v5290, %v5319
    %v5352 = vmax.bf16 %v5320, 0
    %v5353 = vmax.bf16 %v5321, 0
    %v5354 = vmax.bf16 %v5322, 0
    %v5355 = vmax.bf16 %v5323, 0
    %v5356 = vmax.bf16 %v5324, 0
    %v5357 = vmax.bf16 %v5325, 0
    %v5358 = vmax.bf16 %v5326, 0
    %v5359 = vmax.bf16 %v5327, 0
    %v5360 = vmax.bf16 %v5328, 0
    %v5361 = vmax.bf16 %v5329, 0
    %v5362 = vmax.bf16 %v5330, 0
    %v5363 = vmax.bf16 %v5331, 0
    %v5364 = vmax.bf16 %v5332, 0
    %v5365 = vmax.bf16 %v5333, 0
    %v5366 = vmax.bf16 %v5334, 0
    %v5367 = vmax.bf16 %v5335, 0
    %v5368 = vmax.bf16 %v5336, 0
    %v5369 = vmax.bf16 %v5337, 0
    %v5370 = vmax.bf16 %v5338, 0
    %v5371 = vmax.bf16 %v5339, 0
    %v5372 = vmax.bf16 %v5340, 0
    %v5373 = vmax.bf16 %v5341, 0
    %v5374 = vmax.bf16 %v5342, 0
    %v5375 = vmax.bf16 %v5343, 0
    %v5376 = vmax.bf16 %v5344, 0
    %v5377 = vmax.bf16 %v5345, 0
    %v5378 = vmax.bf16 %v5346, 0
    %v5379 = vmax.bf16 %v5347, 0
    %v5380 = vmax.bf16 %v5348, 0
    %v5381 = vmax.bf16 %v5349, 0
    %v5382 = vmax.bf16 %v5350, 0
    %v5383 = vmax.bf16 %v5351, 0
    %s5384 = scalar_lea.vmem [#allocation7], 128
    %v5385 = vld [vmem:[%s5384] sm:$0xf]
    %v5386 = vld [vmem:[%s5384 + $0x4] sm:$0xf]
    %v5387 = vld [vmem:[%s5384 + $0x8] sm:$0xf]
    %v5388 = vld [vmem:[%s5384 + $0xc] sm:$0xf]
    %v5389 = vld [vmem:[%s5384 + $0x10] sm:$0xf]
    %v5390 = vld [vmem:[%s5384 + $0x14] sm:$0xf]
    %v5391 = vld [vmem:[%s5384 + $0x18] sm:$0xf]
    %v5392 = vld [vmem:[%s5384 + $0x1c] sm:$0xf]
    %v5393 = vld [vmem:[%s5384 + $0x20] sm:$0xf]
    %v5394 = vld [vmem:[%s5384 + $0x24] sm:$0xf]
    %v5395 = vld [vmem:[%s5384 + $0x28] sm:$0xf]
    %v5396 = vld [vmem:[%s5384 + $0x2c] sm:$0xf]
    %v5397 = vld [vmem:[%s5384 + $0x30] sm:$0xf]
    %v5398 = vld [vmem:[%s5384 + $0x34] sm:$0xf]
    %v5399 = vld [vmem:[%s5384 + $0x38] sm:$0xf]
    %v5400 = vld [vmem:[%s5384 + $0x3c] sm:$0xf]
    %v5401 = vld [vmem:[%s5384 + $0x40] sm:$0xf]
    %v5402 = vld [vmem:[%s5384 + $0x44] sm:$0xf]
    %v5403 = vld [vmem:[%s5384 + $0x48] sm:$0xf]
    %v5404 = vld [vmem:[%s5384 + $0x4c] sm:$0xf]
    %v5405 = vld [vmem:[%s5384 + $0x50] sm:$0xf]
    %v5406 = vld [vmem:[%s5384 + $0x54] sm:$0xf]
    %v5407 = vld [vmem:[%s5384 + $0x58] sm:$0xf]
    %v5408 = vld [vmem:[%s5384 + $0x5c] sm:$0xf]
    %v5409 = vld [vmem:[%s5384 + $0x60] sm:$0xf]
    %v5410 = vld [vmem:[%s5384 + $0x64] sm:$0xf]
    %v5411 = vld [vmem:[%s5384 + $0x68] sm:$0xf]
    %v5412 = vld [vmem:[%s5384 + $0x6c] sm:$0xf]
    %v5413 = vld [vmem:[%s5384 + $0x70] sm:$0xf]
    %v5414 = vld [vmem:[%s5384 + $0x74] sm:$0xf]
    %v5415 = vld [vmem:[%s5384 + $0x78] sm:$0xf]
    %v5416 = vld [vmem:[%s5384 + $0x7c] sm:$0xf]
    %v5449 = vunpack.c.l.b16 %v5385
    %v5450 = vunpack.c.l.b16 %v5386
    %v5451 = vunpack.c.l.b16 %v5387
    %v5452 = vunpack.c.l.b16 %v5388
    %v5453 = vunpack.c.l.b16 %v5389
    %v5454 = vunpack.c.l.b16 %v5390
    %v5455 = vunpack.c.l.b16 %v5391
    %v5456 = vunpack.c.l.b16 %v5392
    %v5457 = vunpack.c.l.b16 %v5393
    %v5458 = vunpack.c.l.b16 %v5394
    %v5459 = vunpack.c.l.b16 %v5395
    %v5460 = vunpack.c.l.b16 %v5396
    %v5461 = vunpack.c.l.b16 %v5397
    %v5462 = vunpack.c.l.b16 %v5398
    %v5463 = vunpack.c.l.b16 %v5399
    %v5464 = vunpack.c.l.b16 %v5400
    %v5465 = vunpack.c.l.b16 %v5401
    %v5466 = vunpack.c.l.b16 %v5402
    %v5467 = vunpack.c.l.b16 %v5403
    %v5468 = vunpack.c.l.b16 %v5404
    %v5469 = vunpack.c.l.b16 %v5405
    %v5470 = vunpack.c.l.b16 %v5406
    %v5471 = vunpack.c.l.b16 %v5407
    %v5472 = vunpack.c.l.b16 %v5408
    %v5473 = vunpack.c.l.b16 %v5409
    %v5474 = vunpack.c.l.b16 %v5410
    %v5475 = vunpack.c.l.b16 %v5411
    %v5476 = vunpack.c.l.b16 %v5412
    %v5477 = vunpack.c.l.b16 %v5413
    %v5478 = vunpack.c.l.b16 %v5414
    %v5479 = vunpack.c.l.b16 %v5415
    %v5480 = vunpack.c.l.b16 %v5416
    %v5481 = vpack.c.b16 %v5450, %v5449
    %v5482 = vpack.c.b16 %v5452, %v5451
    %v5483 = vpack.c.b16 %v5454, %v5453
    %v5484 = vpack.c.b16 %v5456, %v5455
    %v5485 = vpack.c.b16 %v5458, %v5457
    %v5486 = vpack.c.b16 %v5460, %v5459
    %v5487 = vpack.c.b16 %v5462, %v5461
    %v5488 = vpack.c.b16 %v5464, %v5463
    %v5489 = vpack.c.b16 %v5466, %v5465
    %v5490 = vpack.c.b16 %v5468, %v5467
    %v5491 = vpack.c.b16 %v5470, %v5469
    %v5492 = vpack.c.b16 %v5472, %v5471
    %v5493 = vpack.c.b16 %v5474, %v5473
    %v5494 = vpack.c.b16 %v5476, %v5475
    %v5495 = vpack.c.b16 %v5478, %v5477
    %v5496 = vpack.c.b16 %v5480, %v5479
    %5513 = vmatprep.subr.bf16.mxu0 0
    %5514 = vmatpush1.bf16.msra.mxu0 %v5481
    %5515 = vmatprep.subr.bf16.mxu0 0
    %5516 = vmatpush1.bf16.msra.mxu0 %v5482
    %5517 = vmatprep.subr.bf16.mxu0 0
    %5518 = vmatpush1.bf16.msra.mxu0 %v5483
    %5519 = vmatprep.subr.bf16.mxu0 0
    %5520 = vmatpush1.bf16.msra.mxu0 %v5484
    %5521 = vmatprep.subr.bf16.mxu0 0
    %5522 = vmatpush1.bf16.msra.mxu0 %v5485
    %5523 = vmatprep.subr.bf16.mxu0 0
    %5524 = vmatpush1.bf16.msra.mxu0 %v5486
    %5525 = vmatprep.subr.bf16.mxu0 0
    %5526 = vmatpush1.bf16.msra.mxu0 %v5487
    %5527 = vmatprep.subr.bf16.mxu0 0
    %5528 = vmatpush1.bf16.msra.mxu0 %v5488
    %5529 = vmatprep.subr.bf16.mxu0 0
    %5530 = vmatpush1.bf16.msra.mxu0 %v5489
    %5531 = vmatprep.subr.bf16.mxu0 0
    %5532 = vmatpush1.bf16.msra.mxu0 %v5490
    %5533 = vmatprep.subr.bf16.mxu0 0
    %5534 = vmatpush1.bf16.msra.mxu0 %v5491
    %5535 = vmatprep.subr.bf16.mxu0 0
    %5536 = vmatpush1.bf16.msra.mxu0 %v5492
    %5537 = vmatprep.subr.bf16.mxu0 0
    %5538 = vmatpush1.bf16.msra.mxu0 %v5493
    %5539 = vmatprep.subr.bf16.mxu0 0
    %5540 = vmatpush1.bf16.msra.mxu0 %v5494
    %5541 = vmatprep.subr.bf16.mxu0 0
    %5542 = vmatpush1.bf16.msra.mxu0 %v5495
    %5543 = vmatprep.subr.bf16.mxu0 0
    %5544 = vmatpush1.bf16.msra.mxu0 %v5496
    %5545 = vmatprep.mubr.bf16.mxu0 %v5353
    %5546 = vmatmul.mubr.bf16.gmra.mrb[0].mxu0 %v5352
    %v5547 = vpop.f32.mrb[0].mxu0
    %v5548 = vadd.f32 0.0, %v5547
    %v5549 = vpop.f32.mrb[0].mxu0
    %v5550 = vpop.f32.mrb[0].mxu0
    %v5551 = vadd.f32 0.0, %v5550
    %v5552 = vpop.f32.mrb[0].mxu0
    %5553 = vmatprep.mubr.bf16.mxu0 %v5355
    %5554 = vmatmul.mubr.bf16.gmra.mrb[0].mxu0 %v5354
    %v5555 = vpop.f32.mrb[0].mxu0
    %v5556 = vadd.f32 0.0, %v5555
    %v5557 = vpop.f32.mrb[0].mxu0
    %v5558 = vpop.f32.mrb[0].mxu0
    %v5559 = vadd.f32 0.0, %v5558
    %v5560 = vpop.f32.mrb[0].mxu0
    %5561 = vmatprep.mubr.bf16.mxu0 %v5357
    %5562 = vmatmul.mubr.bf16.gmra.mrb[0].mxu0 %v5356
    %v5563 = vpop.f32.mrb[0].mxu0
    %v5564 = vadd.f32 0.0, %v5563
    %v5565 = vpop.f32.mrb[0].mxu0
    %v5566 = vpop.f32.mrb[0].mxu0
    %v5567 = vadd.f32 0.0, %v5566
    %v5568 = vpop.f32.mrb[0].mxu0
    %5569 = vmatprep.mubr.bf16.mxu0 %v5359
    %5570 = vmatmul.mubr.bf16.gmra.mrb[0].mxu0 %v5358
    %v5571 = vpop.f32.mrb[0].mxu0
    %v5572 = vadd.f32 0.0, %v5571
    %v5573 = vpop.f32.mrb[0].mxu0
    %v5574 = vpop.f32.mrb[0].mxu0
    %v5575 = vadd.f32 0.0, %v5574
    %v5576 = vpop.f32.mrb[0].mxu0
    %5577 = vmatprep.mubr.bf16.mxu0 %v5361
    %5578 = vmatmul.mubr.bf16.gmra.mrb[0].mxu0 %v5360
    %v5579 = vpop.f32.mrb[0].mxu0
    %v5580 = vadd.f32 0.0, %v5579
    %v5581 = vpop.f32.mrb[0].mxu0
    %v5582 = vpop.f32.mrb[0].mxu0
    %v5583 = vadd.f32 0.0, %v5582
    %v5584 = vpop.f32.mrb[0].mxu0
    %5585 = vmatprep.mubr.bf16.mxu0 %v5363
    %5586 = vmatmul.mubr.bf16.gmra.mrb[0].mxu0 %v5362
    %v5587 = vpop.f32.mrb[0].mxu0
    %v5588 = vadd.f32 0.0, %v5587
    %v5589 = vpop.f32.mrb[0].mxu0
    %v5590 = vpop.f32.mrb[0].mxu0
    %v5591 = vadd.f32 0.0, %v5590
    %v5592 = vpop.f32.mrb[0].mxu0
    %5593 = vmatprep.mubr.bf16.mxu0 %v5365
    %5594 = vmatmul.mubr.bf16.gmra.mrb[0].mxu0 %v5364
    %v5595 = vpop.f32.mrb[0].mxu0
    %v5596 = vadd.f32 0.0, %v5595
    %v5597 = vpop.f32.mrb[0].mxu0
    %v5598 = vpop.f32.mrb[0].mxu0
    %v5599 = vadd.f32 0.0, %v5598
    %v5600 = vpop.f32.mrb[0].mxu0
    %5601 = vmatprep.mubr.bf16.mxu0 %v5367
    %5602 = vmatmul.mubr.bf16.gmra.mrb[0].mxu0 %v5366
    %v5603 = vpop.f32.mrb[0].mxu0
    %v5604 = vadd.f32 0.0, %v5603
    %v5605 = vpop.f32.mrb[0].mxu0
    %v5606 = vpop.f32.mrb[0].mxu0
    %v5607 = vadd.f32 0.0, %v5606
    %v5608 = vpop.f32.mrb[0].mxu0
    %5609 = vmatprep.mubr.bf16.mxu0 %v5369
    %5610 = vmatmul.mubr.bf16.gmra.mrb[0].mxu0 %v5368
    %v5611 = vpop.f32.mrb[0].mxu0
    %v5612 = vadd.f32 0.0, %v5611
    %v5613 = vpop.f32.mrb[0].mxu0
    %v5614 = vpop.f32.mrb[0].mxu0
    %v5615 = vadd.f32 0.0, %v5614
    %v5616 = vpop.f32.mrb[0].mxu0
    %5617 = vmatprep.mubr.bf16.mxu0 %v5371
    %5618 = vmatmul.mubr.bf16.gmra.mrb[0].mxu0 %v5370
    %v5619 = vpop.f32.mrb[0].mxu0
    %v5620 = vadd.f32 0.0, %v5619
    %v5621 = vpop.f32.mrb[0].mxu0
    %v5622 = vpop.f32.mrb[0].mxu0
    %v5623 = vadd.f32 0.0, %v5622
    %v5624 = vpop.f32.mrb[0].mxu0
    %5625 = vmatprep.mubr.bf16.mxu0 %v5373
    %5626 = vmatmul.mubr.bf16.gmra.mrb[0].mxu0 %v5372
    %v5627 = vpop.f32.mrb[0].mxu0
    %v5628 = vadd.f32 0.0, %v5627
    %v5629 = vpop.f32.mrb[0].mxu0
    %v5630 = vpop.f32.mrb[0].mxu0
    %v5631 = vadd.f32 0.0, %v5630
    %v5632 = vpop.f32.mrb[0].mxu0
    %5633 = vmatprep.mubr.bf16.mxu0 %v5375
    %5634 = vmatmul.mubr.bf16.gmra.mrb[0].mxu0 %v5374
    %v5635 = vpop.f32.mrb[0].mxu0
    %v5636 = vadd.f32 0.0, %v5635
    %v5637 = vpop.f32.mrb[0].mxu0
    %v5638 = vpop.f32.mrb[0].mxu0
    %v5639 = vadd.f32 0.0, %v5638
    %v5640 = vpop.f32.mrb[0].mxu0
    %5641 = vmatprep.mubr.bf16.mxu0 %v5377
    %5642 = vmatmul.mubr.bf16.gmra.mrb[0].mxu0 %v5376
    %v5643 = vpop.f32.mrb[0].mxu0
    %v5644 = vadd.f32 0.0, %v5643
    %v5645 = vpop.f32.mrb[0].mxu0
    %v5646 = vpop.f32.mrb[0].mxu0
    %v5647 = vadd.f32 0.0, %v5646
    %v5648 = vpop.f32.mrb[0].mxu0
    %5649 = vmatprep.mubr.bf16.mxu0 %v5379
    %5650 = vmatmul.mubr.bf16.gmra.mrb[0].mxu0 %v5378
    %v5651 = vpop.f32.mrb[0].mxu0
    %v5652 = vadd.f32 0.0, %v5651
    %v5653 = vpop.f32.mrb[0].mxu0
    %v5654 = vpop.f32.mrb[0].mxu0
    %v5655 = vadd.f32 0.0, %v5654
    %v5656 = vpop.f32.mrb[0].mxu0
    %5657 = vmatprep.mubr.bf16.mxu0 %v5381
    %5658 = vmatmul.mubr.bf16.gmra.mrb[0].mxu0 %v5380
    %v5659 = vpop.f32.mrb[0].mxu0
    %v5660 = vadd.f32 0.0, %v5659
    %v5661 = vpop.f32.mrb[0].mxu0
    %v5662 = vpop.f32.mrb[0].mxu0
    %v5663 = vadd.f32 0.0, %v5662
    %v5664 = vpop.f32.mrb[0].mxu0
    %5665 = vmatprep.mubr.bf16.mxu0 %v5383
    %5666 = vmatmul.mubr.bf16.gmra.mrb[0].mxu0 %v5382
    %v5667 = vpop.f32.mrb[0].mxu0
    %v5668 = vadd.f32 0.0, %v5667
    %v5669 = vpop.f32.mrb[0].mxu0
    %v5670 = vpop.f32.mrb[0].mxu0
    %v5671 = vadd.f32 0.0, %v5670
    %v5672 = vpop.f32.mrb[0].mxu0
    %5673 = vdwg.mxu0
    %v5674 = vpack.c.bf16 %v5551, %v5548
    %v5675 = vpack.c.bf16 %v5559, %v5556
    %v5676 = vpack.c.bf16 %v5567, %v5564
    %v5677 = vpack.c.bf16 %v5575, %v5572
    %v5678 = vpack.c.bf16 %v5583, %v5580
    %v5679 = vpack.c.bf16 %v5591, %v5588
    %v5680 = vpack.c.bf16 %v5599, %v5596
    %v5681 = vpack.c.bf16 %v5607, %v5604
    %v5682 = vpack.c.bf16 %v5615, %v5612
    %v5683 = vpack.c.bf16 %v5623, %v5620
    %v5684 = vpack.c.bf16 %v5631, %v5628
    %v5685 = vpack.c.bf16 %v5639, %v5636
    %v5686 = vpack.c.bf16 %v5647, %v5644
    %v5687 = vpack.c.bf16 %v5655, %v5652
    %v5688 = vpack.c.bf16 %v5663, %v5660
    %v5689 = vpack.c.bf16 %v5671, %v5668
    %s5690 = scalar_lea.vmem %s6, 1
    %v5691 = vld [vmem:[%s5690] sm:$0x1]
    %v5692 = vpack.c.bf16 %v5691, %v5691
    %v5694 = vpack.i.b16 %v5692, %v5692
    %v5696 = vlaneseq
    %v5697 = vshrl.u32 %v5696, 7
    %v5698 = vsub.s32 0, %v5697
    %v5699 = vrot.slane %v5694, %v5698
    %v5700 = vadd.bf16 %v5674, %v5699
    %v5701 = vadd.bf16 %v5675, %v5699
    %v5702 = vadd.bf16 %v5676, %v5699
    %v5703 = vadd.bf16 %v5677, %v5699
    %v5704 = vadd.bf16 %v5678, %v5699
    %v5705 = vadd.bf16 %v5679, %v5699
    %v5706 = vadd.bf16 %v5680, %v5699
    %v5707 = vadd.bf16 %v5681, %v5699
    %v5708 = vadd.bf16 %v5682, %v5699
    %v5709 = vadd.bf16 %v5683, %v5699
    %v5710 = vadd.bf16 %v5684, %v5699
    %v5711 = vadd.bf16 %v5685, %v5699
    %v5712 = vadd.bf16 %v5686, %v5699
    %v5713 = vadd.bf16 %v5687, %v5699
    %v5714 = vadd.bf16 %v5688, %v5699
    %v5715 = vadd.bf16 %v5689, %v5699
    %v5716 = vmax.bf16 %v5700, 0
    %v5717 = vmax.bf16 %v5701, 0
    %v5718 = vmax.bf16 %v5702, 0
    %v5719 = vmax.bf16 %v5703, 0
    %v5720 = vmax.bf16 %v5704, 0
    %v5721 = vmax.bf16 %v5705, 0
    %v5722 = vmax.bf16 %v5706, 0
    %v5723 = vmax.bf16 %v5707, 0
    %v5724 = vmax.bf16 %v5708, 0
    %v5725 = vmax.bf16 %v5709, 0
    %v5726 = vmax.bf16 %v5710, 0
    %v5727 = vmax.bf16 %v5711, 0
    %v5728 = vmax.bf16 %v5712, 0
    %v5729 = vmax.bf16 %v5713, 0
    %v5730 = vmax.bf16 %v5714, 0
    %v5731 = vmax.bf16 %v5715, 0
    %v5732 = vunpack.c.l.bf16 %v5716
    %v5733 = vunpack.c.h.bf16 %v5716
    %v5734 = vunpack.c.l.bf16 %v5717
    %v5735 = vunpack.c.h.bf16 %v5717
    %v5736 = vunpack.c.l.bf16 %v5718
    %v5737 = vunpack.c.h.bf16 %v5718
    %v5738 = vunpack.c.l.bf16 %v5719
    %v5739 = vunpack.c.h.bf16 %v5719
    %v5740 = vunpack.c.l.bf16 %v5720
    %v5741 = vunpack.c.h.bf16 %v5720
    %v5742 = vunpack.c.l.bf16 %v5721
    %v5743 = vunpack.c.h.bf16 %v5721
    %v5744 = vunpack.c.l.bf16 %v5722
    %v5745 = vunpack.c.h.bf16 %v5722
    %v5746 = vunpack.c.l.bf16 %v5723
    %v5747 = vunpack.c.h.bf16 %v5723
    %v5748 = vunpack.c.l.bf16 %v5724
    %v5749 = vunpack.c.h.bf16 %v5724
    %v5750 = vunpack.c.l.bf16 %v5725
    %v5751 = vunpack.c.h.bf16 %v5725
    %v5752 = vunpack.c.l.bf16 %v5726
    %v5753 = vunpack.c.h.bf16 %v5726
    %v5754 = vunpack.c.l.bf16 %v5727
    %v5755 = vunpack.c.h.bf16 %v5727
    %v5756 = vunpack.c.l.bf16 %v5728
    %v5757 = vunpack.c.h.bf16 %v5728
    %v5758 = vunpack.c.l.bf16 %v5729
    %v5759 = vunpack.c.h.bf16 %v5729
    %v5760 = vunpack.c.l.bf16 %v5730
    %v5761 = vunpack.c.h.bf16 %v5730
    %v5762 = vunpack.c.l.bf16 %v5731
    %v5763 = vunpack.c.h.bf16 %v5731
    %s5764 = scalar_lea.vmem %s7, 1
    %v5765 = vld [vmem:[%s5764] sm:$0x1]
    %v5767 = vlaneseq
    %v5768 = vshrl.u32 %v5767, 7
    %v5769 = vsub.s32 0, %v5768
    %v5770 = vrot.slane %v5765, %v5769
    %v5772 = vmul.f32 %v5732, %v5770
    %v5773 = vmul.f32 %v5733, %v5770
    %v5774 = vmul.f32 %v5734, %v5770
    %v5775 = vmul.f32 %v5735, %v5770
    %v5776 = vmul.f32 %v5736, %v5770
    %v5777 = vmul.f32 %v5737, %v5770
    %v5778 = vmul.f32 %v5738, %v5770
    %v5779 = vmul.f32 %v5739, %v5770
    %v5780 = vmul.f32 %v5740, %v5770
    %v5781 = vmul.f32 %v5741, %v5770
    %v5782 = vmul.f32 %v5742, %v5770
    %v5783 = vmul.f32 %v5743, %v5770
    %v5784 = vmul.f32 %v5744, %v5770
    %v5785 = vmul.f32 %v5745, %v5770
    %v5786 = vmul.f32 %v5746, %v5770
    %v5787 = vmul.f32 %v5747, %v5770
    %v5788 = vmul.f32 %v5748, %v5770
    %v5789 = vmul.f32 %v5749, %v5770
    %v5790 = vmul.f32 %v5750, %v5770
    %v5791 = vmul.f32 %v5751, %v5770
    %v5792 = vmul.f32 %v5752, %v5770
    %v5793 = vmul.f32 %v5753, %v5770
    %v5794 = vmul.f32 %v5754, %v5770
    %v5795 = vmul.f32 %v5755, %v5770
    %v5796 = vmul.f32 %v5756, %v5770
    %v5797 = vmul.f32 %v5757, %v5770
    %v5798 = vmul.f32 %v5758, %v5770
    %v5799 = vmul.f32 %v5759, %v5770
    %v5800 = vmul.f32 %v5760, %v5770
    %v5801 = vmul.f32 %v5761, %v5770
    %v5802 = vmul.f32 %v5762, %v5770
    %v5803 = vmul.f32 %v5763, %v5770
    %5804 = vadd.xlane.f32.xlu0 %v5772
    %v5805 = vpop.xlane.xlu0 %5804
    %5806 = vadd.xlane.f32.xlu0 %v5773
    %v5807 = vpop.xlane.xlu0 %5806
    %5808 = vadd.xlane.f32.xlu0 %v5774
    %v5809 = vpop.xlane.xlu0 %5808
    %5810 = vadd.xlane.f32.xlu0 %v5775
    %v5811 = vpop.xlane.xlu0 %5810
    %5812 = vadd.xlane.f32.xlu0 %v5776
    %v5813 = vpop.xlane.xlu0 %5812
    %5814 = vadd.xlane.f32.xlu0 %v5777
    %v5815 = vpop.xlane.xlu0 %5814
    %5816 = vadd.xlane.f32.xlu0 %v5778
    %v5817 = vpop.xlane.xlu0 %5816
    %5818 = vadd.xlane.f32.xlu0 %v5779
    %v5819 = vpop.xlane.xlu0 %5818
    %5820 = vadd.xlane.f32.xlu0 %v5780
    %v5821 = vpop.xlane.xlu0 %5820
    %5822 = vadd.xlane.f32.xlu0 %v5781
    %v5823 = vpop.xlane.xlu0 %5822
    %5824 = vadd.xlane.f32.xlu0 %v5782
    %v5825 = vpop.xlane.xlu0 %5824
    %5826 = vadd.xlane.f32.xlu0 %v5783
    %v5827 = vpop.xlane.xlu0 %5826
    %5828 = vadd.xlane.f32.xlu0 %v5784
    %v5829 = vpop.xlane.xlu0 %5828
    %5830 = vadd.xlane.f32.xlu0 %v5785
    %v5831 = vpop.xlane.xlu0 %5830
    %5832 = vadd.xlane.f32.xlu0 %v5786
    %v5833 = vpop.xlane.xlu0 %5832
    %5834 = vadd.xlane.f32.xlu0 %v5787
    %v5835 = vpop.xlane.xlu0 %5834
    %5836 = vadd.xlane.f32.xlu0 %v5788
    %v5837 = vpop.xlane.xlu0 %5836
    %5838 = vadd.xlane.f32.xlu0 %v5789
    %v5839 = vpop.xlane.xlu0 %5838
    %5840 = vadd.xlane.f32.xlu0 %v5790
    %v5841 = vpop.xlane.xlu0 %5840
    %5842 = vadd.xlane.f32.xlu0 %v5791
    %v5843 = vpop.xlane.xlu0 %5842
    %5844 = vadd.xlane.f32.xlu0 %v5792
    %v5845 = vpop.xlane.xlu0 %5844
    %5846 = vadd.xlane.f32.xlu0 %v5793
    %v5847 = vpop.xlane.xlu0 %5846
    %5848 = vadd.xlane.f32.xlu0 %v5794
    %v5849 = vpop.xlane.xlu0 %5848
    %5850 = vadd.xlane.f32.xlu0 %v5795
    %v5851 = vpop.xlane.xlu0 %5850
    %5852 = vadd.xlane.f32.xlu0 %v5796
    %v5853 = vpop.xlane.xlu0 %5852
    %5854 = vadd.xlane.f32.xlu0 %v5797
    %v5855 = vpop.xlane.xlu0 %5854
    %5856 = vadd.xlane.f32.xlu0 %v5798
    %v5857 = vpop.xlane.xlu0 %5856
    %5858 = vadd.xlane.f32.xlu0 %v5799
    %v5859 = vpop.xlane.xlu0 %5858
    %5860 = vadd.xlane.f32.xlu0 %v5800
    %v5861 = vpop.xlane.xlu0 %5860
    %5862 = vadd.xlane.f32.xlu0 %v5801
    %v5863 = vpop.xlane.xlu0 %5862
    %5864 = vadd.xlane.f32.xlu0 %v5802
    %v5865 = vpop.xlane.xlu0 %5864
    %5866 = vadd.xlane.f32.xlu0 %v5803
    %v5867 = vpop.xlane.xlu0 %5866
    %v5868 = vadd.f32 %v4456, %v5805
    %v5869 = vadd.f32 %v4457, %v5807
    %v5870 = vadd.f32 %v4458, %v5809
    %v5871 = vadd.f32 %v4459, %v5811
    %v5872 = vadd.f32 %v4460, %v5813
    %v5873 = vadd.f32 %v4461, %v5815
    %v5874 = vadd.f32 %v4462, %v5817
    %v5875 = vadd.f32 %v4463, %v5819
    %v5876 = vadd.f32 %v4464, %v5821
    %v5877 = vadd.f32 %v4465, %v5823
    %v5878 = vadd.f32 %v4466, %v5825
    %v5879 = vadd.f32 %v4467, %v5827
    %v5880 = vadd.f32 %v4468, %v5829
    %v5881 = vadd.f32 %v4469, %v5831
    %v5882 = vadd.f32 %v4470, %v5833
    %v5883 = vadd.f32 %v4471, %v5835
    %v5884 = vadd.f32 %v4472, %v5837
    %v5885 = vadd.f32 %v4473, %v5839
    %v5886 = vadd.f32 %v4474, %v5841
    %v5887 = vadd.f32 %v4475, %v5843
    %v5888 = vadd.f32 %v4476, %v5845
    %v5889 = vadd.f32 %v4477, %v5847
    %v5890 = vadd.f32 %v4478, %v5849
    %v5891 = vadd.f32 %v4479, %v5851
    %v5892 = vadd.f32 %v4480, %v5853
    %v5893 = vadd.f32 %v4481, %v5855
    %v5894 = vadd.f32 %v4482, %v5857
    %v5895 = vadd.f32 %v4483, %v5859
    %v5896 = vadd.f32 %v4484, %v5861
    %v5897 = vadd.f32 %v4485, %v5863
    %v5898 = vadd.f32 %v4486, %v5865
    %v5899 = vadd.f32 %v4487, %v5867
    %s5900 = scalar_lea.vmem [#allocation5], 1024
    %v5901 = vld [vmem:[%s5900] sm:$0xff]
    %v5902 = vld [vmem:[%s5900 + $0x8] sm:$0xff]
    %v5903 = vld [vmem:[%s5900 + $0x10] sm:$0xff]
    %v5904 = vld [vmem:[%s5900 + $0x18] sm:$0xff]
    %v5905 = vld [vmem:[%s5900 + $0x20] sm:$0xff]
    %v5906 = vld [vmem:[%s5900 + $0x28] sm:$0xff]
    %v5907 = vld [vmem:[%s5900 + $0x30] sm:$0xff]
    %v5908 = vld [vmem:[%s5900 + $0x38] sm:$0xff]
    %v5909 = vld [vmem:[%s5900 + $0x40] sm:$0xff]
    %v5910 = vld [vmem:[%s5900 + $0x48] sm:$0xff]
    %v5911 = vld [vmem:[%s5900 + $0x50] sm:$0xff]
    %v5912 = vld [vmem:[%s5900 + $0x58] sm:$0xff]
    %v5913 = vld [vmem:[%s5900 + $0x60] sm:$0xff]
    %v5914 = vld [vmem:[%s5900 + $0x68] sm:$0xff]
    %v5915 = vld [vmem:[%s5900 + $0x70] sm:$0xff]
    %v5916 = vld [vmem:[%s5900 + $0x78] sm:$0xff]
    %v5917 = vld [vmem:[%s5900 + $0x80] sm:$0xff]
    %v5918 = vld [vmem:[%s5900 + $0x88] sm:$0xff]
    %v5919 = vld [vmem:[%s5900 + $0x90] sm:$0xff]
    %v5920 = vld [vmem:[%s5900 + $0x98] sm:$0xff]
    %v5921 = vld [vmem:[%s5900 + $0xa0] sm:$0xff]
    %v5922 = vld [vmem:[%s5900 + $0xa8] sm:$0xff]
    %v5923 = vld [vmem:[%s5900 + $0xb0] sm:$0xff]
    %v5924 = vld [vmem:[%s5900 + $0xb8] sm:$0xff]
    %v5925 = vld [vmem:[%s5900 + $0xc0] sm:$0xff]
    %v5926 = vld [vmem:[%s5900 + $0xc8] sm:$0xff]
    %v5927 = vld [vmem:[%s5900 + $0xd0] sm:$0xff]
    %v5928 = vld [vmem:[%s5900 + $0xd8] sm:$0xff]
    %v5929 = vld [vmem:[%s5900 + $0xe0] sm:$0xff]
    %v5930 = vld [vmem:[%s5900 + $0xe8] sm:$0xff]
    %v5931 = vld [vmem:[%s5900 + $0xf0] sm:$0xff]
    %v5932 = vld [vmem:[%s5900 + $0xf8] sm:$0xff]
    %v5933 = vld [vmem:[%s5900 + $0x100] sm:$0xff]
    %v5934 = vld [vmem:[%s5900 + $0x108] sm:$0xff]
    %v5935 = vld [vmem:[%s5900 + $0x110] sm:$0xff]
    %v5936 = vld [vmem:[%s5900 + $0x118] sm:$0xff]
    %v5937 = vld [vmem:[%s5900 + $0x120] sm:$0xff]
    %v5938 = vld [vmem:[%s5900 + $0x128] sm:$0xff]
    %v5939 = vld [vmem:[%s5900 + $0x130] sm:$0xff]
    %v5940 = vld [vmem:[%s5900 + $0x138] sm:$0xff]
    %v5941 = vld [vmem:[%s5900 + $0x140] sm:$0xff]
    %v5942 = vld [vmem:[%s5900 + $0x148] sm:$0xff]
    %v5943 = vld [vmem:[%s5900 + $0x150] sm:$0xff]
    %v5944 = vld [vmem:[%s5900 + $0x158] sm:$0xff]
    %v5945 = vld [vmem:[%s5900 + $0x160] sm:$0xff]
    %v5946 = vld [vmem:[%s5900 + $0x168] sm:$0xff]
    %v5947 = vld [vmem:[%s5900 + $0x170] sm:$0xff]
    %v5948 = vld [vmem:[%s5900 + $0x178] sm:$0xff]
    %v5949 = vld [vmem:[%s5900 + $0x180] sm:$0xff]
    %v5950 = vld [vmem:[%s5900 + $0x188] sm:$0xff]
    %v5951 = vld [vmem:[%s5900 + $0x190] sm:$0xff]
    %v5952 = vld [vmem:[%s5900 + $0x198] sm:$0xff]
    %v5953 = vld [vmem:[%s5900 + $0x1a0] sm:$0xff]
    %v5954 = vld [vmem:[%s5900 + $0x1a8] sm:$0xff]
    %v5955 = vld [vmem:[%s5900 + $0x1b0] sm:$0xff]
    %v5956 = vld [vmem:[%s5900 + $0x1b8] sm:$0xff]
    %v5957 = vld [vmem:[%s5900 + $0x1c0] sm:$0xff]
    %v5958 = vld [vmem:[%s5900 + $0x1c8] sm:$0xff]
    %v5959 = vld [vmem:[%s5900 + $0x1d0] sm:$0xff]
    %v5960 = vld [vmem:[%s5900 + $0x1d8] sm:$0xff]
    %v5961 = vld [vmem:[%s5900 + $0x1e0] sm:$0xff]
    %v5962 = vld [vmem:[%s5900 + $0x1e8] sm:$0xff]
    %v5963 = vld [vmem:[%s5900 + $0x1f0] sm:$0xff]
    %v5964 = vld [vmem:[%s5900 + $0x1f8] sm:$0xff]
    %v6029 = vunpack.c.l.b16 %v5901
    %v6030 = vunpack.c.h.b16 %v5901
    %v6031 = vunpack.c.l.b16 %v5902
    %v6032 = vunpack.c.h.b16 %v5902
    %v6033 = vunpack.c.l.b16 %v5903
    %v6034 = vunpack.c.h.b16 %v5903
    %v6035 = vunpack.c.l.b16 %v5904
    %v6036 = vunpack.c.h.b16 %v5904
    %v6037 = vunpack.c.l.b16 %v5905
    %v6038 = vunpack.c.h.b16 %v5905
    %v6039 = vunpack.c.l.b16 %v5906
    %v6040 = vunpack.c.h.b16 %v5906
    %v6041 = vunpack.c.l.b16 %v5907
    %v6042 = vunpack.c.h.b16 %v5907
    %v6043 = vunpack.c.l.b16 %v5908
    %v6044 = vunpack.c.h.b16 %v5908
    %v6045 = vunpack.c.l.b16 %v5909
    %v6046 = vunpack.c.h.b16 %v5909
    %v6047 = vunpack.c.l.b16 %v5910
    %v6048 = vunpack.c.h.b16 %v5910
    %v6049 = vunpack.c.l.b16 %v5911
    %v6050 = vunpack.c.h.b16 %v5911
    %v6051 = vunpack.c.l.b16 %v5912
    %v6052 = vunpack.c.h.b16 %v5912
    %v6053 = vunpack.c.l.b16 %v5913
    %v6054 = vunpack.c.h.b16 %v5913
    %v6055 = vunpack.c.l.b16 %v5914
    %v6056 = vunpack.c.h.b16 %v5914
    %v6057 = vunpack.c.l.b16 %v5915
    %v6058 = vunpack.c.h.b16 %v5915
    %v6059 = vunpack.c.l.b16 %v5916
    %v6060 = vunpack.c.h.b16 %v5916
    %v6061 = vunpack.c.l.b16 %v5917
    %v6062 = vunpack.c.h.b16 %v5917
    %v6063 = vunpack.c.l.b16 %v5918
    %v6064 = vunpack.c.h.b16 %v5918
    %v6065 = vunpack.c.l.b16 %v5919
    %v6066 = vunpack.c.h.b16 %v5919
    %v6067 = vunpack.c.l.b16 %v5920
    %v6068 = vunpack.c.h.b16 %v5920
    %v6069 = vunpack.c.l.b16 %v5921
    %v6070 = vunpack.c.h.b16 %v5921
    %v6071 = vunpack.c.l.b16 %v5922
    %v6072 = vunpack.c.h.b16 %v5922
    %v6073 = vunpack.c.l.b16 %v5923
    %v6074 = vunpack.c.h.b16 %v5923
    %v6075 = vunpack.c.l.b16 %v5924
    %v6076 = vunpack.c.h.b16 %v5924
    %v6077 = vunpack.c.l.b16 %v5925
    %v6078 = vunpack.c.h.b16 %v5925
    %v6079 = vunpack.c.l.b16 %v5926
    %v6080 = vunpack.c.h.b16 %v5926
    %v6081 = vunpack.c.l.b16 %v5927
    %v6082 = vunpack.c.h.b16 %v5927
    %v6083 = vunpack.c.l.b16 %v5928
    %v6084 = vunpack.c.h.b16 %v5928
    %v6085 = vunpack.c.l.b16 %v5929
    %v6086 = vunpack.c.h.b16 %v5929
    %v6087 = vunpack.c.l.b16 %v5930
    %v6088 = vunpack.c.h.b16 %v5930
    %v6089 = vunpack.c.l.b16 %v5931
    %v6090 = vunpack.c.h.b16 %v5931
    %v6091 = vunpack.c.l.b16 %v5932
    %v6092 = vunpack.c.h.b16 %v5932
    %v6093 = vunpack.c.l.b16 %v5933
    %v6094 = vunpack.c.h.b16 %v5933
    %v6095 = vunpack.c.l.b16 %v5934
    %v6096 = vunpack.c.h.b16 %v5934
    %v6097 = vunpack.c.l.b16 %v5935
    %v6098 = vunpack.c.h.b16 %v5935
    %v6099 = vunpack.c.l.b16 %v5936
    %v6100 = vunpack.c.h.b16 %v5936
    %v6101 = vunpack.c.l.b16 %v5937
    %v6102 = vunpack.c.h.b16 %v5937
    %v6103 = vunpack.c.l.b16 %v5938
    %v6104 = vunpack.c.h.b16 %v5938
    %v6105 = vunpack.c.l.b16 %v5939
    %v6106 = vunpack.c.h.b16 %v5939
    %v6107 = vunpack.c.l.b16 %v5940
    %v6108 = vunpack.c.h.b16 %v5940
    %v6109 = vunpack.c.l.b16 %v5941
    %v6110 = vunpack.c.h.b16 %v5941
    %v6111 = vunpack.c.l.b16 %v5942
    %v6112 = vunpack.c.h.b16 %v5942
    %v6113 = vunpack.c.l.b16 %v5943
    %v6114 = vunpack.c.h.b16 %v5943
    %v6115 = vunpack.c.l.b16 %v5944
    %v6116 = vunpack.c.h.b16 %v5944
    %v6117 = vunpack.c.l.b16 %v5945
    %v6118 = vunpack.c.h.b16 %v5945
    %v6119 = vunpack.c.l.b16 %v5946
    %v6120 = vunpack.c.h.b16 %v5946
    %v6121 = vunpack.c.l.b16 %v5947
    %v6122 = vunpack.c.h.b16 %v5947
    %v6123 = vunpack.c.l.b16 %v5948
    %v6124 = vunpack.c.h.b16 %v5948
    %v6125 = vunpack.c.l.b16 %v5949
    %v6126 = vunpack.c.h.b16 %v5949
    %v6127 = vunpack.c.l.b16 %v5950
    %v6128 = vunpack.c.h.b16 %v5950
    %v6129 = vunpack.c.l.b16 %v5951
    %v6130 = vunpack.c.h.b16 %v5951
    %v6131 = vunpack.c.l.b16 %v5952
    %v6132 = vunpack.c.h.b16 %v5952
    %v6133 = vunpack.c.l.b16 %v5953
    %v6134 = vunpack.c.h.b16 %v5953
    %v6135 = vunpack.c.l.b16 %v5954
    %v6136 = vunpack.c.h.b16 %v5954
    %v6137 = vunpack.c.l.b16 %v5955
    %v6138 = vunpack.c.h.b16 %v5955
    %v6139 = vunpack.c.l.b16 %v5956
    %v6140 = vunpack.c.h.b16 %v5956
    %v6141 = vunpack.c.l.b16 %v5957
    %v6142 = vunpack.c.h.b16 %v5957
    %v6143 = vunpack.c.l.b16 %v5958
    %v6144 = vunpack.c.h.b16 %v5958
    %v6145 = vunpack.c.l.b16 %v5959
    %v6146 = vunpack.c.h.b16 %v5959
    %v6147 = vunpack.c.l.b16 %v5960
    %v6148 = vunpack.c.h.b16 %v5960
    %v6149 = vunpack.c.l.b16 %v5961
    %v6150 = vunpack.c.h.b16 %v5961
    %v6151 = vunpack.c.l.b16 %v5962
    %v6152 = vunpack.c.h.b16 %v5962
    %v6153 = vunpack.c.l.b16 %v5963
    %v6154 = vunpack.c.h.b16 %v5963
    %v6155 = vunpack.c.l.b16 %v5964
    %v6156 = vunpack.c.h.b16 %v5964
    %v6157 = vpack.c.b16 %v6031, %v6029
    %v6158 = vpack.c.b16 %v6032, %v6030
    %v6159 = vpack.c.b16 %v6035, %v6033
    %v6160 = vpack.c.b16 %v6036, %v6034
    %v6161 = vpack.c.b16 %v6039, %v6037
    %v6162 = vpack.c.b16 %v6040, %v6038
    %v6163 = vpack.c.b16 %v6043, %v6041
    %v6164 = vpack.c.b16 %v6044, %v6042
    %v6165 = vpack.c.b16 %v6047, %v6045
    %v6166 = vpack.c.b16 %v6048, %v6046
    %v6167 = vpack.c.b16 %v6051, %v6049
    %v6168 = vpack.c.b16 %v6052, %v6050
    %v6169 = vpack.c.b16 %v6055, %v6053
    %v6170 = vpack.c.b16 %v6056, %v6054
    %v6171 = vpack.c.b16 %v6059, %v6057
    %v6172 = vpack.c.b16 %v6060, %v6058
    %v6173 = vpack.c.b16 %v6063, %v6061
    %v6174 = vpack.c.b16 %v6064, %v6062
    %v6175 = vpack.c.b16 %v6067, %v6065
    %v6176 = vpack.c.b16 %v6068, %v6066
    %v6177 = vpack.c.b16 %v6071, %v6069
    %v6178 = vpack.c.b16 %v6072, %v6070
    %v6179 = vpack.c.b16 %v6075, %v6073
    %v6180 = vpack.c.b16 %v6076, %v6074
    %v6181 = vpack.c.b16 %v6079, %v6077
    %v6182 = vpack.c.b16 %v6080, %v6078
    %v6183 = vpack.c.b16 %v6083, %v6081
    %v6184 = vpack.c.b16 %v6084, %v6082
    %v6185 = vpack.c.b16 %v6087, %v6085
    %v6186 = vpack.c.b16 %v6088, %v6086
    %v6187 = vpack.c.b16 %v6091, %v6089
    %v6188 = vpack.c.b16 %v6092, %v6090
    %v6189 = vpack.c.b16 %v6095, %v6093
    %v6190 = vpack.c.b16 %v6096, %v6094
    %v6191 = vpack.c.b16 %v6099, %v6097
    %v6192 = vpack.c.b16 %v6100, %v6098
    %v6193 = vpack.c.b16 %v6103, %v6101
    %v6194 = vpack.c.b16 %v6104, %v6102
    %v6195 = vpack.c.b16 %v6107, %v6105
    %v6196 = vpack.c.b16 %v6108, %v6106
    %v6197 = vpack.c.b16 %v6111, %v6109
    %v6198 = vpack.c.b16 %v6112, %v6110
    %v6199 = vpack.c.b16 %v6115, %v6113
    %v6200 = vpack.c.b16 %v6116, %v6114
    %v6201 = vpack.c.b16 %v6119, %v6117
    %v6202 = vpack.c.b16 %v6120, %v6118
    %v6203 = vpack.c.b16 %v6123, %v6121
    %v6204 = vpack.c.b16 %v6124, %v6122
    %v6205 = vpack.c.b16 %v6127, %v6125
    %v6206 = vpack.c.b16 %v6128, %v6126
    %v6207 = vpack.c.b16 %v6131, %v6129
    %v6208 = vpack.c.b16 %v6132, %v6130
    %v6209 = vpack.c.b16 %v6135, %v6133
    %v6210 = vpack.c.b16 %v6136, %v6134
    %v6211 = vpack.c.b16 %v6139, %v6137
    %v6212 = vpack.c.b16 %v6140, %v6138
    %v6213 = vpack.c.b16 %v6143, %v6141
    %v6214 = vpack.c.b16 %v6144, %v6142
    %v6215 = vpack.c.b16 %v6147, %v6145
    %v6216 = vpack.c.b16 %v6148, %v6146
    %v6217 = vpack.c.b16 %v6151, %v6149
    %v6218 = vpack.c.b16 %v6152, %v6150
    %v6219 = vpack.c.b16 %v6155, %v6153
    %v6220 = vpack.c.b16 %v6156, %v6154
    %6285 = vmatprep.subr.bf16.mxu0 %v6158
    %6286 = vmatpush1.bf16.msra.mxu0 %v6157
    %6287 = vmatprep.subr.bf16.mxu0 %v6160
    %6288 = vmatpush1.bf16.msra.mxu0 %v6159
    %6289 = vmatprep.subr.bf16.mxu0 %v6162
    %6290 = vmatpush1.bf16.msra.mxu0 %v6161
    %6291 = vmatprep.subr.bf16.mxu0 %v6164
    %6292 = vmatpush1.bf16.msra.mxu0 %v6163
    %6293 = vmatprep.subr.bf16.mxu0 %v6166
    %6294 = vmatpush1.bf16.msra.mxu0 %v6165
    %6295 = vmatprep.subr.bf16.mxu0 %v6168
    %6296 = vmatpush1.bf16.msra.mxu0 %v6167
    %6297 = vmatprep.subr.bf16.mxu0 %v6170
    %6298 = vmatpush1.bf16.msra.mxu0 %v6169
    %6299 = vmatprep.subr.bf16.mxu0 %v6172
    %6300 = vmatpush1.bf16.msra.mxu0 %v6171
    %6301 = vmatprep.subr.bf16.mxu0 %v6174
    %6302 = vmatpush1.bf16.msra.mxu0 %v6173
    %6303 = vmatprep.subr.bf16.mxu0 %v6176
    %6304 = vmatpush1.bf16.msra.mxu0 %v6175
    %6305 = vmatprep.subr.bf16.mxu0 %v6178
    %6306 = vmatpush1.bf16.msra.mxu0 %v6177
    %6307 = vmatprep.subr.bf16.mxu0 %v6180
    %6308 = vmatpush1.bf16.msra.mxu0 %v6179
    %6309 = vmatprep.subr.bf16.mxu0 %v6182
    %6310 = vmatpush1.bf16.msra.mxu0 %v6181
    %6311 = vmatprep.subr.bf16.mxu0 %v6184
    %6312 = vmatpush1.bf16.msra.mxu0 %v6183
    %6313 = vmatprep.subr.bf16.mxu0 %v6186
    %6314 = vmatpush1.bf16.msra.mxu0 %v6185
    %6315 = vmatprep.subr.bf16.mxu0 %v6188
    %6316 = vmatpush1.bf16.msra.mxu0 %v6187
    %6317 = vmatprep.mubr.bf16.mxu0 %v2834
    %6318 = vmatmul.mubr.bf16.gmra.mrb[0].mxu0 %v2833
    %v6319 = vpop.f32.mrb[0].mxu0
    %v6320 = vadd.f32 0.0, %v6319
    %v6321 = vpop.f32.mrb[0].mxu0
    %v6322 = vadd.f32 0.0, %v6321
    %v6323 = vpop.f32.mrb[0].mxu0
    %v6324 = vadd.f32 0.0, %v6323
    %v6325 = vpop.f32.mrb[0].mxu0
    %v6326 = vadd.f32 0.0, %v6325
    %6327 = vmatprep.mubr.bf16.mxu0 %v2850
    %6328 = vmatmul.mubr.bf16.gmra.mrb[0].mxu0 %v2849
    %v6329 = vpop.f32.mrb[0].mxu0
    %v6330 = vadd.f32 0.0, %v6329
    %v6331 = vpop.f32.mrb[0].mxu0
    %v6332 = vadd.f32 0.0, %v6331
    %v6333 = vpop.f32.mrb[0].mxu0
    %v6334 = vadd.f32 0.0, %v6333
    %v6335 = vpop.f32.mrb[0].mxu0
    %v6336 = vadd.f32 0.0, %v6335
    %6337 = vmatprep.mubr.bf16.mxu0 %v2866
    %6338 = vmatmul.mubr.bf16.gmra.mrb[0].mxu0 %v2865
    %v6339 = vpop.f32.mrb[0].mxu0
    %v6340 = vadd.f32 0.0, %v6339
    %v6341 = vpop.f32.mrb[0].mxu0
    %v6342 = vadd.f32 0.0, %v6341
    %v6343 = vpop.f32.mrb[0].mxu0
    %v6344 = vadd.f32 0.0, %v6343
    %v6345 = vpop.f32.mrb[0].mxu0
    %v6346 = vadd.f32 0.0, %v6345
    %6347 = vmatprep.mubr.bf16.mxu0 %v2882
    %6348 = vmatmul.mubr.bf16.gmra.mrb[0].mxu0 %v2881
    %v6349 = vpop.f32.mrb[0].mxu0
    %v6350 = vadd.f32 0.0, %v6349
    %v6351 = vpop.f32.mrb[0].mxu0
    %v6352 = vadd.f32 0.0, %v6351
    %v6353 = vpop.f32.mrb[0].mxu0
    %v6354 = vadd.f32 0.0, %v6353
    %v6355 = vpop.f32.mrb[0].mxu0
    %v6356 = vadd.f32 0.0, %v6355
    %6357 = vmatprep.mubr.bf16.mxu0 %v2898
    %6358 = vmatmul.mubr.bf16.gmra.mrb[0].mxu0 %v2897
    %v6359 = vpop.f32.mrb[0].mxu0
    %v6360 = vadd.f32 0.0, %v6359
    %v6361 = vpop.f32.mrb[0].mxu0
    %v6362 = vadd.f32 0.0, %v6361
    %v6363 = vpop.f32.mrb[0].mxu0
    %v6364 = vadd.f32 0.0, %v6363
    %v6365 = vpop.f32.mrb[0].mxu0
    %v6366 = vadd.f32 0.0, %v6365
    %6367 = vmatprep.mubr.bf16.mxu0 %v2914
    %6368 = vmatmul.mubr.bf16.gmra.mrb[0].mxu0 %v2913
    %v6369 = vpop.f32.mrb[0].mxu0
    %v6370 = vadd.f32 0.0, %v6369
    %v6371 = vpop.f32.mrb[0].mxu0
    %v6372 = vadd.f32 0.0, %v6371
    %v6373 = vpop.f32.mrb[0].mxu0
    %v6374 = vadd.f32 0.0, %v6373
    %v6375 = vpop.f32.mrb[0].mxu0
    %v6376 = vadd.f32 0.0, %v6375
    %6377 = vmatprep.mubr.bf16.mxu0 %v2930
    %6378 = vmatmul.mubr.bf16.gmra.mrb[0].mxu0 %v2929
    %v6379 = vpop.f32.mrb[0].mxu0
    %v6380 = vadd.f32 0.0, %v6379
    %v6381 = vpop.f32.mrb[0].mxu0
    %v6382 = vadd.f32 0.0, %v6381
    %v6383 = vpop.f32.mrb[0].mxu0
    %v6384 = vadd.f32 0.0, %v6383
    %v6385 = vpop.f32.mrb[0].mxu0
    %v6386 = vadd.f32 0.0, %v6385
    %6387 = vmatprep.mubr.bf16.mxu0 %v2946
    %6388 = vmatmul.mubr.bf16.gmra.mrb[0].mxu0 %v2945
    %v6389 = vpop.f32.mrb[0].mxu0
    %v6390 = vadd.f32 0.0, %v6389
    %v6391 = vpop.f32.mrb[0].mxu0
    %v6392 = vadd.f32 0.0, %v6391
    %v6393 = vpop.f32.mrb[0].mxu0
    %v6394 = vadd.f32 0.0, %v6393
    %v6395 = vpop.f32.mrb[0].mxu0
    %v6396 = vadd.f32 0.0, %v6395
    %6397 = vmatprep.mubr.bf16.mxu0 %v2962
    %6398 = vmatmul.mubr.bf16.gmra.mrb[0].mxu0 %v2961
    %v6399 = vpop.f32.mrb[0].mxu0
    %v6400 = vadd.f32 0.0, %v6399
    %v6401 = vpop.f32.mrb[0].mxu0
    %v6402 = vadd.f32 0.0, %v6401
    %v6403 = vpop.f32.mrb[0].mxu0
    %v6404 = vadd.f32 0.0, %v6403
    %v6405 = vpop.f32.mrb[0].mxu0
    %v6406 = vadd.f32 0.0, %v6405
    %6407 = vmatprep.mubr.bf16.mxu0 %v2978
    %6408 = vmatmul.mubr.bf16.gmra.mrb[0].mxu0 %v2977
    %v6409 = vpop.f32.mrb[0].mxu0
    %v6410 = vadd.f32 0.0, %v6409
    %v6411 = vpop.f32.mrb[0].mxu0
    %v6412 = vadd.f32 0.0, %v6411
    %v6413 = vpop.f32.mrb[0].mxu0
    %v6414 = vadd.f32 0.0, %v6413
    %v6415 = vpop.f32.mrb[0].mxu0
    %v6416 = vadd.f32 0.0, %v6415
    %6417 = vmatprep.mubr.bf16.mxu0 %v2994
    %6418 = vmatmul.mubr.bf16.gmra.mrb[0].mxu0 %v2993
    %v6419 = vpop.f32.mrb[0].mxu0
    %v6420 = vadd.f32 0.0, %v6419
    %v6421 = vpop.f32.mrb[0].mxu0
    %v6422 = vadd.f32 0.0, %v6421
    %v6423 = vpop.f32.mrb[0].mxu0
    %v6424 = vadd.f32 0.0, %v6423
    %v6425 = vpop.f32.mrb[0].mxu0
    %v6426 = vadd.f32 0.0, %v6425
    %6427 = vmatprep.mubr.bf16.mxu0 %v3010
    %6428 = vmatmul.mubr.bf16.gmra.mrb[0].mxu0 %v3009
    %v6429 = vpop.f32.mrb[0].mxu0
    %v6430 = vadd.f32 0.0, %v6429
    %v6431 = vpop.f32.mrb[0].mxu0
    %v6432 = vadd.f32 0.0, %v6431
    %v6433 = vpop.f32.mrb[0].mxu0
    %v6434 = vadd.f32 0.0, %v6433
    %v6435 = vpop.f32.mrb[0].mxu0
    %v6436 = vadd.f32 0.0, %v6435
    %6437 = vmatprep.mubr.bf16.mxu0 %v3026
    %6438 = vmatmul.mubr.bf16.gmra.mrb[0].mxu0 %v3025
    %v6439 = vpop.f32.mrb[0].mxu0
    %v6440 = vadd.f32 0.0, %v6439
    %v6441 = vpop.f32.mrb[0].mxu0
    %v6442 = vadd.f32 0.0, %v6441
    %v6443 = vpop.f32.mrb[0].mxu0
    %v6444 = vadd.f32 0.0, %v6443
    %v6445 = vpop.f32.mrb[0].mxu0
    %v6446 = vadd.f32 0.0, %v6445
    %6447 = vmatprep.mubr.bf16.mxu0 %v3042
    %6448 = vmatmul.mubr.bf16.gmra.mrb[0].mxu0 %v3041
    %v6449 = vpop.f32.mrb[0].mxu0
    %v6450 = vadd.f32 0.0, %v6449
    %v6451 = vpop.f32.mrb[0].mxu0
    %v6452 = vadd.f32 0.0, %v6451
    %v6453 = vpop.f32.mrb[0].mxu0
    %v6454 = vadd.f32 0.0, %v6453
    %v6455 = vpop.f32.mrb[0].mxu0
    %v6456 = vadd.f32 0.0, %v6455
    %6457 = vmatprep.mubr.bf16.mxu0 %v3058
    %6458 = vmatmul.mubr.bf16.gmra.mrb[0].mxu0 %v3057
    %v6459 = vpop.f32.mrb[0].mxu0
    %v6460 = vadd.f32 0.0, %v6459
    %v6461 = vpop.f32.mrb[0].mxu0
    %v6462 = vadd.f32 0.0, %v6461
    %v6463 = vpop.f32.mrb[0].mxu0
    %v6464 = vadd.f32 0.0, %v6463
    %v6465 = vpop.f32.mrb[0].mxu0
    %v6466 = vadd.f32 0.0, %v6465
    %6467 = vmatprep.mubr.bf16.mxu0 %v3074
    %6468 = vmatmul.mubr.bf16.gmra.mrb[0].mxu0 %v3073
    %v6469 = vpop.f32.mrb[0].mxu0
    %v6470 = vadd.f32 0.0, %v6469
    %v6471 = vpop.f32.mrb[0].mxu0
    %v6472 = vadd.f32 0.0, %v6471
    %v6473 = vpop.f32.mrb[0].mxu0
    %v6474 = vadd.f32 0.0, %v6473
    %v6475 = vpop.f32.mrb[0].mxu0
    %v6476 = vadd.f32 0.0, %v6475
    %6477 = vdwg.mxu0
    %6478 = vmatprep.subr.bf16.mxu0 %v6190
    %6479 = vmatpush1.bf16.msra.mxu0 %v6189
    %6480 = vmatprep.subr.bf16.mxu0 %v6192
    %6481 = vmatpush1.bf16.msra.mxu0 %v6191
    %6482 = vmatprep.subr.bf16.mxu0 %v6194
    %6483 = vmatpush1.bf16.msra.mxu0 %v6193
    %6484 = vmatprep.subr.bf16.mxu0 %v6196
    %6485 = vmatpush1.bf16.msra.mxu0 %v6195
    %6486 = vmatprep.subr.bf16.mxu0 %v6198
    %6487 = vmatpush1.bf16.msra.mxu0 %v6197
    %6488 = vmatprep.subr.bf16.mxu0 %v6200
    %6489 = vmatpush1.bf16.msra.mxu0 %v6199
    %6490 = vmatprep.subr.bf16.mxu0 %v6202
    %6491 = vmatpush1.bf16.msra.mxu0 %v6201
    %6492 = vmatprep.subr.bf16.mxu0 %v6204
    %6493 = vmatpush1.bf16.msra.mxu0 %v6203
    %6494 = vmatprep.subr.bf16.mxu0 %v6206
    %6495 = vmatpush1.bf16.msra.mxu0 %v6205
    %6496 = vmatprep.subr.bf16.mxu0 %v6208
    %6497 = vmatpush1.bf16.msra.mxu0 %v6207
    %6498 = vmatprep.subr.bf16.mxu0 %v6210
    %6499 = vmatpush1.bf16.msra.mxu0 %v6209
    %6500 = vmatprep.subr.bf16.mxu0 %v6212
    %6501 = vmatpush1.bf16.msra.mxu0 %v6211
    %6502 = vmatprep.subr.bf16.mxu0 %v6214
    %6503 = vmatpush1.bf16.msra.mxu0 %v6213
    %6504 = vmatprep.subr.bf16.mxu0 %v6216
    %6505 = vmatpush1.bf16.msra.mxu0 %v6215
    %6506 = vmatprep.subr.bf16.mxu0 %v6218
    %6507 = vmatpush1.bf16.msra.mxu0 %v6217
    %6508 = vmatprep.subr.bf16.mxu0 %v6220
    %6509 = vmatpush1.bf16.msra.mxu0 %v6219
    %6510 = vmatprep.mubr.bf16.mxu0 %v2836
    %6511 = vmatmul.mubr.bf16.gmra.mrb[0].mxu0 %v2835
    %v6512 = vpop.f32.mrb[0].mxu0
    %v6513 = vadd.f32 %v6320, %v6512
    %v6514 = vpop.f32.mrb[0].mxu0
    %v6515 = vadd.f32 %v6322, %v6514
    %v6516 = vpop.f32.mrb[0].mxu0
    %v6517 = vadd.f32 %v6324, %v6516
    %v6518 = vpop.f32.mrb[0].mxu0
    %v6519 = vadd.f32 %v6326, %v6518
    %6520 = vmatprep.mubr.bf16.mxu0 %v2852
    %6521 = vmatmul.mubr.bf16.gmra.mrb[0].mxu0 %v2851
    %v6522 = vpop.f32.mrb[0].mxu0
    %v6523 = vadd.f32 %v6330, %v6522
    %v6524 = vpop.f32.mrb[0].mxu0
    %v6525 = vadd.f32 %v6332, %v6524
    %v6526 = vpop.f32.mrb[0].mxu0
    %v6527 = vadd.f32 %v6334, %v6526
    %v6528 = vpop.f32.mrb[0].mxu0
    %v6529 = vadd.f32 %v6336, %v6528
    %6530 = vmatprep.mubr.bf16.mxu0 %v2868
    %6531 = vmatmul.mubr.bf16.gmra.mrb[0].mxu0 %v2867
    %v6532 = vpop.f32.mrb[0].mxu0
    %v6533 = vadd.f32 %v6340, %v6532
    %v6534 = vpop.f32.mrb[0].mxu0
    %v6535 = vadd.f32 %v6342, %v6534
    %v6536 = vpop.f32.mrb[0].mxu0
    %v6537 = vadd.f32 %v6344, %v6536
    %v6538 = vpop.f32.mrb[0].mxu0
    %v6539 = vadd.f32 %v6346, %v6538
    %6540 = vmatprep.mubr.bf16.mxu0 %v2884
    %6541 = vmatmul.mubr.bf16.gmra.mrb[0].mxu0 %v2883
    %v6542 = vpop.f32.mrb[0].mxu0
    %v6543 = vadd.f32 %v6350, %v6542
    %v6544 = vpop.f32.mrb[0].mxu0
    %v6545 = vadd.f32 %v6352, %v6544
    %v6546 = vpop.f32.mrb[0].mxu0
    %v6547 = vadd.f32 %v6354, %v6546
    %v6548 = vpop.f32.mrb[0].mxu0
    %v6549 = vadd.f32 %v6356, %v6548
    %6550 = vmatprep.mubr.bf16.mxu0 %v2900
    %6551 = vmatmul.mubr.bf16.gmra.mrb[0].mxu0 %v2899
    %v6552 = vpop.f32.mrb[0].mxu0
    %v6553 = vadd.f32 %v6360, %v6552
    %v6554 = vpop.f32.mrb[0].mxu0
    %v6555 = vadd.f32 %v6362, %v6554
    %v6556 = vpop.f32.mrb[0].mxu0
    %v6557 = vadd.f32 %v6364, %v6556
    %v6558 = vpop.f32.mrb[0].mxu0
    %v6559 = vadd.f32 %v6366, %v6558
    %6560 = vmatprep.mubr.bf16.mxu0 %v2916
    %6561 = vmatmul.mubr.bf16.gmra.mrb[0].mxu0 %v2915
    %v6562 = vpop.f32.mrb[0].mxu0
    %v6563 = vadd.f32 %v6370, %v6562
    %v6564 = vpop.f32.mrb[0].mxu0
    %v6565 = vadd.f32 %v6372, %v6564
    %v6566 = vpop.f32.mrb[0].mxu0
    %v6567 = vadd.f32 %v6374, %v6566
    %v6568 = vpop.f32.mrb[0].mxu0
    %v6569 = vadd.f32 %v6376, %v6568
    %6570 = vmatprep.mubr.bf16.mxu0 %v2932
    %6571 = vmatmul.mubr.bf16.gmra.mrb[0].mxu0 %v2931
    %v6572 = vpop.f32.mrb[0].mxu0
    %v6573 = vadd.f32 %v6380, %v6572
    %v6574 = vpop.f32.mrb[0].mxu0
    %v6575 = vadd.f32 %v6382, %v6574
    %v6576 = vpop.f32.mrb[0].mxu0
    %v6577 = vadd.f32 %v6384, %v6576
    %v6578 = vpop.f32.mrb[0].mxu0
    %v6579 = vadd.f32 %v6386, %v6578
    %6580 = vmatprep.mubr.bf16.mxu0 %v2948
    %6581 = vmatmul.mubr.bf16.gmra.mrb[0].mxu0 %v2947
    %v6582 = vpop.f32.mrb[0].mxu0
    %v6583 = vadd.f32 %v6390, %v6582
    %v6584 = vpop.f32.mrb[0].mxu0
    %v6585 = vadd.f32 %v6392, %v6584
    %v6586 = vpop.f32.mrb[0].mxu0
    %v6587 = vadd.f32 %v6394, %v6586
    %v6588 = vpop.f32.mrb[0].mxu0
    %v6589 = vadd.f32 %v6396, %v6588
    %6590 = vmatprep.mubr.bf16.mxu0 %v2964
    %6591 = vmatmul.mubr.bf16.gmra.mrb[0].mxu0 %v2963
    %v6592 = vpop.f32.mrb[0].mxu0
    %v6593 = vadd.f32 %v6400, %v6592
    %v6594 = vpop.f32.mrb[0].mxu0
    %v6595 = vadd.f32 %v6402, %v6594
    %v6596 = vpop.f32.mrb[0].mxu0
    %v6597 = vadd.f32 %v6404, %v6596
    %v6598 = vpop.f32.mrb[0].mxu0
    %v6599 = vadd.f32 %v6406, %v6598
    %6600 = vmatprep.mubr.bf16.mxu0 %v2980
    %6601 = vmatmul.mubr.bf16.gmra.mrb[0].mxu0 %v2979
    %v6602 = vpop.f32.mrb[0].mxu0
    %v6603 = vadd.f32 %v6410, %v6602
    %v6604 = vpop.f32.mrb[0].mxu0
    %v6605 = vadd.f32 %v6412, %v6604
    %v6606 = vpop.f32.mrb[0].mxu0
    %v6607 = vadd.f32 %v6414, %v6606
    %v6608 = vpop.f32.mrb[0].mxu0
    %v6609 = vadd.f32 %v6416, %v6608
    %6610 = vmatprep.mubr.bf16.mxu0 %v2996
    %6611 = vmatmul.mubr.bf16.gmra.mrb[0].mxu0 %v2995
    %v6612 = vpop.f32.mrb[0].mxu0
    %v6613 = vadd.f32 %v6420, %v6612
    %v6614 = vpop.f32.mrb[0].mxu0
    %v6615 = vadd.f32 %v6422, %v6614
    %v6616 = vpop.f32.mrb[0].mxu0
    %v6617 = vadd.f32 %v6424, %v6616
    %v6618 = vpop.f32.mrb[0].mxu0
    %v6619 = vadd.f32 %v6426, %v6618
    %6620 = vmatprep.mubr.bf16.mxu0 %v3012
    %6621 = vmatmul.mubr.bf16.gmra.mrb[0].mxu0 %v3011
    %v6622 = vpop.f32.mrb[0].mxu0
    %v6623 = vadd.f32 %v6430, %v6622
    %v6624 = vpop.f32.mrb[0].mxu0
    %v6625 = vadd.f32 %v6432, %v6624
    %v6626 = vpop.f32.mrb[0].mxu0
    %v6627 = vadd.f32 %v6434, %v6626
    %v6628 = vpop.f32.mrb[0].mxu0
    %v6629 = vadd.f32 %v6436, %v6628
    %6630 = vmatprep.mubr.bf16.mxu0 %v3028
    %6631 = vmatmul.mubr.bf16.gmra.mrb[0].mxu0 %v3027
    %v6632 = vpop.f32.mrb[0].mxu0
    %v6633 = vadd.f32 %v6440, %v6632
    %v6634 = vpop.f32.mrb[0].mxu0
    %v6635 = vadd.f32 %v6442, %v6634
    %v6636 = vpop.f32.mrb[0].mxu0
    %v6637 = vadd.f32 %v6444, %v6636
    %v6638 = vpop.f32.mrb[0].mxu0
    %v6639 = vadd.f32 %v6446, %v6638
    %6640 = vmatprep.mubr.bf16.mxu0 %v3044
    %6641 = vmatmul.mubr.bf16.gmra.mrb[0].mxu0 %v3043
    %v6642 = vpop.f32.mrb[0].mxu0
    %v6643 = vadd.f32 %v6450, %v6642
    %v6644 = vpop.f32.mrb[0].mxu0
    %v6645 = vadd.f32 %v6452, %v6644
    %v6646 = vpop.f32.mrb[0].mxu0
    %v6647 = vadd.f32 %v6454, %v6646
    %v6648 = vpop.f32.mrb[0].mxu0
    %v6649 = vadd.f32 %v6456, %v6648
    %6650 = vmatprep.mubr.bf16.mxu0 %v3060
    %6651 = vmatmul.mubr.bf16.gmra.mrb[0].mxu0 %v3059
    %v6652 = vpop.f32.mrb[0].mxu0
    %v6653 = vadd.f32 %v6460, %v6652
    %v6654 = vpop.f32.mrb[0].mxu0
    %v6655 = vadd.f32 %v6462, %v6654
    %v6656 = vpop.f32.mrb[0].mxu0
    %v6657 = vadd.f32 %v6464, %v6656
    %v6658 = vpop.f32.mrb[0].mxu0
    %v6659 = vadd.f32 %v6466, %v6658
    %6660 = vmatprep.mubr.bf16.mxu0 %v3076
    %6661 = vmatmul.mubr.bf16.gmra.mrb[0].mxu0 %v3075
    %v6662 = vpop.f32.mrb[0].mxu0
    %v6663 = vadd.f32 %v6470, %v6662
    %v6664 = vpop.f32.mrb[0].mxu0
    %v6665 = vadd.f32 %v6472, %v6664
    %v6666 = vpop.f32.mrb[0].mxu0
    %v6667 = vadd.f32 %v6474, %v6666
    %v6668 = vpop.f32.mrb[0].mxu0
    %v6669 = vadd.f32 %v6476, %v6668
    %6670 = vdwg.mxu0
    %v6671 = vpack.c.bf16 %v6517, %v6513
    %v6672 = vpack.c.bf16 %v6519, %v6515
    %v6673 = vpack.c.bf16 %v6527, %v6523
    %v6674 = vpack.c.bf16 %v6529, %v6525
    %v6675 = vpack.c.bf16 %v6537, %v6533
    %v6676 = vpack.c.bf16 %v6539, %v6535
    %v6677 = vpack.c.bf16 %v6547, %v6543
    %v6678 = vpack.c.bf16 %v6549, %v6545
    %v6679 = vpack.c.bf16 %v6557, %v6553
    %v6680 = vpack.c.bf16 %v6559, %v6555
    %v6681 = vpack.c.bf16 %v6567, %v6563
    %v6682 = vpack.c.bf16 %v6569, %v6565
    %v6683 = vpack.c.bf16 %v6577, %v6573
    %v6684 = vpack.c.bf16 %v6579, %v6575
    %v6685 = vpack.c.bf16 %v6587, %v6583
    %v6686 = vpack.c.bf16 %v6589, %v6585
    %v6687 = vpack.c.bf16 %v6597, %v6593
    %v6688 = vpack.c.bf16 %v6599, %v6595
    %v6689 = vpack.c.bf16 %v6607, %v6603
    %v6690 = vpack.c.bf16 %v6609, %v6605
    %v6691 = vpack.c.bf16 %v6617, %v6613
    %v6692 = vpack.c.bf16 %v6619, %v6615
    %v6693 = vpack.c.bf16 %v6627, %v6623
    %v6694 = vpack.c.bf16 %v6629, %v6625
    %v6695 = vpack.c.bf16 %v6637, %v6633
    %v6696 = vpack.c.bf16 %v6639, %v6635
    %v6697 = vpack.c.bf16 %v6647, %v6643
    %v6698 = vpack.c.bf16 %v6649, %v6645
    %v6699 = vpack.c.bf16 %v6657, %v6653
    %v6700 = vpack.c.bf16 %v6659, %v6655
    %v6701 = vpack.c.bf16 %v6667, %v6663
    %v6702 = vpack.c.bf16 %v6669, %v6665
    %s6703 = scalar_lea.vmem %s4, 4
    %v6704 = vld [vmem:[%s6703] sm:$0x3]
    %v6706 = vlaneseq
    %v6707 = vshrl.u32 %v6706, 7
    %v6708 = vsub.s32 0, %v6707
    %v6709 = vrot.slane %v6704, %v6708
    %v6710 = vlaneseq
    %v6711 = vshrl.u32 %v6710, 7
    %v6712 = vsub.s32 1, %v6711
    %v6713 = vrot.slane %v6704, %v6712
    %v6716 = vpack.c.bf16 %v6709, %v6709
    %v6717 = vpack.c.bf16 %v6713, %v6713
    %v6719 = vpack.i.b16 %v6716, %v6716
    %v6721 = vlaneseq
    %v6722 = vshrl.u32 %v6721, 7
    %v6723 = vsub.s32 0, %v6722
    %v6724 = vrot.slane %v6719, %v6723
    %v6726 = vpack.i.b16 %v6717, %v6717
    %v6728 = vlaneseq
    %v6729 = vshrl.u32 %v6728, 7
    %v6730 = vsub.s32 0, %v6729
    %v6731 = vrot.slane %v6726, %v6730
    %v6732 = vadd.bf16 %v6671, %v6724
    %v6733 = vadd.bf16 %v6672, %v6731
    %v6734 = vadd.bf16 %v6673, %v6724
    %v6735 = vadd.bf16 %v6674, %v6731
    %v6736 = vadd.bf16 %v6675, %v6724
    %v6737 = vadd.bf16 %v6676, %v6731
    %v6738 = vadd.bf16 %v6677, %v6724
    %v6739 = vadd.bf16 %v6678, %v6731
    %v6740 = vadd.bf16 %v6679, %v6724
    %v6741 = vadd.bf16 %v6680, %v6731
    %v6742 = vadd.bf16 %v6681, %v6724
    %v6743 = vadd.bf16 %v6682, %v6731
    %v6744 = vadd.bf16 %v6683, %v6724
    %v6745 = vadd.bf16 %v6684, %v6731
    %v6746 = vadd.bf16 %v6685, %v6724
    %v6747 = vadd.bf16 %v6686, %v6731
    %v6748 = vadd.bf16 %v6687, %v6724
    %v6749 = vadd.bf16 %v6688, %v6731
    %v6750 = vadd.bf16 %v6689, %v6724
    %v6751 = vadd.bf16 %v6690, %v6731
    %v6752 = vadd.bf16 %v6691, %v6724
    %v6753 = vadd.bf16 %v6692, %v6731
    %v6754 = vadd.bf16 %v6693, %v6724
    %v6755 = vadd.bf16 %v6694, %v6731
    %v6756 = vadd.bf16 %v6695, %v6724
    %v6757 = vadd.bf16 %v6696, %v6731
    %v6758 = vadd.bf16 %v6697, %v6724
    %v6759 = vadd.bf16 %v6698, %v6731
    %v6760 = vadd.bf16 %v6699, %v6724
    %v6761 = vadd.bf16 %v6700, %v6731
    %v6762 = vadd.bf16 %v6701, %v6724
    %v6763 = vadd.bf16 %v6702, %v6731
    %v6764 = vmax.bf16 %v6732, 0
    %v6765 = vmax.bf16 %v6733, 0
    %v6766 = vmax.bf16 %v6734, 0
    %v6767 = vmax.bf16 %v6735, 0
    %v6768 = vmax.bf16 %v6736, 0
    %v6769 = vmax.bf16 %v6737, 0
    %v6770 = vmax.bf16 %v6738, 0
    %v6771 = vmax.bf16 %v6739, 0
    %v6772 = vmax.bf16 %v6740, 0
    %v6773 = vmax.bf16 %v6741, 0
    %v6774 = vmax.bf16 %v6742, 0
    %v6775 = vmax.bf16 %v6743, 0
    %v6776 = vmax.bf16 %v6744, 0
    %v6777 = vmax.bf16 %v6745, 0
    %v6778 = vmax.bf16 %v6746, 0
    %v6779 = vmax.bf16 %v6747, 0
    %v6780 = vmax.bf16 %v6748, 0
    %v6781 = vmax.bf16 %v6749, 0
    %v6782 = vmax.bf16 %v6750, 0
    %v6783 = vmax.bf16 %v6751, 0
    %v6784 = vmax.bf16 %v6752, 0
    %v6785 = vmax.bf16 %v6753, 0
    %v6786 = vmax.bf16 %v6754, 0
    %v6787 = vmax.bf16 %v6755, 0
    %v6788 = vmax.bf16 %v6756, 0
    %v6789 = vmax.bf16 %v6757, 0
    %v6790 = vmax.bf16 %v6758, 0
    %v6791 = vmax.bf16 %v6759, 0
    %v6792 = vmax.bf16 %v6760, 0
    %v6793 = vmax.bf16 %v6761, 0
    %v6794 = vmax.bf16 %v6762, 0
    %v6795 = vmax.bf16 %v6763, 0
    %s6796 = scalar_lea.vmem [#allocation7], 256
    %v6797 = vld [vmem:[%s6796] sm:$0xf]
    %v6798 = vld [vmem:[%s6796 + $0x4] sm:$0xf]
    %v6799 = vld [vmem:[%s6796 + $0x8] sm:$0xf]
    %v6800 = vld [vmem:[%s6796 + $0xc] sm:$0xf]
    %v6801 = vld [vmem:[%s6796 + $0x10] sm:$0xf]
    %v6802 = vld [vmem:[%s6796 + $0x14] sm:$0xf]
    %v6803 = vld [vmem:[%s6796 + $0x18] sm:$0xf]
    %v6804 = vld [vmem:[%s6796 + $0x1c] sm:$0xf]
    %v6805 = vld [vmem:[%s6796 + $0x20] sm:$0xf]
    %v6806 = vld [vmem:[%s6796 + $0x24] sm:$0xf]
    %v6807 = vld [vmem:[%s6796 + $0x28] sm:$0xf]
    %v6808 = vld [vmem:[%s6796 + $0x2c] sm:$0xf]
    %v6809 = vld [vmem:[%s6796 + $0x30] sm:$0xf]
    %v6810 = vld [vmem:[%s6796 + $0x34] sm:$0xf]
    %v6811 = vld [vmem:[%s6796 + $0x38] sm:$0xf]
    %v6812 = vld [vmem:[%s6796 + $0x3c] sm:$0xf]
    %v6813 = vld [vmem:[%s6796 + $0x40] sm:$0xf]
    %v6814 = vld [vmem:[%s6796 + $0x44] sm:$0xf]
    %v6815 = vld [vmem:[%s6796 + $0x48] sm:$0xf]
    %v6816 = vld [vmem:[%s6796 + $0x4c] sm:$0xf]
    %v6817 = vld [vmem:[%s6796 + $0x50] sm:$0xf]
    %v6818 = vld [vmem:[%s6796 + $0x54] sm:$0xf]
    %v6819 = vld [vmem:[%s6796 + $0x58] sm:$0xf]
    %v6820 = vld [vmem:[%s6796 + $0x5c] sm:$0xf]
    %v6821 = vld [vmem:[%s6796 + $0x60] sm:$0xf]
    %v6822 = vld [vmem:[%s6796 + $0x64] sm:$0xf]
    %v6823 = vld [vmem:[%s6796 + $0x68] sm:$0xf]
    %v6824 = vld [vmem:[%s6796 + $0x6c] sm:$0xf]
    %v6825 = vld [vmem:[%s6796 + $0x70] sm:$0xf]
    %v6826 = vld [vmem:[%s6796 + $0x74] sm:$0xf]
    %v6827 = vld [vmem:[%s6796 + $0x78] sm:$0xf]
    %v6828 = vld [vmem:[%s6796 + $0x7c] sm:$0xf]
    %v6861 = vunpack.c.l.b16 %v6797
    %v6862 = vunpack.c.l.b16 %v6798
    %v6863 = vunpack.c.l.b16 %v6799
    %v6864 = vunpack.c.l.b16 %v6800
    %v6865 = vunpack.c.l.b16 %v6801
    %v6866 = vunpack.c.l.b16 %v6802
    %v6867 = vunpack.c.l.b16 %v6803
    %v6868 = vunpack.c.l.b16 %v6804
    %v6869 = vunpack.c.l.b16 %v6805
    %v6870 = vunpack.c.l.b16 %v6806
    %v6871 = vunpack.c.l.b16 %v6807
    %v6872 = vunpack.c.l.b16 %v6808
    %v6873 = vunpack.c.l.b16 %v6809
    %v6874 = vunpack.c.l.b16 %v6810
    %v6875 = vunpack.c.l.b16 %v6811
    %v6876 = vunpack.c.l.b16 %v6812
    %v6877 = vunpack.c.l.b16 %v6813
    %v6878 = vunpack.c.l.b16 %v6814
    %v6879 = vunpack.c.l.b16 %v6815
    %v6880 = vunpack.c.l.b16 %v6816
    %v6881 = vunpack.c.l.b16 %v6817
    %v6882 = vunpack.c.l.b16 %v6818
    %v6883 = vunpack.c.l.b16 %v6819
    %v6884 = vunpack.c.l.b16 %v6820
    %v6885 = vunpack.c.l.b16 %v6821
    %v6886 = vunpack.c.l.b16 %v6822
    %v6887 = vunpack.c.l.b16 %v6823
    %v6888 = vunpack.c.l.b16 %v6824
    %v6889 = vunpack.c.l.b16 %v6825
    %v6890 = vunpack.c.l.b16 %v6826
    %v6891 = vunpack.c.l.b16 %v6827
    %v6892 = vunpack.c.l.b16 %v6828
    %v6893 = vpack.c.b16 %v6862, %v6861
    %v6894 = vpack.c.b16 %v6864, %v6863
    %v6895 = vpack.c.b16 %v6866, %v6865
    %v6896 = vpack.c.b16 %v6868, %v6867
    %v6897 = vpack.c.b16 %v6870, %v6869
    %v6898 = vpack.c.b16 %v6872, %v6871
    %v6899 = vpack.c.b16 %v6874, %v6873
    %v6900 = vpack.c.b16 %v6876, %v6875
    %v6901 = vpack.c.b16 %v6878, %v6877
    %v6902 = vpack.c.b16 %v6880, %v6879
    %v6903 = vpack.c.b16 %v6882, %v6881
    %v6904 = vpack.c.b16 %v6884, %v6883
    %v6905 = vpack.c.b16 %v6886, %v6885
    %v6906 = vpack.c.b16 %v6888, %v6887
    %v6907 = vpack.c.b16 %v6890, %v6889
    %v6908 = vpack.c.b16 %v6892, %v6891
    %6925 = vmatprep.subr.bf16.mxu0 0
    %6926 = vmatpush1.bf16.msra.mxu0 %v6893
    %6927 = vmatprep.subr.bf16.mxu0 0
    %6928 = vmatpush1.bf16.msra.mxu0 %v6894
    %6929 = vmatprep.subr.bf16.mxu0 0
    %6930 = vmatpush1.bf16.msra.mxu0 %v6895
    %6931 = vmatprep.subr.bf16.mxu0 0
    %6932 = vmatpush1.bf16.msra.mxu0 %v6896
    %6933 = vmatprep.subr.bf16.mxu0 0
    %6934 = vmatpush1.bf16.msra.mxu0 %v6897
    %6935 = vmatprep.subr.bf16.mxu0 0
    %6936 = vmatpush1.bf16.msra.mxu0 %v6898
    %6937 = vmatprep.subr.bf16.mxu0 0
    %6938 = vmatpush1.bf16.msra.mxu0 %v6899
    %6939 = vmatprep.subr.bf16.mxu0 0
    %6940 = vmatpush1.bf16.msra.mxu0 %v6900
    %6941 = vmatprep.subr.bf16.mxu0 0
    %6942 = vmatpush1.bf16.msra.mxu0 %v6901
    %6943 = vmatprep.subr.bf16.mxu0 0
    %6944 = vmatpush1.bf16.msra.mxu0 %v6902
    %6945 = vmatprep.subr.bf16.mxu0 0
    %6946 = vmatpush1.bf16.msra.mxu0 %v6903
    %6947 = vmatprep.subr.bf16.mxu0 0
    %6948 = vmatpush1.bf16.msra.mxu0 %v6904
    %6949 = vmatprep.subr.bf16.mxu0 0
    %6950 = vmatpush1.bf16.msra.mxu0 %v6905
    %6951 = vmatprep.subr.bf16.mxu0 0
    %6952 = vmatpush1.bf16.msra.mxu0 %v6906
    %6953 = vmatprep.subr.bf16.mxu0 0
    %6954 = vmatpush1.bf16.msra.mxu0 %v6907
    %6955 = vmatprep.subr.bf16.mxu0 0
    %6956 = vmatpush1.bf16.msra.mxu0 %v6908
    %6957 = vmatprep.mubr.bf16.mxu0 %v6765
    %6958 = vmatmul.mubr.bf16.gmra.mrb[0].mxu0 %v6764
    %v6959 = vpop.f32.mrb[0].mxu0
    %v6960 = vadd.f32 0.0, %v6959
    %v6961 = vpop.f32.mrb[0].mxu0
    %v6962 = vpop.f32.mrb[0].mxu0
    %v6963 = vadd.f32 0.0, %v6962
    %v6964 = vpop.f32.mrb[0].mxu0
    %6965 = vmatprep.mubr.bf16.mxu0 %v6767
    %6966 = vmatmul.mubr.bf16.gmra.mrb[0].mxu0 %v6766
    %v6967 = vpop.f32.mrb[0].mxu0
    %v6968 = vadd.f32 0.0, %v6967
    %v6969 = vpop.f32.mrb[0].mxu0
    %v6970 = vpop.f32.mrb[0].mxu0
    %v6971 = vadd.f32 0.0, %v6970
    %v6972 = vpop.f32.mrb[0].mxu0
    %6973 = vmatprep.mubr.bf16.mxu0 %v6769
    %6974 = vmatmul.mubr.bf16.gmra.mrb[0].mxu0 %v6768
    %v6975 = vpop.f32.mrb[0].mxu0
    %v6976 = vadd.f32 0.0, %v6975
    %v6977 = vpop.f32.mrb[0].mxu0
    %v6978 = vpop.f32.mrb[0].mxu0
    %v6979 = vadd.f32 0.0, %v6978
    %v6980 = vpop.f32.mrb[0].mxu0
    %6981 = vmatprep.mubr.bf16.mxu0 %v6771
    %6982 = vmatmul.mubr.bf16.gmra.mrb[0].mxu0 %v6770
    %v6983 = vpop.f32.mrb[0].mxu0
    %v6984 = vadd.f32 0.0, %v6983
    %v6985 = vpop.f32.mrb[0].mxu0
    %v6986 = vpop.f32.mrb[0].mxu0
    %v6987 = vadd.f32 0.0, %v6986
    %v6988 = vpop.f32.mrb[0].mxu0
    %6989 = vmatprep.mubr.bf16.mxu0 %v6773
    %6990 = vmatmul.mubr.bf16.gmra.mrb[0].mxu0 %v6772
    %v6991 = vpop.f32.mrb[0].mxu0
    %v6992 = vadd.f32 0.0, %v6991
    %v6993 = vpop.f32.mrb[0].mxu0
    %v6994 = vpop.f32.mrb[0].mxu0
    %v6995 = vadd.f32 0.0, %v6994
    %v6996 = vpop.f32.mrb[0].mxu0
    %6997 = vmatprep.mubr.bf16.mxu0 %v6775
    %6998 = vmatmul.mubr.bf16.gmra.mrb[0].mxu0 %v6774
    %v6999 = vpop.f32.mrb[0].mxu0
    %v7000 = vadd.f32 0.0, %v6999
    %v7001 = vpop.f32.mrb[0].mxu0
    %v7002 = vpop.f32.mrb[0].mxu0
    %v7003 = vadd.f32 0.0, %v7002
    %v7004 = vpop.f32.mrb[0].mxu0
    %7005 = vmatprep.mubr.bf16.mxu0 %v6777
    %7006 = vmatmul.mubr.bf16.gmra.mrb[0].mxu0 %v6776
    %v7007 = vpop.f32.mrb[0].mxu0
    %v7008 = vadd.f32 0.0, %v7007
    %v7009 = vpop.f32.mrb[0].mxu0
    %v7010 = vpop.f32.mrb[0].mxu0
    %v7011 = vadd.f32 0.0, %v7010
    %v7012 = vpop.f32.mrb[0].mxu0
    %7013 = vmatprep.mubr.bf16.mxu0 %v6779
    %7014 = vmatmul.mubr.bf16.gmra.mrb[0].mxu0 %v6778
    %v7015 = vpop.f32.mrb[0].mxu0
    %v7016 = vadd.f32 0.0, %v7015
    %v7017 = vpop.f32.mrb[0].mxu0
    %v7018 = vpop.f32.mrb[0].mxu0
    %v7019 = vadd.f32 0.0, %v7018
    %v7020 = vpop.f32.mrb[0].mxu0
    %7021 = vmatprep.mubr.bf16.mxu0 %v6781
    %7022 = vmatmul.mubr.bf16.gmra.mrb[0].mxu0 %v6780
    %v7023 = vpop.f32.mrb[0].mxu0
    %v7024 = vadd.f32 0.0, %v7023
    %v7025 = vpop.f32.mrb[0].mxu0
    %v7026 = vpop.f32.mrb[0].mxu0
    %v7027 = vadd.f32 0.0, %v7026
    %v7028 = vpop.f32.mrb[0].mxu0
    %7029 = vmatprep.mubr.bf16.mxu0 %v6783
    %7030 = vmatmul.mubr.bf16.gmra.mrb[0].mxu0 %v6782
    %v7031 = vpop.f32.mrb[0].mxu0
    %v7032 = vadd.f32 0.0, %v7031
    %v7033 = vpop.f32.mrb[0].mxu0
    %v7034 = vpop.f32.mrb[0].mxu0
    %v7035 = vadd.f32 0.0, %v7034
    %v7036 = vpop.f32.mrb[0].mxu0
    %7037 = vmatprep.mubr.bf16.mxu0 %v6785
    %7038 = vmatmul.mubr.bf16.gmra.mrb[0].mxu0 %v6784
    %v7039 = vpop.f32.mrb[0].mxu0
    %v7040 = vadd.f32 0.0, %v7039
    %v7041 = vpop.f32.mrb[0].mxu0
    %v7042 = vpop.f32.mrb[0].mxu0
    %v7043 = vadd.f32 0.0, %v7042
    %v7044 = vpop.f32.mrb[0].mxu0
    %7045 = vmatprep.mubr.bf16.mxu0 %v6787
    %7046 = vmatmul.mubr.bf16.gmra.mrb[0].mxu0 %v6786
    %v7047 = vpop.f32.mrb[0].mxu0
    %v7048 = vadd.f32 0.0, %v7047
    %v7049 = vpop.f32.mrb[0].mxu0
    %v7050 = vpop.f32.mrb[0].mxu0
    %v7051 = vadd.f32 0.0, %v7050
    %v7052 = vpop.f32.mrb[0].mxu0
    %7053 = vmatprep.mubr.bf16.mxu0 %v6789
    %7054 = vmatmul.mubr.bf16.gmra.mrb[0].mxu0 %v6788
    %v7055 = vpop.f32.mrb[0].mxu0
    %v7056 = vadd.f32 0.0, %v7055
    %v7057 = vpop.f32.mrb[0].mxu0
    %v7058 = vpop.f32.mrb[0].mxu0
    %v7059 = vadd.f32 0.0, %v7058
    %v7060 = vpop.f32.mrb[0].mxu0
    %7061 = vmatprep.mubr.bf16.mxu0 %v6791
    %7062 = vmatmul.mubr.bf16.gmra.mrb[0].mxu0 %v6790
    %v7063 = vpop.f32.mrb[0].mxu0
    %v7064 = vadd.f32 0.0, %v7063
    %v7065 = vpop.f32.mrb[0].mxu0
    %v7066 = vpop.f32.mrb[0].mxu0
    %v7067 = vadd.f32 0.0, %v7066
    %v7068 = vpop.f32.mrb[0].mxu0
    %7069 = vmatprep.mubr.bf16.mxu0 %v6793
    %7070 = vmatmul.mubr.bf16.gmra.mrb[0].mxu0 %v6792
    %v7071 = vpop.f32.mrb[0].mxu0
    %v7072 = vadd.f32 0.0, %v7071
    %v7073 = vpop.f32.mrb[0].mxu0
    %v7074 = vpop.f32.mrb[0].mxu0
    %v7075 = vadd.f32 0.0, %v7074
    %v7076 = vpop.f32.mrb[0].mxu0
    %7077 = vmatprep.mubr.bf16.mxu0 %v6795
    %7078 = vmatmul.mubr.bf16.gmra.mrb[0].mxu0 %v6794
    %v7079 = vpop.f32.mrb[0].mxu0
    %v7080 = vadd.f32 0.0, %v7079
    %v7081 = vpop.f32.mrb[0].mxu0
    %v7082 = vpop.f32.mrb[0].mxu0
    %v7083 = vadd.f32 0.0, %v7082
    %v7084 = vpop.f32.mrb[0].mxu0
    %7085 = vdwg.mxu0
    %v7086 = vpack.c.bf16 %v6963, %v6960
    %v7087 = vpack.c.bf16 %v6971, %v6968
    %v7088 = vpack.c.bf16 %v6979, %v6976
    %v7089 = vpack.c.bf16 %v6987, %v6984
    %v7090 = vpack.c.bf16 %v6995, %v6992
    %v7091 = vpack.c.bf16 %v7003, %v7000
    %v7092 = vpack.c.bf16 %v7011, %v7008
    %v7093 = vpack.c.bf16 %v7019, %v7016
    %v7094 = vpack.c.bf16 %v7027, %v7024
    %v7095 = vpack.c.bf16 %v7035, %v7032
    %v7096 = vpack.c.bf16 %v7043, %v7040
    %v7097 = vpack.c.bf16 %v7051, %v7048
    %v7098 = vpack.c.bf16 %v7059, %v7056
    %v7099 = vpack.c.bf16 %v7067, %v7064
    %v7100 = vpack.c.bf16 %v7075, %v7072
    %v7101 = vpack.c.bf16 %v7083, %v7080
    %s7102 = scalar_lea.vmem %s6, 2
    %v7103 = vld [vmem:[%s7102] sm:$0x1]
    %v7104 = vpack.c.bf16 %v7103, %v7103
    %v7106 = vpack.i.b16 %v7104, %v7104
    %v7108 = vlaneseq
    %v7109 = vshrl.u32 %v7108, 7
    %v7110 = vsub.s32 0, %v7109
    %v7111 = vrot.slane %v7106, %v7110
    %v7112 = vadd.bf16 %v7086, %v7111
    %v7113 = vadd.bf16 %v7087, %v7111
    %v7114 = vadd.bf16 %v7088, %v7111
    %v7115 = vadd.bf16 %v7089, %v7111
    %v7116 = vadd.bf16 %v7090, %v7111
    %v7117 = vadd.bf16 %v7091, %v7111
    %v7118 = vadd.bf16 %v7092, %v7111
    %v7119 = vadd.bf16 %v7093, %v7111
    %v7120 = vadd.bf16 %v7094, %v7111
    %v7121 = vadd.bf16 %v7095, %v7111
    %v7122 = vadd.bf16 %v7096, %v7111
    %v7123 = vadd.bf16 %v7097, %v7111
    %v7124 = vadd.bf16 %v7098, %v7111
    %v7125 = vadd.bf16 %v7099, %v7111
    %v7126 = vadd.bf16 %v7100, %v7111
    %v7127 = vadd.bf16 %v7101, %v7111
    %v7128 = vmax.bf16 %v7112, 0
    %v7129 = vmax.bf16 %v7113, 0
    %v7130 = vmax.bf16 %v7114, 0
    %v7131 = vmax.bf16 %v7115, 0
    %v7132 = vmax.bf16 %v7116, 0
    %v7133 = vmax.bf16 %v7117, 0
    %v7134 = vmax.bf16 %v7118, 0
    %v7135 = vmax.bf16 %v7119, 0
    %v7136 = vmax.bf16 %v7120, 0
    %v7137 = vmax.bf16 %v7121, 0
    %v7138 = vmax.bf16 %v7122, 0
    %v7139 = vmax.bf16 %v7123, 0
    %v7140 = vmax.bf16 %v7124, 0
    %v7141 = vmax.bf16 %v7125, 0
    %v7142 = vmax.bf16 %v7126, 0
    %v7143 = vmax.bf16 %v7127, 0
    %v7144 = vunpack.c.l.bf16 %v7128
    %v7145 = vunpack.c.h.bf16 %v7128
    %v7146 = vunpack.c.l.bf16 %v7129
    %v7147 = vunpack.c.h.bf16 %v7129
    %v7148 = vunpack.c.l.bf16 %v7130
    %v7149 = vunpack.c.h.bf16 %v7130
    %v7150 = vunpack.c.l.bf16 %v7131
    %v7151 = vunpack.c.h.bf16 %v7131
    %v7152 = vunpack.c.l.bf16 %v7132
    %v7153 = vunpack.c.h.bf16 %v7132
    %v7154 = vunpack.c.l.bf16 %v7133
    %v7155 = vunpack.c.h.bf16 %v7133
    %v7156 = vunpack.c.l.bf16 %v7134
    %v7157 = vunpack.c.h.bf16 %v7134
    %v7158 = vunpack.c.l.bf16 %v7135
    %v7159 = vunpack.c.h.bf16 %v7135
    %v7160 = vunpack.c.l.bf16 %v7136
    %v7161 = vunpack.c.h.bf16 %v7136
    %v7162 = vunpack.c.l.bf16 %v7137
    %v7163 = vunpack.c.h.bf16 %v7137
    %v7164 = vunpack.c.l.bf16 %v7138
    %v7165 = vunpack.c.h.bf16 %v7138
    %v7166 = vunpack.c.l.bf16 %v7139
    %v7167 = vunpack.c.h.bf16 %v7139
    %v7168 = vunpack.c.l.bf16 %v7140
    %v7169 = vunpack.c.h.bf16 %v7140
    %v7170 = vunpack.c.l.bf16 %v7141
    %v7171 = vunpack.c.h.bf16 %v7141
    %v7172 = vunpack.c.l.bf16 %v7142
    %v7173 = vunpack.c.h.bf16 %v7142
    %v7174 = vunpack.c.l.bf16 %v7143
    %v7175 = vunpack.c.h.bf16 %v7143
    %s7176 = scalar_lea.vmem %s7, 2
    %v7177 = vld [vmem:[%s7176] sm:$0x1]
    %v7179 = vlaneseq
    %v7180 = vshrl.u32 %v7179, 7
    %v7181 = vsub.s32 0, %v7180
    %v7182 = vrot.slane %v7177, %v7181
    %v7184 = vmul.f32 %v7144, %v7182
    %v7185 = vmul.f32 %v7145, %v7182
    %v7186 = vmul.f32 %v7146, %v7182
    %v7187 = vmul.f32 %v7147, %v7182
    %v7188 = vmul.f32 %v7148, %v7182
    %v7189 = vmul.f32 %v7149, %v7182
    %v7190 = vmul.f32 %v7150, %v7182
    %v7191 = vmul.f32 %v7151, %v7182
    %v7192 = vmul.f32 %v7152, %v7182
    %v7193 = vmul.f32 %v7153, %v7182
    %v7194 = vmul.f32 %v7154, %v7182
    %v7195 = vmul.f32 %v7155, %v7182
    %v7196 = vmul.f32 %v7156, %v7182
    %v7197 = vmul.f32 %v7157, %v7182
    %v7198 = vmul.f32 %v7158, %v7182
    %v7199 = vmul.f32 %v7159, %v7182
    %v7200 = vmul.f32 %v7160, %v7182
    %v7201 = vmul.f32 %v7161, %v7182
    %v7202 = vmul.f32 %v7162, %v7182
    %v7203 = vmul.f32 %v7163, %v7182
    %v7204 = vmul.f32 %v7164, %v7182
    %v7205 = vmul.f32 %v7165, %v7182
    %v7206 = vmul.f32 %v7166, %v7182
    %v7207 = vmul.f32 %v7167, %v7182
    %v7208 = vmul.f32 %v7168, %v7182
    %v7209 = vmul.f32 %v7169, %v7182
    %v7210 = vmul.f32 %v7170, %v7182
    %v7211 = vmul.f32 %v7171, %v7182
    %v7212 = vmul.f32 %v7172, %v7182
    %v7213 = vmul.f32 %v7173, %v7182
    %v7214 = vmul.f32 %v7174, %v7182
    %v7215 = vmul.f32 %v7175, %v7182
    %7216 = vadd.xlane.f32.xlu0 %v7184
    %v7217 = vpop.xlane.xlu0 %7216
    %7218 = vadd.xlane.f32.xlu0 %v7185
    %v7219 = vpop.xlane.xlu0 %7218
    %7220 = vadd.xlane.f32.xlu0 %v7186
    %v7221 = vpop.xlane.xlu0 %7220
    %7222 = vadd.xlane.f32.xlu0 %v7187
    %v7223 = vpop.xlane.xlu0 %7222
    %7224 = vadd.xlane.f32.xlu0 %v7188
    %v7225 = vpop.xlane.xlu0 %7224
    %7226 = vadd.xlane.f32.xlu0 %v7189
    %v7227 = vpop.xlane.xlu0 %7226
    %7228 = vadd.xlane.f32.xlu0 %v7190
    %v7229 = vpop.xlane.xlu0 %7228
    %7230 = vadd.xlane.f32.xlu0 %v7191
    %v7231 = vpop.xlane.xlu0 %7230
    %7232 = vadd.xlane.f32.xlu0 %v7192
    %v7233 = vpop.xlane.xlu0 %7232
    %7234 = vadd.xlane.f32.xlu0 %v7193
    %v7235 = vpop.xlane.xlu0 %7234
    %7236 = vadd.xlane.f32.xlu0 %v7194
    %v7237 = vpop.xlane.xlu0 %7236
    %7238 = vadd.xlane.f32.xlu0 %v7195
    %v7239 = vpop.xlane.xlu0 %7238
    %7240 = vadd.xlane.f32.xlu0 %v7196
    %v7241 = vpop.xlane.xlu0 %7240
    %7242 = vadd.xlane.f32.xlu0 %v7197
    %v7243 = vpop.xlane.xlu0 %7242
    %7244 = vadd.xlane.f32.xlu0 %v7198
    %v7245 = vpop.xlane.xlu0 %7244
    %7246 = vadd.xlane.f32.xlu0 %v7199
    %v7247 = vpop.xlane.xlu0 %7246
    %7248 = vadd.xlane.f32.xlu0 %v7200
    %v7249 = vpop.xlane.xlu0 %7248
    %7250 = vadd.xlane.f32.xlu0 %v7201
    %v7251 = vpop.xlane.xlu0 %7250
    %7252 = vadd.xlane.f32.xlu0 %v7202
    %v7253 = vpop.xlane.xlu0 %7252
    %7254 = vadd.xlane.f32.xlu0 %v7203
    %v7255 = vpop.xlane.xlu0 %7254
    %7256 = vadd.xlane.f32.xlu0 %v7204
    %v7257 = vpop.xlane.xlu0 %7256
    %7258 = vadd.xlane.f32.xlu0 %v7205
    %v7259 = vpop.xlane.xlu0 %7258
    %7260 = vadd.xlane.f32.xlu0 %v7206
    %v7261 = vpop.xlane.xlu0 %7260
    %7262 = vadd.xlane.f32.xlu0 %v7207
    %v7263 = vpop.xlane.xlu0 %7262
    %7264 = vadd.xlane.f32.xlu0 %v7208
    %v7265 = vpop.xlane.xlu0 %7264
    %7266 = vadd.xlane.f32.xlu0 %v7209
    %v7267 = vpop.xlane.xlu0 %7266
    %7268 = vadd.xlane.f32.xlu0 %v7210
    %v7269 = vpop.xlane.xlu0 %7268
    %7270 = vadd.xlane.f32.xlu0 %v7211
    %v7271 = vpop.xlane.xlu0 %7270
    %7272 = vadd.xlane.f32.xlu0 %v7212
    %v7273 = vpop.xlane.xlu0 %7272
    %7274 = vadd.xlane.f32.xlu0 %v7213
    %v7275 = vpop.xlane.xlu0 %7274
    %7276 = vadd.xlane.f32.xlu0 %v7214
    %v7277 = vpop.xlane.xlu0 %7276
    %7278 = vadd.xlane.f32.xlu0 %v7215
    %v7279 = vpop.xlane.xlu0 %7278
    %v7280 = vadd.f32 %v5868, %v7217
    %v7281 = vadd.f32 %v5869, %v7219
    %v7282 = vadd.f32 %v5870, %v7221
    %v7283 = vadd.f32 %v5871, %v7223
    %v7284 = vadd.f32 %v5872, %v7225
    %v7285 = vadd.f32 %v5873, %v7227
    %v7286 = vadd.f32 %v5874, %v7229
    %v7287 = vadd.f32 %v5875, %v7231
    %v7288 = vadd.f32 %v5876, %v7233
    %v7289 = vadd.f32 %v5877, %v7235
    %v7290 = vadd.f32 %v5878, %v7237
    %v7291 = vadd.f32 %v5879, %v7239
    %v7292 = vadd.f32 %v5880, %v7241
    %v7293 = vadd.f32 %v5881, %v7243
    %v7294 = vadd.f32 %v5882, %v7245
    %v7295 = vadd.f32 %v5883, %v7247
    %v7296 = vadd.f32 %v5884, %v7249
    %v7297 = vadd.f32 %v5885, %v7251
    %v7298 = vadd.f32 %v5886, %v7253
    %v7299 = vadd.f32 %v5887, %v7255
    %v7300 = vadd.f32 %v5888, %v7257
    %v7301 = vadd.f32 %v5889, %v7259
    %v7302 = vadd.f32 %v5890, %v7261
    %v7303 = vadd.f32 %v5891, %v7263
    %v7304 = vadd.f32 %v5892, %v7265
    %v7305 = vadd.f32 %v5893, %v7267
    %v7306 = vadd.f32 %v5894, %v7269
    %v7307 = vadd.f32 %v5895, %v7271
    %v7308 = vadd.f32 %v5896, %v7273
    %v7309 = vadd.f32 %v5897, %v7275
    %v7310 = vadd.f32 %v5898, %v7277
    %v7311 = vadd.f32 %v5899, %v7279
    %s7312 = scalar_lea.vmem [#allocation5], 1536
    %v7313 = vld [vmem:[%s7312] sm:$0xff]
    %v7314 = vld [vmem:[%s7312 + $0x8] sm:$0xff]
    %v7315 = vld [vmem:[%s7312 + $0x10] sm:$0xff]
    %v7316 = vld [vmem:[%s7312 + $0x18] sm:$0xff]
    %v7317 = vld [vmem:[%s7312 + $0x20] sm:$0xff]
    %v7318 = vld [vmem:[%s7312 + $0x28] sm:$0xff]
    %v7319 = vld [vmem:[%s7312 + $0x30] sm:$0xff]
    %v7320 = vld [vmem:[%s7312 + $0x38] sm:$0xff]
    %v7321 = vld [vmem:[%s7312 + $0x40] sm:$0xff]
    %v7322 = vld [vmem:[%s7312 + $0x48] sm:$0xff]
    %v7323 = vld [vmem:[%s7312 + $0x50] sm:$0xff]
    %v7324 = vld [vmem:[%s7312 + $0x58] sm:$0xff]
    %v7325 = vld [vmem:[%s7312 + $0x60] sm:$0xff]
    %v7326 = vld [vmem:[%s7312 + $0x68] sm:$0xff]
    %v7327 = vld [vmem:[%s7312 + $0x70] sm:$0xff]
    %v7328 = vld [vmem:[%s7312 + $0x78] sm:$0xff]
    %v7329 = vld [vmem:[%s7312 + $0x80] sm:$0xff]
    %v7330 = vld [vmem:[%s7312 + $0x88] sm:$0xff]
    %v7331 = vld [vmem:[%s7312 + $0x90] sm:$0xff]
    %v7332 = vld [vmem:[%s7312 + $0x98] sm:$0xff]
    %v7333 = vld [vmem:[%s7312 + $0xa0] sm:$0xff]
    %v7334 = vld [vmem:[%s7312 + $0xa8] sm:$0xff]
    %v7335 = vld [vmem:[%s7312 + $0xb0] sm:$0xff]
    %v7336 = vld [vmem:[%s7312 + $0xb8] sm:$0xff]
    %v7337 = vld [vmem:[%s7312 + $0xc0] sm:$0xff]
    %v7338 = vld [vmem:[%s7312 + $0xc8] sm:$0xff]
    %v7339 = vld [vmem:[%s7312 + $0xd0] sm:$0xff]
    %v7340 = vld [vmem:[%s7312 + $0xd8] sm:$0xff]
    %v7341 = vld [vmem:[%s7312 + $0xe0] sm:$0xff]
    %v7342 = vld [vmem:[%s7312 + $0xe8] sm:$0xff]
    %v7343 = vld [vmem:[%s7312 + $0xf0] sm:$0xff]
    %v7344 = vld [vmem:[%s7312 + $0xf8] sm:$0xff]
    %v7345 = vld [vmem:[%s7312 + $0x100] sm:$0xff]
    %v7346 = vld [vmem:[%s7312 + $0x108] sm:$0xff]
    %v7347 = vld [vmem:[%s7312 + $0x110] sm:$0xff]
    %v7348 = vld [vmem:[%s7312 + $0x118] sm:$0xff]
    %v7349 = vld [vmem:[%s7312 + $0x120] sm:$0xff]
    %v7350 = vld [vmem:[%s7312 + $0x128] sm:$0xff]
    %v7351 = vld [vmem:[%s7312 + $0x130] sm:$0xff]
    %v7352 = vld [vmem:[%s7312 + $0x138] sm:$0xff]
    %v7353 = vld [vmem:[%s7312 + $0x140] sm:$0xff]
    %v7354 = vld [vmem:[%s7312 + $0x148] sm:$0xff]
    %v7355 = vld [vmem:[%s7312 + $0x150] sm:$0xff]
    %v7356 = vld [vmem:[%s7312 + $0x158] sm:$0xff]
    %v7357 = vld [vmem:[%s7312 + $0x160] sm:$0xff]
    %v7358 = vld [vmem:[%s7312 + $0x168] sm:$0xff]
    %v7359 = vld [vmem:[%s7312 + $0x170] sm:$0xff]
    %v7360 = vld [vmem:[%s7312 + $0x178] sm:$0xff]
    %v7361 = vld [vmem:[%s7312 + $0x180] sm:$0xff]
    %v7362 = vld [vmem:[%s7312 + $0x188] sm:$0xff]
    %v7363 = vld [vmem:[%s7312 + $0x190] sm:$0xff]
    %v7364 = vld [vmem:[%s7312 + $0x198] sm:$0xff]
    %v7365 = vld [vmem:[%s7312 + $0x1a0] sm:$0xff]
    %v7366 = vld [vmem:[%s7312 + $0x1a8] sm:$0xff]
    %v7367 = vld [vmem:[%s7312 + $0x1b0] sm:$0xff]
    %v7368 = vld [vmem:[%s7312 + $0x1b8] sm:$0xff]
    %v7369 = vld [vmem:[%s7312 + $0x1c0] sm:$0xff]
    %v7370 = vld [vmem:[%s7312 + $0x1c8] sm:$0xff]
    %v7371 = vld [vmem:[%s7312 + $0x1d0] sm:$0xff]
    %v7372 = vld [vmem:[%s7312 + $0x1d8] sm:$0xff]
    %v7373 = vld [vmem:[%s7312 + $0x1e0] sm:$0xff]
    %v7374 = vld [vmem:[%s7312 + $0x1e8] sm:$0xff]
    %v7375 = vld [vmem:[%s7312 + $0x1f0] sm:$0xff]
    %v7376 = vld [vmem:[%s7312 + $0x1f8] sm:$0xff]
    %v7441 = vunpack.c.l.b16 %v7313
    %v7442 = vunpack.c.h.b16 %v7313
    %v7443 = vunpack.c.l.b16 %v7314
    %v7444 = vunpack.c.h.b16 %v7314
    %v7445 = vunpack.c.l.b16 %v7315
    %v7446 = vunpack.c.h.b16 %v7315
    %v7447 = vunpack.c.l.b16 %v7316
    %v7448 = vunpack.c.h.b16 %v7316
    %v7449 = vunpack.c.l.b16 %v7317
    %v7450 = vunpack.c.h.b16 %v7317
    %v7451 = vunpack.c.l.b16 %v7318
    %v7452 = vunpack.c.h.b16 %v7318
    %v7453 = vunpack.c.l.b16 %v7319
    %v7454 = vunpack.c.h.b16 %v7319
    %v7455 = vunpack.c.l.b16 %v7320
    %v7456 = vunpack.c.h.b16 %v7320
    %v7457 = vunpack.c.l.b16 %v7321
    %v7458 = vunpack.c.h.b16 %v7321
    %v7459 = vunpack.c.l.b16 %v7322
    %v7460 = vunpack.c.h.b16 %v7322
    %v7461 = vunpack.c.l.b16 %v7323
    %v7462 = vunpack.c.h.b16 %v7323
    %v7463 = vunpack.c.l.b16 %v7324
    %v7464 = vunpack.c.h.b16 %v7324
    %v7465 = vunpack.c.l.b16 %v7325
    %v7466 = vunpack.c.h.b16 %v7325
    %v7467 = vunpack.c.l.b16 %v7326
    %v7468 = vunpack.c.h.b16 %v7326
    %v7469 = vunpack.c.l.b16 %v7327
    %v7470 = vunpack.c.h.b16 %v7327
    %v7471 = vunpack.c.l.b16 %v7328
    %v7472 = vunpack.c.h.b16 %v7328
    %v7473 = vunpack.c.l.b16 %v7329
    %v7474 = vunpack.c.h.b16 %v7329
    %v7475 = vunpack.c.l.b16 %v7330
    %v7476 = vunpack.c.h.b16 %v7330
    %v7477 = vunpack.c.l.b16 %v7331
    %v7478 = vunpack.c.h.b16 %v7331
    %v7479 = vunpack.c.l.b16 %v7332
    %v7480 = vunpack.c.h.b16 %v7332
    %v7481 = vunpack.c.l.b16 %v7333
    %v7482 = vunpack.c.h.b16 %v7333
    %v7483 = vunpack.c.l.b16 %v7334
    %v7484 = vunpack.c.h.b16 %v7334
    %v7485 = vunpack.c.l.b16 %v7335
    %v7486 = vunpack.c.h.b16 %v7335
    %v7487 = vunpack.c.l.b16 %v7336
    %v7488 = vunpack.c.h.b16 %v7336
    %v7489 = vunpack.c.l.b16 %v7337
    %v7490 = vunpack.c.h.b16 %v7337
    %v7491 = vunpack.c.l.b16 %v7338
    %v7492 = vunpack.c.h.b16 %v7338
    %v7493 = vunpack.c.l.b16 %v7339
    %v7494 = vunpack.c.h.b16 %v7339
    %v7495 = vunpack.c.l.b16 %v7340
    %v7496 = vunpack.c.h.b16 %v7340
    %v7497 = vunpack.c.l.b16 %v7341
    %v7498 = vunpack.c.h.b16 %v7341
    %v7499 = vunpack.c.l.b16 %v7342
    %v7500 = vunpack.c.h.b16 %v7342
    %v7501 = vunpack.c.l.b16 %v7343
    %v7502 = vunpack.c.h.b16 %v7343
    %v7503 = vunpack.c.l.b16 %v7344
    %v7504 = vunpack.c.h.b16 %v7344
    %v7505 = vunpack.c.l.b16 %v7345
    %v7506 = vunpack.c.h.b16 %v7345
    %v7507 = vunpack.c.l.b16 %v7346
    %v7508 = vunpack.c.h.b16 %v7346
    %v7509 = vunpack.c.l.b16 %v7347
    %v7510 = vunpack.c.h.b16 %v7347
    %v7511 = vunpack.c.l.b16 %v7348
    %v7512 = vunpack.c.h.b16 %v7348
    %v7513 = vunpack.c.l.b16 %v7349
    %v7514 = vunpack.c.h.b16 %v7349
    %v7515 = vunpack.c.l.b16 %v7350
    %v7516 = vunpack.c.h.b16 %v7350
    %v7517 = vunpack.c.l.b16 %v7351
    %v7518 = vunpack.c.h.b16 %v7351
    %v7519 = vunpack.c.l.b16 %v7352
    %v7520 = vunpack.c.h.b16 %v7352
    %v7521 = vunpack.c.l.b16 %v7353
    %v7522 = vunpack.c.h.b16 %v7353
    %v7523 = vunpack.c.l.b16 %v7354
    %v7524 = vunpack.c.h.b16 %v7354
    %v7525 = vunpack.c.l.b16 %v7355
    %v7526 = vunpack.c.h.b16 %v7355
    %v7527 = vunpack.c.l.b16 %v7356
    %v7528 = vunpack.c.h.b16 %v7356
    %v7529 = vunpack.c.l.b16 %v7357
    %v7530 = vunpack.c.h.b16 %v7357
    %v7531 = vunpack.c.l.b16 %v7358
    %v7532 = vunpack.c.h.b16 %v7358
    %v7533 = vunpack.c.l.b16 %v7359
    %v7534 = vunpack.c.h.b16 %v7359
    %v7535 = vunpack.c.l.b16 %v7360
    %v7536 = vunpack.c.h.b16 %v7360
    %v7537 = vunpack.c.l.b16 %v7361
    %v7538 = vunpack.c.h.b16 %v7361
    %v7539 = vunpack.c.l.b16 %v7362
    %v7540 = vunpack.c.h.b16 %v7362
    %v7541 = vunpack.c.l.b16 %v7363
    %v7542 = vunpack.c.h.b16 %v7363
    %v7543 = vunpack.c.l.b16 %v7364
    %v7544 = vunpack.c.h.b16 %v7364
    %v7545 = vunpack.c.l.b16 %v7365
    %v7546 = vunpack.c.h.b16 %v7365
    %v7547 = vunpack.c.l.b16 %v7366
    %v7548 = vunpack.c.h.b16 %v7366
    %v7549 = vunpack.c.l.b16 %v7367
    %v7550 = vunpack.c.h.b16 %v7367
    %v7551 = vunpack.c.l.b16 %v7368
    %v7552 = vunpack.c.h.b16 %v7368
    %v7553 = vunpack.c.l.b16 %v7369
    %v7554 = vunpack.c.h.b16 %v7369
    %v7555 = vunpack.c.l.b16 %v7370
    %v7556 = vunpack.c.h.b16 %v7370
    %v7557 = vunpack.c.l.b16 %v7371
    %v7558 = vunpack.c.h.b16 %v7371
    %v7559 = vunpack.c.l.b16 %v7372
    %v7560 = vunpack.c.h.b16 %v7372
    %v7561 = vunpack.c.l.b16 %v7373
    %v7562 = vunpack.c.h.b16 %v7373
    %v7563 = vunpack.c.l.b16 %v7374
    %v7564 = vunpack.c.h.b16 %v7374
    %v7565 = vunpack.c.l.b16 %v7375
    %v7566 = vunpack.c.h.b16 %v7375
    %v7567 = vunpack.c.l.b16 %v7376
    %v7568 = vunpack.c.h.b16 %v7376
    %v7569 = vpack.c.b16 %v7443, %v7441
    %v7570 = vpack.c.b16 %v7444, %v7442
    %v7571 = vpack.c.b16 %v7447, %v7445
    %v7572 = vpack.c.b16 %v7448, %v7446
    %v7573 = vpack.c.b16 %v7451, %v7449
    %v7574 = vpack.c.b16 %v7452, %v7450
    %v7575 = vpack.c.b16 %v7455, %v7453
    %v7576 = vpack.c.b16 %v7456, %v7454
    %v7577 = vpack.c.b16 %v7459, %v7457
    %v7578 = vpack.c.b16 %v7460, %v7458
    %v7579 = vpack.c.b16 %v7463, %v7461
    %v7580 = vpack.c.b16 %v7464, %v7462
    %v7581 = vpack.c.b16 %v7467, %v7465
    %v7582 = vpack.c.b16 %v7468, %v7466
    %v7583 = vpack.c.b16 %v7471, %v7469
    %v7584 = vpack.c.b16 %v7472, %v7470
    %v7585 = vpack.c.b16 %v7475, %v7473
    %v7586 = vpack.c.b16 %v7476, %v7474
    %v7587 = vpack.c.b16 %v7479, %v7477
    %v7588 = vpack.c.b16 %v7480, %v7478
    %v7589 = vpack.c.b16 %v7483, %v7481
    %v7590 = vpack.c.b16 %v7484, %v7482
    %v7591 = vpack.c.b16 %v7487, %v7485
    %v7592 = vpack.c.b16 %v7488, %v7486
    %v7593 = vpack.c.b16 %v7491, %v7489
    %v7594 = vpack.c.b16 %v7492, %v7490
    %v7595 = vpack.c.b16 %v7495, %v7493
    %v7596 = vpack.c.b16 %v7496, %v7494
    %v7597 = vpack.c.b16 %v7499, %v7497
    %v7598 = vpack.c.b16 %v7500, %v7498
    %v7599 = vpack.c.b16 %v7503, %v7501
    %v7600 = vpack.c.b16 %v7504, %v7502
    %v7601 = vpack.c.b16 %v7507, %v7505
    %v7602 = vpack.c.b16 %v7508, %v7506
    %v7603 = vpack.c.b16 %v7511, %v7509
    %v7604 = vpack.c.b16 %v7512, %v7510
    %v7605 = vpack.c.b16 %v7515, %v7513
    %v7606 = vpack.c.b16 %v7516, %v7514
    %v7607 = vpack.c.b16 %v7519, %v7517
    %v7608 = vpack.c.b16 %v7520, %v7518
    %v7609 = vpack.c.b16 %v7523, %v7521
    %v7610 = vpack.c.b16 %v7524, %v7522
    %v7611 = vpack.c.b16 %v7527, %v7525
    %v7612 = vpack.c.b16 %v7528, %v7526
    %v7613 = vpack.c.b16 %v7531, %v7529
    %v7614 = vpack.c.b16 %v7532, %v7530
    %v7615 = vpack.c.b16 %v7535, %v7533
    %v7616 = vpack.c.b16 %v7536, %v7534
    %v7617 = vpack.c.b16 %v7539, %v7537
    %v7618 = vpack.c.b16 %v7540, %v7538
    %v7619 = vpack.c.b16 %v7543, %v7541
    %v7620 = vpack.c.b16 %v7544, %v7542
    %v7621 = vpack.c.b16 %v7547, %v7545
    %v7622 = vpack.c.b16 %v7548, %v7546
    %v7623 = vpack.c.b16 %v7551, %v7549
    %v7624 = vpack.c.b16 %v7552, %v7550
    %v7625 = vpack.c.b16 %v7555, %v7553
    %v7626 = vpack.c.b16 %v7556, %v7554
    %v7627 = vpack.c.b16 %v7559, %v7557
    %v7628 = vpack.c.b16 %v7560, %v7558
    %v7629 = vpack.c.b16 %v7563, %v7561
    %v7630 = vpack.c.b16 %v7564, %v7562
    %v7631 = vpack.c.b16 %v7567, %v7565
    %v7632 = vpack.c.b16 %v7568, %v7566
    %7697 = vmatprep.subr.bf16.mxu0 %v7570
    %7698 = vmatpush1.bf16.msra.mxu0 %v7569
    %7699 = vmatprep.subr.bf16.mxu0 %v7572
    %7700 = vmatpush1.bf16.msra.mxu0 %v7571
    %7701 = vmatprep.subr.bf16.mxu0 %v7574
    %7702 = vmatpush1.bf16.msra.mxu0 %v7573
    %7703 = vmatprep.subr.bf16.mxu0 %v7576
    %7704 = vmatpush1.bf16.msra.mxu0 %v7575
    %7705 = vmatprep.subr.bf16.mxu0 %v7578
    %7706 = vmatpush1.bf16.msra.mxu0 %v7577
    %7707 = vmatprep.subr.bf16.mxu0 %v7580
    %7708 = vmatpush1.bf16.msra.mxu0 %v7579
    %7709 = vmatprep.subr.bf16.mxu0 %v7582
    %7710 = vmatpush1.bf16.msra.mxu0 %v7581
    %7711 = vmatprep.subr.bf16.mxu0 %v7584
    %7712 = vmatpush1.bf16.msra.mxu0 %v7583
    %7713 = vmatprep.subr.bf16.mxu0 %v7586
    %7714 = vmatpush1.bf16.msra.mxu0 %v7585
    %7715 = vmatprep.subr.bf16.mxu0 %v7588
    %7716 = vmatpush1.bf16.msra.mxu0 %v7587
    %7717 = vmatprep.subr.bf16.mxu0 %v7590
    %7718 = vmatpush1.bf16.msra.mxu0 %v7589
    %7719 = vmatprep.subr.bf16.mxu0 %v7592
    %7720 = vmatpush1.bf16.msra.mxu0 %v7591
    %7721 = vmatprep.subr.bf16.mxu0 %v7594
    %7722 = vmatpush1.bf16.msra.mxu0 %v7593
    %7723 = vmatprep.subr.bf16.mxu0 %v7596
    %7724 = vmatpush1.bf16.msra.mxu0 %v7595
    %7725 = vmatprep.subr.bf16.mxu0 %v7598
    %7726 = vmatpush1.bf16.msra.mxu0 %v7597
    %7727 = vmatprep.subr.bf16.mxu0 %v7600
    %7728 = vmatpush1.bf16.msra.mxu0 %v7599
    %7729 = vmatprep.mubr.bf16.mxu0 %v2838
    %7730 = vmatmul.mubr.bf16.gmra.mrb[0].mxu0 %v2837
    %v7731 = vpop.f32.mrb[0].mxu0
    %v7732 = vadd.f32 0.0, %v7731
    %v7733 = vpop.f32.mrb[0].mxu0
    %v7734 = vadd.f32 0.0, %v7733
    %v7735 = vpop.f32.mrb[0].mxu0
    %v7736 = vadd.f32 0.0, %v7735
    %v7737 = vpop.f32.mrb[0].mxu0
    %v7738 = vadd.f32 0.0, %v7737
    %7739 = vmatprep.mubr.bf16.mxu0 %v2854
    %7740 = vmatmul.mubr.bf16.gmra.mrb[0].mxu0 %v2853
    %v7741 = vpop.f32.mrb[0].mxu0
    %v7742 = vadd.f32 0.0, %v7741
    %v7743 = vpop.f32.mrb[0].mxu0
    %v7744 = vadd.f32 0.0, %v7743
    %v7745 = vpop.f32.mrb[0].mxu0
    %v7746 = vadd.f32 0.0, %v7745
    %v7747 = vpop.f32.mrb[0].mxu0
    %v7748 = vadd.f32 0.0, %v7747
    %7749 = vmatprep.mubr.bf16.mxu0 %v2870
    %7750 = vmatmul.mubr.bf16.gmra.mrb[0].mxu0 %v2869
    %v7751 = vpop.f32.mrb[0].mxu0
    %v7752 = vadd.f32 0.0, %v7751
    %v7753 = vpop.f32.mrb[0].mxu0
    %v7754 = vadd.f32 0.0, %v7753
    %v7755 = vpop.f32.mrb[0].mxu0
    %v7756 = vadd.f32 0.0, %v7755
    %v7757 = vpop.f32.mrb[0].mxu0
    %v7758 = vadd.f32 0.0, %v7757
    %7759 = vmatprep.mubr.bf16.mxu0 %v2886
    %7760 = vmatmul.mubr.bf16.gmra.mrb[0].mxu0 %v2885
    %v7761 = vpop.f32.mrb[0].mxu0
    %v7762 = vadd.f32 0.0, %v7761
    %v7763 = vpop.f32.mrb[0].mxu0
    %v7764 = vadd.f32 0.0, %v7763
    %v7765 = vpop.f32.mrb[0].mxu0
    %v7766 = vadd.f32 0.0, %v7765
    %v7767 = vpop.f32.mrb[0].mxu0
    %v7768 = vadd.f32 0.0, %v7767
    %7769 = vmatprep.mubr.bf16.mxu0 %v2902
    %7770 = vmatmul.mubr.bf16.gmra.mrb[0].mxu0 %v2901
    %v7771 = vpop.f32.mrb[0].mxu0
    %v7772 = vadd.f32 0.0, %v7771
    %v7773 = vpop.f32.mrb[0].mxu0
    %v7774 = vadd.f32 0.0, %v7773
    %v7775 = vpop.f32.mrb[0].mxu0
    %v7776 = vadd.f32 0.0, %v7775
    %v7777 = vpop.f32.mrb[0].mxu0
    %v7778 = vadd.f32 0.0, %v7777
    %7779 = vmatprep.mubr.bf16.mxu0 %v2918
    %7780 = vmatmul.mubr.bf16.gmra.mrb[0].mxu0 %v2917
    %v7781 = vpop.f32.mrb[0].mxu0
    %v7782 = vadd.f32 0.0, %v7781
    %v7783 = vpop.f32.mrb[0].mxu0
    %v7784 = vadd.f32 0.0, %v7783
    %v7785 = vpop.f32.mrb[0].mxu0
    %v7786 = vadd.f32 0.0, %v7785
    %v7787 = vpop.f32.mrb[0].mxu0
    %v7788 = vadd.f32 0.0, %v7787
    %7789 = vmatprep.mubr.bf16.mxu0 %v2934
    %7790 = vmatmul.mubr.bf16.gmra.mrb[0].mxu0 %v2933
    %v7791 = vpop.f32.mrb[0].mxu0
    %v7792 = vadd.f32 0.0, %v7791
    %v7793 = vpop.f32.mrb[0].mxu0
    %v7794 = vadd.f32 0.0, %v7793
    %v7795 = vpop.f32.mrb[0].mxu0
    %v7796 = vadd.f32 0.0, %v7795
    %v7797 = vpop.f32.mrb[0].mxu0
    %v7798 = vadd.f32 0.0, %v7797
    %7799 = vmatprep.mubr.bf16.mxu0 %v2950
    %7800 = vmatmul.mubr.bf16.gmra.mrb[0].mxu0 %v2949
    %v7801 = vpop.f32.mrb[0].mxu0
    %v7802 = vadd.f32 0.0, %v7801
    %v7803 = vpop.f32.mrb[0].mxu0
    %v7804 = vadd.f32 0.0, %v7803
    %v7805 = vpop.f32.mrb[0].mxu0
    %v7806 = vadd.f32 0.0, %v7805
    %v7807 = vpop.f32.mrb[0].mxu0
    %v7808 = vadd.f32 0.0, %v7807
    %7809 = vmatprep.mubr.bf16.mxu0 %v2966
    %7810 = vmatmul.mubr.bf16.gmra.mrb[0].mxu0 %v2965
    %v7811 = vpop.f32.mrb[0].mxu0
    %v7812 = vadd.f32 0.0, %v7811
    %v7813 = vpop.f32.mrb[0].mxu0
    %v7814 = vadd.f32 0.0, %v7813
    %v7815 = vpop.f32.mrb[0].mxu0
    %v7816 = vadd.f32 0.0, %v7815
    %v7817 = vpop.f32.mrb[0].mxu0
    %v7818 = vadd.f32 0.0, %v7817
    %7819 = vmatprep.mubr.bf16.mxu0 %v2982
    %7820 = vmatmul.mubr.bf16.gmra.mrb[0].mxu0 %v2981
    %v7821 = vpop.f32.mrb[0].mxu0
    %v7822 = vadd.f32 0.0, %v7821
    %v7823 = vpop.f32.mrb[0].mxu0
    %v7824 = vadd.f32 0.0, %v7823
    %v7825 = vpop.f32.mrb[0].mxu0
    %v7826 = vadd.f32 0.0, %v7825
    %v7827 = vpop.f32.mrb[0].mxu0
    %v7828 = vadd.f32 0.0, %v7827
    %7829 = vmatprep.mubr.bf16.mxu0 %v2998
    %7830 = vmatmul.mubr.bf16.gmra.mrb[0].mxu0 %v2997
    %v7831 = vpop.f32.mrb[0].mxu0
    %v7832 = vadd.f32 0.0, %v7831
    %v7833 = vpop.f32.mrb[0].mxu0
    %v7834 = vadd.f32 0.0, %v7833
    %v7835 = vpop.f32.mrb[0].mxu0
    %v7836 = vadd.f32 0.0, %v7835
    %v7837 = vpop.f32.mrb[0].mxu0
    %v7838 = vadd.f32 0.0, %v7837
    %7839 = vmatprep.mubr.bf16.mxu0 %v3014
    %7840 = vmatmul.mubr.bf16.gmra.mrb[0].mxu0 %v3013
    %v7841 = vpop.f32.mrb[0].mxu0
    %v7842 = vadd.f32 0.0, %v7841
    %v7843 = vpop.f32.mrb[0].mxu0
    %v7844 = vadd.f32 0.0, %v7843
    %v7845 = vpop.f32.mrb[0].mxu0
    %v7846 = vadd.f32 0.0, %v7845
    %v7847 = vpop.f32.mrb[0].mxu0
    %v7848 = vadd.f32 0.0, %v7847
    %7849 = vmatprep.mubr.bf16.mxu0 %v3030
    %7850 = vmatmul.mubr.bf16.gmra.mrb[0].mxu0 %v3029
    %v7851 = vpop.f32.mrb[0].mxu0
    %v7852 = vadd.f32 0.0, %v7851
    %v7853 = vpop.f32.mrb[0].mxu0
    %v7854 = vadd.f32 0.0, %v7853
    %v7855 = vpop.f32.mrb[0].mxu0
    %v7856 = vadd.f32 0.0, %v7855
    %v7857 = vpop.f32.mrb[0].mxu0
    %v7858 = vadd.f32 0.0, %v7857
    %7859 = vmatprep.mubr.bf16.mxu0 %v3046
    %7860 = vmatmul.mubr.bf16.gmra.mrb[0].mxu0 %v3045
    %v7861 = vpop.f32.mrb[0].mxu0
    %v7862 = vadd.f32 0.0, %v7861
    %v7863 = vpop.f32.mrb[0].mxu0
    %v7864 = vadd.f32 0.0, %v7863
    %v7865 = vpop.f32.mrb[0].mxu0
    %v7866 = vadd.f32 0.0, %v7865
    %v7867 = vpop.f32.mrb[0].mxu0
    %v7868 = vadd.f32 0.0, %v7867
    %7869 = vmatprep.mubr.bf16.mxu0 %v3062
    %7870 = vmatmul.mubr.bf16.gmra.mrb[0].mxu0 %v3061
    %v7871 = vpop.f32.mrb[0].mxu0
    %v7872 = vadd.f32 0.0, %v7871
    %v7873 = vpop.f32.mrb[0].mxu0
    %v7874 = vadd.f32 0.0, %v7873
    %v7875 = vpop.f32.mrb[0].mxu0
    %v7876 = vadd.f32 0.0, %v7875
    %v7877 = vpop.f32.mrb[0].mxu0
    %v7878 = vadd.f32 0.0, %v7877
    %7879 = vmatprep.mubr.bf16.mxu0 %v3078
    %7880 = vmatmul.mubr.bf16.gmra.mrb[0].mxu0 %v3077
    %v7881 = vpop.f32.mrb[0].mxu0
    %v7882 = vadd.f32 0.0, %v7881
    %v7883 = vpop.f32.mrb[0].mxu0
    %v7884 = vadd.f32 0.0, %v7883
    %v7885 = vpop.f32.mrb[0].mxu0
    %v7886 = vadd.f32 0.0, %v7885
    %v7887 = vpop.f32.mrb[0].mxu0
    %v7888 = vadd.f32 0.0, %v7887
    %7889 = vdwg.mxu0
    %7890 = vmatprep.subr.bf16.mxu0 %v7602
    %7891 = vmatpush1.bf16.msra.mxu0 %v7601
    %7892 = vmatprep.subr.bf16.mxu0 %v7604
    %7893 = vmatpush1.bf16.msra.mxu0 %v7603
    %7894 = vmatprep.subr.bf16.mxu0 %v7606
    %7895 = vmatpush1.bf16.msra.mxu0 %v7605
    %7896 = vmatprep.subr.bf16.mxu0 %v7608
    %7897 = vmatpush1.bf16.msra.mxu0 %v7607
    %7898 = vmatprep.subr.bf16.mxu0 %v7610
    %7899 = vmatpush1.bf16.msra.mxu0 %v7609
    %7900 = vmatprep.subr.bf16.mxu0 %v7612
    %7901 = vmatpush1.bf16.msra.mxu0 %v7611
    %7902 = vmatprep.subr.bf16.mxu0 %v7614
    %7903 = vmatpush1.bf16.msra.mxu0 %v7613
    %7904 = vmatprep.subr.bf16.mxu0 %v7616
    %7905 = vmatpush1.bf16.msra.mxu0 %v7615
    %7906 = vmatprep.subr.bf16.mxu0 %v7618
    %7907 = vmatpush1.bf16.msra.mxu0 %v7617
    %7908 = vmatprep.subr.bf16.mxu0 %v7620
    %7909 = vmatpush1.bf16.msra.mxu0 %v7619
    %7910 = vmatprep.subr.bf16.mxu0 %v7622
    %7911 = vmatpush1.bf16.msra.mxu0 %v7621
    %7912 = vmatprep.subr.bf16.mxu0 %v7624
    %7913 = vmatpush1.bf16.msra.mxu0 %v7623
    %7914 = vmatprep.subr.bf16.mxu0 %v7626
    %7915 = vmatpush1.bf16.msra.mxu0 %v7625
    %7916 = vmatprep.subr.bf16.mxu0 %v7628
    %7917 = vmatpush1.bf16.msra.mxu0 %v7627
    %7918 = vmatprep.subr.bf16.mxu0 %v7630
    %7919 = vmatpush1.bf16.msra.mxu0 %v7629
    %7920 = vmatprep.subr.bf16.mxu0 %v7632
    %7921 = vmatpush1.bf16.msra.mxu0 %v7631
    %7922 = vmatprep.mubr.bf16.mxu0 %v2840
    %7923 = vmatmul.mubr.bf16.gmra.mrb[0].mxu0 %v2839
    %v7924 = vpop.f32.mrb[0].mxu0
    %v7925 = vadd.f32 %v7732, %v7924
    %v7926 = vpop.f32.mrb[0].mxu0
    %v7927 = vadd.f32 %v7734, %v7926
    %v7928 = vpop.f32.mrb[0].mxu0
    %v7929 = vadd.f32 %v7736, %v7928
    %v7930 = vpop.f32.mrb[0].mxu0
    %v7931 = vadd.f32 %v7738, %v7930
    %7932 = vmatprep.mubr.bf16.mxu0 %v2856
    %7933 = vmatmul.mubr.bf16.gmra.mrb[0].mxu0 %v2855
    %v7934 = vpop.f32.mrb[0].mxu0
    %v7935 = vadd.f32 %v7742, %v7934
    %v7936 = vpop.f32.mrb[0].mxu0
    %v7937 = vadd.f32 %v7744, %v7936
    %v7938 = vpop.f32.mrb[0].mxu0
    %v7939 = vadd.f32 %v7746, %v7938
    %v7940 = vpop.f32.mrb[0].mxu0
    %v7941 = vadd.f32 %v7748, %v7940
    %7942 = vmatprep.mubr.bf16.mxu0 %v2872
    %7943 = vmatmul.mubr.bf16.gmra.mrb[0].mxu0 %v2871
    %v7944 = vpop.f32.mrb[0].mxu0
    %v7945 = vadd.f32 %v7752, %v7944
    %v7946 = vpop.f32.mrb[0].mxu0
    %v7947 = vadd.f32 %v7754, %v7946
    %v7948 = vpop.f32.mrb[0].mxu0
    %v7949 = vadd.f32 %v7756, %v7948
    %v7950 = vpop.f32.mrb[0].mxu0
    %v7951 = vadd.f32 %v7758, %v7950
    %7952 = vmatprep.mubr.bf16.mxu0 %v2888
    %7953 = vmatmul.mubr.bf16.gmra.mrb[0].mxu0 %v2887
    %v7954 = vpop.f32.mrb[0].mxu0
    %v7955 = vadd.f32 %v7762, %v7954
    %v7956 = vpop.f32.mrb[0].mxu0
    %v7957 = vadd.f32 %v7764, %v7956
    %v7958 = vpop.f32.mrb[0].mxu0
    %v7959 = vadd.f32 %v7766, %v7958
    %v7960 = vpop.f32.mrb[0].mxu0
    %v7961 = vadd.f32 %v7768, %v7960
    %7962 = vmatprep.mubr.bf16.mxu0 %v2904
    %7963 = vmatmul.mubr.bf16.gmra.mrb[0].mxu0 %v2903
    %v7964 = vpop.f32.mrb[0].mxu0
    %v7965 = vadd.f32 %v7772, %v7964
    %v7966 = vpop.f32.mrb[0].mxu0
    %v7967 = vadd.f32 %v7774, %v7966
    %v7968 = vpop.f32.mrb[0].mxu0
    %v7969 = vadd.f32 %v7776, %v7968
    %v7970 = vpop.f32.mrb[0].mxu0
    %v7971 = vadd.f32 %v7778, %v7970
    %7972 = vmatprep.mubr.bf16.mxu0 %v2920
    %7973 = vmatmul.mubr.bf16.gmra.mrb[0].mxu0 %v2919
    %v7974 = vpop.f32.mrb[0].mxu0
    %v7975 = vadd.f32 %v7782, %v7974
    %v7976 = vpop.f32.mrb[0].mxu0
    %v7977 = vadd.f32 %v7784, %v7976
    %v7978 = vpop.f32.mrb[0].mxu0
    %v7979 = vadd.f32 %v7786, %v7978
    %v7980 = vpop.f32.mrb[0].mxu0
    %v7981 = vadd.f32 %v7788, %v7980
    %7982 = vmatprep.mubr.bf16.mxu0 %v2936
    %7983 = vmatmul.mubr.bf16.gmra.mrb[0].mxu0 %v2935
    %v7984 = vpop.f32.mrb[0].mxu0
    %v7985 = vadd.f32 %v7792, %v7984
    %v7986 = vpop.f32.mrb[0].mxu0
    %v7987 = vadd.f32 %v7794, %v7986
    %v7988 = vpop.f32.mrb[0].mxu0
    %v7989 = vadd.f32 %v7796, %v7988
    %v7990 = vpop.f32.mrb[0].mxu0
    %v7991 = vadd.f32 %v7798, %v7990
    %7992 = vmatprep.mubr.bf16.mxu0 %v2952
    %7993 = vmatmul.mubr.bf16.gmra.mrb[0].mxu0 %v2951
    %v7994 = vpop.f32.mrb[0].mxu0
    %v7995 = vadd.f32 %v7802, %v7994
    %v7996 = vpop.f32.mrb[0].mxu0
    %v7997 = vadd.f32 %v7804, %v7996
    %v7998 = vpop.f32.mrb[0].mxu0
    %v7999 = vadd.f32 %v7806, %v7998
    %v8000 = vpop.f32.mrb[0].mxu0
    %v8001 = vadd.f32 %v7808, %v8000
    %8002 = vmatprep.mubr.bf16.mxu0 %v2968
    %8003 = vmatmul.mubr.bf16.gmra.mrb[0].mxu0 %v2967
    %v8004 = vpop.f32.mrb[0].mxu0
    %v8005 = vadd.f32 %v7812, %v8004
    %v8006 = vpop.f32.mrb[0].mxu0
    %v8007 = vadd.f32 %v7814, %v8006
    %v8008 = vpop.f32.mrb[0].mxu0
    %v8009 = vadd.f32 %v7816, %v8008
    %v8010 = vpop.f32.mrb[0].mxu0
    %v8011 = vadd.f32 %v7818, %v8010
    %8012 = vmatprep.mubr.bf16.mxu0 %v2984
    %8013 = vmatmul.mubr.bf16.gmra.mrb[0].mxu0 %v2983
    %v8014 = vpop.f32.mrb[0].mxu0
    %v8015 = vadd.f32 %v7822, %v8014
    %v8016 = vpop.f32.mrb[0].mxu0
    %v8017 = vadd.f32 %v7824, %v8016
    %v8018 = vpop.f32.mrb[0].mxu0
    %v8019 = vadd.f32 %v7826, %v8018
    %v8020 = vpop.f32.mrb[0].mxu0
    %v8021 = vadd.f32 %v7828, %v8020
    %8022 = vmatprep.mubr.bf16.mxu0 %v3000
    %8023 = vmatmul.mubr.bf16.gmra.mrb[0].mxu0 %v2999
    %v8024 = vpop.f32.mrb[0].mxu0
    %v8025 = vadd.f32 %v7832, %v8024
    %v8026 = vpop.f32.mrb[0].mxu0
    %v8027 = vadd.f32 %v7834, %v8026
    %v8028 = vpop.f32.mrb[0].mxu0
    %v8029 = vadd.f32 %v7836, %v8028
    %v8030 = vpop.f32.mrb[0].mxu0
    %v8031 = vadd.f32 %v7838, %v8030
    %8032 = vmatprep.mubr.bf16.mxu0 %v3016
    %8033 = vmatmul.mubr.bf16.gmra.mrb[0].mxu0 %v3015
    %v8034 = vpop.f32.mrb[0].mxu0
    %v8035 = vadd.f32 %v7842, %v8034
    %v8036 = vpop.f32.mrb[0].mxu0
    %v8037 = vadd.f32 %v7844, %v8036
    %v8038 = vpop.f32.mrb[0].mxu0
    %v8039 = vadd.f32 %v7846, %v8038
    %v8040 = vpop.f32.mrb[0].mxu0
    %v8041 = vadd.f32 %v7848, %v8040
    %8042 = vmatprep.mubr.bf16.mxu0 %v3032
    %8043 = vmatmul.mubr.bf16.gmra.mrb[0].mxu0 %v3031
    %v8044 = vpop.f32.mrb[0].mxu0
    %v8045 = vadd.f32 %v7852, %v8044
    %v8046 = vpop.f32.mrb[0].mxu0
    %v8047 = vadd.f32 %v7854, %v8046
    %v8048 = vpop.f32.mrb[0].mxu0
    %v8049 = vadd.f32 %v7856, %v8048
    %v8050 = vpop.f32.mrb[0].mxu0
    %v8051 = vadd.f32 %v7858, %v8050
    %8052 = vmatprep.mubr.bf16.mxu0 %v3048
    %8053 = vmatmul.mubr.bf16.gmra.mrb[0].mxu0 %v3047
    %v8054 = vpop.f32.mrb[0].mxu0
    %v8055 = vadd.f32 %v7862, %v8054
    %v8056 = vpop.f32.mrb[0].mxu0
    %v8057 = vadd.f32 %v7864, %v8056
    %v8058 = vpop.f32.mrb[0].mxu0
    %v8059 = vadd.f32 %v7866, %v8058
    %v8060 = vpop.f32.mrb[0].mxu0
    %v8061 = vadd.f32 %v7868, %v8060
    %8062 = vmatprep.mubr.bf16.mxu0 %v3064
    %8063 = vmatmul.mubr.bf16.gmra.mrb[0].mxu0 %v3063
    %v8064 = vpop.f32.mrb[0].mxu0
    %v8065 = vadd.f32 %v7872, %v8064
    %v8066 = vpop.f32.mrb[0].mxu0
    %v8067 = vadd.f32 %v7874, %v8066
    %v8068 = vpop.f32.mrb[0].mxu0
    %v8069 = vadd.f32 %v7876, %v8068
    %v8070 = vpop.f32.mrb[0].mxu0
    %v8071 = vadd.f32 %v7878, %v8070
    %8072 = vmatprep.mubr.bf16.mxu0 %v3080
    %8073 = vmatmul.mubr.bf16.gmra.mrb[0].mxu0 %v3079
    %v8074 = vpop.f32.mrb[0].mxu0
    %v8075 = vadd.f32 %v7882, %v8074
    %v8076 = vpop.f32.mrb[0].mxu0
    %v8077 = vadd.f32 %v7884, %v8076
    %v8078 = vpop.f32.mrb[0].mxu0
    %v8079 = vadd.f32 %v7886, %v8078
    %v8080 = vpop.f32.mrb[0].mxu0
    %v8081 = vadd.f32 %v7888, %v8080
    %8082 = vdwg.mxu0
    %v8083 = vpack.c.bf16 %v7929, %v7925
    %v8084 = vpack.c.bf16 %v7931, %v7927
    %v8085 = vpack.c.bf16 %v7939, %v7935
    %v8086 = vpack.c.bf16 %v7941, %v7937
    %v8087 = vpack.c.bf16 %v7949, %v7945
    %v8088 = vpack.c.bf16 %v7951, %v7947
    %v8089 = vpack.c.bf16 %v7959, %v7955
    %v8090 = vpack.c.bf16 %v7961, %v7957
    %v8091 = vpack.c.bf16 %v7969, %v7965
    %v8092 = vpack.c.bf16 %v7971, %v7967
    %v8093 = vpack.c.bf16 %v7979, %v7975
    %v8094 = vpack.c.bf16 %v7981, %v7977
    %v8095 = vpack.c.bf16 %v7989, %v7985
    %v8096 = vpack.c.bf16 %v7991, %v7987
    %v8097 = vpack.c.bf16 %v7999, %v7995
    %v8098 = vpack.c.bf16 %v8001, %v7997
    %v8099 = vpack.c.bf16 %v8009, %v8005
    %v8100 = vpack.c.bf16 %v8011, %v8007
    %v8101 = vpack.c.bf16 %v8019, %v8015
    %v8102 = vpack.c.bf16 %v8021, %v8017
    %v8103 = vpack.c.bf16 %v8029, %v8025
    %v8104 = vpack.c.bf16 %v8031, %v8027
    %v8105 = vpack.c.bf16 %v8039, %v8035
    %v8106 = vpack.c.bf16 %v8041, %v8037
    %v8107 = vpack.c.bf16 %v8049, %v8045
    %v8108 = vpack.c.bf16 %v8051, %v8047
    %v8109 = vpack.c.bf16 %v8059, %v8055
    %v8110 = vpack.c.bf16 %v8061, %v8057
    %v8111 = vpack.c.bf16 %v8069, %v8065
    %v8112 = vpack.c.bf16 %v8071, %v8067
    %v8113 = vpack.c.bf16 %v8079, %v8075
    %v8114 = vpack.c.bf16 %v8081, %v8077
    %s8115 = scalar_lea.vmem %s4, 6
    %v8116 = vld [vmem:[%s8115] sm:$0x3]
    %v8118 = vlaneseq
    %v8119 = vshrl.u32 %v8118, 7
    %v8120 = vsub.s32 0, %v8119
    %v8121 = vrot.slane %v8116, %v8120
    %v8122 = vlaneseq
    %v8123 = vshrl.u32 %v8122, 7
    %v8124 = vsub.s32 1, %v8123
    %v8125 = vrot.slane %v8116, %v8124
    %v8128 = vpack.c.bf16 %v8121, %v8121
    %v8129 = vpack.c.bf16 %v8125, %v8125
    %v8131 = vpack.i.b16 %v8128, %v8128
    %v8133 = vlaneseq
    %v8134 = vshrl.u32 %v8133, 7
    %v8135 = vsub.s32 0, %v8134
    %v8136 = vrot.slane %v8131, %v8135
    %v8138 = vpack.i.b16 %v8129, %v8129
    %v8140 = vlaneseq
    %v8141 = vshrl.u32 %v8140, 7
    %v8142 = vsub.s32 0, %v8141
    %v8143 = vrot.slane %v8138, %v8142
    %v8144 = vadd.bf16 %v8083, %v8136
    %v8145 = vadd.bf16 %v8084, %v8143
    %v8146 = vadd.bf16 %v8085, %v8136
    %v8147 = vadd.bf16 %v8086, %v8143
    %v8148 = vadd.bf16 %v8087, %v8136
    %v8149 = vadd.bf16 %v8088, %v8143
    %v8150 = vadd.bf16 %v8089, %v8136
    %v8151 = vadd.bf16 %v8090, %v8143
    %v8152 = vadd.bf16 %v8091, %v8136
    %v8153 = vadd.bf16 %v8092, %v8143
    %v8154 = vadd.bf16 %v8093, %v8136
    %v8155 = vadd.bf16 %v8094, %v8143
    %v8156 = vadd.bf16 %v8095, %v8136
    %v8157 = vadd.bf16 %v8096, %v8143
    %v8158 = vadd.bf16 %v8097, %v8136
    %v8159 = vadd.bf16 %v8098, %v8143
    %v8160 = vadd.bf16 %v8099, %v8136
    %v8161 = vadd.bf16 %v8100, %v8143
    %v8162 = vadd.bf16 %v8101, %v8136
    %v8163 = vadd.bf16 %v8102, %v8143
    %v8164 = vadd.bf16 %v8103, %v8136
    %v8165 = vadd.bf16 %v8104, %v8143
    %v8166 = vadd.bf16 %v8105, %v8136
    %v8167 = vadd.bf16 %v8106, %v8143
    %v8168 = vadd.bf16 %v8107, %v8136
    %v8169 = vadd.bf16 %v8108, %v8143
    %v8170 = vadd.bf16 %v8109, %v8136
    %v8171 = vadd.bf16 %v8110, %v8143
    %v8172 = vadd.bf16 %v8111, %v8136
    %v8173 = vadd.bf16 %v8112, %v8143
    %v8174 = vadd.bf16 %v8113, %v8136
    %v8175 = vadd.bf16 %v8114, %v8143
    %v8176 = vmax.bf16 %v8144, 0
    %v8177 = vmax.bf16 %v8145, 0
    %v8178 = vmax.bf16 %v8146, 0
    %v8179 = vmax.bf16 %v8147, 0
    %v8180 = vmax.bf16 %v8148, 0
    %v8181 = vmax.bf16 %v8149, 0
    %v8182 = vmax.bf16 %v8150, 0
    %v8183 = vmax.bf16 %v8151, 0
    %v8184 = vmax.bf16 %v8152, 0
    %v8185 = vmax.bf16 %v8153, 0
    %v8186 = vmax.bf16 %v8154, 0
    %v8187 = vmax.bf16 %v8155, 0
    %v8188 = vmax.bf16 %v8156, 0
    %v8189 = vmax.bf16 %v8157, 0
    %v8190 = vmax.bf16 %v8158, 0
    %v8191 = vmax.bf16 %v8159, 0
    %v8192 = vmax.bf16 %v8160, 0
    %v8193 = vmax.bf16 %v8161, 0
    %v8194 = vmax.bf16 %v8162, 0
    %v8195 = vmax.bf16 %v8163, 0
    %v8196 = vmax.bf16 %v8164, 0
    %v8197 = vmax.bf16 %v8165, 0
    %v8198 = vmax.bf16 %v8166, 0
    %v8199 = vmax.bf16 %v8167, 0
    %v8200 = vmax.bf16 %v8168, 0
    %v8201 = vmax.bf16 %v8169, 0
    %v8202 = vmax.bf16 %v8170, 0
    %v8203 = vmax.bf16 %v8171, 0
    %v8204 = vmax.bf16 %v8172, 0
    %v8205 = vmax.bf16 %v8173, 0
    %v8206 = vmax.bf16 %v8174, 0
    %v8207 = vmax.bf16 %v8175, 0
    %s8208 = scalar_lea.vmem [#allocation7], 384
    %v8209 = vld [vmem:[%s8208] sm:$0xf]
    %v8210 = vld [vmem:[%s8208 + $0x4] sm:$0xf]
    %v8211 = vld [vmem:[%s8208 + $0x8] sm:$0xf]
    %v8212 = vld [vmem:[%s8208 + $0xc] sm:$0xf]
    %v8213 = vld [vmem:[%s8208 + $0x10] sm:$0xf]
    %v8214 = vld [vmem:[%s8208 + $0x14] sm:$0xf]
    %v8215 = vld [vmem:[%s8208 + $0x18] sm:$0xf]
    %v8216 = vld [vmem:[%s8208 + $0x1c] sm:$0xf]
    %v8217 = vld [vmem:[%s8208 + $0x20] sm:$0xf]
    %v8218 = vld [vmem:[%s8208 + $0x24] sm:$0xf]
    %v8219 = vld [vmem:[%s8208 + $0x28] sm:$0xf]
    %v8220 = vld [vmem:[%s8208 + $0x2c] sm:$0xf]
    %v8221 = vld [vmem:[%s8208 + $0x30] sm:$0xf]
    %v8222 = vld [vmem:[%s8208 + $0x34] sm:$0xf]
    %v8223 = vld [vmem:[%s8208 + $0x38] sm:$0xf]
    %v8224 = vld [vmem:[%s8208 + $0x3c] sm:$0xf]
    %v8225 = vld [vmem:[%s8208 + $0x40] sm:$0xf]
    %v8226 = vld [vmem:[%s8208 + $0x44] sm:$0xf]
    %v8227 = vld [vmem:[%s8208 + $0x48] sm:$0xf]
    %v8228 = vld [vmem:[%s8208 + $0x4c] sm:$0xf]
    %v8229 = vld [vmem:[%s8208 + $0x50] sm:$0xf]
    %v8230 = vld [vmem:[%s8208 + $0x54] sm:$0xf]
    %v8231 = vld [vmem:[%s8208 + $0x58] sm:$0xf]
    %v8232 = vld [vmem:[%s8208 + $0x5c] sm:$0xf]
    %v8233 = vld [vmem:[%s8208 + $0x60] sm:$0xf]
    %v8234 = vld [vmem:[%s8208 + $0x64] sm:$0xf]
    %v8235 = vld [vmem:[%s8208 + $0x68] sm:$0xf]
    %v8236 = vld [vmem:[%s8208 + $0x6c] sm:$0xf]
    %v8237 = vld [vmem:[%s8208 + $0x70] sm:$0xf]
    %v8238 = vld [vmem:[%s8208 + $0x74] sm:$0xf]
    %v8239 = vld [vmem:[%s8208 + $0x78] sm:$0xf]
    %v8240 = vld [vmem:[%s8208 + $0x7c] sm:$0xf]
    %v8273 = vunpack.c.l.b16 %v8209
    %v8274 = vunpack.c.l.b16 %v8210
    %v8275 = vunpack.c.l.b16 %v8211
    %v8276 = vunpack.c.l.b16 %v8212
    %v8277 = vunpack.c.l.b16 %v8213
    %v8278 = vunpack.c.l.b16 %v8214
    %v8279 = vunpack.c.l.b16 %v8215
    %v8280 = vunpack.c.l.b16 %v8216
    %v8281 = vunpack.c.l.b16 %v8217
    %v8282 = vunpack.c.l.b16 %v8218
    %v8283 = vunpack.c.l.b16 %v8219
    %v8284 = vunpack.c.l.b16 %v8220
    %v8285 = vunpack.c.l.b16 %v8221
    %v8286 = vunpack.c.l.b16 %v8222
    %v8287 = vunpack.c.l.b16 %v8223
    %v8288 = vunpack.c.l.b16 %v8224
    %v8289 = vunpack.c.l.b16 %v8225
    %v8290 = vunpack.c.l.b16 %v8226
    %v8291 = vunpack.c.l.b16 %v8227
    %v8292 = vunpack.c.l.b16 %v8228
    %v8293 = vunpack.c.l.b16 %v8229
    %v8294 = vunpack.c.l.b16 %v8230
    %v8295 = vunpack.c.l.b16 %v8231
    %v8296 = vunpack.c.l.b16 %v8232
    %v8297 = vunpack.c.l.b16 %v8233
    %v8298 = vunpack.c.l.b16 %v8234
    %v8299 = vunpack.c.l.b16 %v8235
    %v8300 = vunpack.c.l.b16 %v8236
    %v8301 = vunpack.c.l.b16 %v8237
    %v8302 = vunpack.c.l.b16 %v8238
    %v8303 = vunpack.c.l.b16 %v8239
    %v8304 = vunpack.c.l.b16 %v8240
    %v8305 = vpack.c.b16 %v8274, %v8273
    %v8306 = vpack.c.b16 %v8276, %v8275
    %v8307 = vpack.c.b16 %v8278, %v8277
    %v8308 = vpack.c.b16 %v8280, %v8279
    %v8309 = vpack.c.b16 %v8282, %v8281
    %v8310 = vpack.c.b16 %v8284, %v8283
    %v8311 = vpack.c.b16 %v8286, %v8285
    %v8312 = vpack.c.b16 %v8288, %v8287
    %v8313 = vpack.c.b16 %v8290, %v8289
    %v8314 = vpack.c.b16 %v8292, %v8291
    %v8315 = vpack.c.b16 %v8294, %v8293
    %v8316 = vpack.c.b16 %v8296, %v8295
    %v8317 = vpack.c.b16 %v8298, %v8297
    %v8318 = vpack.c.b16 %v8300, %v8299
    %v8319 = vpack.c.b16 %v8302, %v8301
    %v8320 = vpack.c.b16 %v8304, %v8303
    %8337 = vmatprep.subr.bf16.mxu0 0
    %8338 = vmatpush1.bf16.msra.mxu0 %v8305
    %8339 = vmatprep.subr.bf16.mxu0 0
    %8340 = vmatpush1.bf16.msra.mxu0 %v8306
    %8341 = vmatprep.subr.bf16.mxu0 0
    %8342 = vmatpush1.bf16.msra.mxu0 %v8307
    %8343 = vmatprep.subr.bf16.mxu0 0
    %8344 = vmatpush1.bf16.msra.mxu0 %v8308
    %8345 = vmatprep.subr.bf16.mxu0 0
    %8346 = vmatpush1.bf16.msra.mxu0 %v8309
    %8347 = vmatprep.subr.bf16.mxu0 0
    %8348 = vmatpush1.bf16.msra.mxu0 %v8310
    %8349 = vmatprep.subr.bf16.mxu0 0
    %8350 = vmatpush1.bf16.msra.mxu0 %v8311
    %8351 = vmatprep.subr.bf16.mxu0 0
    %8352 = vmatpush1.bf16.msra.mxu0 %v8312
    %8353 = vmatprep.subr.bf16.mxu0 0
    %8354 = vmatpush1.bf16.msra.mxu0 %v8313
    %8355 = vmatprep.subr.bf16.mxu0 0
    %8356 = vmatpush1.bf16.msra.mxu0 %v8314
    %8357 = vmatprep.subr.bf16.mxu0 0
    %8358 = vmatpush1.bf16.msra.mxu0 %v8315
    %8359 = vmatprep.subr.bf16.mxu0 0
    %8360 = vmatpush1.bf16.msra.mxu0 %v8316
    %8361 = vmatprep.subr.bf16.mxu0 0
    %8362 = vmatpush1.bf16.msra.mxu0 %v8317
    %8363 = vmatprep.subr.bf16.mxu0 0
    %8364 = vmatpush1.bf16.msra.mxu0 %v8318
    %8365 = vmatprep.subr.bf16.mxu0 0
    %8366 = vmatpush1.bf16.msra.mxu0 %v8319
    %8367 = vmatprep.subr.bf16.mxu0 0
    %8368 = vmatpush1.bf16.msra.mxu0 %v8320
    %8369 = vmatprep.mubr.bf16.mxu0 %v8177
    %8370 = vmatmul.mubr.bf16.gmra.mrb[0].mxu0 %v8176
    %v8371 = vpop.f32.mrb[0].mxu0
    %v8372 = vadd.f32 0.0, %v8371
    %v8373 = vpop.f32.mrb[0].mxu0
    %v8374 = vpop.f32.mrb[0].mxu0
    %v8375 = vadd.f32 0.0, %v8374
    %v8376 = vpop.f32.mrb[0].mxu0
    %8377 = vmatprep.mubr.bf16.mxu0 %v8179
    %8378 = vmatmul.mubr.bf16.gmra.mrb[0].mxu0 %v8178
    %v8379 = vpop.f32.mrb[0].mxu0
    %v8380 = vadd.f32 0.0, %v8379
    %v8381 = vpop.f32.mrb[0].mxu0
    %v8382 = vpop.f32.mrb[0].mxu0
    %v8383 = vadd.f32 0.0, %v8382
    %v8384 = vpop.f32.mrb[0].mxu0
    %8385 = vmatprep.mubr.bf16.mxu0 %v8181
    %8386 = vmatmul.mubr.bf16.gmra.mrb[0].mxu0 %v8180
    %v8387 = vpop.f32.mrb[0].mxu0
    %v8388 = vadd.f32 0.0, %v8387
    %v8389 = vpop.f32.mrb[0].mxu0
    %v8390 = vpop.f32.mrb[0].mxu0
    %v8391 = vadd.f32 0.0, %v8390
    %v8392 = vpop.f32.mrb[0].mxu0
    %8393 = vmatprep.mubr.bf16.mxu0 %v8183
    %8394 = vmatmul.mubr.bf16.gmra.mrb[0].mxu0 %v8182
    %v8395 = vpop.f32.mrb[0].mxu0
    %v8396 = vadd.f32 0.0, %v8395
    %v8397 = vpop.f32.mrb[0].mxu0
    %v8398 = vpop.f32.mrb[0].mxu0
    %v8399 = vadd.f32 0.0, %v8398
    %v8400 = vpop.f32.mrb[0].mxu0
    %8401 = vmatprep.mubr.bf16.mxu0 %v8185
    %8402 = vmatmul.mubr.bf16.gmra.mrb[0].mxu0 %v8184
    %v8403 = vpop.f32.mrb[0].mxu0
    %v8404 = vadd.f32 0.0, %v8403
    %v8405 = vpop.f32.mrb[0].mxu0
    %v8406 = vpop.f32.mrb[0].mxu0
    %v8407 = vadd.f32 0.0, %v8406
    %v8408 = vpop.f32.mrb[0].mxu0
    %8409 = vmatprep.mubr.bf16.mxu0 %v8187
    %8410 = vmatmul.mubr.bf16.gmra.mrb[0].mxu0 %v8186
    %v8411 = vpop.f32.mrb[0].mxu0
    %v8412 = vadd.f32 0.0, %v8411
    %v8413 = vpop.f32.mrb[0].mxu0
    %v8414 = vpop.f32.mrb[0].mxu0
    %v8415 = vadd.f32 0.0, %v8414
    %v8416 = vpop.f32.mrb[0].mxu0
    %8417 = vmatprep.mubr.bf16.mxu0 %v8189
    %8418 = vmatmul.mubr.bf16.gmra.mrb[0].mxu0 %v8188
    %v8419 = vpop.f32.mrb[0].mxu0
    %v8420 = vadd.f32 0.0, %v8419
    %v8421 = vpop.f32.mrb[0].mxu0
    %v8422 = vpop.f32.mrb[0].mxu0
    %v8423 = vadd.f32 0.0, %v8422
    %v8424 = vpop.f32.mrb[0].mxu0
    %8425 = vmatprep.mubr.bf16.mxu0 %v8191
    %8426 = vmatmul.mubr.bf16.gmra.mrb[0].mxu0 %v8190
    %v8427 = vpop.f32.mrb[0].mxu0
    %v8428 = vadd.f32 0.0, %v8427
    %v8429 = vpop.f32.mrb[0].mxu0
    %v8430 = vpop.f32.mrb[0].mxu0
    %v8431 = vadd.f32 0.0, %v8430
    %v8432 = vpop.f32.mrb[0].mxu0
    %8433 = vmatprep.mubr.bf16.mxu0 %v8193
    %8434 = vmatmul.mubr.bf16.gmra.mrb[0].mxu0 %v8192
    %v8435 = vpop.f32.mrb[0].mxu0
    %v8436 = vadd.f32 0.0, %v8435
    %v8437 = vpop.f32.mrb[0].mxu0
    %v8438 = vpop.f32.mrb[0].mxu0
    %v8439 = vadd.f32 0.0, %v8438
    %v8440 = vpop.f32.mrb[0].mxu0
    %8441 = vmatprep.mubr.bf16.mxu0 %v8195
    %8442 = vmatmul.mubr.bf16.gmra.mrb[0].mxu0 %v8194
    %v8443 = vpop.f32.mrb[0].mxu0
    %v8444 = vadd.f32 0.0, %v8443
    %v8445 = vpop.f32.mrb[0].mxu0
    %v8446 = vpop.f32.mrb[0].mxu0
    %v8447 = vadd.f32 0.0, %v8446
    %v8448 = vpop.f32.mrb[0].mxu0
    %8449 = vmatprep.mubr.bf16.mxu0 %v8197
    %8450 = vmatmul.mubr.bf16.gmra.mrb[0].mxu0 %v8196
    %v8451 = vpop.f32.mrb[0].mxu0
    %v8452 = vadd.f32 0.0, %v8451
    %v8453 = vpop.f32.mrb[0].mxu0
    %v8454 = vpop.f32.mrb[0].mxu0
    %v8455 = vadd.f32 0.0, %v8454
    %v8456 = vpop.f32.mrb[0].mxu0
    %8457 = vmatprep.mubr.bf16.mxu0 %v8199
    %8458 = vmatmul.mubr.bf16.gmra.mrb[0].mxu0 %v8198
    %v8459 = vpop.f32.mrb[0].mxu0
    %v8460 = vadd.f32 0.0, %v8459
    %v8461 = vpop.f32.mrb[0].mxu0
    %v8462 = vpop.f32.mrb[0].mxu0
    %v8463 = vadd.f32 0.0, %v8462
    %v8464 = vpop.f32.mrb[0].mxu0
    %8465 = vmatprep.mubr.bf16.mxu0 %v8201
    %8466 = vmatmul.mubr.bf16.gmra.mrb[0].mxu0 %v8200
    %v8467 = vpop.f32.mrb[0].mxu0
    %v8468 = vadd.f32 0.0, %v8467
    %v8469 = vpop.f32.mrb[0].mxu0
    %v8470 = vpop.f32.mrb[0].mxu0
    %v8471 = vadd.f32 0.0, %v8470
    %v8472 = vpop.f32.mrb[0].mxu0
    %8473 = vmatprep.mubr.bf16.mxu0 %v8203
    %8474 = vmatmul.mubr.bf16.gmra.mrb[0].mxu0 %v8202
    %v8475 = vpop.f32.mrb[0].mxu0
    %v8476 = vadd.f32 0.0, %v8475
    %v8477 = vpop.f32.mrb[0].mxu0
    %v8478 = vpop.f32.mrb[0].mxu0
    %v8479 = vadd.f32 0.0, %v8478
    %v8480 = vpop.f32.mrb[0].mxu0
    %8481 = vmatprep.mubr.bf16.mxu0 %v8205
    %8482 = vmatmul.mubr.bf16.gmra.mrb[0].mxu0 %v8204
    %v8483 = vpop.f32.mrb[0].mxu0
    %v8484 = vadd.f32 0.0, %v8483
    %v8485 = vpop.f32.mrb[0].mxu0
    %v8486 = vpop.f32.mrb[0].mxu0
    %v8487 = vadd.f32 0.0, %v8486
    %v8488 = vpop.f32.mrb[0].mxu0
    %8489 = vmatprep.mubr.bf16.mxu0 %v8207
    %8490 = vmatmul.mubr.bf16.gmra.mrb[0].mxu0 %v8206
    %v8491 = vpop.f32.mrb[0].mxu0
    %v8492 = vadd.f32 0.0, %v8491
    %v8493 = vpop.f32.mrb[0].mxu0
    %v8494 = vpop.f32.mrb[0].mxu0
    %v8495 = vadd.f32 0.0, %v8494
    %v8496 = vpop.f32.mrb[0].mxu0
    %8497 = vdwg.mxu0
    %v8498 = vpack.c.bf16 %v8375, %v8372
    %v8499 = vpack.c.bf16 %v8383, %v8380
    %v8500 = vpack.c.bf16 %v8391, %v8388
    %v8501 = vpack.c.bf16 %v8399, %v8396
    %v8502 = vpack.c.bf16 %v8407, %v8404
    %v8503 = vpack.c.bf16 %v8415, %v8412
    %v8504 = vpack.c.bf16 %v8423, %v8420
    %v8505 = vpack.c.bf16 %v8431, %v8428
    %v8506 = vpack.c.bf16 %v8439, %v8436
    %v8507 = vpack.c.bf16 %v8447, %v8444
    %v8508 = vpack.c.bf16 %v8455, %v8452
    %v8509 = vpack.c.bf16 %v8463, %v8460
    %v8510 = vpack.c.bf16 %v8471, %v8468
    %v8511 = vpack.c.bf16 %v8479, %v8476
    %v8512 = vpack.c.bf16 %v8487, %v8484
    %v8513 = vpack.c.bf16 %v8495, %v8492
    %s8514 = scalar_lea.vmem %s6, 3
    %v8515 = vld [vmem:[%s8514] sm:$0x1]
    %v8516 = vpack.c.bf16 %v8515, %v8515
    %v8518 = vpack.i.b16 %v8516, %v8516
    %v8520 = vlaneseq
    %v8521 = vshrl.u32 %v8520, 7
    %v8522 = vsub.s32 0, %v8521
    %v8523 = vrot.slane %v8518, %v8522
    %v8524 = vadd.bf16 %v8498, %v8523
    %v8525 = vadd.bf16 %v8499, %v8523
    %v8526 = vadd.bf16 %v8500, %v8523
    %v8527 = vadd.bf16 %v8501, %v8523
    %v8528 = vadd.bf16 %v8502, %v8523
    %v8529 = vadd.bf16 %v8503, %v8523
    %v8530 = vadd.bf16 %v8504, %v8523
    %v8531 = vadd.bf16 %v8505, %v8523
    %v8532 = vadd.bf16 %v8506, %v8523
    %v8533 = vadd.bf16 %v8507, %v8523
    %v8534 = vadd.bf16 %v8508, %v8523
    %v8535 = vadd.bf16 %v8509, %v8523
    %v8536 = vadd.bf16 %v8510, %v8523
    %v8537 = vadd.bf16 %v8511, %v8523
    %v8538 = vadd.bf16 %v8512, %v8523
    %v8539 = vadd.bf16 %v8513, %v8523
    %v8540 = vmax.bf16 %v8524, 0
    %v8541 = vmax.bf16 %v8525, 0
    %v8542 = vmax.bf16 %v8526, 0
    %v8543 = vmax.bf16 %v8527, 0
    %v8544 = vmax.bf16 %v8528, 0
    %v8545 = vmax.bf16 %v8529, 0
    %v8546 = vmax.bf16 %v8530, 0
    %v8547 = vmax.bf16 %v8531, 0
    %v8548 = vmax.bf16 %v8532, 0
    %v8549 = vmax.bf16 %v8533, 0
    %v8550 = vmax.bf16 %v8534, 0
    %v8551 = vmax.bf16 %v8535, 0
    %v8552 = vmax.bf16 %v8536, 0
    %v8553 = vmax.bf16 %v8537, 0
    %v8554 = vmax.bf16 %v8538, 0
    %v8555 = vmax.bf16 %v8539, 0
    %v8556 = vunpack.c.l.bf16 %v8540
    %v8557 = vunpack.c.h.bf16 %v8540
    %v8558 = vunpack.c.l.bf16 %v8541
    %v8559 = vunpack.c.h.bf16 %v8541
    %v8560 = vunpack.c.l.bf16 %v8542
    %v8561 = vunpack.c.h.bf16 %v8542
    %v8562 = vunpack.c.l.bf16 %v8543
    %v8563 = vunpack.c.h.bf16 %v8543
    %v8564 = vunpack.c.l.bf16 %v8544
    %v8565 = vunpack.c.h.bf16 %v8544
    %v8566 = vunpack.c.l.bf16 %v8545
    %v8567 = vunpack.c.h.bf16 %v8545
    %v8568 = vunpack.c.l.bf16 %v8546
    %v8569 = vunpack.c.h.bf16 %v8546
    %v8570 = vunpack.c.l.bf16 %v8547
    %v8571 = vunpack.c.h.bf16 %v8547
    %v8572 = vunpack.c.l.bf16 %v8548
    %v8573 = vunpack.c.h.bf16 %v8548
    %v8574 = vunpack.c.l.bf16 %v8549
    %v8575 = vunpack.c.h.bf16 %v8549
    %v8576 = vunpack.c.l.bf16 %v8550
    %v8577 = vunpack.c.h.bf16 %v8550
    %v8578 = vunpack.c.l.bf16 %v8551
    %v8579 = vunpack.c.h.bf16 %v8551
    %v8580 = vunpack.c.l.bf16 %v8552
    %v8581 = vunpack.c.h.bf16 %v8552
    %v8582 = vunpack.c.l.bf16 %v8553
    %v8583 = vunpack.c.h.bf16 %v8553
    %v8584 = vunpack.c.l.bf16 %v8554
    %v8585 = vunpack.c.h.bf16 %v8554
    %v8586 = vunpack.c.l.bf16 %v8555
    %v8587 = vunpack.c.h.bf16 %v8555
    %s8588 = scalar_lea.vmem %s7, 3
    %v8589 = vld [vmem:[%s8588] sm:$0x1]
    %v8591 = vlaneseq
    %v8592 = vshrl.u32 %v8591, 7
    %v8593 = vsub.s32 0, %v8592
    %v8594 = vrot.slane %v8589, %v8593
    %v8596 = vmul.f32 %v8556, %v8594
    %v8597 = vmul.f32 %v8557, %v8594
    %v8598 = vmul.f32 %v8558, %v8594
    %v8599 = vmul.f32 %v8559, %v8594
    %v8600 = vmul.f32 %v8560, %v8594
    %v8601 = vmul.f32 %v8561, %v8594
    %v8602 = vmul.f32 %v8562, %v8594
    %v8603 = vmul.f32 %v8563, %v8594
    %v8604 = vmul.f32 %v8564, %v8594
    %v8605 = vmul.f32 %v8565, %v8594
    %v8606 = vmul.f32 %v8566, %v8594
    %v8607 = vmul.f32 %v8567, %v8594
    %v8608 = vmul.f32 %v8568, %v8594
    %v8609 = vmul.f32 %v8569, %v8594
    %v8610 = vmul.f32 %v8570, %v8594
    %v8611 = vmul.f32 %v8571, %v8594
    %v8612 = vmul.f32 %v8572, %v8594
    %v8613 = vmul.f32 %v8573, %v8594
    %v8614 = vmul.f32 %v8574, %v8594
    %v8615 = vmul.f32 %v8575, %v8594
    %v8616 = vmul.f32 %v8576, %v8594
    %v8617 = vmul.f32 %v8577, %v8594
    %v8618 = vmul.f32 %v8578, %v8594
    %v8619 = vmul.f32 %v8579, %v8594
    %v8620 = vmul.f32 %v8580, %v8594
    %v8621 = vmul.f32 %v8581, %v8594
    %v8622 = vmul.f32 %v8582, %v8594
    %v8623 = vmul.f32 %v8583, %v8594
    %v8624 = vmul.f32 %v8584, %v8594
    %v8625 = vmul.f32 %v8585, %v8594
    %v8626 = vmul.f32 %v8586, %v8594
    %v8627 = vmul.f32 %v8587, %v8594
    %8628 = vadd.xlane.f32.xlu0 %v8596
    %v8629 = vpop.xlane.xlu0 %8628
    %8630 = vadd.xlane.f32.xlu0 %v8597
    %v8631 = vpop.xlane.xlu0 %8630
    %8632 = vadd.xlane.f32.xlu0 %v8598
    %v8633 = vpop.xlane.xlu0 %8632
    %8634 = vadd.xlane.f32.xlu0 %v8599
    %v8635 = vpop.xlane.xlu0 %8634
    %8636 = vadd.xlane.f32.xlu0 %v8600
    %v8637 = vpop.xlane.xlu0 %8636
    %8638 = vadd.xlane.f32.xlu0 %v8601
    %v8639 = vpop.xlane.xlu0 %8638
    %8640 = vadd.xlane.f32.xlu0 %v8602
    %v8641 = vpop.xlane.xlu0 %8640
    %8642 = vadd.xlane.f32.xlu0 %v8603
    %v8643 = vpop.xlane.xlu0 %8642
    %8644 = vadd.xlane.f32.xlu0 %v8604
    %v8645 = vpop.xlane.xlu0 %8644
    %8646 = vadd.xlane.f32.xlu0 %v8605
    %v8647 = vpop.xlane.xlu0 %8646
    %8648 = vadd.xlane.f32.xlu0 %v8606
    %v8649 = vpop.xlane.xlu0 %8648
    %8650 = vadd.xlane.f32.xlu0 %v8607
    %v8651 = vpop.xlane.xlu0 %8650
    %8652 = vadd.xlane.f32.xlu0 %v8608
    %v8653 = vpop.xlane.xlu0 %8652
    %8654 = vadd.xlane.f32.xlu0 %v8609
    %v8655 = vpop.xlane.xlu0 %8654
    %8656 = vadd.xlane.f32.xlu0 %v8610
    %v8657 = vpop.xlane.xlu0 %8656
    %8658 = vadd.xlane.f32.xlu0 %v8611
    %v8659 = vpop.xlane.xlu0 %8658
    %8660 = vadd.xlane.f32.xlu0 %v8612
    %v8661 = vpop.xlane.xlu0 %8660
    %8662 = vadd.xlane.f32.xlu0 %v8613
    %v8663 = vpop.xlane.xlu0 %8662
    %8664 = vadd.xlane.f32.xlu0 %v8614
    %v8665 = vpop.xlane.xlu0 %8664
    %8666 = vadd.xlane.f32.xlu0 %v8615
    %v8667 = vpop.xlane.xlu0 %8666
    %8668 = vadd.xlane.f32.xlu0 %v8616
    %v8669 = vpop.xlane.xlu0 %8668
    %8670 = vadd.xlane.f32.xlu0 %v8617
    %v8671 = vpop.xlane.xlu0 %8670
    %8672 = vadd.xlane.f32.xlu0 %v8618
    %v8673 = vpop.xlane.xlu0 %8672
    %8674 = vadd.xlane.f32.xlu0 %v8619
    %v8675 = vpop.xlane.xlu0 %8674
    %8676 = vadd.xlane.f32.xlu0 %v8620
    %v8677 = vpop.xlane.xlu0 %8676
    %8678 = vadd.xlane.f32.xlu0 %v8621
    %v8679 = vpop.xlane.xlu0 %8678
    %8680 = vadd.xlane.f32.xlu0 %v8622
    %v8681 = vpop.xlane.xlu0 %8680
    %8682 = vadd.xlane.f32.xlu0 %v8623
    %v8683 = vpop.xlane.xlu0 %8682
    %8684 = vadd.xlane.f32.xlu0 %v8624
    %v8685 = vpop.xlane.xlu0 %8684
    %8686 = vadd.xlane.f32.xlu0 %v8625
    %v8687 = vpop.xlane.xlu0 %8686
    %8688 = vadd.xlane.f32.xlu0 %v8626
    %v8689 = vpop.xlane.xlu0 %8688
    %8690 = vadd.xlane.f32.xlu0 %v8627
    %v8691 = vpop.xlane.xlu0 %8690
    %v8692 = vadd.f32 %v7280, %v8629
    %v8693 = vadd.f32 %v7281, %v8631
    %v8694 = vadd.f32 %v7282, %v8633
    %v8695 = vadd.f32 %v7283, %v8635
    %v8696 = vadd.f32 %v7284, %v8637
    %v8697 = vadd.f32 %v7285, %v8639
    %v8698 = vadd.f32 %v7286, %v8641
    %v8699 = vadd.f32 %v7287, %v8643
    %v8700 = vadd.f32 %v7288, %v8645
    %v8701 = vadd.f32 %v7289, %v8647
    %v8702 = vadd.f32 %v7290, %v8649
    %v8703 = vadd.f32 %v7291, %v8651
    %v8704 = vadd.f32 %v7292, %v8653
    %v8705 = vadd.f32 %v7293, %v8655
    %v8706 = vadd.f32 %v7294, %v8657
    %v8707 = vadd.f32 %v7295, %v8659
    %v8708 = vadd.f32 %v7296, %v8661
    %v8709 = vadd.f32 %v7297, %v8663
    %v8710 = vadd.f32 %v7298, %v8665
    %v8711 = vadd.f32 %v7299, %v8667
    %v8712 = vadd.f32 %v7300, %v8669
    %v8713 = vadd.f32 %v7301, %v8671
    %v8714 = vadd.f32 %v7302, %v8673
    %v8715 = vadd.f32 %v7303, %v8675
    %v8716 = vadd.f32 %v7304, %v8677
    %v8717 = vadd.f32 %v7305, %v8679
    %v8718 = vadd.f32 %v7306, %v8681
    %v8719 = vadd.f32 %v7307, %v8683
    %v8720 = vadd.f32 %v7308, %v8685
    %v8721 = vadd.f32 %v7309, %v8687
    %v8722 = vadd.f32 %v7310, %v8689
    %v8723 = vadd.f32 %v7311, %v8691
    %v8724 = vld [vmem:[#allocation2] sm:$0x1]
    %v8726 = vlaneseq
    %v8727 = vshrl.u32 %v8726, 7
    %v8728 = vsub.s32 0, %v8727
    %v8729 = vrot.slane %v8724, %v8728
    %v8731 = vadd.f32 %v8692, %v8729
    %v8732 = vadd.f32 %v8693, %v8729
    %v8733 = vadd.f32 %v8694, %v8729
    %v8734 = vadd.f32 %v8695, %v8729
    %v8735 = vadd.f32 %v8696, %v8729
    %v8736 = vadd.f32 %v8697, %v8729
    %v8737 = vadd.f32 %v8698, %v8729
    %v8738 = vadd.f32 %v8699, %v8729
    %v8739 = vadd.f32 %v8700, %v8729
    %v8740 = vadd.f32 %v8701, %v8729
    %v8741 = vadd.f32 %v8702, %v8729
    %v8742 = vadd.f32 %v8703, %v8729
    %v8743 = vadd.f32 %v8704, %v8729
    %v8744 = vadd.f32 %v8705, %v8729
    %v8745 = vadd.f32 %v8706, %v8729
    %v8746 = vadd.f32 %v8707, %v8729
    %v8747 = vadd.f32 %v8708, %v8729
    %v8748 = vadd.f32 %v8709, %v8729
    %v8749 = vadd.f32 %v8710, %v8729
    %v8750 = vadd.f32 %v8711, %v8729
    %v8751 = vadd.f32 %v8712, %v8729
    %v8752 = vadd.f32 %v8713, %v8729
    %v8753 = vadd.f32 %v8714, %v8729
    %v8754 = vadd.f32 %v8715, %v8729
    %v8755 = vadd.f32 %v8716, %v8729
    %v8756 = vadd.f32 %v8717, %v8729
    %v8757 = vadd.f32 %v8718, %v8729
    %v8758 = vadd.f32 %v8719, %v8729
    %v8759 = vadd.f32 %v8720, %v8729
    %v8760 = vadd.f32 %v8721, %v8729
    %v8761 = vadd.f32 %v8722, %v8729
    %v8762 = vadd.f32 %v8723, %v8729
    %vm8763 = vcmask 7168
    %8764 = vst.msk [vmem:[%s9] sm:$0xff] %vm8763, %v8731
    %8765 = vst.msk [vmem:[%s9 + $0x8] sm:$0xff] %vm8763, %v8732
    %8766 = vst.msk [vmem:[%s9 + $0x10] sm:$0xff] %vm8763, %v8733
    %8767 = vst.msk [vmem:[%s9 + $0x18] sm:$0xff] %vm8763, %v8734
    %8768 = vst.msk [vmem:[%s9 + $0x20] sm:$0xff] %vm8763, %v8735
    %8769 = vst.msk [vmem:[%s9 + $0x28] sm:$0xff] %vm8763, %v8736
    %8770 = vst.msk [vmem:[%s9 + $0x30] sm:$0xff] %vm8763, %v8737
    %8771 = vst.msk [vmem:[%s9 + $0x38] sm:$0xff] %vm8763, %v8738
    %8772 = vst.msk [vmem:[%s9 + $0x40] sm:$0xff] %vm8763, %v8739
    %8773 = vst.msk [vmem:[%s9 + $0x48] sm:$0xff] %vm8763, %v8740
    %8774 = vst.msk [vmem:[%s9 + $0x50] sm:$0xff] %vm8763, %v8741
    %8775 = vst.msk [vmem:[%s9 + $0x58] sm:$0xff] %vm8763, %v8742
    %8776 = vst.msk [vmem:[%s9 + $0x60] sm:$0xff] %vm8763, %v8743
    %8777 = vst.msk [vmem:[%s9 + $0x68] sm:$0xff] %vm8763, %v8744
    %8778 = vst.msk [vmem:[%s9 + $0x70] sm:$0xff] %vm8763, %v8745
    %8779 = vst.msk [vmem:[%s9 + $0x78] sm:$0xff] %vm8763, %v8746
    %8780 = vst.msk [vmem:[%s9 + $0x80] sm:$0xff] %vm8763, %v8747
    %8781 = vst.msk [vmem:[%s9 + $0x88] sm:$0xff] %vm8763, %v8748
    %8782 = vst.msk [vmem:[%s9 + $0x90] sm:$0xff] %vm8763, %v8749
    %8783 = vst.msk [vmem:[%s9 + $0x98] sm:$0xff] %vm8763, %v8750
    %8784 = vst.msk [vmem:[%s9 + $0xa0] sm:$0xff] %vm8763, %v8751
    %8785 = vst.msk [vmem:[%s9 + $0xa8] sm:$0xff] %vm8763, %v8752
    %8786 = vst.msk [vmem:[%s9 + $0xb0] sm:$0xff] %vm8763, %v8753
    %8787 = vst.msk [vmem:[%s9 + $0xb8] sm:$0xff] %vm8763, %v8754
    %8788 = vst.msk [vmem:[%s9 + $0xc0] sm:$0xff] %vm8763, %v8755
    %8789 = vst.msk [vmem:[%s9 + $0xc8] sm:$0xff] %vm8763, %v8756
    %8790 = vst.msk [vmem:[%s9 + $0xd0] sm:$0xff] %vm8763, %v8757
    %8791 = vst.msk [vmem:[%s9 + $0xd8] sm:$0xff] %vm8763, %v8758
    %8792 = vst.msk [vmem:[%s9 + $0xe0] sm:$0xff] %vm8763, %v8759
    %8793 = vst.msk [vmem:[%s9 + $0xe8] sm:$0xff] %vm8763, %v8760
    %8794 = vst.msk [vmem:[%s9 + $0xf0] sm:$0xff] %vm8763, %v8761
    %8795 = vst.msk [vmem:[%s9 + $0xf8] sm:$0xff] %vm8763, %v8762
    // Predicated region
    $region50: #{tpu_custom_call.1} parent=1 // pred_check
      _
    $region51: #{tpu_custom_call.1} parent=1 // pred_check_branch
      %8797 = sbr.rel (0) target = $region53
    $region52: #{tpu_custom_call.1} parent=1 // pred_region
      _
    $region53: #{tpu_custom_call.1} parent=1 // pred_fallthru
      _
    // Predicated region
    $region54: #{tpu_custom_call.1} parent=1 // pred_check
      _
    $region55: #{tpu_custom_call.1} parent=1 // pred_check_branch
      %8799 = sbr.rel (0) target = $region57
    $region56: #{tpu_custom_call.1} parent=1 // pred_region
      _
    $region57: #{tpu_custom_call.1} parent=1 // pred_fallthru
      _
    %8800 = vsyncpa [#allocation4], 1
    %8801 = vsyncpa [#allocation6], 1

</llo_original>
